<compile_context>
chip_gen: v7x
topology: tpu7x:2x2x1
jax: 0.10.0
libtpu: 0.0.40
codegen_flags: <defaults>
</compile_context>

<pallas_src>
import math

import jax
import jax.numpy as jnp
from jax.experimental import pallas as pl
from jax.experimental.pallas import tpu as pltpu

# ---- model configuration (small shapes consistent with the module) ----
E = 16                      # embedding_size
HID = 32                    # hidden_dim (bidirectional LSTM output width)
H = HID // 2                # per-direction LSTM hidden size (16)
G = 8 * H                   # fused gate width: 4 gates x 2 directions = 128
D_MODEL = HID               # attention d_model
N_HEADS = 3
D_K = 16
D_V = 16
T = 8                       # seq len == num_output so LinearModel input matches
NUM_OUTPUT = T
LIN_HID = (D_MODEL * NUM_OUTPUT) // 16   # first LinearModel layer width (16)
EPS_LN = 1e-3

B_BLK = 8                   # sequences per grid step (full f32 sublane tile)


# ----------------------------------------------------------------------------
# Fused kernel.  Gate-major fused column layout (blocks of width H):
#   [i_f, i_b, f_f, f_b, g_f, g_b, o_f, o_b]   (PyTorch gate order i,f,g,o)
# State layout: h, c are (B_BLK, 2H) = [fwd | bwd].
# ----------------------------------------------------------------------------
def fused_kernel(x_ref, wbig_ref, whh_ref, wqkv_ref, pw_ref, w1r_ref, w2_ref,
                 bias_ref, out_ref, xbuf):
    f32 = jnp.float32
    Bb = B_BLK

    bias = bias_ref[...]                       # (6, 128) packed 1-row params
    b_gate = bias[0:1, :]                      # (1, G)   LSTM gate bias
    proj_b = bias[1:2, 0:D_MODEL]
    gamma = bias[2:3, 0:D_MODEL]
    beta = bias[3:4, 0:D_MODEL]
    b1 = bias[4:5, 0:LIN_HID]
    b2 = bias[5:6, 0:NUM_OUTPUT]

    # ---- BiLSTM: single fused (fwd+bwd) input projection, hoisted ----
    # Rows are time-major within the block; lanes are [x(t) | x(T-1-t)], so one
    # matmul + one full-vreg bias add yields every step's merged gate input.
    gx_all = jnp.dot(x_ref[...], wbig_ref[...],
                     preferred_element_type=f32) + b_gate         # (T*Bb, G)

    whh = whh_ref[...]                                            # (2H, G) block-diag
    h = jnp.zeros((Bb, 2 * H), f32)
    c = jnp.zeros((Bb, 2 * H), f32)
    hs = []                                                       # per-step hidden, registers
    for s in range(T):
        gates = gx_all[s * Bb:(s + 1) * Bb, :] + jnp.dot(
            h, whh, preferred_element_type=f32)                   # (Bb, 128)
        sig = jax.nn.sigmoid(gates)
        i_g = sig[:, 0 * H:2 * H]
        f_g = sig[:, 2 * H:4 * H]
        g_g = jnp.tanh(gates[:, 4 * H:6 * H])
        o_g = sig[:, 6 * H:8 * H]
        c = f_g * c + i_g * g_g
        h = o_g * jnp.tanh(c)
        hs.append(h)

    # BiLSTM output, b-major rows (row = b*T + t), [fwd | bwd] lanes.
    # Full 32-lane selects (no 16-lane masked stores), staged once through VMEM;
    # the (Bb,T,32)->(Bb*T,32) reshape is a layout no-op since T == 8 sublanes.
    lane = jax.lax.broadcasted_iota(jnp.int32, (Bb, 2 * H), 1)
    for t in range(T):
        xbuf[:, t, :] = jnp.where(lane < H, hs[t], hs[T - 1 - t])
    x2 = xbuf[...].reshape(Bb * T, D_MODEL)                       # (Bb*T, 32)

    # ---- multi-head attention: one batched QKV projection for all heads ----
    qkv = jnp.dot(x2, wqkv_ref[...], preferred_element_type=f32)  # (Bb*T, 144)
    inv_scale = jnp.float32(1.0 / math.sqrt(D_K))
    q_off, k_off, v_off = 0, N_HEADS * D_K, 2 * N_HEADS * D_K
    head_outs = []
    for hd in range(N_HEADS):
        q = qkv[:, q_off + hd * D_K:q_off + (hd + 1) * D_K].reshape(Bb, T, D_K)
        k = qkv[:, k_off + hd * D_K:k_off + (hd + 1) * D_K].reshape(Bb, T, D_K)
        v = qkv[:, v_off + hd * D_V:v_off + (hd + 1) * D_V].reshape(Bb, T, D_V)
        s = jnp.einsum('btk,bsk->bts', q, k,
                       preferred_element_type=f32) * inv_scale    # (Bb, T, T)
        s = s - jnp.max(s, axis=-1, keepdims=True)
        p = jnp.exp(s)
        attn = p / jnp.sum(p, axis=-1, keepdims=True)             # exact division
        o = jnp.einsum('bts,bsv->btv', attn, v, preferred_element_type=f32)
        head_outs.append(o.reshape(Bb * T, D_V))
    cat = jnp.concatenate(head_outs, axis=-1)                     # (Bb*T, 48)

    z = x2 + jnp.dot(cat, pw_ref[...], preferred_element_type=f32) + proj_b

    # custom LayerNormalization: unbiased std, eps added to the std
    mean = jnp.mean(z, axis=-1, keepdims=True)
    diff = z - mean
    var = jnp.sum(diff * diff, axis=-1, keepdims=True) * (1.0 / (D_MODEL - 1))
    ln = gamma * (diff / (jnp.sqrt(var) + EPS_LN)) + beta         # (Bb*T, 32)

    # ---- flatten + LinearModel without a sublane->lane relayout:
    #      y1[b,:] = sum_t ln[b,t,:] @ w1r[t]   (w1r = w1.reshape(T, 32, 16))
    xbuf[...] = ln.reshape(Bb, T, D_MODEL)                        # reuse staging buf
    acc = jnp.zeros((Bb, LIN_HID), f32)
    for t in range(T):
        acc = acc + jnp.dot(xbuf[:, t, :], w1r_ref[t],
                            preferred_element_type=f32)
    y1 = acc + b1
    out_ref[...] = jnp.dot(y1, w2_ref[...], preferred_element_type=f32) + b2


# ----------------------------------------------------------------------------
# Wrapper: pads batch to a multiple of B_BLK, builds the fused-direction input
# rows, runs a 1-D batch grid (parallel semantics), slices padding back off.
# ----------------------------------------------------------------------------
def forward(batch, fp):
    """batch: (n, T, E). (The PyTorch forward's unused `z` arg is omitted.)"""
    n, t_dim, e_dim = batch.shape
    assert t_dim == T and e_dim == E
    n_pad = -(-n // B_BLK) * B_BLK
    if n_pad != n:
        batch = jnp.concatenate(
            [batch, jnp.zeros((n_pad - n, T, E), batch.dtype)], axis=0)
    nblk = n_pad // B_BLK

    # rows time-major within each block; lanes = [x(t) | x(T-1-t)] so a single
    # in-kernel matmul feeds both LSTM directions' gate inputs.
    xb = batch.reshape(nblk, B_BLK, T, E)
    x_fwd = jnp.transpose(xb, (0, 2, 1, 3))                   # (nblk, T, B_BLK, E)
    x_bwd = jnp.transpose(xb[:, :, ::-1, :], (0, 2, 1, 3))
    x_cat = jnp.concatenate([x_fwd, x_bwd], axis=-1).reshape(
        nblk * T * B_BLK, 2 * E)

    def full(arr):
        nd = arr.ndim
        return pl.BlockSpec(arr.shape, lambda *_: (0,) * nd)

    out = pl.pallas_call(
        fused_kernel,
        out_shape=jax.ShapeDtypeStruct((n_pad, NUM_OUTPUT), jnp.float32),
        grid=(nblk,),
        in_specs=[
            pl.BlockSpec((T * B_BLK, 2 * E), lambda g: (g, 0)),   # per-block input
            full(fp['w_big']), full(fp['whh_all']), full(fp['w_qkv']),
            full(fp['proj_w']), full(fp['w1r']), full(fp['w2']),
            full(fp['biases']),
        ],
        out_specs=pl.BlockSpec((B_BLK, NUM_OUTPUT), lambda g: (g, 0)),
        scratch_shapes=[pltpu.VMEM((B_BLK, T, D_MODEL), jnp.float32)],
        compiler_params=pltpu.CompilerParams(
            dimension_semantics=("parallel",)),
    )(x_cat, fp['w_big'], fp['whh_all'], fp['w_qkv'], fp['proj_w'],
      fp['w1r'], fp['w2'], fp['biases'])
    return out[:n]


# ----------------------------------------------------------------------------
# Parameters: synthetic weights in "PyTorch layout", then fused/permuted
# layouts for the kernel (built once, outside the kernel).
# ----------------------------------------------------------------------------
def linear_model_dims(input_size, output_size):
    dims = []
    inp = input_size
    temp = input_size // 16
    while True:
        if temp <= output_size:
            dims.append((inp, output_size))
            break
        else:
            dims.append((inp, temp))
            inp = temp
            temp = temp // 16
    return dims


def init_params(key):
    ks = jax.random.split(key, 12)

    def rnd(k, shape, scale=0.1):
        return scale * jax.random.normal(k, shape, jnp.float32)

    p = {}
    # BiLSTM (forward + backward); bias = b_ih + b_hh combined; gate order i,f,g,o
    p['wih_f'] = rnd(ks[0], (E, 4 * H))
    p['whh_f'] = rnd(ks[1], (H, 4 * H))
    p['b_f'] = rnd(ks[2], (1, 4 * H))
    p['wih_b'] = rnd(ks[3], (E, 4 * H))
    p['whh_b'] = rnd(ks[4], (H, 4 * H))
    p['b_b'] = rnd(ks[5], (1, 4 * H))
    # multi-head attention
    p['wq'] = rnd(ks[6], (N_HEADS, D_MODEL, D_K))
    p['wk'] = rnd(ks[7], (N_HEADS, D_MODEL, D_K))
    p['wv'] = rnd(ks[8], (N_HEADS, D_MODEL, D_V))
    p['proj_w'] = rnd(ks[9], (N_HEADS * D_V, D_MODEL))   # stored (in, out)
    p['proj_b'] = rnd(ks[10], (1, D_MODEL))
    p['ln_gamma'] = jnp.ones((1, D_MODEL), jnp.float32)
    p['ln_beta'] = jnp.zeros((1, D_MODEL), jnp.float32)
    # LinearModel
    dims = linear_model_dims(D_MODEL * NUM_OUTPUT, NUM_OUTPUT)
    kk = jax.random.split(ks[11], 2 * len(dims))
    p['lin_ws'] = [rnd(kk[2 * i], (fi, fo)) for i, (fi, fo) in enumerate(dims)]
    p['lin_bs'] = [rnd(kk[2 * i + 1], (1, fo)) for i, (fi, fo) in enumerate(dims)]
    return p


def prepare_fused_params(p):
    """Gate-major fused LSTM weights, concatenated QKV, packed 1-row params."""
    zf_h = jnp.zeros((H, H), jnp.float32)
    zf_e = jnp.zeros((E, H), jnp.float32)
    cols_in, cols_hh, cols_bias = [], [], []
    for g in range(4):                        # PyTorch gate order i, f, g, o
        wf_g = p['wih_f'][:, g * H:(g + 1) * H]
        wb_g = p['wih_b'][:, g * H:(g + 1) * H]
        hf_g = p['whh_f'][:, g * H:(g + 1) * H]
        hb_g = p['whh_b'][:, g * H:(g + 1) * H]
        # input weight rows 0:E act on x(t) (fwd), rows E:2E act on x(T-1-t) (bwd)
        cols_in += [jnp.concatenate([wf_g, zf_e], axis=0),
                    jnp.concatenate([zf_e, wb_g], axis=0)]
        cols_hh += [jnp.concatenate([hf_g, zf_h], axis=0),
                    jnp.concatenate([zf_h, hb_g], axis=0)]
        cols_bias += [p['b_f'][:, g * H:(g + 1) * H],
                      p['b_b'][:, g * H:(g + 1) * H]]

    fp = {}
    fp['w_big'] = jnp.concatenate(cols_in, axis=1)        # (2E, G) = (32, 128)
    fp['whh_all'] = jnp.concatenate(cols_hh, axis=1)      # (2H, G) = (32, 128)
    b_all = jnp.concatenate(cols_bias, axis=1)            # (1, G)

    wq_all = jnp.concatenate([p['wq'][h] for h in range(N_HEADS)], axis=1)
    wk_all = jnp.concatenate([p['wk'][h] for h in range(N_HEADS)], axis=1)
    wv_all = jnp.concatenate([p['wv'][h] for h in range(N_HEADS)], axis=1)
    fp['w_qkv'] = jnp.concatenate([wq_all, wk_all, wv_all], axis=1)  # (32, 144)

    fp['proj_w'] = p['proj_w']

    assert len(p['lin_ws']) == 2, "kernel specialized for 2-layer LinearModel"
    w1, w2 = p['lin_ws']
    b1, b2 = p['lin_bs']
    fp['w1r'] = w1.reshape(T, D_MODEL, LIN_HID)           # (T, 32, 16)
    fp['w2'] = w2                                         # (16, 8)

    def pad_row(v):
        return jnp.concatenate(
            [v, jnp.zeros((1, G - v.shape[1]), jnp.float32)], axis=1)

    # pack all 1-row params into one (6, 128) tensor -> a single DMA
    fp['biases'] = jnp.concatenate(
        [b_all, pad_row(p['proj_b']), pad_row(p['ln_gamma']),
         pad_row(p['ln_beta']), pad_row(b1), pad_row(b2)], axis=0)
    return fp


# ----------------------------------------------------------------------------
# Pure-JAX reference (un-fused, PyTorch-layout math) for correctness check.
# ----------------------------------------------------------------------------
def reference_forward(x, p):
    nb = x.shape[0]

    def direction(wih, whh, b, reverse):
        h = jnp.zeros((nb, H), jnp.float32)
        c = jnp.zeros((nb, H), jnp.float32)
        outs = [None] * T
        times = range(T - 1, -1, -1) if reverse else range(T)
        for t in times:
            gates = x[:, t, :] @ wih + h @ whh + b
            i = jax.nn.sigmoid(gates[:, 0 * H:1 * H])
            f = jax.nn.sigmoid(gates[:, 1 * H:2 * H])
            g = jnp.tanh(gates[:, 2 * H:3 * H])
            o = jax.nn.sigmoid(gates[:, 3 * H:4 * H])
            c = f * c + i * g
            h = o * jnp.tanh(c)
            outs[t] = h
        return jnp.stack(outs, axis=1)

    out_f = direction(p['wih_f'], p['whh_f'], p['b_f'], False)
    out_b = direction(p['wih_b'], p['whh_b'], p['b_b'], True)
    lstm = jnp.concatenate([out_f, out_b], axis=-1)       # (nb, T, HID)

    x2 = lstm.reshape(nb * T, D_MODEL)
    heads = []
    for hd in range(N_HEADS):
        q = (x2 @ p['wq'][hd]).reshape(nb, T, D_K)
        k = (x2 @ p['wk'][hd]).reshape(nb, T, D_K)
        v = (x2 @ p['wv'][hd]).reshape(nb, T, D_V)
        s = jnp.einsum('btk,bsk->bts', q, k) / math.sqrt(D_K)
        a = jax.nn.softmax(s, axis=-1)
        heads.append(jnp.einsum('bts,bsv->btv', a, v).reshape(nb * T, D_V))
    cat = jnp.concatenate(heads, axis=-1)
    z = x2 + cat @ p['proj_w'] + p['proj_b']
    mean = jnp.mean(z, axis=-1, keepdims=True)
    std = jnp.std(z, axis=-1, keepdims=True, ddof=1)
    ln = p['ln_gamma'] * ((z - mean) / (std + EPS_LN)) + p['ln_beta']
    y = ln.reshape(nb, T * D_MODEL)
    for w, b in zip(p['lin_ws'], p['lin_bs']):
        y = y @ w + b
    return y


if __name__ == "__main__":
    key = jax.random.PRNGKey(0)
    k_x, k_p = jax.random.split(key)
    batch = 2
    x = jax.random.normal(k_x, (batch, T, E), jnp.float32)   # (batch, seq, embedding)
    params = init_params(k_p)
    fused_params = prepare_fused_params(params)

    fwd = jax.jit(forward)
    out = jax.block_until_ready(fwd(x, fused_params))
    assert out.shape == (batch, NUM_OUTPUT), out.shape
    assert bool(jnp.all(jnp.isfinite(out)))

    with jax.default_matmul_precision("highest"):
        ref = reference_forward(x, params)
    assert jnp.allclose(out, ref, rtol=2e-2, atol=2e-2), (out, ref)

    print("KERNEL_OK")
</pallas_src>

<mosaic_0001>
module attributes {stable_mosaic.version = 11 : i64} {
  func.func @fused_kernel(%arg0: i32, %arg1: memref<64x32xf32, #tpu.memory_space<vmem>>, %arg2: memref<32x128xf32, #tpu.memory_space<vmem>>, %arg3: memref<32x128xf32, #tpu.memory_space<vmem>>, %arg4: memref<32x144xf32, #tpu.memory_space<vmem>>, %arg5: memref<48x32xf32, #tpu.memory_space<vmem>>, %arg6: memref<8x32x16xf32, #tpu.memory_space<vmem>>, %arg7: memref<16x8xf32, #tpu.memory_space<vmem>>, %arg8: memref<6x128xf32, #tpu.memory_space<vmem>>, %arg9: memref<8x8xf32, #tpu.memory_space<vmem>>, %arg10: memref<8x8x32xf32, #tpu.memory_space<vmem>>) attributes {dimension_semantics = [#tpu.dimension_semantics<parallel>], iteration_bounds = array<i64: 1>, scalar_prefetch = 0 : i64, scratch_operands = 1 : i64, tpu.core_type = #tpu.core_type<tc>, window_params = [{transform_indices = @transform_0, window_bounds = array<i64: 64, 32>}, {pipeline_mode = #tpu.pipeline_mode<synchronous>, transform_indices = @transform_1, window_bounds = array<i64: 32, 128>}, {pipeline_mode = #tpu.pipeline_mode<synchronous>, transform_indices = @transform_2, window_bounds = array<i64: 32, 128>}, {pipeline_mode = #tpu.pipeline_mode<synchronous>, transform_indices = @transform_3, window_bounds = array<i64: 32, 144>}, {pipeline_mode = #tpu.pipeline_mode<synchronous>, transform_indices = @transform_4, window_bounds = array<i64: 48, 32>}, {pipeline_mode = #tpu.pipeline_mode<synchronous>, transform_indices = @transform_5, window_bounds = array<i64: 8, 32, 16>}, {pipeline_mode = #tpu.pipeline_mode<synchronous>, transform_indices = @transform_6, window_bounds = array<i64: 16, 8>}, {pipeline_mode = #tpu.pipeline_mode<synchronous>, transform_indices = @transform_7, window_bounds = array<i64: 6, 128>}, {transform_indices = @transform_8, window_bounds = array<i64: 8, 8>}]} {
    %c0 = arith.constant 0 : index
    %c0_0 = arith.constant 0 : index
    %0 = vector.load %arg8[%c0, %c0_0] : memref<6x128xf32, #tpu.memory_space<vmem>>, vector<6x128xf32>
    %1 = vector.extract_strided_slice %0 {offsets = [0, 0], sizes = [1, 128], strides = [1, 1]} : vector<6x128xf32> to vector<1x128xf32>
    %2 = vector.extract_strided_slice %0 {offsets = [1, 0], sizes = [1, 32], strides = [1, 1]} : vector<6x128xf32> to vector<1x32xf32>
    %3 = vector.extract_strided_slice %0 {offsets = [2, 0], sizes = [1, 32], strides = [1, 1]} : vector<6x128xf32> to vector<1x32xf32>
    %4 = vector.extract_strided_slice %0 {offsets = [3, 0], sizes = [1, 32], strides = [1, 1]} : vector<6x128xf32> to vector<1x32xf32>
    %5 = vector.extract_strided_slice %0 {offsets = [4, 0], sizes = [1, 16], strides = [1, 1]} : vector<6x128xf32> to vector<1x16xf32>
    %6 = vector.extract_strided_slice %0 {offsets = [5, 0], sizes = [1, 8], strides = [1, 1]} : vector<6x128xf32> to vector<1x8xf32>
    %c0_1 = arith.constant 0 : index
    %c0_2 = arith.constant 0 : index
    %7 = vector.load %arg1[%c0_1, %c0_2] : memref<64x32xf32, #tpu.memory_space<vmem>>, vector<64x32xf32>
    %c0_3 = arith.constant 0 : index
    %c0_4 = arith.constant 0 : index
    %8 = vector.load %arg2[%c0_3, %c0_4] : memref<32x128xf32, #tpu.memory_space<vmem>>, vector<32x128xf32>
    %cst = arith.constant dense<0.000000e+00> : vector<64x128xf32>
    %9 = tpu.matmul %7, %8, %cst {dimension_numbers = #tpu.dot_dimension_numbers<[1], [0], [0], [1], [0, 0, 1, 1], [], []>} : vector<64x32xf32>, vector<32x128xf32>, vector<64x128xf32> -> vector<64x128xf32>
    %10 = vector.broadcast %1 : vector<1x128xf32> to vector<64x128xf32>
    %11 = arith.addf %9, %10 : vector<64x128xf32>
    %c0_5 = arith.constant 0 : index
    %c0_6 = arith.constant 0 : index
    %12 = vector.load %arg3[%c0_5, %c0_6] : memref<32x128xf32, #tpu.memory_space<vmem>>, vector<32x128xf32>
    %cst_7 = arith.constant 0.000000e+00 : f32
    %13 = vector.broadcast %cst_7 : f32 to vector<8x32xf32>
    %cst_8 = arith.constant 0.000000e+00 : f32
    %14 = vector.broadcast %cst_8 : f32 to vector<8x32xf32>
    %15 = vector.extract_strided_slice %11 {offsets = [0, 0], sizes = [8, 128], strides = [1, 1]} : vector<64x128xf32> to vector<8x128xf32>
    %cst_9 = arith.constant dense<0.000000e+00> : vector<8x128xf32>
    %16 = tpu.matmul %13, %12, %cst_9 {dimension_numbers = #tpu.dot_dimension_numbers<[1], [0], [0], [1], [0, 0, 1, 1], [], []>} : vector<8x32xf32>, vector<32x128xf32>, vector<8x128xf32> -> vector<8x128xf32>
    %17 = arith.addf %15, %16 : vector<8x128xf32>
    %18 = arith.negf %17 : vector<8x128xf32>
    %19 = math.exp %18 : vector<8x128xf32>
    %cst_10 = arith.constant 1.000000e+00 : f32
    %20 = vector.broadcast %cst_10 : f32 to vector<8x128xf32>
    %21 = arith.addf %20, %19 : vector<8x128xf32>
    %22 = arith.divf %20, %21 : vector<8x128xf32>
    %23 = vector.extract_strided_slice %22 {offsets = [0, 0], sizes = [8, 32], strides = [1, 1]} : vector<8x128xf32> to vector<8x32xf32>
    %24 = vector.extract_strided_slice %22 {offsets = [0, 32], sizes = [8, 32], strides = [1, 1]} : vector<8x128xf32> to vector<8x32xf32>
    %25 = vector.extract_strided_slice %17 {offsets = [0, 64], sizes = [8, 32], strides = [1, 1]} : vector<8x128xf32> to vector<8x32xf32>
    %26 = math.tanh %25 : vector<8x32xf32>
    %27 = vector.extract_strided_slice %22 {offsets = [0, 96], sizes = [8, 32], strides = [1, 1]} : vector<8x128xf32> to vector<8x32xf32>
    %28 = arith.mulf %24, %14 : vector<8x32xf32>
    %29 = arith.mulf %23, %26 : vector<8x32xf32>
    %30 = arith.addf %28, %29 : vector<8x32xf32>
    %31 = math.tanh %30 : vector<8x32xf32>
    %32 = arith.mulf %27, %31 : vector<8x32xf32>
    %33 = vector.extract_strided_slice %11 {offsets = [8, 0], sizes = [8, 128], strides = [1, 1]} : vector<64x128xf32> to vector<8x128xf32>
    %cst_11 = arith.constant dense<0.000000e+00> : vector<8x128xf32>
    %34 = tpu.matmul %32, %12, %cst_11 {dimension_numbers = #tpu.dot_dimension_numbers<[1], [0], [0], [1], [0, 0, 1, 1], [], []>} : vector<8x32xf32>, vector<32x128xf32>, vector<8x128xf32> -> vector<8x128xf32>
    %35 = arith.addf %33, %34 : vector<8x128xf32>
    %36 = arith.negf %35 : vector<8x128xf32>
    %37 = math.exp %36 : vector<8x128xf32>
    %cst_12 = arith.constant 1.000000e+00 : f32
    %38 = vector.broadcast %cst_12 : f32 to vector<8x128xf32>
    %39 = arith.addf %38, %37 : vector<8x128xf32>
    %40 = arith.divf %38, %39 : vector<8x128xf32>
    %41 = vector.extract_strided_slice %40 {offsets = [0, 0], sizes = [8, 32], strides = [1, 1]} : vector<8x128xf32> to vector<8x32xf32>
    %42 = vector.extract_strided_slice %40 {offsets = [0, 32], sizes = [8, 32], strides = [1, 1]} : vector<8x128xf32> to vector<8x32xf32>
    %43 = vector.extract_strided_slice %35 {offsets = [0, 64], sizes = [8, 32], strides = [1, 1]} : vector<8x128xf32> to vector<8x32xf32>
    %44 = math.tanh %43 : vector<8x32xf32>
    %45 = vector.extract_strided_slice %40 {offsets = [0, 96], sizes = [8, 32], strides = [1, 1]} : vector<8x128xf32> to vector<8x32xf32>
    %46 = arith.mulf %42, %30 : vector<8x32xf32>
    %47 = arith.mulf %41, %44 : vector<8x32xf32>
    %48 = arith.addf %46, %47 : vector<8x32xf32>
    %49 = math.tanh %48 : vector<8x32xf32>
    %50 = arith.mulf %45, %49 : vector<8x32xf32>
    %51 = vector.extract_strided_slice %11 {offsets = [16, 0], sizes = [8, 128], strides = [1, 1]} : vector<64x128xf32> to vector<8x128xf32>
    %cst_13 = arith.constant dense<0.000000e+00> : vector<8x128xf32>
    %52 = tpu.matmul %50, %12, %cst_13 {dimension_numbers = #tpu.dot_dimension_numbers<[1], [0], [0], [1], [0, 0, 1, 1], [], []>} : vector<8x32xf32>, vector<32x128xf32>, vector<8x128xf32> -> vector<8x128xf32>
    %53 = arith.addf %51, %52 : vector<8x128xf32>
    %54 = arith.negf %53 : vector<8x128xf32>
    %55 = math.exp %54 : vector<8x128xf32>
    %cst_14 = arith.constant 1.000000e+00 : f32
    %56 = vector.broadcast %cst_14 : f32 to vector<8x128xf32>
    %57 = arith.addf %56, %55 : vector<8x128xf32>
    %58 = arith.divf %56, %57 : vector<8x128xf32>
    %59 = vector.extract_strided_slice %58 {offsets = [0, 0], sizes = [8, 32], strides = [1, 1]} : vector<8x128xf32> to vector<8x32xf32>
    %60 = vector.extract_strided_slice %58 {offsets = [0, 32], sizes = [8, 32], strides = [1, 1]} : vector<8x128xf32> to vector<8x32xf32>
    %61 = vector.extract_strided_slice %53 {offsets = [0, 64], sizes = [8, 32], strides = [1, 1]} : vector<8x128xf32> to vector<8x32xf32>
    %62 = math.tanh %61 : vector<8x32xf32>
    %63 = vector.extract_strided_slice %58 {offsets = [0, 96], sizes = [8, 32], strides = [1, 1]} : vector<8x128xf32> to vector<8x32xf32>
    %64 = arith.mulf %60, %48 : vector<8x32xf32>
    %65 = arith.mulf %59, %62 : vector<8x32xf32>
    %66 = arith.addf %64, %65 : vector<8x32xf32>
    %67 = math.tanh %66 : vector<8x32xf32>
    %68 = arith.mulf %63, %67 : vector<8x32xf32>
    %69 = vector.extract_strided_slice %11 {offsets = [24, 0], sizes = [8, 128], strides = [1, 1]} : vector<64x128xf32> to vector<8x128xf32>
    %cst_15 = arith.constant dense<0.000000e+00> : vector<8x128xf32>
    %70 = tpu.matmul %68, %12, %cst_15 {dimension_numbers = #tpu.dot_dimension_numbers<[1], [0], [0], [1], [0, 0, 1, 1], [], []>} : vector<8x32xf32>, vector<32x128xf32>, vector<8x128xf32> -> vector<8x128xf32>
    %71 = arith.addf %69, %70 : vector<8x128xf32>
    %72 = arith.negf %71 : vector<8x128xf32>
    %73 = math.exp %72 : vector<8x128xf32>
    %cst_16 = arith.constant 1.000000e+00 : f32
    %74 = vector.broadcast %cst_16 : f32 to vector<8x128xf32>
    %75 = arith.addf %74, %73 : vector<8x128xf32>
    %76 = arith.divf %74, %75 : vector<8x128xf32>
    %77 = vector.extract_strided_slice %76 {offsets = [0, 0], sizes = [8, 32], strides = [1, 1]} : vector<8x128xf32> to vector<8x32xf32>
    %78 = vector.extract_strided_slice %76 {offsets = [0, 32], sizes = [8, 32], strides = [1, 1]} : vector<8x128xf32> to vector<8x32xf32>
    %79 = vector.extract_strided_slice %71 {offsets = [0, 64], sizes = [8, 32], strides = [1, 1]} : vector<8x128xf32> to vector<8x32xf32>
    %80 = math.tanh %79 : vector<8x32xf32>
    %81 = vector.extract_strided_slice %76 {offsets = [0, 96], sizes = [8, 32], strides = [1, 1]} : vector<8x128xf32> to vector<8x32xf32>
    %82 = arith.mulf %78, %66 : vector<8x32xf32>
    %83 = arith.mulf %77, %80 : vector<8x32xf32>
    %84 = arith.addf %82, %83 : vector<8x32xf32>
    %85 = math.tanh %84 : vector<8x32xf32>
    %86 = arith.mulf %81, %85 : vector<8x32xf32>
    %87 = vector.extract_strided_slice %11 {offsets = [32, 0], sizes = [8, 128], strides = [1, 1]} : vector<64x128xf32> to vector<8x128xf32>
    %cst_17 = arith.constant dense<0.000000e+00> : vector<8x128xf32>
    %88 = tpu.matmul %86, %12, %cst_17 {dimension_numbers = #tpu.dot_dimension_numbers<[1], [0], [0], [1], [0, 0, 1, 1], [], []>} : vector<8x32xf32>, vector<32x128xf32>, vector<8x128xf32> -> vector<8x128xf32>
    %89 = arith.addf %87, %88 : vector<8x128xf32>
    %90 = arith.negf %89 : vector<8x128xf32>
    %91 = math.exp %90 : vector<8x128xf32>
    %cst_18 = arith.constant 1.000000e+00 : f32
    %92 = vector.broadcast %cst_18 : f32 to vector<8x128xf32>
    %93 = arith.addf %92, %91 : vector<8x128xf32>
    %94 = arith.divf %92, %93 : vector<8x128xf32>
    %95 = vector.extract_strided_slice %94 {offsets = [0, 0], sizes = [8, 32], strides = [1, 1]} : vector<8x128xf32> to vector<8x32xf32>
    %96 = vector.extract_strided_slice %94 {offsets = [0, 32], sizes = [8, 32], strides = [1, 1]} : vector<8x128xf32> to vector<8x32xf32>
    %97 = vector.extract_strided_slice %89 {offsets = [0, 64], sizes = [8, 32], strides = [1, 1]} : vector<8x128xf32> to vector<8x32xf32>
    %98 = math.tanh %97 : vector<8x32xf32>
    %99 = vector.extract_strided_slice %94 {offsets = [0, 96], sizes = [8, 32], strides = [1, 1]} : vector<8x128xf32> to vector<8x32xf32>
    %100 = arith.mulf %96, %84 : vector<8x32xf32>
    %101 = arith.mulf %95, %98 : vector<8x32xf32>
    %102 = arith.addf %100, %101 : vector<8x32xf32>
    %103 = math.tanh %102 : vector<8x32xf32>
    %104 = arith.mulf %99, %103 : vector<8x32xf32>
    %105 = vector.extract_strided_slice %11 {offsets = [40, 0], sizes = [8, 128], strides = [1, 1]} : vector<64x128xf32> to vector<8x128xf32>
    %cst_19 = arith.constant dense<0.000000e+00> : vector<8x128xf32>
    %106 = tpu.matmul %104, %12, %cst_19 {dimension_numbers = #tpu.dot_dimension_numbers<[1], [0], [0], [1], [0, 0, 1, 1], [], []>} : vector<8x32xf32>, vector<32x128xf32>, vector<8x128xf32> -> vector<8x128xf32>
    %107 = arith.addf %105, %106 : vector<8x128xf32>
    %108 = arith.negf %107 : vector<8x128xf32>
    %109 = math.exp %108 : vector<8x128xf32>
    %cst_20 = arith.constant 1.000000e+00 : f32
    %110 = vector.broadcast %cst_20 : f32 to vector<8x128xf32>
    %111 = arith.addf %110, %109 : vector<8x128xf32>
    %112 = arith.divf %110, %111 : vector<8x128xf32>
    %113 = vector.extract_strided_slice %112 {offsets = [0, 0], sizes = [8, 32], strides = [1, 1]} : vector<8x128xf32> to vector<8x32xf32>
    %114 = vector.extract_strided_slice %112 {offsets = [0, 32], sizes = [8, 32], strides = [1, 1]} : vector<8x128xf32> to vector<8x32xf32>
    %115 = vector.extract_strided_slice %107 {offsets = [0, 64], sizes = [8, 32], strides = [1, 1]} : vector<8x128xf32> to vector<8x32xf32>
    %116 = math.tanh %115 : vector<8x32xf32>
    %117 = vector.extract_strided_slice %112 {offsets = [0, 96], sizes = [8, 32], strides = [1, 1]} : vector<8x128xf32> to vector<8x32xf32>
    %118 = arith.mulf %114, %102 : vector<8x32xf32>
    %119 = arith.mulf %113, %116 : vector<8x32xf32>
    %120 = arith.addf %118, %119 : vector<8x32xf32>
    %121 = math.tanh %120 : vector<8x32xf32>
    %122 = arith.mulf %117, %121 : vector<8x32xf32>
    %123 = vector.extract_strided_slice %11 {offsets = [48, 0], sizes = [8, 128], strides = [1, 1]} : vector<64x128xf32> to vector<8x128xf32>
    %cst_21 = arith.constant dense<0.000000e+00> : vector<8x128xf32>
    %124 = tpu.matmul %122, %12, %cst_21 {dimension_numbers = #tpu.dot_dimension_numbers<[1], [0], [0], [1], [0, 0, 1, 1], [], []>} : vector<8x32xf32>, vector<32x128xf32>, vector<8x128xf32> -> vector<8x128xf32>
    %125 = arith.addf %123, %124 : vector<8x128xf32>
    %126 = arith.negf %125 : vector<8x128xf32>
    %127 = math.exp %126 : vector<8x128xf32>
    %cst_22 = arith.constant 1.000000e+00 : f32
    %128 = vector.broadcast %cst_22 : f32 to vector<8x128xf32>
    %129 = arith.addf %128, %127 : vector<8x128xf32>
    %130 = arith.divf %128, %129 : vector<8x128xf32>
    %131 = vector.extract_strided_slice %130 {offsets = [0, 0], sizes = [8, 32], strides = [1, 1]} : vector<8x128xf32> to vector<8x32xf32>
    %132 = vector.extract_strided_slice %130 {offsets = [0, 32], sizes = [8, 32], strides = [1, 1]} : vector<8x128xf32> to vector<8x32xf32>
    %133 = vector.extract_strided_slice %125 {offsets = [0, 64], sizes = [8, 32], strides = [1, 1]} : vector<8x128xf32> to vector<8x32xf32>
    %134 = math.tanh %133 : vector<8x32xf32>
    %135 = vector.extract_strided_slice %130 {offsets = [0, 96], sizes = [8, 32], strides = [1, 1]} : vector<8x128xf32> to vector<8x32xf32>
    %136 = arith.mulf %132, %120 : vector<8x32xf32>
    %137 = arith.mulf %131, %134 : vector<8x32xf32>
    %138 = arith.addf %136, %137 : vector<8x32xf32>
    %139 = math.tanh %138 : vector<8x32xf32>
    %140 = arith.mulf %135, %139 : vector<8x32xf32>
    %141 = vector.extract_strided_slice %11 {offsets = [56, 0], sizes = [8, 128], strides = [1, 1]} : vector<64x128xf32> to vector<8x128xf32>
    %cst_23 = arith.constant dense<0.000000e+00> : vector<8x128xf32>
    %142 = tpu.matmul %140, %12, %cst_23 {dimension_numbers = #tpu.dot_dimension_numbers<[1], [0], [0], [1], [0, 0, 1, 1], [], []>} : vector<8x32xf32>, vector<32x128xf32>, vector<8x128xf32> -> vector<8x128xf32>
    %143 = arith.addf %141, %142 : vector<8x128xf32>
    %144 = arith.negf %143 : vector<8x128xf32>
    %145 = math.exp %144 : vector<8x128xf32>
    %cst_24 = arith.constant 1.000000e+00 : f32
    %146 = vector.broadcast %cst_24 : f32 to vector<8x128xf32>
    %147 = arith.addf %146, %145 : vector<8x128xf32>
    %148 = arith.divf %146, %147 : vector<8x128xf32>
    %149 = vector.extract_strided_slice %148 {offsets = [0, 0], sizes = [8, 32], strides = [1, 1]} : vector<8x128xf32> to vector<8x32xf32>
    %150 = vector.extract_strided_slice %148 {offsets = [0, 32], sizes = [8, 32], strides = [1, 1]} : vector<8x128xf32> to vector<8x32xf32>
    %151 = vector.extract_strided_slice %143 {offsets = [0, 64], sizes = [8, 32], strides = [1, 1]} : vector<8x128xf32> to vector<8x32xf32>
    %152 = math.tanh %151 : vector<8x32xf32>
    %153 = vector.extract_strided_slice %148 {offsets = [0, 96], sizes = [8, 32], strides = [1, 1]} : vector<8x128xf32> to vector<8x32xf32>
    %154 = arith.mulf %150, %138 : vector<8x32xf32>
    %155 = arith.mulf %149, %152 : vector<8x32xf32>
    %156 = arith.addf %154, %155 : vector<8x32xf32>
    %157 = math.tanh %156 : vector<8x32xf32>
    %158 = arith.mulf %153, %157 : vector<8x32xf32>
    %159 = tpu.iota {dimensions = array<i32: 1>} : vector<8x32xi32>
    %c16_i32 = arith.constant 16 : i32
    %160 = vector.broadcast %c16_i32 : i32 to vector<8x32xi32>
    %161 = arith.cmpi slt, %159, %160 : vector<8x32xi32>
    %162 = arith.select %161, %32, %158 : vector<8x32xi1>, vector<8x32xf32>
    %c0_25 = arith.constant 0 : index
    %c0_26 = arith.constant 0 : index
    %c0_27 = arith.constant 0 : index
    %163 = vector.load %arg10[%c0_25, %c0_26, %c0_27] : memref<8x8x32xf32, #tpu.memory_space<vmem>>, vector<8x1x32xf32>
    %164 = vector.shape_cast %163 : vector<8x1x32xf32> to vector<8x32xf32>
    %165 = vector.shape_cast %162 : vector<8x32xf32> to vector<8x1x32xf32>
    tpu.vector_store %arg10[%c0_25, %c0_26, %c0_27], %165 {strides = array<i32>} : memref<8x8x32xf32, #tpu.memory_space<vmem>>, vector<8x1x32xf32>,
    %c16_i32_28 = arith.constant 16 : i32
    %166 = vector.broadcast %c16_i32_28 : i32 to vector<8x32xi32>
    %167 = arith.cmpi slt, %159, %166 : vector<8x32xi32>
    %168 = arith.select %167, %50, %140 : vector<8x32xi1>, vector<8x32xf32>
    %c0_29 = arith.constant 0 : index
    %c1 = arith.constant 1 : index
    %c0_30 = arith.constant 0 : index
    %169 = vector.load %arg10[%c0_29, %c1, %c0_30] : memref<8x8x32xf32, #tpu.memory_space<vmem>>, vector<8x1x32xf32>
    %170 = vector.shape_cast %169 : vector<8x1x32xf32> to vector<8x32xf32>
    %171 = vector.shape_cast %168 : vector<8x32xf32> to vector<8x1x32xf32>
    tpu.vector_store %arg10[%c0_29, %c1, %c0_30], %171 {strides = array<i32>} : memref<8x8x32xf32, #tpu.memory_space<vmem>>, vector<8x1x32xf32>,
    %c16_i32_31 = arith.constant 16 : i32
    %172 = vector.broadcast %c16_i32_31 : i32 to vector<8x32xi32>
    %173 = arith.cmpi slt, %159, %172 : vector<8x32xi32>
    %174 = arith.select %173, %68, %122 : vector<8x32xi1>, vector<8x32xf32>
    %c0_32 = arith.constant 0 : index
    %c2 = arith.constant 2 : index
    %c0_33 = arith.constant 0 : index
    %175 = vector.load %arg10[%c0_32, %c2, %c0_33] : memref<8x8x32xf32, #tpu.memory_space<vmem>>, vector<8x1x32xf32>
    %176 = vector.shape_cast %175 : vector<8x1x32xf32> to vector<8x32xf32>
    %177 = vector.shape_cast %174 : vector<8x32xf32> to vector<8x1x32xf32>
    tpu.vector_store %arg10[%c0_32, %c2, %c0_33], %177 {strides = array<i32>} : memref<8x8x32xf32, #tpu.memory_space<vmem>>, vector<8x1x32xf32>,
    %c16_i32_34 = arith.constant 16 : i32
    %178 = vector.broadcast %c16_i32_34 : i32 to vector<8x32xi32>
    %179 = arith.cmpi slt, %159, %178 : vector<8x32xi32>
    %180 = arith.select %179, %86, %104 : vector<8x32xi1>, vector<8x32xf32>
    %c0_35 = arith.constant 0 : index
    %c3 = arith.constant 3 : index
    %c0_36 = arith.constant 0 : index
    %181 = vector.load %arg10[%c0_35, %c3, %c0_36] : memref<8x8x32xf32, #tpu.memory_space<vmem>>, vector<8x1x32xf32>
    %182 = vector.shape_cast %181 : vector<8x1x32xf32> to vector<8x32xf32>
    %183 = vector.shape_cast %180 : vector<8x32xf32> to vector<8x1x32xf32>
    tpu.vector_store %arg10[%c0_35, %c3, %c0_36], %183 {strides = array<i32>} : memref<8x8x32xf32, #tpu.memory_space<vmem>>, vector<8x1x32xf32>,
    %c16_i32_37 = arith.constant 16 : i32
    %184 = vector.broadcast %c16_i32_37 : i32 to vector<8x32xi32>
    %185 = arith.cmpi slt, %159, %184 : vector<8x32xi32>
    %186 = arith.select %185, %104, %86 : vector<8x32xi1>, vector<8x32xf32>
    %c0_38 = arith.constant 0 : index
    %c4 = arith.constant 4 : index
    %c0_39 = arith.constant 0 : index
    %187 = vector.load %arg10[%c0_38, %c4, %c0_39] : memref<8x8x32xf32, #tpu.memory_space<vmem>>, vector<8x1x32xf32>
    %188 = vector.shape_cast %187 : vector<8x1x32xf32> to vector<8x32xf32>
    %189 = vector.shape_cast %186 : vector<8x32xf32> to vector<8x1x32xf32>
    tpu.vector_store %arg10[%c0_38, %c4, %c0_39], %189 {strides = array<i32>} : memref<8x8x32xf32, #tpu.memory_space<vmem>>, vector<8x1x32xf32>,
    %c16_i32_40 = arith.constant 16 : i32
    %190 = vector.broadcast %c16_i32_40 : i32 to vector<8x32xi32>
    %191 = arith.cmpi slt, %159, %190 : vector<8x32xi32>
    %192 = arith.select %191, %122, %68 : vector<8x32xi1>, vector<8x32xf32>
    %c0_41 = arith.constant 0 : index
    %c5 = arith.constant 5 : index
    %c0_42 = arith.constant 0 : index
    %193 = vector.load %arg10[%c0_41, %c5, %c0_42] : memref<8x8x32xf32, #tpu.memory_space<vmem>>, vector<8x1x32xf32>
    %194 = vector.shape_cast %193 : vector<8x1x32xf32> to vector<8x32xf32>
    %195 = vector.shape_cast %192 : vector<8x32xf32> to vector<8x1x32xf32>
    tpu.vector_store %arg10[%c0_41, %c5, %c0_42], %195 {strides = array<i32>} : memref<8x8x32xf32, #tpu.memory_space<vmem>>, vector<8x1x32xf32>,
    %c16_i32_43 = arith.constant 16 : i32
    %196 = vector.broadcast %c16_i32_43 : i32 to vector<8x32xi32>
    %197 = arith.cmpi slt, %159, %196 : vector<8x32xi32>
    %198 = arith.select %197, %140, %50 : vector<8x32xi1>, vector<8x32xf32>
    %c0_44 = arith.constant 0 : index
    %c6 = arith.constant 6 : index
    %c0_45 = arith.constant 0 : index
    %199 = vector.load %arg10[%c0_44, %c6, %c0_45] : memref<8x8x32xf32, #tpu.memory_space<vmem>>, vector<8x1x32xf32>
    %200 = vector.shape_cast %199 : vector<8x1x32xf32> to vector<8x32xf32>
    %201 = vector.shape_cast %198 : vector<8x32xf32> to vector<8x1x32xf32>
    tpu.vector_store %arg10[%c0_44, %c6, %c0_45], %201 {strides = array<i32>} : memref<8x8x32xf32, #tpu.memory_space<vmem>>, vector<8x1x32xf32>,
    %c16_i32_46 = arith.constant 16 : i32
    %202 = vector.broadcast %c16_i32_46 : i32 to vector<8x32xi32>
    %203 = arith.cmpi slt, %159, %202 : vector<8x32xi32>
    %204 = arith.select %203, %158, %32 : vector<8x32xi1>, vector<8x32xf32>
    %c0_47 = arith.constant 0 : index
    %c7 = arith.constant 7 : index
    %c0_48 = arith.constant 0 : index
    %205 = vector.load %arg10[%c0_47, %c7, %c0_48] : memref<8x8x32xf32, #tpu.memory_space<vmem>>, vector<8x1x32xf32>
    %206 = vector.shape_cast %205 : vector<8x1x32xf32> to vector<8x32xf32>
    %207 = vector.shape_cast %204 : vector<8x32xf32> to vector<8x1x32xf32>
    tpu.vector_store %arg10[%c0_47, %c7, %c0_48], %207 {strides = array<i32>} : memref<8x8x32xf32, #tpu.memory_space<vmem>>, vector<8x1x32xf32>,
    %c0_49 = arith.constant 0 : index
    %c0_50 = arith.constant 0 : index
    %c0_51 = arith.constant 0 : index
    %208 = vector.load %arg10[%c0_49, %c0_50, %c0_51] : memref<8x8x32xf32, #tpu.memory_space<vmem>>, vector<8x8x32xf32>
    %209 = vector.shape_cast %208 : vector<8x8x32xf32> to vector<64x32xf32>
    %c0_52 = arith.constant 0 : index
    %c0_53 = arith.constant 0 : index
    %210 = vector.load %arg4[%c0_52, %c0_53] : memref<32x144xf32, #tpu.memory_space<vmem>>, vector<32x144xf32>
    %cst_54 = arith.constant dense<0.000000e+00> : vector<64x144xf32>
    %211 = tpu.matmul %209, %210, %cst_54 {dimension_numbers = #tpu.dot_dimension_numbers<[1], [0], [0], [1], [0, 0, 1, 1], [], []>} : vector<64x32xf32>, vector<32x144xf32>, vector<64x144xf32> -> vector<64x144xf32>
    %212 = vector.extract_strided_slice %211 {offsets = [0, 0], sizes = [64, 16], strides = [1, 1]} : vector<64x144xf32> to vector<64x16xf32>
    %213 = vector.shape_cast %212 : vector<64x16xf32> to vector<8x8x16xf32>
    %214 = vector.extract_strided_slice %211 {offsets = [0, 48], sizes = [64, 16], strides = [1, 1]} : vector<64x144xf32> to vector<64x16xf32>
    %215 = vector.shape_cast %214 : vector<64x16xf32> to vector<8x8x16xf32>
    %216 = vector.extract_strided_slice %211 {offsets = [0, 96], sizes = [64, 16], strides = [1, 1]} : vector<64x144xf32> to vector<64x16xf32>
    %217 = vector.shape_cast %216 : vector<64x16xf32> to vector<8x8x16xf32>
    "tpu.trace_start"() <{level = 10 : i32, message = "btk,bsk->bts"}> : () -> ()
    %cst_55 = arith.constant dense<0.000000e+00> : vector<8x8x8xf32>
    %218 = tpu.matmul %213, %215, %cst_55 {dimension_numbers = #tpu.dot_dimension_numbers<[2], [2], [1], [1], [0, 0, 0, 1, 1, 1], [0], [0]>} : vector<8x8x16xf32>, vector<8x8x16xf32>, vector<8x8x8xf32> -> vector<8x8x8xf32>
    "tpu.trace_stop"() : () -> ()
    %cst_56 = arith.constant 2.500000e-01 : f32
    %219 = vector.broadcast %cst_56 : f32 to vector<8x8x8xf32>
    %220 = arith.mulf %218, %219 : vector<8x8x8xf32>
    %cst_57 = arith.constant dense<0xFF800000> : vector<8x8xf32>
    %221 = vector.multi_reduction <maximumf>, %220, %cst_57 [2] : vector<8x8x8xf32> to vector<8x8xf32>
    %222 = vector.shape_cast %221 : vector<8x8xf32> to vector<8x8x1xf32>
    %223 = vector.broadcast %222 : vector<8x8x1xf32> to vector<8x8x8xf32>
    %224 = arith.subf %220, %223 : vector<8x8x8xf32>
    %225 = math.exp %224 : vector<8x8x8xf32>
    %cst_58 = arith.constant dense<0.000000e+00> : vector<8x8xf32>
    %226 = vector.multi_reduction <add>, %225, %cst_58 [2] : vector<8x8x8xf32> to vector<8x8xf32>
    %227 = vector.shape_cast %226 : vector<8x8xf32> to vector<8x8x1xf32>
    %228 = vector.broadcast %227 : vector<8x8x1xf32> to vector<8x8x8xf32>
    %229 = arith.divf %225, %228 : vector<8x8x8xf32>
    "tpu.trace_start"() <{level = 10 : i32, message = "bts,bsv->btv"}> : () -> ()
    %cst_59 = arith.constant dense<0.000000e+00> : vector<8x8x16xf32>
    %230 = tpu.matmul %229, %217, %cst_59 {dimension_numbers = #tpu.dot_dimension_numbers<[2], [1], [1], [2], [0, 0, 0, 1, 1, 2], [0], [0]>} : vector<8x8x8xf32>, vector<8x8x16xf32>, vector<8x8x16xf32> -> vector<8x8x16xf32>
    "tpu.trace_stop"() : () -> ()
    %231 = vector.shape_cast %230 : vector<8x8x16xf32> to vector<64x16xf32>
    %232 = vector.extract_strided_slice %211 {offsets = [0, 16], sizes = [64, 16], strides = [1, 1]} : vector<64x144xf32> to vector<64x16xf32>
    %233 = vector.shape_cast %232 : vector<64x16xf32> to vector<8x8x16xf32>
    %234 = vector.extract_strided_slice %211 {offsets = [0, 64], sizes = [64, 16], strides = [1, 1]} : vector<64x144xf32> to vector<64x16xf32>
    %235 = vector.shape_cast %234 : vector<64x16xf32> to vector<8x8x16xf32>
    %236 = vector.extract_strided_slice %211 {offsets = [0, 112], sizes = [64, 16], strides = [1, 1]} : vector<64x144xf32> to vector<64x16xf32>
    %237 = vector.shape_cast %236 : vector<64x16xf32> to vector<8x8x16xf32>
    "tpu.trace_start"() <{level = 10 : i32, message = "btk,bsk->bts"}> : () -> ()
    %cst_60 = arith.constant dense<0.000000e+00> : vector<8x8x8xf32>
    %238 = tpu.matmul %233, %235, %cst_60 {dimension_numbers = #tpu.dot_dimension_numbers<[2], [2], [1], [1], [0, 0, 0, 1, 1, 1], [0], [0]>} : vector<8x8x16xf32>, vector<8x8x16xf32>, vector<8x8x8xf32> -> vector<8x8x8xf32>
    "tpu.trace_stop"() : () -> ()
    %cst_61 = arith.constant 2.500000e-01 : f32
    %239 = vector.broadcast %cst_61 : f32 to vector<8x8x8xf32>
    %240 = arith.mulf %238, %239 : vector<8x8x8xf32>
    %cst_62 = arith.constant dense<0xFF800000> : vector<8x8xf32>
    %241 = vector.multi_reduction <maximumf>, %240, %cst_62 [2] : vector<8x8x8xf32> to vector<8x8xf32>
    %242 = vector.shape_cast %241 : vector<8x8xf32> to vector<8x8x1xf32>
    %243 = vector.broadcast %242 : vector<8x8x1xf32> to vector<8x8x8xf32>
    %244 = arith.subf %240, %243 : vector<8x8x8xf32>
    %245 = math.exp %244 : vector<8x8x8xf32>
    %cst_63 = arith.constant dense<0.000000e+00> : vector<8x8xf32>
    %246 = vector.multi_reduction <add>, %245, %cst_63 [2] : vector<8x8x8xf32> to vector<8x8xf32>
    %247 = vector.shape_cast %246 : vector<8x8xf32> to vector<8x8x1xf32>
    %248 = vector.broadcast %247 : vector<8x8x1xf32> to vector<8x8x8xf32>
    %249 = arith.divf %245, %248 : vector<8x8x8xf32>
    "tpu.trace_start"() <{level = 10 : i32, message = "bts,bsv->btv"}> : () -> ()
    %cst_64 = arith.constant dense<0.000000e+00> : vector<8x8x16xf32>
    %250 = tpu.matmul %249, %237, %cst_64 {dimension_numbers = #tpu.dot_dimension_numbers<[2], [1], [1], [2], [0, 0, 0, 1, 1, 2], [0], [0]>} : vector<8x8x8xf32>, vector<8x8x16xf32>, vector<8x8x16xf32> -> vector<8x8x16xf32>
    "tpu.trace_stop"() : () -> ()
    %251 = vector.shape_cast %250 : vector<8x8x16xf32> to vector<64x16xf32>
    %252 = vector.extract_strided_slice %211 {offsets = [0, 32], sizes = [64, 16], strides = [1, 1]} : vector<64x144xf32> to vector<64x16xf32>
    %253 = vector.shape_cast %252 : vector<64x16xf32> to vector<8x8x16xf32>
    %254 = vector.extract_strided_slice %211 {offsets = [0, 80], sizes = [64, 16], strides = [1, 1]} : vector<64x144xf32> to vector<64x16xf32>
    %255 = vector.shape_cast %254 : vector<64x16xf32> to vector<8x8x16xf32>
    %256 = vector.extract_strided_slice %211 {offsets = [0, 128], sizes = [64, 16], strides = [1, 1]} : vector<64x144xf32> to vector<64x16xf32>
    %257 = vector.shape_cast %256 : vector<64x16xf32> to vector<8x8x16xf32>
    "tpu.trace_start"() <{level = 10 : i32, message = "btk,bsk->bts"}> : () -> ()
    %cst_65 = arith.constant dense<0.000000e+00> : vector<8x8x8xf32>
    %258 = tpu.matmul %253, %255, %cst_65 {dimension_numbers = #tpu.dot_dimension_numbers<[2], [2], [1], [1], [0, 0, 0, 1, 1, 1], [0], [0]>} : vector<8x8x16xf32>, vector<8x8x16xf32>, vector<8x8x8xf32> -> vector<8x8x8xf32>
    "tpu.trace_stop"() : () -> ()
    %cst_66 = arith.constant 2.500000e-01 : f32
    %259 = vector.broadcast %cst_66 : f32 to vector<8x8x8xf32>
    %260 = arith.mulf %258, %259 : vector<8x8x8xf32>
    %cst_67 = arith.constant dense<0xFF800000> : vector<8x8xf32>
    %261 = vector.multi_reduction <maximumf>, %260, %cst_67 [2] : vector<8x8x8xf32> to vector<8x8xf32>
    %262 = vector.shape_cast %261 : vector<8x8xf32> to vector<8x8x1xf32>
    %263 = vector.broadcast %262 : vector<8x8x1xf32> to vector<8x8x8xf32>
    %264 = arith.subf %260, %263 : vector<8x8x8xf32>
    %265 = math.exp %264 : vector<8x8x8xf32>
    %cst_68 = arith.constant dense<0.000000e+00> : vector<8x8xf32>
    %266 = vector.multi_reduction <add>, %265, %cst_68 [2] : vector<8x8x8xf32> to vector<8x8xf32>
    %267 = vector.shape_cast %266 : vector<8x8xf32> to vector<8x8x1xf32>
    %268 = vector.broadcast %267 : vector<8x8x1xf32> to vector<8x8x8xf32>
    %269 = arith.divf %265, %268 : vector<8x8x8xf32>
    "tpu.trace_start"() <{level = 10 : i32, message = "bts,bsv->btv"}> : () -> ()
    %cst_69 = arith.constant dense<0.000000e+00> : vector<8x8x16xf32>
    %270 = tpu.matmul %269, %257, %cst_69 {dimension_numbers = #tpu.dot_dimension_numbers<[2], [1], [1], [2], [0, 0, 0, 1, 1, 2], [0], [0]>} : vector<8x8x8xf32>, vector<8x8x16xf32>, vector<8x8x16xf32> -> vector<8x8x16xf32>
    "tpu.trace_stop"() : () -> ()
    %271 = vector.shape_cast %270 : vector<8x8x16xf32> to vector<64x16xf32>
    %272 = tpu.concatenate %231, %251, %271 in 1 : vector<64x16xf32>, vector<64x16xf32>, vector<64x16xf32> -> vector<64x48xf32>
    %c0_70 = arith.constant 0 : index
    %c0_71 = arith.constant 0 : index
    %273 = vector.load %arg5[%c0_70, %c0_71] : memref<48x32xf32, #tpu.memory_space<vmem>>, vector<48x32xf32>
    %cst_72 = arith.constant dense<0.000000e+00> : vector<64x32xf32>
    %274 = tpu.matmul %272, %273, %cst_72 {dimension_numbers = #tpu.dot_dimension_numbers<[1], [0], [0], [1], [0, 0, 1, 1], [], []>} : vector<64x48xf32>, vector<48x32xf32>, vector<64x32xf32> -> vector<64x32xf32>
    %275 = arith.addf %209, %274 : vector<64x32xf32>
    %276 = vector.broadcast %2 : vector<1x32xf32> to vector<64x32xf32>
    %277 = arith.addf %275, %276 : vector<64x32xf32>
    %cst_73 = arith.constant dense<0.000000e+00> : vector<64xf32>
    %278 = vector.multi_reduction <add>, %277, %cst_73 [1] : vector<64x32xf32> to vector<64xf32>
    %279 = vector.shape_cast %278 : vector<64xf32> to vector<64x1xf32>
    %cst_74 = arith.constant 3.200000e+01 : f32
    %280 = vector.broadcast %cst_74 : f32 to vector<64x1xf32>
    %281 = arith.divf %279, %280 : vector<64x1xf32>
    %282 = vector.broadcast %281 : vector<64x1xf32> to vector<64x32xf32>
    %283 = arith.subf %277, %282 : vector<64x32xf32>
    %284 = arith.mulf %283, %283 : vector<64x32xf32>
    %cst_75 = arith.constant dense<0.000000e+00> : vector<64xf32>
    %285 = vector.multi_reduction <add>, %284, %cst_75 [1] : vector<64x32xf32> to vector<64xf32>
    %286 = vector.shape_cast %285 : vector<64xf32> to vector<64x1xf32>
    %cst_76 = arith.constant 0.0322580636 : f32
    %287 = vector.broadcast %cst_76 : f32 to vector<64x1xf32>
    %288 = arith.mulf %286, %287 : vector<64x1xf32>
    %289 = math.sqrt %288 : vector<64x1xf32>
    %cst_77 = arith.constant 1.000000e-03 : f32
    %290 = vector.broadcast %cst_77 : f32 to vector<64x1xf32>
    %291 = arith.addf %289, %290 : vector<64x1xf32>
    %292 = vector.broadcast %291 : vector<64x1xf32> to vector<64x32xf32>
    %293 = arith.divf %283, %292 : vector<64x32xf32>
    %294 = vector.broadcast %3 : vector<1x32xf32> to vector<64x32xf32>
    %295 = arith.mulf %294, %293 : vector<64x32xf32>
    %296 = vector.broadcast %4 : vector<1x32xf32> to vector<64x32xf32>
    %297 = arith.addf %295, %296 : vector<64x32xf32>
    %298 = vector.shape_cast %297 : vector<64x32xf32> to vector<8x8x32xf32>
    %c0_78 = arith.constant 0 : index
    %c0_79 = arith.constant 0 : index
    %c0_80 = arith.constant 0 : index
    %299 = vector.load %arg10[%c0_78, %c0_79, %c0_80] : memref<8x8x32xf32, #tpu.memory_space<vmem>>, vector<8x8x32xf32>
    tpu.vector_store %arg10[%c0_78, %c0_79, %c0_80], %298 {strides = array<i32>} : memref<8x8x32xf32, #tpu.memory_space<vmem>>, vector<8x8x32xf32>,
    %cst_81 = arith.constant 0.000000e+00 : f32
    %300 = vector.broadcast %cst_81 : f32 to vector<8x16xf32>
    %c0_82 = arith.constant 0 : index
    %c0_83 = arith.constant 0 : index
    %c0_84 = arith.constant 0 : index
    %301 = vector.load %arg10[%c0_82, %c0_83, %c0_84] : memref<8x8x32xf32, #tpu.memory_space<vmem>>, vector<8x1x32xf32>
    %302 = vector.shape_cast %301 : vector<8x1x32xf32> to vector<8x32xf32>
    %c0_85 = arith.constant 0 : index
    %c0_86 = arith.constant 0 : index
    %c0_87 = arith.constant 0 : index
    %303 = vector.load %arg6[%c0_85, %c0_86, %c0_87] : memref<8x32x16xf32, #tpu.memory_space<vmem>>, vector<1x32x16xf32>
    %304 = vector.shape_cast %303 : vector<1x32x16xf32> to vector<32x16xf32>
    %cst_88 = arith.constant dense<0.000000e+00> : vector<8x16xf32>
    %305 = tpu.matmul %302, %304, %cst_88 {dimension_numbers = #tpu.dot_dimension_numbers<[1], [0], [0], [1], [0, 0, 1, 1], [], []>} : vector<8x32xf32>, vector<32x16xf32>, vector<8x16xf32> -> vector<8x16xf32>
    %306 = arith.addf %300, %305 : vector<8x16xf32>
    %c0_89 = arith.constant 0 : index
    %c1_90 = arith.constant 1 : index
    %c0_91 = arith.constant 0 : index
    %307 = vector.load %arg10[%c0_89, %c1_90, %c0_91] : memref<8x8x32xf32, #tpu.memory_space<vmem>>, vector<8x1x32xf32>
    %308 = vector.shape_cast %307 : vector<8x1x32xf32> to vector<8x32xf32>
    %c1_92 = arith.constant 1 : index
    %c0_93 = arith.constant 0 : index
    %c0_94 = arith.constant 0 : index
    %309 = vector.load %arg6[%c1_92, %c0_93, %c0_94] : memref<8x32x16xf32, #tpu.memory_space<vmem>>, vector<1x32x16xf32>
    %310 = vector.shape_cast %309 : vector<1x32x16xf32> to vector<32x16xf32>
    %cst_95 = arith.constant dense<0.000000e+00> : vector<8x16xf32>
    %311 = tpu.matmul %308, %310, %cst_95 {dimension_numbers = #tpu.dot_dimension_numbers<[1], [0], [0], [1], [0, 0, 1, 1], [], []>} : vector<8x32xf32>, vector<32x16xf32>, vector<8x16xf32> -> vector<8x16xf32>
    %312 = arith.addf %306, %311 : vector<8x16xf32>
    %c0_96 = arith.constant 0 : index
    %c2_97 = arith.constant 2 : index
    %c0_98 = arith.constant 0 : index
    %313 = vector.load %arg10[%c0_96, %c2_97, %c0_98] : memref<8x8x32xf32, #tpu.memory_space<vmem>>, vector<8x1x32xf32>
    %314 = vector.shape_cast %313 : vector<8x1x32xf32> to vector<8x32xf32>
    %c2_99 = arith.constant 2 : index
    %c0_100 = arith.constant 0 : index
    %c0_101 = arith.constant 0 : index
    %315 = vector.load %arg6[%c2_99, %c0_100, %c0_101] : memref<8x32x16xf32, #tpu.memory_space<vmem>>, vector<1x32x16xf32>
    %316 = vector.shape_cast %315 : vector<1x32x16xf32> to vector<32x16xf32>
    %cst_102 = arith.constant dense<0.000000e+00> : vector<8x16xf32>
    %317 = tpu.matmul %314, %316, %cst_102 {dimension_numbers = #tpu.dot_dimension_numbers<[1], [0], [0], [1], [0, 0, 1, 1], [], []>} : vector<8x32xf32>, vector<32x16xf32>, vector<8x16xf32> -> vector<8x16xf32>
    %318 = arith.addf %312, %317 : vector<8x16xf32>
    %c0_103 = arith.constant 0 : index
    %c3_104 = arith.constant 3 : index
    %c0_105 = arith.constant 0 : index
    %319 = vector.load %arg10[%c0_103, %c3_104, %c0_105] : memref<8x8x32xf32, #tpu.memory_space<vmem>>, vector<8x1x32xf32>
    %320 = vector.shape_cast %319 : vector<8x1x32xf32> to vector<8x32xf32>
    %c3_106 = arith.constant 3 : index
    %c0_107 = arith.constant 0 : index
    %c0_108 = arith.constant 0 : index
    %321 = vector.load %arg6[%c3_106, %c0_107, %c0_108] : memref<8x32x16xf32, #tpu.memory_space<vmem>>, vector<1x32x16xf32>
    %322 = vector.shape_cast %321 : vector<1x32x16xf32> to vector<32x16xf32>
    %cst_109 = arith.constant dense<0.000000e+00> : vector<8x16xf32>
    %323 = tpu.matmul %320, %322, %cst_109 {dimension_numbers = #tpu.dot_dimension_numbers<[1], [0], [0], [1], [0, 0, 1, 1], [], []>} : vector<8x32xf32>, vector<32x16xf32>, vector<8x16xf32> -> vector<8x16xf32>
    %324 = arith.addf %318, %323 : vector<8x16xf32>
    %c0_110 = arith.constant 0 : index
    %c4_111 = arith.constant 4 : index
    %c0_112 = arith.constant 0 : index
    %325 = vector.load %arg10[%c0_110, %c4_111, %c0_112] : memref<8x8x32xf32, #tpu.memory_space<vmem>>, vector<8x1x32xf32>
    %326 = vector.shape_cast %325 : vector<8x1x32xf32> to vector<8x32xf32>
    %c4_113 = arith.constant 4 : index
    %c0_114 = arith.constant 0 : index
    %c0_115 = arith.constant 0 : index
    %327 = vector.load %arg6[%c4_113, %c0_114, %c0_115] : memref<8x32x16xf32, #tpu.memory_space<vmem>>, vector<1x32x16xf32>
    %328 = vector.shape_cast %327 : vector<1x32x16xf32> to vector<32x16xf32>
    %cst_116 = arith.constant dense<0.000000e+00> : vector<8x16xf32>
    %329 = tpu.matmul %326, %328, %cst_116 {dimension_numbers = #tpu.dot_dimension_numbers<[1], [0], [0], [1], [0, 0, 1, 1], [], []>} : vector<8x32xf32>, vector<32x16xf32>, vector<8x16xf32> -> vector<8x16xf32>
    %330 = arith.addf %324, %329 : vector<8x16xf32>
    %c0_117 = arith.constant 0 : index
    %c5_118 = arith.constant 5 : index
    %c0_119 = arith.constant 0 : index
    %331 = vector.load %arg10[%c0_117, %c5_118, %c0_119] : memref<8x8x32xf32, #tpu.memory_space<vmem>>, vector<8x1x32xf32>
    %332 = vector.shape_cast %331 : vector<8x1x32xf32> to vector<8x32xf32>
    %c5_120 = arith.constant 5 : index
    %c0_121 = arith.constant 0 : index
    %c0_122 = arith.constant 0 : index
    %333 = vector.load %arg6[%c5_120, %c0_121, %c0_122] : memref<8x32x16xf32, #tpu.memory_space<vmem>>, vector<1x32x16xf32>
    %334 = vector.shape_cast %333 : vector<1x32x16xf32> to vector<32x16xf32>
    %cst_123 = arith.constant dense<0.000000e+00> : vector<8x16xf32>
    %335 = tpu.matmul %332, %334, %cst_123 {dimension_numbers = #tpu.dot_dimension_numbers<[1], [0], [0], [1], [0, 0, 1, 1], [], []>} : vector<8x32xf32>, vector<32x16xf32>, vector<8x16xf32> -> vector<8x16xf32>
    %336 = arith.addf %330, %335 : vector<8x16xf32>
    %c0_124 = arith.constant 0 : index
    %c6_125 = arith.constant 6 : index
    %c0_126 = arith.constant 0 : index
    %337 = vector.load %arg10[%c0_124, %c6_125, %c0_126] : memref<8x8x32xf32, #tpu.memory_space<vmem>>, vector<8x1x32xf32>
    %338 = vector.shape_cast %337 : vector<8x1x32xf32> to vector<8x32xf32>
    %c6_127 = arith.constant 6 : index
    %c0_128 = arith.constant 0 : index
    %c0_129 = arith.constant 0 : index
    %339 = vector.load %arg6[%c6_127, %c0_128, %c0_129] : memref<8x32x16xf32, #tpu.memory_space<vmem>>, vector<1x32x16xf32>
    %340 = vector.shape_cast %339 : vector<1x32x16xf32> to vector<32x16xf32>
    %cst_130 = arith.constant dense<0.000000e+00> : vector<8x16xf32>
    %341 = tpu.matmul %338, %340, %cst_130 {dimension_numbers = #tpu.dot_dimension_numbers<[1], [0], [0], [1], [0, 0, 1, 1], [], []>} : vector<8x32xf32>, vector<32x16xf32>, vector<8x16xf32> -> vector<8x16xf32>
    %342 = arith.addf %336, %341 : vector<8x16xf32>
    %c0_131 = arith.constant 0 : index
    %c7_132 = arith.constant 7 : index
    %c0_133 = arith.constant 0 : index
    %343 = vector.load %arg10[%c0_131, %c7_132, %c0_133] : memref<8x8x32xf32, #tpu.memory_space<vmem>>, vector<8x1x32xf32>
    %344 = vector.shape_cast %343 : vector<8x1x32xf32> to vector<8x32xf32>
    %c7_134 = arith.constant 7 : index
    %c0_135 = arith.constant 0 : index
    %c0_136 = arith.constant 0 : index
    %345 = vector.load %arg6[%c7_134, %c0_135, %c0_136] : memref<8x32x16xf32, #tpu.memory_space<vmem>>, vector<1x32x16xf32>
    %346 = vector.shape_cast %345 : vector<1x32x16xf32> to vector<32x16xf32>
    %cst_137 = arith.constant dense<0.000000e+00> : vector<8x16xf32>
    %347 = tpu.matmul %344, %346, %cst_137 {dimension_numbers = #tpu.dot_dimension_numbers<[1], [0], [0], [1], [0, 0, 1, 1], [], []>} : vector<8x32xf32>, vector<32x16xf32>, vector<8x16xf32> -> vector<8x16xf32>
    %348 = arith.addf %342, %347 : vector<8x16xf32>
    %349 = vector.broadcast %5 : vector<1x16xf32> to vector<8x16xf32>
    %350 = arith.addf %348, %349 : vector<8x16xf32>
    %c0_138 = arith.constant 0 : index
    %c0_139 = arith.constant 0 : index
    %351 = vector.load %arg7[%c0_138, %c0_139] : memref<16x8xf32, #tpu.memory_space<vmem>>, vector<16x8xf32>
    %cst_140 = arith.constant dense<0.000000e+00> : vector<8x8xf32>
    %352 = tpu.matmul %350, %351, %cst_140 {dimension_numbers = #tpu.dot_dimension_numbers<[1], [0], [0], [1], [0, 0, 1, 1], [], []>} : vector<8x16xf32>, vector<16x8xf32>, vector<8x8xf32> -> vector<8x8xf32>
    %353 = vector.broadcast %6 : vector<1x8xf32> to vector<8x8xf32>
    %354 = arith.addf %352, %353 : vector<8x8xf32>
    %c0_141 = arith.constant 0 : index
    %c0_142 = arith.constant 0 : index
    %355 = vector.load %arg9[%c0_141, %c0_142] : memref<8x8xf32, #tpu.memory_space<vmem>>, vector<8x8xf32>
    tpu.vector_store %arg9[%c0_141, %c0_142], %354 {strides = array<i32>} : memref<8x8xf32, #tpu.memory_space<vmem>>, vector<8x8xf32>,
    return
  }
  func.func @transform_0(%arg0: i32) -> (i32, i32) {
    %c0_i32 = arith.constant 0 : i32
    %c0_i32_0 = arith.constant 0 : i32
    return %arg0, %c0_i32 : i32, i32
  }
  func.func @transform_1(%arg0: i32) -> (i32, i32) {
    %c0_i32 = arith.constant 0 : i32
    %c0_i32_0 = arith.constant 0 : i32
    %c0_i32_1 = arith.constant 0 : i32
    return %c0_i32, %c0_i32_0 : i32, i32
  }
  func.func @transform_2(%arg0: i32) -> (i32, i32) {
    %c0_i32 = arith.constant 0 : i32
    %c0_i32_0 = arith.constant 0 : i32
    %c0_i32_1 = arith.constant 0 : i32
    return %c0_i32, %c0_i32_0 : i32, i32
  }
  func.func @transform_3(%arg0: i32) -> (i32, i32) {
    %c0_i32 = arith.constant 0 : i32
    %c0_i32_0 = arith.constant 0 : i32
    %c0_i32_1 = arith.constant 0 : i32
    return %c0_i32, %c0_i32_0 : i32, i32
  }
  func.func @transform_4(%arg0: i32) -> (i32, i32) {
    %c0_i32 = arith.constant 0 : i32
    %c0_i32_0 = arith.constant 0 : i32
    %c0_i32_1 = arith.constant 0 : i32
    return %c0_i32, %c0_i32_0 : i32, i32
  }
  func.func @transform_5(%arg0: i32) -> (i32, i32, i32) {
    %c0_i32 = arith.constant 0 : i32
    %c0_i32_0 = arith.constant 0 : i32
    %c0_i32_1 = arith.constant 0 : i32
    %c0_i32_2 = arith.constant 0 : i32
    return %c0_i32, %c0_i32_0, %c0_i32_1 : i32, i32, i32
  }
  func.func @transform_6(%arg0: i32) -> (i32, i32) {
    %c0_i32 = arith.constant 0 : i32
    %c0_i32_0 = arith.constant 0 : i32
    %c0_i32_1 = arith.constant 0 : i32
    return %c0_i32, %c0_i32_0 : i32, i32
  }
  func.func @transform_7(%arg0: i32) -> (i32, i32) {
    %c0_i32 = arith.constant 0 : i32
    %c0_i32_0 = arith.constant 0 : i32
    %c0_i32_1 = arith.constant 0 : i32
    return %c0_i32, %c0_i32_0 : i32, i32
  }
  func.func @transform_8(%arg0: i32) -> (i32, i32) {
    %c0_i32 = arith.constant 0 : i32
    %c0_i32_0 = arith.constant 0 : i32
    return %arg0, %c0_i32 : i32, i32
  }
}

</mosaic_0001>

<llo_original>
// kernel: reverse
$region0: #{reverse}
  %s0 = inlined_call_operand.vmem [shape: f32[8,8,16], index: 0, kind: input, shape index: {}]
  %s1 = inlined_call_operand.vmem [shape: f32[8,8,16], index: 1, kind: output, shape index: {}]
  $region1: #{reverse} parent=0
    #allocation0 [shape = 'u8[32768]{0}', space=vmem, size = 0x8000, scoped, tag = 'operand span for operand 0']
    #allocation1 [shape = 'u8[32768]{0}', space=vmem, size = 0x8000, scoped, tag = 'operand span for operand 1']
    // Predicated region
    $region2: #{reverse} parent=1 // pred_check
      _
    $region3: #{reverse} parent=1 // pred_check_branch
      %3 = sbr.rel (0) target = $region5
    $region4: #{reverse} parent=1 // pred_region
      // Predicated region
      $region6: #{reverse} parent=4 // pred_check
        _
      $region7: #{reverse} parent=4 // pred_check_branch
        %5 = sbr.rel (0) target = $region9
      $region8: #{reverse} parent=4 // pred_region
        // Predicated region
        $region21: #{reverse} parent=8 // pred_check
          _
        $region22: #{reverse} parent=8 // pred_check_branch
          %34 = sbr.rel (0) target = $region24
        $region23: #{reverse} parent=8 // pred_region
          loop: start=0, step=1, limit=1
          $region25: #{reverse} parent=23 // loop_pre_header
            _
          $region26: #{reverse} parent=23 // loop_header
            %s36 = sphi 0, %s40
            %p37 = scmp.ge.s32.totalorder %s36, 1
            %s41 = sphi %s0, %s0
            %s42 = sphi [#allocation0], [#allocation0]
          $region27: #{reverse} parent=23 // loop_header_branch
            %39 = sbr.rel (%p37) target = $region31
          $region28: #{reverse} parent=23 // loop_body
            %v43 = vld [vmem:[%s41] sm:$0xff]
            %44 = vst [vmem:[%s42] sm:$0xff] %v43
            %v45 = vld [vmem:[%s41 + $0x8] sm:$0xff]
            %46 = vst [vmem:[%s42 + $0x8] sm:$0xff] %v45
            %v47 = vld [vmem:[%s41 + $0x10] sm:$0xff]
            %48 = vst [vmem:[%s42 + $0x10] sm:$0xff] %v47
            %v49 = vld [vmem:[%s41 + $0x18] sm:$0xff]
            %50 = vst [vmem:[%s42 + $0x18] sm:$0xff] %v49
            %v51 = vld [vmem:[%s41 + $0x20] sm:$0xff]
            %52 = vst [vmem:[%s42 + $0x20] sm:$0xff] %v51
            %v53 = vld [vmem:[%s41 + $0x28] sm:$0xff]
            %54 = vst [vmem:[%s42 + $0x28] sm:$0xff] %v53
            %v55 = vld [vmem:[%s41 + $0x30] sm:$0xff]
            %56 = vst [vmem:[%s42 + $0x30] sm:$0xff] %v55
            %v57 = vld [vmem:[%s41 + $0x38] sm:$0xff]
            %58 = vst [vmem:[%s42 + $0x38] sm:$0xff] %v57
          $region29: #{reverse} parent=23 // loop_footer
            %s40 = sadd.s32 1, %s36
          $region30: #{reverse} parent=23 // loop_footer_branch
            %35 = sbr.rel target = $region26
          $region31: #{reverse} parent=23 // loop_exit
            _
        $region24: #{reverse} parent=8 // pred_fallthru
          _
        // Predicated region
        $region32: #{reverse} parent=8 // pred_check
          _
        $region33: #{reverse} parent=8 // pred_check_branch
          %60 = sbr.rel target = $region35
        $region34: #{reverse} parent=8 // pred_region
          _
        $region35: #{reverse} parent=8 // pred_fallthru
          _
      $region9: #{reverse} parent=4 // pred_fallthru
        _
      // Predicated region
      $region10: #{reverse} parent=4 // pred_check
        _
      $region11: #{reverse} parent=4 // pred_check_branch
        %7 = sbr.rel target = $region13
      $region12: #{reverse} parent=4 // pred_region
        loop: start=0, step=1, limit=1
        $region14: #{reverse} parent=12 // loop_pre_header
          _
        $region15: #{reverse} parent=12 // loop_header
          %s10 = sphi 0, %s14
          %p11 = scmp.ge.s32.totalorder %s10, 1
          %s15 = sphi %s0, %s0
          %s16 = sphi [#allocation0], [#allocation0]
        $region16: #{reverse} parent=12 // loop_header_branch
          %13 = sbr.rel (%p11) target = $region20
        $region17: #{reverse} parent=12 // loop_body
          %v17 = vld [vmem:[%s15] sm:$0xff]
          %18 = vst [vmem:[%s16] sm:$0xff] %v17
          %v19 = vld [vmem:[%s15 + $0x8] sm:$0xff]
          %20 = vst [vmem:[%s16 + $0x8] sm:$0xff] %v19
          %v21 = vld [vmem:[%s15 + $0x10] sm:$0xff]
          %22 = vst [vmem:[%s16 + $0x10] sm:$0xff] %v21
          %v23 = vld [vmem:[%s15 + $0x18] sm:$0xff]
          %24 = vst [vmem:[%s16 + $0x18] sm:$0xff] %v23
          %v25 = vld [vmem:[%s15 + $0x20] sm:$0xff]
          %26 = vst [vmem:[%s16 + $0x20] sm:$0xff] %v25
          %v27 = vld [vmem:[%s15 + $0x28] sm:$0xff]
          %28 = vst [vmem:[%s16 + $0x28] sm:$0xff] %v27
          %v29 = vld [vmem:[%s15 + $0x30] sm:$0xff]
          %30 = vst [vmem:[%s16 + $0x30] sm:$0xff] %v29
          %v31 = vld [vmem:[%s15 + $0x38] sm:$0xff]
          %32 = vst [vmem:[%s16 + $0x38] sm:$0xff] %v31
        $region18: #{reverse} parent=12 // loop_footer
          %s14 = sadd.s32 1, %s10
        $region19: #{reverse} parent=12 // loop_footer_branch
          %9 = sbr.rel target = $region15
        $region20: #{reverse} parent=12 // loop_exit
          _
      $region13: #{reverse} parent=4 // pred_fallthru
        _
    $region5: #{reverse} parent=1 // pred_fallthru
      _
    %61 = vnop
    %s62 = scalar_lea.vmem [#allocation0], 7
    %v63 = vld [vmem:[%s62] ss:$-1 sm:$0xff]
    %64 = vst [vmem:[#allocation1] sm:$0xff] %v63
    %s65 = scalar_lea.vmem [#allocation1], 8
    %s66 = scalar_lea.vmem [#allocation0], 8
    %s67 = scalar_lea.vmem %s66, 7 [#allocation0]
    %v68 = vld [vmem:[%s67] ss:$-1 sm:$0xff]
    %69 = vst [vmem:[%s65] sm:$0xff] %v68
    %s70 = scalar_lea.vmem [#allocation1], 16
    %s71 = scalar_lea.vmem [#allocation0], 16
    %s72 = scalar_lea.vmem %s71, 7 [#allocation0]
    %v73 = vld [vmem:[%s72] ss:$-1 sm:$0xff]
    %74 = vst [vmem:[%s70] sm:$0xff] %v73
    %s75 = scalar_lea.vmem [#allocation1], 24
    %s76 = scalar_lea.vmem [#allocation0], 24
    %s77 = scalar_lea.vmem %s76, 7 [#allocation0]
    %v78 = vld [vmem:[%s77] ss:$-1 sm:$0xff]
    %79 = vst [vmem:[%s75] sm:$0xff] %v78
    %s80 = scalar_lea.vmem [#allocation1], 32
    %s81 = scalar_lea.vmem [#allocation0], 32
    %s82 = scalar_lea.vmem %s81, 7 [#allocation0]
    %v83 = vld [vmem:[%s82] ss:$-1 sm:$0xff]
    %84 = vst [vmem:[%s80] sm:$0xff] %v83
    %s85 = scalar_lea.vmem [#allocation1], 40
    %s86 = scalar_lea.vmem [#allocation0], 40
    %s87 = scalar_lea.vmem %s86, 7 [#allocation0]
    %v88 = vld [vmem:[%s87] ss:$-1 sm:$0xff]
    %89 = vst [vmem:[%s85] sm:$0xff] %v88
    %s90 = scalar_lea.vmem [#allocation1], 48
    %s91 = scalar_lea.vmem [#allocation0], 48
    %s92 = scalar_lea.vmem %s91, 7 [#allocation0]
    %v93 = vld [vmem:[%s92] ss:$-1 sm:$0xff]
    %94 = vst [vmem:[%s90] sm:$0xff] %v93
    %s95 = scalar_lea.vmem [#allocation1], 56
    %s96 = scalar_lea.vmem [#allocation0], 56
    %s97 = scalar_lea.vmem %s96, 7 [#allocation0]
    %v98 = vld [vmem:[%s97] ss:$-1 sm:$0xff]
    %99 = vst [vmem:[%s95] sm:$0xff] %v98
    // Predicated region
    $region36: #{reverse} parent=1 // pred_check
      _
    $region37: #{reverse} parent=1 // pred_check_branch
      %101 = sbr.rel (0) target = $region39
    $region38: #{reverse} parent=1 // pred_region
      // Predicated region
      $region40: #{reverse} parent=38 // pred_check
        _
      $region41: #{reverse} parent=38 // pred_check_branch
        %103 = sbr.rel (0) target = $region43
      $region42: #{reverse} parent=38 // pred_region
        // Predicated region
        $region55: #{reverse} parent=42 // pred_check
          _
        $region56: #{reverse} parent=42 // pred_check_branch
          %132 = sbr.rel (0) target = $region58
        $region57: #{reverse} parent=42 // pred_region
          loop: start=0, step=1, limit=1
          $region59: #{reverse} parent=57 // loop_pre_header
            _
          $region60: #{reverse} parent=57 // loop_header
            %s134 = sphi 0, %s138
            %p135 = scmp.ge.s32.totalorder %s134, 1
            %s139 = sphi [#allocation1], [#allocation1]
            %s140 = sphi %s1, %s1
          $region61: #{reverse} parent=57 // loop_header_branch
            %137 = sbr.rel (%p135) target = $region65
          $region62: #{reverse} parent=57 // loop_body
            %v141 = vld [vmem:[%s139] sm:$0xff]
            %142 = vst [vmem:[%s140] sm:$0xff] %v141
            %v143 = vld [vmem:[%s139 + $0x8] sm:$0xff]
            %144 = vst [vmem:[%s140 + $0x8] sm:$0xff] %v143
            %v145 = vld [vmem:[%s139 + $0x10] sm:$0xff]
            %146 = vst [vmem:[%s140 + $0x10] sm:$0xff] %v145
            %v147 = vld [vmem:[%s139 + $0x18] sm:$0xff]
            %148 = vst [vmem:[%s140 + $0x18] sm:$0xff] %v147
            %v149 = vld [vmem:[%s139 + $0x20] sm:$0xff]
            %150 = vst [vmem:[%s140 + $0x20] sm:$0xff] %v149
            %v151 = vld [vmem:[%s139 + $0x28] sm:$0xff]
            %152 = vst [vmem:[%s140 + $0x28] sm:$0xff] %v151
            %v153 = vld [vmem:[%s139 + $0x30] sm:$0xff]
            %154 = vst [vmem:[%s140 + $0x30] sm:$0xff] %v153
            %v155 = vld [vmem:[%s139 + $0x38] sm:$0xff]
            %156 = vst [vmem:[%s140 + $0x38] sm:$0xff] %v155
          $region63: #{reverse} parent=57 // loop_footer
            %s138 = sadd.s32 1, %s134
          $region64: #{reverse} parent=57 // loop_footer_branch
            %133 = sbr.rel target = $region60
          $region65: #{reverse} parent=57 // loop_exit
            _
        $region58: #{reverse} parent=42 // pred_fallthru
          _
        // Predicated region
        $region66: #{reverse} parent=42 // pred_check
          _
        $region67: #{reverse} parent=42 // pred_check_branch
          %158 = sbr.rel target = $region69
        $region68: #{reverse} parent=42 // pred_region
          _
        $region69: #{reverse} parent=42 // pred_fallthru
          _
      $region43: #{reverse} parent=38 // pred_fallthru
        _
      // Predicated region
      $region44: #{reverse} parent=38 // pred_check
        _
      $region45: #{reverse} parent=38 // pred_check_branch
        %105 = sbr.rel target = $region47
      $region46: #{reverse} parent=38 // pred_region
        loop: start=0, step=1, limit=1
        $region48: #{reverse} parent=46 // loop_pre_header
          _
        $region49: #{reverse} parent=46 // loop_header
          %s108 = sphi 0, %s112
          %p109 = scmp.ge.s32.totalorder %s108, 1
          %s113 = sphi [#allocation1], [#allocation1]
          %s114 = sphi %s1, %s1
        $region50: #{reverse} parent=46 // loop_header_branch
          %111 = sbr.rel (%p109) target = $region54
        $region51: #{reverse} parent=46 // loop_body
          %v115 = vld [vmem:[%s113] sm:$0xff]
          %116 = vst [vmem:[%s114] sm:$0xff] %v115
          %v117 = vld [vmem:[%s113 + $0x8] sm:$0xff]
          %118 = vst [vmem:[%s114 + $0x8] sm:$0xff] %v117
          %v119 = vld [vmem:[%s113 + $0x10] sm:$0xff]
          %120 = vst [vmem:[%s114 + $0x10] sm:$0xff] %v119
          %v121 = vld [vmem:[%s113 + $0x18] sm:$0xff]
          %122 = vst [vmem:[%s114 + $0x18] sm:$0xff] %v121
          %v123 = vld [vmem:[%s113 + $0x20] sm:$0xff]
          %124 = vst [vmem:[%s114 + $0x20] sm:$0xff] %v123
          %v125 = vld [vmem:[%s113 + $0x28] sm:$0xff]
          %126 = vst [vmem:[%s114 + $0x28] sm:$0xff] %v125
          %v127 = vld [vmem:[%s113 + $0x30] sm:$0xff]
          %128 = vst [vmem:[%s114 + $0x30] sm:$0xff] %v127
          %v129 = vld [vmem:[%s113 + $0x38] sm:$0xff]
          %130 = vst [vmem:[%s114 + $0x38] sm:$0xff] %v129
        $region52: #{reverse} parent=46 // loop_footer
          %s112 = sadd.s32 1, %s108
        $region53: #{reverse} parent=46 // loop_footer_branch
          %107 = sbr.rel target = $region49
        $region54: #{reverse} parent=46 // loop_exit
          _
      $region47: #{reverse} parent=38 // pred_fallthru
        _
    $region39: #{reverse} parent=1 // pred_fallthru
      _
    %159 = vnop

// kernel: forward.1
$region0: #{forward.1}
  #allocation0 [shape = 'u32[]', space=smem, size = 0x4, offset = 0x4, fixed_abs, tag = 'smem constant byte address 0x4 - core index']
  #allocation1 [shape = 'u32[144,128]{1,0:T(1,128)}', space=vmem, size = 0x12000, scoped, tag = 'internal scratch']
  #allocation2 [shape = 'f32[8,8,32]{2,1,0:T(8,128)}', space=vmem, size = 0x8000, scoped, tag = 'scratch operand']
  %s0 = inlined_call_operand.vmem [shape: f32[64,32], index: 0, kind: input, shape index: {}]
  %s1 = inlined_call_operand.vmem [shape: f32[32,128], index: 1, kind: input, shape index: {}]
  %s2 = inlined_call_operand.vmem [shape: f32[32,128], index: 2, kind: input, shape index: {}]
  %s3 = inlined_call_operand.vmem [shape: f32[32,144], index: 3, kind: input, shape index: {}]
  %s4 = inlined_call_operand.vmem [shape: f32[48,32], index: 4, kind: input, shape index: {}]
  %s5 = inlined_call_operand.vmem [shape: f32[8,32,16], index: 5, kind: input, shape index: {}]
  %s6 = inlined_call_operand.vmem [shape: f32[16,8], index: 6, kind: input, shape index: {}]
  %s7 = inlined_call_operand.vmem [shape: f32[6,128], index: 7, kind: input, shape index: {}]
  %s8 = inlined_call_operand.vmem [shape: f32[8,8], index: 8, kind: output, shape index: {}]
  %s9 = sld [smem:[#allocation0]]
  $region42: #{forward.1} parent=0
    _
  %s11 = ssub.s32 1, %s9
  %s12 = scalar_select 0, %s11, %s9
  // Predicated region
  $region2: #{forward.1} parent=0 // pred_check
    _
  $region3: #{forward.1} parent=0 // pred_check_branch
    %14 = sbr.rel (0) target = $region5
  $region4: #{forward.1} parent=0 // pred_region
    _
  $region5: #{forward.1} parent=0 // pred_fallthru
    _
  // Predicated region
  $region6: #{forward.1} parent=0 // pred_check
    _
  $region7: #{forward.1} parent=0 // pred_check_branch
    %16 = sbr.rel (0) target = $region9
  $region8: #{forward.1} parent=0 // pred_region
    _
  $region9: #{forward.1} parent=0 // pred_fallthru
    _
  // Predicated region
  $region10: #{forward.1} parent=0 // pred_check
    _
  $region11: #{forward.1} parent=0 // pred_check_branch
    %18 = sbr.rel (0) target = $region13
  $region12: #{forward.1} parent=0 // pred_region
    _
  $region13: #{forward.1} parent=0 // pred_fallthru
    _
  // Predicated region
  $region14: #{forward.1} parent=0 // pred_check
    _
  $region15: #{forward.1} parent=0 // pred_check_branch
    %20 = sbr.rel (0) target = $region17
  $region16: #{forward.1} parent=0 // pred_region
    _
  $region17: #{forward.1} parent=0 // pred_fallthru
    _
  // Predicated region
  $region18: #{forward.1} parent=0 // pred_check
    _
  $region19: #{forward.1} parent=0 // pred_check_branch
    %22 = sbr.rel (0) target = $region21
  $region20: #{forward.1} parent=0 // pred_region
    _
  $region21: #{forward.1} parent=0 // pred_fallthru
    _
  // Predicated region
  $region22: #{forward.1} parent=0 // pred_check
    _
  $region23: #{forward.1} parent=0 // pred_check_branch
    %24 = sbr.rel (0) target = $region25
  $region24: #{forward.1} parent=0 // pred_region
    _
  $region25: #{forward.1} parent=0 // pred_fallthru
    _
  // Predicated region
  $region26: #{forward.1} parent=0 // pred_check
    _
  $region27: #{forward.1} parent=0 // pred_check_branch
    %26 = sbr.rel (0) target = $region29
  $region28: #{forward.1} parent=0 // pred_region
    _
  $region29: #{forward.1} parent=0 // pred_fallthru
    _
  // Predicated region
  $region30: #{forward.1} parent=0 // pred_check
    _
  $region31: #{forward.1} parent=0 // pred_check_branch
    %28 = sbr.rel (0) target = $region33
  $region32: #{forward.1} parent=0 // pred_region
    _
  $region33: #{forward.1} parent=0 // pred_fallthru
    _
  %v29 = vld [vmem:[%s7] sm:$0x3f]
  %v30 = vld [vmem:[%s0] sm:$0xff]
  %v31 = vld [vmem:[%s0 + $0x8] sm:$0xff]
  %v32 = vld [vmem:[%s0 + $0x10] sm:$0xff]
  %v33 = vld [vmem:[%s0 + $0x18] sm:$0xff]
  %v34 = vld [vmem:[%s0 + $0x20] sm:$0xff]
  %v35 = vld [vmem:[%s0 + $0x28] sm:$0xff]
  %v36 = vld [vmem:[%s0 + $0x30] sm:$0xff]
  %v37 = vld [vmem:[%s0 + $0x38] sm:$0xff]
  %v38 = vld [vmem:[%s1] sm:$0xff]
  %v39 = vld [vmem:[%s1 + $0x8] sm:$0xff]
  %v40 = vld [vmem:[%s1 + $0x10] sm:$0xff]
  %v41 = vld [vmem:[%s1 + $0x18] sm:$0xff]
  %v42 = vlaneseq
  %v43 = vshrl.u32 %v42, 7
  %v44 = vsub.s32 0, %v43
  %v45 = vrot.slane %v29, %v44
  %vm46 = vcmask 261120
  %v48 = vsel %vm46, %v30, 0
  %v51 = vsel %vm46, %v31, 0
  %v54 = vsel %vm46, %v32, 0
  %v57 = vsel %vm46, %v33, 0
  %v60 = vsel %vm46, %v34, 0
  %v63 = vsel %vm46, %v35, 0
  %v66 = vsel %vm46, %v36, 0
  %v69 = vsel %vm46, %v37, 0
  %71 = vmatprep.subr.mxu0 0.0
  %72 = vmatpush1.msra.mxu0 %v38
  %73 = vmatprep.subr.mxu0 0.0
  %74 = vmatpush1.msra.mxu0 %v39
  %75 = vmatprep.subr.mxu0 0.0
  %76 = vmatpush1.msra.mxu0 %v40
  %77 = vmatprep.subr.mxu0 0.0
  %78 = vmatpush1.msra.mxu0 %v41
  %79 = vmatprep.subr.mxu0 0.0
  %80 = vmatpush1.msra.mxu0 0.0
  %81 = vmatprep.subr.mxu0 0.0
  %82 = vmatpush1.msra.mxu0 0.0
  %83 = vmatprep.subr.mxu0 0.0
  %84 = vmatpush1.msra.mxu0 0.0
  %85 = vmatprep.subr.mxu0 0.0
  %86 = vmatpush1.msra.mxu0 0.0
  %87 = vmatprep.subr.mxu0 0.0
  %88 = vmatpush1.msra.mxu0 0.0
  %89 = vmatprep.subr.mxu0 0.0
  %90 = vmatpush1.msra.mxu0 0.0
  %91 = vmatprep.subr.mxu0 0.0
  %92 = vmatpush1.msra.mxu0 0.0
  %93 = vmatprep.subr.mxu0 0.0
  %94 = vmatpush1.msra.mxu0 0.0
  %95 = vmatprep.subr.mxu0 0.0
  %96 = vmatpush1.msra.mxu0 0.0
  %97 = vmatprep.subr.mxu0 0.0
  %98 = vmatpush1.msra.mxu0 0.0
  %99 = vmatprep.subr.mxu0 0.0
  %100 = vmatpush1.msra.mxu0 0.0
  %101 = vmatprep.subr.mxu0 0.0
  %102 = vmatpush1.msra.mxu0 0.0
  %103 = vmatprep.subr.mxu0 0.0
  %104 = vmatpush1.msra.mxu0 0.0
  %105 = vmatprep.subr.mxu0 0.0
  %106 = vmatpush1.msra.mxu0 0.0
  %107 = vmatprep.subr.mxu0 0.0
  %108 = vmatpush1.msra.mxu0 0.0
  %109 = vmatprep.subr.mxu0 0.0
  %110 = vmatpush1.msra.mxu0 0.0
  %111 = vmatprep.subr.mxu0 0.0
  %112 = vmatpush1.msra.mxu0 0.0
  %113 = vmatprep.subr.mxu0 0.0
  %114 = vmatpush1.msra.mxu0 0.0
  %115 = vmatprep.subr.mxu0 0.0
  %116 = vmatpush1.msra.mxu0 0.0
  %117 = vmatprep.subr.mxu0 0.0
  %118 = vmatpush1.msra.mxu0 0.0
  %119 = vmatprep.subr.mxu0 0.0
  %120 = vmatpush1.msra.mxu0 0.0
  %121 = vmatprep.subr.mxu0 0.0
  %122 = vmatpush1.msra.mxu0 0.0
  %123 = vmatprep.subr.mxu0 0.0
  %124 = vmatpush1.msra.mxu0 0.0
  %125 = vmatprep.subr.mxu0 0.0
  %126 = vmatpush1.msra.mxu0 0.0
  %127 = vmatprep.subr.mxu0 0.0
  %128 = vmatpush1.msra.mxu0 0.0
  %129 = vmatprep.subr.mxu0 0.0
  %130 = vmatpush1.msra.mxu0 0.0
  %131 = vmatprep.subr.mxu0 0.0
  %132 = vmatpush1.msra.mxu0 0.0
  %133 = vmatprep.subr.mxu0 0.0
  %134 = vmatpush1.msra.mxu0 0.0
  %135 = vmatprep.mubr.f32.mxu0 0.0
  %136 = vmatmul.mubr.f32.gmra.mrb[0].mxu0 %v48
  %v137 = vpop.f32.mrb[0].mxu0
  %v138 = vadd.f32 %v45, %v137
  %v139 = vpop.f32.mrb[0].mxu0
  %140 = vmatprep.mubr.f32.mxu0 0.0
  %141 = vmatmul.mubr.f32.gmra.mrb[0].mxu0 %v51
  %v142 = vpop.f32.mrb[0].mxu0
  %v143 = vadd.f32 %v45, %v142
  %v144 = vpop.f32.mrb[0].mxu0
  %145 = vmatprep.mubr.f32.mxu0 0.0
  %146 = vmatmul.mubr.f32.gmra.mrb[0].mxu0 %v54
  %v147 = vpop.f32.mrb[0].mxu0
  %v148 = vadd.f32 %v45, %v147
  %v149 = vpop.f32.mrb[0].mxu0
  %150 = vmatprep.mubr.f32.mxu0 0.0
  %151 = vmatmul.mubr.f32.gmra.mrb[0].mxu0 %v57
  %v152 = vpop.f32.mrb[0].mxu0
  %v153 = vadd.f32 %v45, %v152
  %v154 = vpop.f32.mrb[0].mxu0
  %155 = vmatprep.mubr.f32.mxu0 0.0
  %156 = vmatmul.mubr.f32.gmra.mrb[0].mxu0 %v60
  %v157 = vpop.f32.mrb[0].mxu0
  %v158 = vadd.f32 %v45, %v157
  %v159 = vpop.f32.mrb[0].mxu0
  %160 = vmatprep.mubr.f32.mxu0 0.0
  %161 = vmatmul.mubr.f32.gmra.mrb[0].mxu0 %v63
  %v162 = vpop.f32.mrb[0].mxu0
  %v163 = vadd.f32 %v45, %v162
  %v164 = vpop.f32.mrb[0].mxu0
  %165 = vmatprep.mubr.f32.mxu0 0.0
  %166 = vmatmul.mubr.f32.gmra.mrb[0].mxu0 %v66
  %v167 = vpop.f32.mrb[0].mxu0
  %v168 = vadd.f32 %v45, %v167
  %v169 = vpop.f32.mrb[0].mxu0
  %170 = vmatprep.mubr.f32.mxu0 0.0
  %171 = vmatmul.mubr.f32.gmra.mrb[0].mxu0 %v69
  %v172 = vpop.f32.mrb[0].mxu0
  %v173 = vadd.f32 %v45, %v172
  %v174 = vpop.f32.mrb[0].mxu0
  %175 = vdwg.mxu0
  %v176 = vld [vmem:[%s2] sm:$0xff]
  %v177 = vld [vmem:[%s2 + $0x8] sm:$0xff]
  %v178 = vld [vmem:[%s2 + $0x10] sm:$0xff]
  %v179 = vld [vmem:[%s2 + $0x18] sm:$0xff]
  %v181 = vsel %vm46, 0.0, 0
  %183 = vmatprep.subr.mxu0 0.0
  %184 = vmatpush1.msra.mxu0 %v176
  %185 = vmatprep.subr.mxu0 0.0
  %186 = vmatpush1.msra.mxu0 %v177
  %187 = vmatprep.subr.mxu0 0.0
  %188 = vmatpush1.msra.mxu0 %v178
  %189 = vmatprep.subr.mxu0 0.0
  %190 = vmatpush1.msra.mxu0 %v179
  %191 = vmatprep.subr.mxu0 0.0
  %192 = vmatpush1.msra.mxu0 0.0
  %193 = vmatprep.subr.mxu0 0.0
  %194 = vmatpush1.msra.mxu0 0.0
  %195 = vmatprep.subr.mxu0 0.0
  %196 = vmatpush1.msra.mxu0 0.0
  %197 = vmatprep.subr.mxu0 0.0
  %198 = vmatpush1.msra.mxu0 0.0
  %199 = vmatprep.subr.mxu0 0.0
  %200 = vmatpush1.msra.mxu0 0.0
  %201 = vmatprep.subr.mxu0 0.0
  %202 = vmatpush1.msra.mxu0 0.0
  %203 = vmatprep.subr.mxu0 0.0
  %204 = vmatpush1.msra.mxu0 0.0
  %205 = vmatprep.subr.mxu0 0.0
  %206 = vmatpush1.msra.mxu0 0.0
  %207 = vmatprep.subr.mxu0 0.0
  %208 = vmatpush1.msra.mxu0 0.0
  %209 = vmatprep.subr.mxu0 0.0
  %210 = vmatpush1.msra.mxu0 0.0
  %211 = vmatprep.subr.mxu0 0.0
  %212 = vmatpush1.msra.mxu0 0.0
  %213 = vmatprep.subr.mxu0 0.0
  %214 = vmatpush1.msra.mxu0 0.0
  %215 = vmatprep.subr.mxu0 0.0
  %216 = vmatpush1.msra.mxu0 0.0
  %217 = vmatprep.subr.mxu0 0.0
  %218 = vmatpush1.msra.mxu0 0.0
  %219 = vmatprep.subr.mxu0 0.0
  %220 = vmatpush1.msra.mxu0 0.0
  %221 = vmatprep.subr.mxu0 0.0
  %222 = vmatpush1.msra.mxu0 0.0
  %223 = vmatprep.subr.mxu0 0.0
  %224 = vmatpush1.msra.mxu0 0.0
  %225 = vmatprep.subr.mxu0 0.0
  %226 = vmatpush1.msra.mxu0 0.0
  %227 = vmatprep.subr.mxu0 0.0
  %228 = vmatpush1.msra.mxu0 0.0
  %229 = vmatprep.subr.mxu0 0.0
  %230 = vmatpush1.msra.mxu0 0.0
  %231 = vmatprep.subr.mxu0 0.0
  %232 = vmatpush1.msra.mxu0 0.0
  %233 = vmatprep.subr.mxu0 0.0
  %234 = vmatpush1.msra.mxu0 0.0
  %235 = vmatprep.subr.mxu0 0.0
  %236 = vmatpush1.msra.mxu0 0.0
  %237 = vmatprep.subr.mxu0 0.0
  %238 = vmatpush1.msra.mxu0 0.0
  %239 = vmatprep.subr.mxu0 0.0
  %240 = vmatpush1.msra.mxu0 0.0
  %241 = vmatprep.subr.mxu0 0.0
  %242 = vmatpush1.msra.mxu0 0.0
  %243 = vmatprep.subr.mxu0 0.0
  %244 = vmatpush1.msra.mxu0 0.0
  %245 = vmatprep.subr.mxu0 0.0
  %246 = vmatpush1.msra.mxu0 0.0
  %247 = vmatprep.mubr.f32.mxu0 0.0
  %248 = vmatmul.mubr.f32.gmra.mrb[0].mxu0 %v181
  %v249 = vpop.f32.mrb[0].mxu0
  %v250 = vadd.f32 0.0, %v249
  %v251 = vpop.f32.mrb[0].mxu0
  %252 = vdwg.mxu0
  %v253 = vadd.f32 %v138, %v250
  %v254 = vxor.u32 %v253, 2147483648
  %v255 = vmul.f32 %v254, 1.442695
  %v256 = vpow.pop %v255
  %v257 = vadd.f32 %v256, 1.0
  %v258 = vrcp.pop %v257
  %v259 = vmul.f32 1.0, %v258
  %v260 = vtanh.pop %v253
  %v261 = vmul.f32 %v259, 0.0
  %263 = vrot.lane.b32.xlu0 %v260, 64
  %v264 = vpop.permute.xlu0 %263
  %v266 = vmul.f32 %v259, %v264
  %268 = vrot.lane.b32.xlu0 %v266, 32
  %v269 = vpop.permute.xlu0 %268
  %v271 = vadd.f32 %v261, %v269
  %v272 = vtanh.pop %v271
  %274 = vrot.lane.b32.xlu0 %v272, 64
  %v275 = vpop.permute.xlu0 %274
  %v277 = vmul.f32 %v259, %v275
  %279 = vrot.lane.b32.xlu0 %v277, 32
  %v280 = vpop.permute.xlu0 %279
  %v281 = vsel %vm46, %v280, 0
  %283 = vmatprep.subr.mxu0 0.0
  %284 = vmatpush1.msra.mxu0 %v176
  %285 = vmatprep.subr.mxu0 0.0
  %286 = vmatpush1.msra.mxu0 %v177
  %287 = vmatprep.subr.mxu0 0.0
  %288 = vmatpush1.msra.mxu0 %v178
  %289 = vmatprep.subr.mxu0 0.0
  %290 = vmatpush1.msra.mxu0 %v179
  %291 = vmatprep.subr.mxu0 0.0
  %292 = vmatpush1.msra.mxu0 0.0
  %293 = vmatprep.subr.mxu0 0.0
  %294 = vmatpush1.msra.mxu0 0.0
  %295 = vmatprep.subr.mxu0 0.0
  %296 = vmatpush1.msra.mxu0 0.0
  %297 = vmatprep.subr.mxu0 0.0
  %298 = vmatpush1.msra.mxu0 0.0
  %299 = vmatprep.subr.mxu0 0.0
  %300 = vmatpush1.msra.mxu0 0.0
  %301 = vmatprep.subr.mxu0 0.0
  %302 = vmatpush1.msra.mxu0 0.0
  %303 = vmatprep.subr.mxu0 0.0
  %304 = vmatpush1.msra.mxu0 0.0
  %305 = vmatprep.subr.mxu0 0.0
  %306 = vmatpush1.msra.mxu0 0.0
  %307 = vmatprep.subr.mxu0 0.0
  %308 = vmatpush1.msra.mxu0 0.0
  %309 = vmatprep.subr.mxu0 0.0
  %310 = vmatpush1.msra.mxu0 0.0
  %311 = vmatprep.subr.mxu0 0.0
  %312 = vmatpush1.msra.mxu0 0.0
  %313 = vmatprep.subr.mxu0 0.0
  %314 = vmatpush1.msra.mxu0 0.0
  %315 = vmatprep.subr.mxu0 0.0
  %316 = vmatpush1.msra.mxu0 0.0
  %317 = vmatprep.subr.mxu0 0.0
  %318 = vmatpush1.msra.mxu0 0.0
  %319 = vmatprep.subr.mxu0 0.0
  %320 = vmatpush1.msra.mxu0 0.0
  %321 = vmatprep.subr.mxu0 0.0
  %322 = vmatpush1.msra.mxu0 0.0
  %323 = vmatprep.subr.mxu0 0.0
  %324 = vmatpush1.msra.mxu0 0.0
  %325 = vmatprep.subr.mxu0 0.0
  %326 = vmatpush1.msra.mxu0 0.0
  %327 = vmatprep.subr.mxu0 0.0
  %328 = vmatpush1.msra.mxu0 0.0
  %329 = vmatprep.subr.mxu0 0.0
  %330 = vmatpush1.msra.mxu0 0.0
  %331 = vmatprep.subr.mxu0 0.0
  %332 = vmatpush1.msra.mxu0 0.0
  %333 = vmatprep.subr.mxu0 0.0
  %334 = vmatpush1.msra.mxu0 0.0
  %335 = vmatprep.subr.mxu0 0.0
  %336 = vmatpush1.msra.mxu0 0.0
  %337 = vmatprep.subr.mxu0 0.0
  %338 = vmatpush1.msra.mxu0 0.0
  %339 = vmatprep.subr.mxu0 0.0
  %340 = vmatpush1.msra.mxu0 0.0
  %341 = vmatprep.subr.mxu0 0.0
  %342 = vmatpush1.msra.mxu0 0.0
  %343 = vmatprep.subr.mxu0 0.0
  %344 = vmatpush1.msra.mxu0 0.0
  %345 = vmatprep.subr.mxu0 0.0
  %346 = vmatpush1.msra.mxu0 0.0
  %347 = vmatprep.mubr.f32.mxu0 0.0
  %348 = vmatmul.mubr.f32.gmra.mrb[0].mxu0 %v281
  %v349 = vpop.f32.mrb[0].mxu0
  %v350 = vadd.f32 0.0, %v349
  %v351 = vpop.f32.mrb[0].mxu0
  %352 = vdwg.mxu0
  %v353 = vadd.f32 %v143, %v350
  %v354 = vxor.u32 %v353, 2147483648
  %v355 = vmul.f32 %v354, 1.442695
  %v356 = vpow.pop %v355
  %v357 = vadd.f32 %v356, 1.0
  %v358 = vrcp.pop %v357
  %v359 = vmul.f32 1.0, %v358
  %v360 = vtanh.pop %v353
  %v361 = vmul.f32 %v359, %v271
  %363 = vrot.lane.b32.xlu0 %v360, 64
  %v364 = vpop.permute.xlu0 %363
  %v366 = vmul.f32 %v359, %v364
  %368 = vrot.lane.b32.xlu0 %v366, 32
  %v369 = vpop.permute.xlu0 %368
  %v371 = vadd.f32 %v361, %v369
  %v372 = vtanh.pop %v371
  %374 = vrot.lane.b32.xlu0 %v372, 64
  %v375 = vpop.permute.xlu0 %374
  %v377 = vmul.f32 %v359, %v375
  %379 = vrot.lane.b32.xlu0 %v377, 32
  %v380 = vpop.permute.xlu0 %379
  %v381 = vsel %vm46, %v380, 0
  %383 = vmatprep.subr.mxu0 0.0
  %384 = vmatpush1.msra.mxu0 %v176
  %385 = vmatprep.subr.mxu0 0.0
  %386 = vmatpush1.msra.mxu0 %v177
  %387 = vmatprep.subr.mxu0 0.0
  %388 = vmatpush1.msra.mxu0 %v178
  %389 = vmatprep.subr.mxu0 0.0
  %390 = vmatpush1.msra.mxu0 %v179
  %391 = vmatprep.subr.mxu0 0.0
  %392 = vmatpush1.msra.mxu0 0.0
  %393 = vmatprep.subr.mxu0 0.0
  %394 = vmatpush1.msra.mxu0 0.0
  %395 = vmatprep.subr.mxu0 0.0
  %396 = vmatpush1.msra.mxu0 0.0
  %397 = vmatprep.subr.mxu0 0.0
  %398 = vmatpush1.msra.mxu0 0.0
  %399 = vmatprep.subr.mxu0 0.0
  %400 = vmatpush1.msra.mxu0 0.0
  %401 = vmatprep.subr.mxu0 0.0
  %402 = vmatpush1.msra.mxu0 0.0
  %403 = vmatprep.subr.mxu0 0.0
  %404 = vmatpush1.msra.mxu0 0.0
  %405 = vmatprep.subr.mxu0 0.0
  %406 = vmatpush1.msra.mxu0 0.0
  %407 = vmatprep.subr.mxu0 0.0
  %408 = vmatpush1.msra.mxu0 0.0
  %409 = vmatprep.subr.mxu0 0.0
  %410 = vmatpush1.msra.mxu0 0.0
  %411 = vmatprep.subr.mxu0 0.0
  %412 = vmatpush1.msra.mxu0 0.0
  %413 = vmatprep.subr.mxu0 0.0
  %414 = vmatpush1.msra.mxu0 0.0
  %415 = vmatprep.subr.mxu0 0.0
  %416 = vmatpush1.msra.mxu0 0.0
  %417 = vmatprep.subr.mxu0 0.0
  %418 = vmatpush1.msra.mxu0 0.0
  %419 = vmatprep.subr.mxu0 0.0
  %420 = vmatpush1.msra.mxu0 0.0
  %421 = vmatprep.subr.mxu0 0.0
  %422 = vmatpush1.msra.mxu0 0.0
  %423 = vmatprep.subr.mxu0 0.0
  %424 = vmatpush1.msra.mxu0 0.0
  %425 = vmatprep.subr.mxu0 0.0
  %426 = vmatpush1.msra.mxu0 0.0
  %427 = vmatprep.subr.mxu0 0.0
  %428 = vmatpush1.msra.mxu0 0.0
  %429 = vmatprep.subr.mxu0 0.0
  %430 = vmatpush1.msra.mxu0 0.0
  %431 = vmatprep.subr.mxu0 0.0
  %432 = vmatpush1.msra.mxu0 0.0
  %433 = vmatprep.subr.mxu0 0.0
  %434 = vmatpush1.msra.mxu0 0.0
  %435 = vmatprep.subr.mxu0 0.0
  %436 = vmatpush1.msra.mxu0 0.0
  %437 = vmatprep.subr.mxu0 0.0
  %438 = vmatpush1.msra.mxu0 0.0
  %439 = vmatprep.subr.mxu0 0.0
  %440 = vmatpush1.msra.mxu0 0.0
  %441 = vmatprep.subr.mxu0 0.0
  %442 = vmatpush1.msra.mxu0 0.0
  %443 = vmatprep.subr.mxu0 0.0
  %444 = vmatpush1.msra.mxu0 0.0
  %445 = vmatprep.subr.mxu0 0.0
  %446 = vmatpush1.msra.mxu0 0.0
  %447 = vmatprep.mubr.f32.mxu0 0.0
  %448 = vmatmul.mubr.f32.gmra.mrb[0].mxu0 %v381
  %v449 = vpop.f32.mrb[0].mxu0
  %v450 = vadd.f32 0.0, %v449
  %v451 = vpop.f32.mrb[0].mxu0
  %452 = vdwg.mxu0
  %v453 = vadd.f32 %v148, %v450
  %v454 = vxor.u32 %v453, 2147483648
  %v455 = vmul.f32 %v454, 1.442695
  %v456 = vpow.pop %v455
  %v457 = vadd.f32 %v456, 1.0
  %v458 = vrcp.pop %v457
  %v459 = vmul.f32 1.0, %v458
  %v460 = vtanh.pop %v453
  %v461 = vmul.f32 %v459, %v371
  %463 = vrot.lane.b32.xlu0 %v460, 64
  %v464 = vpop.permute.xlu0 %463
  %v466 = vmul.f32 %v459, %v464
  %468 = vrot.lane.b32.xlu0 %v466, 32
  %v469 = vpop.permute.xlu0 %468
  %v471 = vadd.f32 %v461, %v469
  %v472 = vtanh.pop %v471
  %474 = vrot.lane.b32.xlu0 %v472, 64
  %v475 = vpop.permute.xlu0 %474
  %v477 = vmul.f32 %v459, %v475
  %479 = vrot.lane.b32.xlu0 %v477, 32
  %v480 = vpop.permute.xlu0 %479
  %v481 = vsel %vm46, %v480, 0
  %483 = vmatprep.subr.mxu0 0.0
  %484 = vmatpush1.msra.mxu0 %v176
  %485 = vmatprep.subr.mxu0 0.0
  %486 = vmatpush1.msra.mxu0 %v177
  %487 = vmatprep.subr.mxu0 0.0
  %488 = vmatpush1.msra.mxu0 %v178
  %489 = vmatprep.subr.mxu0 0.0
  %490 = vmatpush1.msra.mxu0 %v179
  %491 = vmatprep.subr.mxu0 0.0
  %492 = vmatpush1.msra.mxu0 0.0
  %493 = vmatprep.subr.mxu0 0.0
  %494 = vmatpush1.msra.mxu0 0.0
  %495 = vmatprep.subr.mxu0 0.0
  %496 = vmatpush1.msra.mxu0 0.0
  %497 = vmatprep.subr.mxu0 0.0
  %498 = vmatpush1.msra.mxu0 0.0
  %499 = vmatprep.subr.mxu0 0.0
  %500 = vmatpush1.msra.mxu0 0.0
  %501 = vmatprep.subr.mxu0 0.0
  %502 = vmatpush1.msra.mxu0 0.0
  %503 = vmatprep.subr.mxu0 0.0
  %504 = vmatpush1.msra.mxu0 0.0
  %505 = vmatprep.subr.mxu0 0.0
  %506 = vmatpush1.msra.mxu0 0.0
  %507 = vmatprep.subr.mxu0 0.0
  %508 = vmatpush1.msra.mxu0 0.0
  %509 = vmatprep.subr.mxu0 0.0
  %510 = vmatpush1.msra.mxu0 0.0
  %511 = vmatprep.subr.mxu0 0.0
  %512 = vmatpush1.msra.mxu0 0.0
  %513 = vmatprep.subr.mxu0 0.0
  %514 = vmatpush1.msra.mxu0 0.0
  %515 = vmatprep.subr.mxu0 0.0
  %516 = vmatpush1.msra.mxu0 0.0
  %517 = vmatprep.subr.mxu0 0.0
  %518 = vmatpush1.msra.mxu0 0.0
  %519 = vmatprep.subr.mxu0 0.0
  %520 = vmatpush1.msra.mxu0 0.0
  %521 = vmatprep.subr.mxu0 0.0
  %522 = vmatpush1.msra.mxu0 0.0
  %523 = vmatprep.subr.mxu0 0.0
  %524 = vmatpush1.msra.mxu0 0.0
  %525 = vmatprep.subr.mxu0 0.0
  %526 = vmatpush1.msra.mxu0 0.0
  %527 = vmatprep.subr.mxu0 0.0
  %528 = vmatpush1.msra.mxu0 0.0
  %529 = vmatprep.subr.mxu0 0.0
  %530 = vmatpush1.msra.mxu0 0.0
  %531 = vmatprep.subr.mxu0 0.0
  %532 = vmatpush1.msra.mxu0 0.0
  %533 = vmatprep.subr.mxu0 0.0
  %534 = vmatpush1.msra.mxu0 0.0
  %535 = vmatprep.subr.mxu0 0.0
  %536 = vmatpush1.msra.mxu0 0.0
  %537 = vmatprep.subr.mxu0 0.0
  %538 = vmatpush1.msra.mxu0 0.0
  %539 = vmatprep.subr.mxu0 0.0
  %540 = vmatpush1.msra.mxu0 0.0
  %541 = vmatprep.subr.mxu0 0.0
  %542 = vmatpush1.msra.mxu0 0.0
  %543 = vmatprep.subr.mxu0 0.0
  %544 = vmatpush1.msra.mxu0 0.0
  %545 = vmatprep.subr.mxu0 0.0
  %546 = vmatpush1.msra.mxu0 0.0
  %547 = vmatprep.mubr.f32.mxu0 0.0
  %548 = vmatmul.mubr.f32.gmra.mrb[0].mxu0 %v481
  %v549 = vpop.f32.mrb[0].mxu0
  %v550 = vadd.f32 0.0, %v549
  %v551 = vpop.f32.mrb[0].mxu0
  %552 = vdwg.mxu0
  %v553 = vadd.f32 %v153, %v550
  %v554 = vxor.u32 %v553, 2147483648
  %v555 = vmul.f32 %v554, 1.442695
  %v556 = vpow.pop %v555
  %v557 = vadd.f32 %v556, 1.0
  %v558 = vrcp.pop %v557
  %v559 = vmul.f32 1.0, %v558
  %v560 = vtanh.pop %v553
  %v561 = vmul.f32 %v559, %v471
  %563 = vrot.lane.b32.xlu0 %v560, 64
  %v564 = vpop.permute.xlu0 %563
  %v566 = vmul.f32 %v559, %v564
  %568 = vrot.lane.b32.xlu0 %v566, 32
  %v569 = vpop.permute.xlu0 %568
  %v571 = vadd.f32 %v561, %v569
  %v572 = vtanh.pop %v571
  %574 = vrot.lane.b32.xlu0 %v572, 64
  %v575 = vpop.permute.xlu0 %574
  %v577 = vmul.f32 %v559, %v575
  %579 = vrot.lane.b32.xlu0 %v577, 32
  %v580 = vpop.permute.xlu0 %579
  %v581 = vsel %vm46, %v580, 0
  %583 = vmatprep.subr.mxu0 0.0
  %584 = vmatpush1.msra.mxu0 %v176
  %585 = vmatprep.subr.mxu0 0.0
  %586 = vmatpush1.msra.mxu0 %v177
  %587 = vmatprep.subr.mxu0 0.0
  %588 = vmatpush1.msra.mxu0 %v178
  %589 = vmatprep.subr.mxu0 0.0
  %590 = vmatpush1.msra.mxu0 %v179
  %591 = vmatprep.subr.mxu0 0.0
  %592 = vmatpush1.msra.mxu0 0.0
  %593 = vmatprep.subr.mxu0 0.0
  %594 = vmatpush1.msra.mxu0 0.0
  %595 = vmatprep.subr.mxu0 0.0
  %596 = vmatpush1.msra.mxu0 0.0
  %597 = vmatprep.subr.mxu0 0.0
  %598 = vmatpush1.msra.mxu0 0.0
  %599 = vmatprep.subr.mxu0 0.0
  %600 = vmatpush1.msra.mxu0 0.0
  %601 = vmatprep.subr.mxu0 0.0
  %602 = vmatpush1.msra.mxu0 0.0
  %603 = vmatprep.subr.mxu0 0.0
  %604 = vmatpush1.msra.mxu0 0.0
  %605 = vmatprep.subr.mxu0 0.0
  %606 = vmatpush1.msra.mxu0 0.0
  %607 = vmatprep.subr.mxu0 0.0
  %608 = vmatpush1.msra.mxu0 0.0
  %609 = vmatprep.subr.mxu0 0.0
  %610 = vmatpush1.msra.mxu0 0.0
  %611 = vmatprep.subr.mxu0 0.0
  %612 = vmatpush1.msra.mxu0 0.0
  %613 = vmatprep.subr.mxu0 0.0
  %614 = vmatpush1.msra.mxu0 0.0
  %615 = vmatprep.subr.mxu0 0.0
  %616 = vmatpush1.msra.mxu0 0.0
  %617 = vmatprep.subr.mxu0 0.0
  %618 = vmatpush1.msra.mxu0 0.0
  %619 = vmatprep.subr.mxu0 0.0
  %620 = vmatpush1.msra.mxu0 0.0
  %621 = vmatprep.subr.mxu0 0.0
  %622 = vmatpush1.msra.mxu0 0.0
  %623 = vmatprep.subr.mxu0 0.0
  %624 = vmatpush1.msra.mxu0 0.0
  %625 = vmatprep.subr.mxu0 0.0
  %626 = vmatpush1.msra.mxu0 0.0
  %627 = vmatprep.subr.mxu0 0.0
  %628 = vmatpush1.msra.mxu0 0.0
  %629 = vmatprep.subr.mxu0 0.0
  %630 = vmatpush1.msra.mxu0 0.0
  %631 = vmatprep.subr.mxu0 0.0
  %632 = vmatpush1.msra.mxu0 0.0
  %633 = vmatprep.subr.mxu0 0.0
  %634 = vmatpush1.msra.mxu0 0.0
  %635 = vmatprep.subr.mxu0 0.0
  %636 = vmatpush1.msra.mxu0 0.0
  %637 = vmatprep.subr.mxu0 0.0
  %638 = vmatpush1.msra.mxu0 0.0
  %639 = vmatprep.subr.mxu0 0.0
  %640 = vmatpush1.msra.mxu0 0.0
  %641 = vmatprep.subr.mxu0 0.0
  %642 = vmatpush1.msra.mxu0 0.0
  %643 = vmatprep.subr.mxu0 0.0
  %644 = vmatpush1.msra.mxu0 0.0
  %645 = vmatprep.subr.mxu0 0.0
  %646 = vmatpush1.msra.mxu0 0.0
  %647 = vmatprep.mubr.f32.mxu0 0.0
  %648 = vmatmul.mubr.f32.gmra.mrb[0].mxu0 %v581
  %v649 = vpop.f32.mrb[0].mxu0
  %v650 = vadd.f32 0.0, %v649
  %v651 = vpop.f32.mrb[0].mxu0
  %652 = vdwg.mxu0
  %v653 = vadd.f32 %v158, %v650
  %v654 = vxor.u32 %v653, 2147483648
  %v655 = vmul.f32 %v654, 1.442695
  %v656 = vpow.pop %v655
  %v657 = vadd.f32 %v656, 1.0
  %v658 = vrcp.pop %v657
  %v659 = vmul.f32 1.0, %v658
  %v660 = vtanh.pop %v653
  %v661 = vmul.f32 %v659, %v571
  %663 = vrot.lane.b32.xlu0 %v660, 64
  %v664 = vpop.permute.xlu0 %663
  %v666 = vmul.f32 %v659, %v664
  %668 = vrot.lane.b32.xlu0 %v666, 32
  %v669 = vpop.permute.xlu0 %668
  %v671 = vadd.f32 %v661, %v669
  %v672 = vtanh.pop %v671
  %674 = vrot.lane.b32.xlu0 %v672, 64
  %v675 = vpop.permute.xlu0 %674
  %v677 = vmul.f32 %v659, %v675
  %679 = vrot.lane.b32.xlu0 %v677, 32
  %v680 = vpop.permute.xlu0 %679
  %v681 = vsel %vm46, %v680, 0
  %683 = vmatprep.subr.mxu0 0.0
  %684 = vmatpush1.msra.mxu0 %v176
  %685 = vmatprep.subr.mxu0 0.0
  %686 = vmatpush1.msra.mxu0 %v177
  %687 = vmatprep.subr.mxu0 0.0
  %688 = vmatpush1.msra.mxu0 %v178
  %689 = vmatprep.subr.mxu0 0.0
  %690 = vmatpush1.msra.mxu0 %v179
  %691 = vmatprep.subr.mxu0 0.0
  %692 = vmatpush1.msra.mxu0 0.0
  %693 = vmatprep.subr.mxu0 0.0
  %694 = vmatpush1.msra.mxu0 0.0
  %695 = vmatprep.subr.mxu0 0.0
  %696 = vmatpush1.msra.mxu0 0.0
  %697 = vmatprep.subr.mxu0 0.0
  %698 = vmatpush1.msra.mxu0 0.0
  %699 = vmatprep.subr.mxu0 0.0
  %700 = vmatpush1.msra.mxu0 0.0
  %701 = vmatprep.subr.mxu0 0.0
  %702 = vmatpush1.msra.mxu0 0.0
  %703 = vmatprep.subr.mxu0 0.0
  %704 = vmatpush1.msra.mxu0 0.0
  %705 = vmatprep.subr.mxu0 0.0
  %706 = vmatpush1.msra.mxu0 0.0
  %707 = vmatprep.subr.mxu0 0.0
  %708 = vmatpush1.msra.mxu0 0.0
  %709 = vmatprep.subr.mxu0 0.0
  %710 = vmatpush1.msra.mxu0 0.0
  %711 = vmatprep.subr.mxu0 0.0
  %712 = vmatpush1.msra.mxu0 0.0
  %713 = vmatprep.subr.mxu0 0.0
  %714 = vmatpush1.msra.mxu0 0.0
  %715 = vmatprep.subr.mxu0 0.0
  %716 = vmatpush1.msra.mxu0 0.0
  %717 = vmatprep.subr.mxu0 0.0
  %718 = vmatpush1.msra.mxu0 0.0
  %719 = vmatprep.subr.mxu0 0.0
  %720 = vmatpush1.msra.mxu0 0.0
  %721 = vmatprep.subr.mxu0 0.0
  %722 = vmatpush1.msra.mxu0 0.0
  %723 = vmatprep.subr.mxu0 0.0
  %724 = vmatpush1.msra.mxu0 0.0
  %725 = vmatprep.subr.mxu0 0.0
  %726 = vmatpush1.msra.mxu0 0.0
  %727 = vmatprep.subr.mxu0 0.0
  %728 = vmatpush1.msra.mxu0 0.0
  %729 = vmatprep.subr.mxu0 0.0
  %730 = vmatpush1.msra.mxu0 0.0
  %731 = vmatprep.subr.mxu0 0.0
  %732 = vmatpush1.msra.mxu0 0.0
  %733 = vmatprep.subr.mxu0 0.0
  %734 = vmatpush1.msra.mxu0 0.0
  %735 = vmatprep.subr.mxu0 0.0
  %736 = vmatpush1.msra.mxu0 0.0
  %737 = vmatprep.subr.mxu0 0.0
  %738 = vmatpush1.msra.mxu0 0.0
  %739 = vmatprep.subr.mxu0 0.0
  %740 = vmatpush1.msra.mxu0 0.0
  %741 = vmatprep.subr.mxu0 0.0
  %742 = vmatpush1.msra.mxu0 0.0
  %743 = vmatprep.subr.mxu0 0.0
  %744 = vmatpush1.msra.mxu0 0.0
  %745 = vmatprep.subr.mxu0 0.0
  %746 = vmatpush1.msra.mxu0 0.0
  %747 = vmatprep.mubr.f32.mxu0 0.0
  %748 = vmatmul.mubr.f32.gmra.mrb[0].mxu0 %v681
  %v749 = vpop.f32.mrb[0].mxu0
  %v750 = vadd.f32 0.0, %v749
  %v751 = vpop.f32.mrb[0].mxu0
  %752 = vdwg.mxu0
  %v753 = vadd.f32 %v163, %v750
  %v754 = vxor.u32 %v753, 2147483648
  %v755 = vmul.f32 %v754, 1.442695
  %v756 = vpow.pop %v755
  %v757 = vadd.f32 %v756, 1.0
  %v758 = vrcp.pop %v757
  %v759 = vmul.f32 1.0, %v758
  %v760 = vtanh.pop %v753
  %v761 = vmul.f32 %v759, %v671
  %763 = vrot.lane.b32.xlu0 %v760, 64
  %v764 = vpop.permute.xlu0 %763
  %v766 = vmul.f32 %v759, %v764
  %768 = vrot.lane.b32.xlu0 %v766, 32
  %v769 = vpop.permute.xlu0 %768
  %v771 = vadd.f32 %v761, %v769
  %v772 = vtanh.pop %v771
  %774 = vrot.lane.b32.xlu0 %v772, 64
  %v775 = vpop.permute.xlu0 %774
  %v777 = vmul.f32 %v759, %v775
  %779 = vrot.lane.b32.xlu0 %v777, 32
  %v780 = vpop.permute.xlu0 %779
  %v781 = vsel %vm46, %v780, 0
  %783 = vmatprep.subr.mxu0 0.0
  %784 = vmatpush1.msra.mxu0 %v176
  %785 = vmatprep.subr.mxu0 0.0
  %786 = vmatpush1.msra.mxu0 %v177
  %787 = vmatprep.subr.mxu0 0.0
  %788 = vmatpush1.msra.mxu0 %v178
  %789 = vmatprep.subr.mxu0 0.0
  %790 = vmatpush1.msra.mxu0 %v179
  %791 = vmatprep.subr.mxu0 0.0
  %792 = vmatpush1.msra.mxu0 0.0
  %793 = vmatprep.subr.mxu0 0.0
  %794 = vmatpush1.msra.mxu0 0.0
  %795 = vmatprep.subr.mxu0 0.0
  %796 = vmatpush1.msra.mxu0 0.0
  %797 = vmatprep.subr.mxu0 0.0
  %798 = vmatpush1.msra.mxu0 0.0
  %799 = vmatprep.subr.mxu0 0.0
  %800 = vmatpush1.msra.mxu0 0.0
  %801 = vmatprep.subr.mxu0 0.0
  %802 = vmatpush1.msra.mxu0 0.0
  %803 = vmatprep.subr.mxu0 0.0
  %804 = vmatpush1.msra.mxu0 0.0
  %805 = vmatprep.subr.mxu0 0.0
  %806 = vmatpush1.msra.mxu0 0.0
  %807 = vmatprep.subr.mxu0 0.0
  %808 = vmatpush1.msra.mxu0 0.0
  %809 = vmatprep.subr.mxu0 0.0
  %810 = vmatpush1.msra.mxu0 0.0
  %811 = vmatprep.subr.mxu0 0.0
  %812 = vmatpush1.msra.mxu0 0.0
  %813 = vmatprep.subr.mxu0 0.0
  %814 = vmatpush1.msra.mxu0 0.0
  %815 = vmatprep.subr.mxu0 0.0
  %816 = vmatpush1.msra.mxu0 0.0
  %817 = vmatprep.subr.mxu0 0.0
  %818 = vmatpush1.msra.mxu0 0.0
  %819 = vmatprep.subr.mxu0 0.0
  %820 = vmatpush1.msra.mxu0 0.0
  %821 = vmatprep.subr.mxu0 0.0
  %822 = vmatpush1.msra.mxu0 0.0
  %823 = vmatprep.subr.mxu0 0.0
  %824 = vmatpush1.msra.mxu0 0.0
  %825 = vmatprep.subr.mxu0 0.0
  %826 = vmatpush1.msra.mxu0 0.0
  %827 = vmatprep.subr.mxu0 0.0
  %828 = vmatpush1.msra.mxu0 0.0
  %829 = vmatprep.subr.mxu0 0.0
  %830 = vmatpush1.msra.mxu0 0.0
  %831 = vmatprep.subr.mxu0 0.0
  %832 = vmatpush1.msra.mxu0 0.0
  %833 = vmatprep.subr.mxu0 0.0
  %834 = vmatpush1.msra.mxu0 0.0
  %835 = vmatprep.subr.mxu0 0.0
  %836 = vmatpush1.msra.mxu0 0.0
  %837 = vmatprep.subr.mxu0 0.0
  %838 = vmatpush1.msra.mxu0 0.0
  %839 = vmatprep.subr.mxu0 0.0
  %840 = vmatpush1.msra.mxu0 0.0
  %841 = vmatprep.subr.mxu0 0.0
  %842 = vmatpush1.msra.mxu0 0.0
  %843 = vmatprep.subr.mxu0 0.0
  %844 = vmatpush1.msra.mxu0 0.0
  %845 = vmatprep.subr.mxu0 0.0
  %846 = vmatpush1.msra.mxu0 0.0
  %847 = vmatprep.mubr.f32.mxu0 0.0
  %848 = vmatmul.mubr.f32.gmra.mrb[0].mxu0 %v781
  %v849 = vpop.f32.mrb[0].mxu0
  %v850 = vadd.f32 0.0, %v849
  %v851 = vpop.f32.mrb[0].mxu0
  %852 = vdwg.mxu0
  %v853 = vadd.f32 %v168, %v850
  %v854 = vxor.u32 %v853, 2147483648
  %v855 = vmul.f32 %v854, 1.442695
  %v856 = vpow.pop %v855
  %v857 = vadd.f32 %v856, 1.0
  %v858 = vrcp.pop %v857
  %v859 = vmul.f32 1.0, %v858
  %v860 = vtanh.pop %v853
  %v861 = vmul.f32 %v859, %v771
  %863 = vrot.lane.b32.xlu0 %v860, 64
  %v864 = vpop.permute.xlu0 %863
  %v866 = vmul.f32 %v859, %v864
  %868 = vrot.lane.b32.xlu0 %v866, 32
  %v869 = vpop.permute.xlu0 %868
  %v871 = vadd.f32 %v861, %v869
  %v872 = vtanh.pop %v871
  %874 = vrot.lane.b32.xlu0 %v872, 64
  %v875 = vpop.permute.xlu0 %874
  %v877 = vmul.f32 %v859, %v875
  %879 = vrot.lane.b32.xlu0 %v877, 32
  %v880 = vpop.permute.xlu0 %879
  %v881 = vsel %vm46, %v880, 0
  %883 = vmatprep.subr.mxu0 0.0
  %884 = vmatpush1.msra.mxu0 %v176
  %885 = vmatprep.subr.mxu0 0.0
  %886 = vmatpush1.msra.mxu0 %v177
  %887 = vmatprep.subr.mxu0 0.0
  %888 = vmatpush1.msra.mxu0 %v178
  %889 = vmatprep.subr.mxu0 0.0
  %890 = vmatpush1.msra.mxu0 %v179
  %891 = vmatprep.subr.mxu0 0.0
  %892 = vmatpush1.msra.mxu0 0.0
  %893 = vmatprep.subr.mxu0 0.0
  %894 = vmatpush1.msra.mxu0 0.0
  %895 = vmatprep.subr.mxu0 0.0
  %896 = vmatpush1.msra.mxu0 0.0
  %897 = vmatprep.subr.mxu0 0.0
  %898 = vmatpush1.msra.mxu0 0.0
  %899 = vmatprep.subr.mxu0 0.0
  %900 = vmatpush1.msra.mxu0 0.0
  %901 = vmatprep.subr.mxu0 0.0
  %902 = vmatpush1.msra.mxu0 0.0
  %903 = vmatprep.subr.mxu0 0.0
  %904 = vmatpush1.msra.mxu0 0.0
  %905 = vmatprep.subr.mxu0 0.0
  %906 = vmatpush1.msra.mxu0 0.0
  %907 = vmatprep.subr.mxu0 0.0
  %908 = vmatpush1.msra.mxu0 0.0
  %909 = vmatprep.subr.mxu0 0.0
  %910 = vmatpush1.msra.mxu0 0.0
  %911 = vmatprep.subr.mxu0 0.0
  %912 = vmatpush1.msra.mxu0 0.0
  %913 = vmatprep.subr.mxu0 0.0
  %914 = vmatpush1.msra.mxu0 0.0
  %915 = vmatprep.subr.mxu0 0.0
  %916 = vmatpush1.msra.mxu0 0.0
  %917 = vmatprep.subr.mxu0 0.0
  %918 = vmatpush1.msra.mxu0 0.0
  %919 = vmatprep.subr.mxu0 0.0
  %920 = vmatpush1.msra.mxu0 0.0
  %921 = vmatprep.subr.mxu0 0.0
  %922 = vmatpush1.msra.mxu0 0.0
  %923 = vmatprep.subr.mxu0 0.0
  %924 = vmatpush1.msra.mxu0 0.0
  %925 = vmatprep.subr.mxu0 0.0
  %926 = vmatpush1.msra.mxu0 0.0
  %927 = vmatprep.subr.mxu0 0.0
  %928 = vmatpush1.msra.mxu0 0.0
  %929 = vmatprep.subr.mxu0 0.0
  %930 = vmatpush1.msra.mxu0 0.0
  %931 = vmatprep.subr.mxu0 0.0
  %932 = vmatpush1.msra.mxu0 0.0
  %933 = vmatprep.subr.mxu0 0.0
  %934 = vmatpush1.msra.mxu0 0.0
  %935 = vmatprep.subr.mxu0 0.0
  %936 = vmatpush1.msra.mxu0 0.0
  %937 = vmatprep.subr.mxu0 0.0
  %938 = vmatpush1.msra.mxu0 0.0
  %939 = vmatprep.subr.mxu0 0.0
  %940 = vmatpush1.msra.mxu0 0.0
  %941 = vmatprep.subr.mxu0 0.0
  %942 = vmatpush1.msra.mxu0 0.0
  %943 = vmatprep.subr.mxu0 0.0
  %944 = vmatpush1.msra.mxu0 0.0
  %945 = vmatprep.subr.mxu0 0.0
  %946 = vmatpush1.msra.mxu0 0.0
  %947 = vmatprep.mubr.f32.mxu0 0.0
  %948 = vmatmul.mubr.f32.gmra.mrb[0].mxu0 %v881
  %v949 = vpop.f32.mrb[0].mxu0
  %v950 = vadd.f32 0.0, %v949
  %v951 = vpop.f32.mrb[0].mxu0
  %952 = vdwg.mxu0
  %v953 = vadd.f32 %v173, %v950
  %v954 = vxor.u32 %v953, 2147483648
  %v955 = vmul.f32 %v954, 1.442695
  %v956 = vpow.pop %v955
  %v957 = vadd.f32 %v956, 1.0
  %v958 = vrcp.pop %v957
  %v959 = vmul.f32 1.0, %v958
  %v960 = vtanh.pop %v953
  %v961 = vmul.f32 %v959, %v871
  %963 = vrot.lane.b32.xlu0 %v960, 64
  %v964 = vpop.permute.xlu0 %963
  %v966 = vmul.f32 %v959, %v964
  %968 = vrot.lane.b32.xlu0 %v966, 32
  %v969 = vpop.permute.xlu0 %968
  %v971 = vadd.f32 %v961, %v969
  %v972 = vtanh.pop %v971
  %974 = vrot.lane.b32.xlu0 %v972, 64
  %v975 = vpop.permute.xlu0 %974
  %v977 = vmul.f32 %v959, %v975
  %v978 = vlaneseq
  %v979 = vand.u32 %v978, 127
  %vm980 = vcmp.lt.s32.totalorder %v979, 16
  %983 = vrot.lane.b32.xlu0 %v977, 32
  %v984 = vpop.permute.xlu0 %983
  %v986 = vsel %vm980, %v280, %v984
  %v988 = vcombine.high %v986, %v986
  %v990 = vunpack.c.l.s4 1966171168
  %v991 = vunpack.c.0.s8 %v990
  %v992 = vlaneseq
  %v993 = vshrl.u32 %v992, 7
  %v994 = vsub.s32 %v991, %v993
  %v995 = vrot.slane %v986, %v994
  %v997 = vunpack.c.l.s4 1966171168
  %v998 = vunpack.c.0.s8 %v997
  %v999 = vlaneseq
  %v1000 = vshrl.u32 %v999, 7
  %v1001 = vsub.s32 %v998, %v1000
  %v1002 = vrot.slane %v988, %v1001
  %v1003 = vcombine.high %v995, %v995
  %v1004 = vcombine.high %v1002, %v1002
  %v1006 = vunpack.c.l.s4 1966171168
  %v1007 = vunpack.c.0.s8 %v1006
  %v1008 = vlaneseq
  %v1009 = vshrl.u32 %v1008, 7
  %v1010 = vsub.s32 %v1007, %v1009
  %v1011 = vrot.slane %v995, %v1010
  %v1013 = vunpack.c.l.s4 1966171168
  %v1014 = vunpack.c.0.s8 %v1013
  %v1015 = vlaneseq
  %v1016 = vshrl.u32 %v1015, 7
  %v1017 = vsub.s32 %v1014, %v1016
  %v1018 = vrot.slane %v1002, %v1017
  %v1020 = vunpack.c.l.s4 1966171168
  %v1021 = vunpack.c.0.s8 %v1020
  %v1022 = vlaneseq
  %v1023 = vshrl.u32 %v1022, 7
  %v1024 = vsub.s32 %v1021, %v1023
  %v1025 = vrot.slane %v1003, %v1024
  %v1027 = vunpack.c.l.s4 1966171168
  %v1028 = vunpack.c.0.s8 %v1027
  %v1029 = vlaneseq
  %v1030 = vshrl.u32 %v1029, 7
  %v1031 = vsub.s32 %v1028, %v1030
  %v1032 = vrot.slane %v1004, %v1031
  %v1033 = vcombine.high %v1011, %v1011
  %v1034 = vcombine.high %v1018, %v1018
  %v1035 = vcombine.high %v1025, %v1025
  %v1036 = vcombine.high %v1032, %v1032
  %vm1045 = vcmask 253952
  %1046 = vst.msk [vmem:[#allocation2] sm:$0x1] %vm1045, %v1011
  %1047 = vst.msk [vmem:[#allocation2 + $0x8] sm:$0x1] %vm1045, %v1025
  %1048 = vst.msk [vmem:[#allocation2 + $0x10] sm:$0x1] %vm1045, %v1033
  %1049 = vst.msk [vmem:[#allocation2 + $0x18] sm:$0x1] %vm1045, %v1035
  %1050 = vst.msk [vmem:[#allocation2 + $0x20] sm:$0x1] %vm1045, %v1018
  %1051 = vst.msk [vmem:[#allocation2 + $0x28] sm:$0x1] %vm1045, %v1032
  %1052 = vst.msk [vmem:[#allocation2 + $0x30] sm:$0x1] %vm1045, %v1034
  %1053 = vst.msk [vmem:[#allocation2 + $0x38] sm:$0x1] %vm1045, %v1036
  %v1056 = vsel %vm980, %v380, %v880
  %v1058 = vcombine.high %v1056, %v1056
  %v1060 = vunpack.c.l.s4 1966171168
  %v1061 = vunpack.c.0.s8 %v1060
  %v1062 = vlaneseq
  %v1063 = vshrl.u32 %v1062, 7
  %v1064 = vsub.s32 %v1061, %v1063
  %v1065 = vrot.slane %v1056, %v1064
  %v1067 = vunpack.c.l.s4 1966171168
  %v1068 = vunpack.c.0.s8 %v1067
  %v1069 = vlaneseq
  %v1070 = vshrl.u32 %v1069, 7
  %v1071 = vsub.s32 %v1068, %v1070
  %v1072 = vrot.slane %v1058, %v1071
  %v1073 = vcombine.high %v1065, %v1065
  %v1074 = vcombine.high %v1072, %v1072
  %v1076 = vunpack.c.l.s4 1966171168
  %v1077 = vunpack.c.0.s8 %v1076
  %v1078 = vlaneseq
  %v1079 = vshrl.u32 %v1078, 7
  %v1080 = vsub.s32 %v1077, %v1079
  %v1081 = vrot.slane %v1065, %v1080
  %v1083 = vunpack.c.l.s4 1966171168
  %v1084 = vunpack.c.0.s8 %v1083
  %v1085 = vlaneseq
  %v1086 = vshrl.u32 %v1085, 7
  %v1087 = vsub.s32 %v1084, %v1086
  %v1088 = vrot.slane %v1072, %v1087
  %v1090 = vunpack.c.l.s4 1966171168
  %v1091 = vunpack.c.0.s8 %v1090
  %v1092 = vlaneseq
  %v1093 = vshrl.u32 %v1092, 7
  %v1094 = vsub.s32 %v1091, %v1093
  %v1095 = vrot.slane %v1073, %v1094
  %v1097 = vunpack.c.l.s4 1966171168
  %v1098 = vunpack.c.0.s8 %v1097
  %v1099 = vlaneseq
  %v1100 = vshrl.u32 %v1099, 7
  %v1101 = vsub.s32 %v1098, %v1100
  %v1102 = vrot.slane %v1074, %v1101
  %v1103 = vcombine.high %v1081, %v1081
  %v1104 = vcombine.high %v1088, %v1088
  %v1105 = vcombine.high %v1095, %v1095
  %v1106 = vcombine.high %v1102, %v1102
  %1115 = vst.msk [vmem:[#allocation2 + $0x1] sm:$0x1] %vm1045, %v1081
  %1116 = vst.msk [vmem:[#allocation2 + $0x9] sm:$0x1] %vm1045, %v1095
  %1117 = vst.msk [vmem:[#allocation2 + $0x11] sm:$0x1] %vm1045, %v1103
  %1118 = vst.msk [vmem:[#allocation2 + $0x19] sm:$0x1] %vm1045, %v1105
  %1119 = vst.msk [vmem:[#allocation2 + $0x21] sm:$0x1] %vm1045, %v1088
  %1120 = vst.msk [vmem:[#allocation2 + $0x29] sm:$0x1] %vm1045, %v1102
  %1121 = vst.msk [vmem:[#allocation2 + $0x31] sm:$0x1] %vm1045, %v1104
  %1122 = vst.msk [vmem:[#allocation2 + $0x39] sm:$0x1] %vm1045, %v1106
  %v1125 = vsel %vm980, %v480, %v780
  %v1127 = vcombine.high %v1125, %v1125
  %v1129 = vunpack.c.l.s4 1966171168
  %v1130 = vunpack.c.0.s8 %v1129
  %v1131 = vlaneseq
  %v1132 = vshrl.u32 %v1131, 7
  %v1133 = vsub.s32 %v1130, %v1132
  %v1134 = vrot.slane %v1125, %v1133
  %v1136 = vunpack.c.l.s4 1966171168
  %v1137 = vunpack.c.0.s8 %v1136
  %v1138 = vlaneseq
  %v1139 = vshrl.u32 %v1138, 7
  %v1140 = vsub.s32 %v1137, %v1139
  %v1141 = vrot.slane %v1127, %v1140
  %v1142 = vcombine.high %v1134, %v1134
  %v1143 = vcombine.high %v1141, %v1141
  %v1145 = vunpack.c.l.s4 1966171168
  %v1146 = vunpack.c.0.s8 %v1145
  %v1147 = vlaneseq
  %v1148 = vshrl.u32 %v1147, 7
  %v1149 = vsub.s32 %v1146, %v1148
  %v1150 = vrot.slane %v1134, %v1149
  %v1152 = vunpack.c.l.s4 1966171168
  %v1153 = vunpack.c.0.s8 %v1152
  %v1154 = vlaneseq
  %v1155 = vshrl.u32 %v1154, 7
  %v1156 = vsub.s32 %v1153, %v1155
  %v1157 = vrot.slane %v1141, %v1156
  %v1159 = vunpack.c.l.s4 1966171168
  %v1160 = vunpack.c.0.s8 %v1159
  %v1161 = vlaneseq
  %v1162 = vshrl.u32 %v1161, 7
  %v1163 = vsub.s32 %v1160, %v1162
  %v1164 = vrot.slane %v1142, %v1163
  %v1166 = vunpack.c.l.s4 1966171168
  %v1167 = vunpack.c.0.s8 %v1166
  %v1168 = vlaneseq
  %v1169 = vshrl.u32 %v1168, 7
  %v1170 = vsub.s32 %v1167, %v1169
  %v1171 = vrot.slane %v1143, %v1170
  %v1172 = vcombine.high %v1150, %v1150
  %v1173 = vcombine.high %v1157, %v1157
  %v1174 = vcombine.high %v1164, %v1164
  %v1175 = vcombine.high %v1171, %v1171
  %1184 = vst.msk [vmem:[#allocation2 + $0x2] sm:$0x1] %vm1045, %v1150
  %1185 = vst.msk [vmem:[#allocation2 + $0xa] sm:$0x1] %vm1045, %v1164
  %1186 = vst.msk [vmem:[#allocation2 + $0x12] sm:$0x1] %vm1045, %v1172
  %1187 = vst.msk [vmem:[#allocation2 + $0x1a] sm:$0x1] %vm1045, %v1174
  %1188 = vst.msk [vmem:[#allocation2 + $0x22] sm:$0x1] %vm1045, %v1157
  %1189 = vst.msk [vmem:[#allocation2 + $0x2a] sm:$0x1] %vm1045, %v1171
  %1190 = vst.msk [vmem:[#allocation2 + $0x32] sm:$0x1] %vm1045, %v1173
  %1191 = vst.msk [vmem:[#allocation2 + $0x3a] sm:$0x1] %vm1045, %v1175
  %v1194 = vsel %vm980, %v580, %v680
  %v1196 = vcombine.high %v1194, %v1194
  %v1198 = vunpack.c.l.s4 1966171168
  %v1199 = vunpack.c.0.s8 %v1198
  %v1200 = vlaneseq
  %v1201 = vshrl.u32 %v1200, 7
  %v1202 = vsub.s32 %v1199, %v1201
  %v1203 = vrot.slane %v1194, %v1202
  %v1205 = vunpack.c.l.s4 1966171168
  %v1206 = vunpack.c.0.s8 %v1205
  %v1207 = vlaneseq
  %v1208 = vshrl.u32 %v1207, 7
  %v1209 = vsub.s32 %v1206, %v1208
  %v1210 = vrot.slane %v1196, %v1209
  %v1211 = vcombine.high %v1203, %v1203
  %v1212 = vcombine.high %v1210, %v1210
  %v1214 = vunpack.c.l.s4 1966171168
  %v1215 = vunpack.c.0.s8 %v1214
  %v1216 = vlaneseq
  %v1217 = vshrl.u32 %v1216, 7
  %v1218 = vsub.s32 %v1215, %v1217
  %v1219 = vrot.slane %v1203, %v1218
  %v1221 = vunpack.c.l.s4 1966171168
  %v1222 = vunpack.c.0.s8 %v1221
  %v1223 = vlaneseq
  %v1224 = vshrl.u32 %v1223, 7
  %v1225 = vsub.s32 %v1222, %v1224
  %v1226 = vrot.slane %v1210, %v1225
  %v1228 = vunpack.c.l.s4 1966171168
  %v1229 = vunpack.c.0.s8 %v1228
  %v1230 = vlaneseq
  %v1231 = vshrl.u32 %v1230, 7
  %v1232 = vsub.s32 %v1229, %v1231
  %v1233 = vrot.slane %v1211, %v1232
  %v1235 = vunpack.c.l.s4 1966171168
  %v1236 = vunpack.c.0.s8 %v1235
  %v1237 = vlaneseq
  %v1238 = vshrl.u32 %v1237, 7
  %v1239 = vsub.s32 %v1236, %v1238
  %v1240 = vrot.slane %v1212, %v1239
  %v1241 = vcombine.high %v1219, %v1219
  %v1242 = vcombine.high %v1226, %v1226
  %v1243 = vcombine.high %v1233, %v1233
  %v1244 = vcombine.high %v1240, %v1240
  %1253 = vst.msk [vmem:[#allocation2 + $0x3] sm:$0x1] %vm1045, %v1219
  %1254 = vst.msk [vmem:[#allocation2 + $0xb] sm:$0x1] %vm1045, %v1233
  %1255 = vst.msk [vmem:[#allocation2 + $0x13] sm:$0x1] %vm1045, %v1241
  %1256 = vst.msk [vmem:[#allocation2 + $0x1b] sm:$0x1] %vm1045, %v1243
  %1257 = vst.msk [vmem:[#allocation2 + $0x23] sm:$0x1] %vm1045, %v1226
  %1258 = vst.msk [vmem:[#allocation2 + $0x2b] sm:$0x1] %vm1045, %v1240
  %1259 = vst.msk [vmem:[#allocation2 + $0x33] sm:$0x1] %vm1045, %v1242
  %1260 = vst.msk [vmem:[#allocation2 + $0x3b] sm:$0x1] %vm1045, %v1244
  %v1261 = vsel %vm980, %v680, %v580
  %v1263 = vcombine.high %v1261, %v1261
  %v1265 = vunpack.c.l.s4 1966171168
  %v1266 = vunpack.c.0.s8 %v1265
  %v1267 = vlaneseq
  %v1268 = vshrl.u32 %v1267, 7
  %v1269 = vsub.s32 %v1266, %v1268
  %v1270 = vrot.slane %v1261, %v1269
  %v1272 = vunpack.c.l.s4 1966171168
  %v1273 = vunpack.c.0.s8 %v1272
  %v1274 = vlaneseq
  %v1275 = vshrl.u32 %v1274, 7
  %v1276 = vsub.s32 %v1273, %v1275
  %v1277 = vrot.slane %v1263, %v1276
  %v1278 = vcombine.high %v1270, %v1270
  %v1279 = vcombine.high %v1277, %v1277
  %v1281 = vunpack.c.l.s4 1966171168
  %v1282 = vunpack.c.0.s8 %v1281
  %v1283 = vlaneseq
  %v1284 = vshrl.u32 %v1283, 7
  %v1285 = vsub.s32 %v1282, %v1284
  %v1286 = vrot.slane %v1270, %v1285
  %v1288 = vunpack.c.l.s4 1966171168
  %v1289 = vunpack.c.0.s8 %v1288
  %v1290 = vlaneseq
  %v1291 = vshrl.u32 %v1290, 7
  %v1292 = vsub.s32 %v1289, %v1291
  %v1293 = vrot.slane %v1277, %v1292
  %v1295 = vunpack.c.l.s4 1966171168
  %v1296 = vunpack.c.0.s8 %v1295
  %v1297 = vlaneseq
  %v1298 = vshrl.u32 %v1297, 7
  %v1299 = vsub.s32 %v1296, %v1298
  %v1300 = vrot.slane %v1278, %v1299
  %v1302 = vunpack.c.l.s4 1966171168
  %v1303 = vunpack.c.0.s8 %v1302
  %v1304 = vlaneseq
  %v1305 = vshrl.u32 %v1304, 7
  %v1306 = vsub.s32 %v1303, %v1305
  %v1307 = vrot.slane %v1279, %v1306
  %v1308 = vcombine.high %v1286, %v1286
  %v1309 = vcombine.high %v1293, %v1293
  %v1310 = vcombine.high %v1300, %v1300
  %v1311 = vcombine.high %v1307, %v1307
  %1320 = vst.msk [vmem:[#allocation2 + $0x4] sm:$0x1] %vm1045, %v1286
  %1321 = vst.msk [vmem:[#allocation2 + $0xc] sm:$0x1] %vm1045, %v1300
  %1322 = vst.msk [vmem:[#allocation2 + $0x14] sm:$0x1] %vm1045, %v1308
  %1323 = vst.msk [vmem:[#allocation2 + $0x1c] sm:$0x1] %vm1045, %v1310
  %1324 = vst.msk [vmem:[#allocation2 + $0x24] sm:$0x1] %vm1045, %v1293
  %1325 = vst.msk [vmem:[#allocation2 + $0x2c] sm:$0x1] %vm1045, %v1307
  %1326 = vst.msk [vmem:[#allocation2 + $0x34] sm:$0x1] %vm1045, %v1309
  %1327 = vst.msk [vmem:[#allocation2 + $0x3c] sm:$0x1] %vm1045, %v1311
  %v1328 = vsel %vm980, %v780, %v480
  %v1330 = vcombine.high %v1328, %v1328
  %v1332 = vunpack.c.l.s4 1966171168
  %v1333 = vunpack.c.0.s8 %v1332
  %v1334 = vlaneseq
  %v1335 = vshrl.u32 %v1334, 7
  %v1336 = vsub.s32 %v1333, %v1335
  %v1337 = vrot.slane %v1328, %v1336
  %v1339 = vunpack.c.l.s4 1966171168
  %v1340 = vunpack.c.0.s8 %v1339
  %v1341 = vlaneseq
  %v1342 = vshrl.u32 %v1341, 7
  %v1343 = vsub.s32 %v1340, %v1342
  %v1344 = vrot.slane %v1330, %v1343
  %v1345 = vcombine.high %v1337, %v1337
  %v1346 = vcombine.high %v1344, %v1344
  %v1348 = vunpack.c.l.s4 1966171168
  %v1349 = vunpack.c.0.s8 %v1348
  %v1350 = vlaneseq
  %v1351 = vshrl.u32 %v1350, 7
  %v1352 = vsub.s32 %v1349, %v1351
  %v1353 = vrot.slane %v1337, %v1352
  %v1355 = vunpack.c.l.s4 1966171168
  %v1356 = vunpack.c.0.s8 %v1355
  %v1357 = vlaneseq
  %v1358 = vshrl.u32 %v1357, 7
  %v1359 = vsub.s32 %v1356, %v1358
  %v1360 = vrot.slane %v1344, %v1359
  %v1362 = vunpack.c.l.s4 1966171168
  %v1363 = vunpack.c.0.s8 %v1362
  %v1364 = vlaneseq
  %v1365 = vshrl.u32 %v1364, 7
  %v1366 = vsub.s32 %v1363, %v1365
  %v1367 = vrot.slane %v1345, %v1366
  %v1369 = vunpack.c.l.s4 1966171168
  %v1370 = vunpack.c.0.s8 %v1369
  %v1371 = vlaneseq
  %v1372 = vshrl.u32 %v1371, 7
  %v1373 = vsub.s32 %v1370, %v1372
  %v1374 = vrot.slane %v1346, %v1373
  %v1375 = vcombine.high %v1353, %v1353
  %v1376 = vcombine.high %v1360, %v1360
  %v1377 = vcombine.high %v1367, %v1367
  %v1378 = vcombine.high %v1374, %v1374
  %1387 = vst.msk [vmem:[#allocation2 + $0x5] sm:$0x1] %vm1045, %v1353
  %1388 = vst.msk [vmem:[#allocation2 + $0xd] sm:$0x1] %vm1045, %v1367
  %1389 = vst.msk [vmem:[#allocation2 + $0x15] sm:$0x1] %vm1045, %v1375
  %1390 = vst.msk [vmem:[#allocation2 + $0x1d] sm:$0x1] %vm1045, %v1377
  %1391 = vst.msk [vmem:[#allocation2 + $0x25] sm:$0x1] %vm1045, %v1360
  %1392 = vst.msk [vmem:[#allocation2 + $0x2d] sm:$0x1] %vm1045, %v1374
  %1393 = vst.msk [vmem:[#allocation2 + $0x35] sm:$0x1] %vm1045, %v1376
  %1394 = vst.msk [vmem:[#allocation2 + $0x3d] sm:$0x1] %vm1045, %v1378
  %v1395 = vsel %vm980, %v880, %v380
  %v1397 = vcombine.high %v1395, %v1395
  %v1399 = vunpack.c.l.s4 1966171168
  %v1400 = vunpack.c.0.s8 %v1399
  %v1401 = vlaneseq
  %v1402 = vshrl.u32 %v1401, 7
  %v1403 = vsub.s32 %v1400, %v1402
  %v1404 = vrot.slane %v1395, %v1403
  %v1406 = vunpack.c.l.s4 1966171168
  %v1407 = vunpack.c.0.s8 %v1406
  %v1408 = vlaneseq
  %v1409 = vshrl.u32 %v1408, 7
  %v1410 = vsub.s32 %v1407, %v1409
  %v1411 = vrot.slane %v1397, %v1410
  %v1412 = vcombine.high %v1404, %v1404
  %v1413 = vcombine.high %v1411, %v1411
  %v1415 = vunpack.c.l.s4 1966171168
  %v1416 = vunpack.c.0.s8 %v1415
  %v1417 = vlaneseq
  %v1418 = vshrl.u32 %v1417, 7
  %v1419 = vsub.s32 %v1416, %v1418
  %v1420 = vrot.slane %v1404, %v1419
  %v1422 = vunpack.c.l.s4 1966171168
  %v1423 = vunpack.c.0.s8 %v1422
  %v1424 = vlaneseq
  %v1425 = vshrl.u32 %v1424, 7
  %v1426 = vsub.s32 %v1423, %v1425
  %v1427 = vrot.slane %v1411, %v1426
  %v1429 = vunpack.c.l.s4 1966171168
  %v1430 = vunpack.c.0.s8 %v1429
  %v1431 = vlaneseq
  %v1432 = vshrl.u32 %v1431, 7
  %v1433 = vsub.s32 %v1430, %v1432
  %v1434 = vrot.slane %v1412, %v1433
  %v1436 = vunpack.c.l.s4 1966171168
  %v1437 = vunpack.c.0.s8 %v1436
  %v1438 = vlaneseq
  %v1439 = vshrl.u32 %v1438, 7
  %v1440 = vsub.s32 %v1437, %v1439
  %v1441 = vrot.slane %v1413, %v1440
  %v1442 = vcombine.high %v1420, %v1420
  %v1443 = vcombine.high %v1427, %v1427
  %v1444 = vcombine.high %v1434, %v1434
  %v1445 = vcombine.high %v1441, %v1441
  %1454 = vst.msk [vmem:[#allocation2 + $0x6] sm:$0x1] %vm1045, %v1420
  %1455 = vst.msk [vmem:[#allocation2 + $0xe] sm:$0x1] %vm1045, %v1434
  %1456 = vst.msk [vmem:[#allocation2 + $0x16] sm:$0x1] %vm1045, %v1442
  %1457 = vst.msk [vmem:[#allocation2 + $0x1e] sm:$0x1] %vm1045, %v1444
  %1458 = vst.msk [vmem:[#allocation2 + $0x26] sm:$0x1] %vm1045, %v1427
  %1459 = vst.msk [vmem:[#allocation2 + $0x2e] sm:$0x1] %vm1045, %v1441
  %1460 = vst.msk [vmem:[#allocation2 + $0x36] sm:$0x1] %vm1045, %v1443
  %1461 = vst.msk [vmem:[#allocation2 + $0x3e] sm:$0x1] %vm1045, %v1445
  %v1462 = vsel %vm980, %v984, %v280
  %v1464 = vcombine.high %v1462, %v1462
  %v1466 = vunpack.c.l.s4 1966171168
  %v1467 = vunpack.c.0.s8 %v1466
  %v1468 = vlaneseq
  %v1469 = vshrl.u32 %v1468, 7
  %v1470 = vsub.s32 %v1467, %v1469
  %v1471 = vrot.slane %v1462, %v1470
  %v1473 = vunpack.c.l.s4 1966171168
  %v1474 = vunpack.c.0.s8 %v1473
  %v1475 = vlaneseq
  %v1476 = vshrl.u32 %v1475, 7
  %v1477 = vsub.s32 %v1474, %v1476
  %v1478 = vrot.slane %v1464, %v1477
  %v1479 = vcombine.high %v1471, %v1471
  %v1480 = vcombine.high %v1478, %v1478
  %v1482 = vunpack.c.l.s4 1966171168
  %v1483 = vunpack.c.0.s8 %v1482
  %v1484 = vlaneseq
  %v1485 = vshrl.u32 %v1484, 7
  %v1486 = vsub.s32 %v1483, %v1485
  %v1487 = vrot.slane %v1471, %v1486
  %v1489 = vunpack.c.l.s4 1966171168
  %v1490 = vunpack.c.0.s8 %v1489
  %v1491 = vlaneseq
  %v1492 = vshrl.u32 %v1491, 7
  %v1493 = vsub.s32 %v1490, %v1492
  %v1494 = vrot.slane %v1478, %v1493
  %v1496 = vunpack.c.l.s4 1966171168
  %v1497 = vunpack.c.0.s8 %v1496
  %v1498 = vlaneseq
  %v1499 = vshrl.u32 %v1498, 7
  %v1500 = vsub.s32 %v1497, %v1499
  %v1501 = vrot.slane %v1479, %v1500
  %v1503 = vunpack.c.l.s4 1966171168
  %v1504 = vunpack.c.0.s8 %v1503
  %v1505 = vlaneseq
  %v1506 = vshrl.u32 %v1505, 7
  %v1507 = vsub.s32 %v1504, %v1506
  %v1508 = vrot.slane %v1480, %v1507
  %v1509 = vcombine.high %v1487, %v1487
  %v1510 = vcombine.high %v1494, %v1494
  %v1511 = vcombine.high %v1501, %v1501
  %v1512 = vcombine.high %v1508, %v1508
  %1521 = vst.msk [vmem:[#allocation2 + $0x7] sm:$0x1] %vm1045, %v1487
  %1522 = vst.msk [vmem:[#allocation2 + $0xf] sm:$0x1] %vm1045, %v1501
  %1523 = vst.msk [vmem:[#allocation2 + $0x17] sm:$0x1] %vm1045, %v1509
  %1524 = vst.msk [vmem:[#allocation2 + $0x1f] sm:$0x1] %vm1045, %v1511
  %1525 = vst.msk [vmem:[#allocation2 + $0x27] sm:$0x1] %vm1045, %v1494
  %1526 = vst.msk [vmem:[#allocation2 + $0x2f] sm:$0x1] %vm1045, %v1508
  %1527 = vst.msk [vmem:[#allocation2 + $0x37] sm:$0x1] %vm1045, %v1510
  %1528 = vst.msk [vmem:[#allocation2 + $0x3f] sm:$0x1] %vm1045, %v1512
  %v1529 = vld [vmem:[#allocation2] sm:$0xff]
  %v1530 = vld [vmem:[#allocation2 + $0x8] sm:$0xff]
  %v1531 = vld [vmem:[#allocation2 + $0x10] sm:$0xff]
  %v1532 = vld [vmem:[#allocation2 + $0x18] sm:$0xff]
  %v1533 = vld [vmem:[#allocation2 + $0x20] sm:$0xff]
  %v1534 = vld [vmem:[#allocation2 + $0x28] sm:$0xff]
  %v1535 = vld [vmem:[#allocation2 + $0x30] sm:$0xff]
  %v1536 = vld [vmem:[#allocation2 + $0x38] sm:$0xff]
  %v1537 = vld [vmem:[%s3] sm:$0xff]
  %v1538 = vld [vmem:[%s3 + $0x8] sm:$0xff]
  %v1539 = vld [vmem:[%s3 + $0x10] sm:$0xff]
  %v1540 = vld [vmem:[%s3 + $0x18] sm:$0xff]
  %v1541 = vld [vmem:[%s3 + $0x20] sm:$0xff]
  %v1542 = vld [vmem:[%s3 + $0x28] sm:$0xff]
  %v1543 = vld [vmem:[%s3 + $0x30] sm:$0xff]
  %v1544 = vld [vmem:[%s3 + $0x38] sm:$0xff]
  %v1546 = vsel %vm46, %v1529, 0
  %v1549 = vsel %vm46, %v1530, 0
  %v1552 = vsel %vm46, %v1531, 0
  %v1555 = vsel %vm46, %v1532, 0
  %v1558 = vsel %vm46, %v1533, 0
  %v1561 = vsel %vm46, %v1534, 0
  %v1564 = vsel %vm46, %v1535, 0
  %v1567 = vsel %vm46, %v1536, 0
  %1569 = vmatprep.subr.mxu0 %v1538
  %1570 = vmatpush1.msra.mxu0 %v1537
  %1571 = vmatprep.subr.mxu0 %v1540
  %1572 = vmatpush1.msra.mxu0 %v1539
  %1573 = vmatprep.subr.mxu0 %v1542
  %1574 = vmatpush1.msra.mxu0 %v1541
  %1575 = vmatprep.subr.mxu0 %v1544
  %1576 = vmatpush1.msra.mxu0 %v1543
  %1577 = vmatprep.subr.mxu0 0.0
  %1578 = vmatpush1.msra.mxu0 0.0
  %1579 = vmatprep.subr.mxu0 0.0
  %1580 = vmatpush1.msra.mxu0 0.0
  %1581 = vmatprep.subr.mxu0 0.0
  %1582 = vmatpush1.msra.mxu0 0.0
  %1583 = vmatprep.subr.mxu0 0.0
  %1584 = vmatpush1.msra.mxu0 0.0
  %1585 = vmatprep.subr.mxu0 0.0
  %1586 = vmatpush1.msra.mxu0 0.0
  %1587 = vmatprep.subr.mxu0 0.0
  %1588 = vmatpush1.msra.mxu0 0.0
  %1589 = vmatprep.subr.mxu0 0.0
  %1590 = vmatpush1.msra.mxu0 0.0
  %1591 = vmatprep.subr.mxu0 0.0
  %1592 = vmatpush1.msra.mxu0 0.0
  %1593 = vmatprep.subr.mxu0 0.0
  %1594 = vmatpush1.msra.mxu0 0.0
  %1595 = vmatprep.subr.mxu0 0.0
  %1596 = vmatpush1.msra.mxu0 0.0
  %1597 = vmatprep.subr.mxu0 0.0
  %1598 = vmatpush1.msra.mxu0 0.0
  %1599 = vmatprep.subr.mxu0 0.0
  %1600 = vmatpush1.msra.mxu0 0.0
  %1601 = vmatprep.subr.mxu0 0.0
  %1602 = vmatpush1.msra.mxu0 0.0
  %1603 = vmatprep.subr.mxu0 0.0
  %1604 = vmatpush1.msra.mxu0 0.0
  %1605 = vmatprep.subr.mxu0 0.0
  %1606 = vmatpush1.msra.mxu0 0.0
  %1607 = vmatprep.subr.mxu0 0.0
  %1608 = vmatpush1.msra.mxu0 0.0
  %1609 = vmatprep.subr.mxu0 0.0
  %1610 = vmatpush1.msra.mxu0 0.0
  %1611 = vmatprep.subr.mxu0 0.0
  %1612 = vmatpush1.msra.mxu0 0.0
  %1613 = vmatprep.subr.mxu0 0.0
  %1614 = vmatpush1.msra.mxu0 0.0
  %1615 = vmatprep.subr.mxu0 0.0
  %1616 = vmatpush1.msra.mxu0 0.0
  %1617 = vmatprep.subr.mxu0 0.0
  %1618 = vmatpush1.msra.mxu0 0.0
  %1619 = vmatprep.subr.mxu0 0.0
  %1620 = vmatpush1.msra.mxu0 0.0
  %1621 = vmatprep.subr.mxu0 0.0
  %1622 = vmatpush1.msra.mxu0 0.0
  %1623 = vmatprep.subr.mxu0 0.0
  %1624 = vmatpush1.msra.mxu0 0.0
  %1625 = vmatprep.subr.mxu0 0.0
  %1626 = vmatpush1.msra.mxu0 0.0
  %1627 = vmatprep.subr.mxu0 0.0
  %1628 = vmatpush1.msra.mxu0 0.0
  %1629 = vmatprep.subr.mxu0 0.0
  %1630 = vmatpush1.msra.mxu0 0.0
  %1631 = vmatprep.subr.mxu0 0.0
  %1632 = vmatpush1.msra.mxu0 0.0
  %1633 = vmatprep.mubr.f32.mxu0 0.0
  %1634 = vmatmul.mubr.f32.gmra.mrb[0].mxu0 %v1546
  %v1635 = vpop.f32.mrb[0].mxu0
  %v1636 = vadd.f32 0.0, %v1635
  %v1637 = vpop.f32.mrb[0].mxu0
  %v1638 = vadd.f32 0.0, %v1637
  %1639 = vmatprep.mubr.f32.mxu0 0.0
  %1640 = vmatmul.mubr.f32.gmra.mrb[0].mxu0 %v1549
  %v1641 = vpop.f32.mrb[0].mxu0
  %v1642 = vadd.f32 0.0, %v1641
  %v1643 = vpop.f32.mrb[0].mxu0
  %v1644 = vadd.f32 0.0, %v1643
  %1645 = vmatprep.mubr.f32.mxu0 0.0
  %1646 = vmatmul.mubr.f32.gmra.mrb[0].mxu0 %v1552
  %v1647 = vpop.f32.mrb[0].mxu0
  %v1648 = vadd.f32 0.0, %v1647
  %v1649 = vpop.f32.mrb[0].mxu0
  %v1650 = vadd.f32 0.0, %v1649
  %1651 = vmatprep.mubr.f32.mxu0 0.0
  %1652 = vmatmul.mubr.f32.gmra.mrb[0].mxu0 %v1555
  %v1653 = vpop.f32.mrb[0].mxu0
  %v1654 = vadd.f32 0.0, %v1653
  %v1655 = vpop.f32.mrb[0].mxu0
  %v1656 = vadd.f32 0.0, %v1655
  %1657 = vmatprep.mubr.f32.mxu0 0.0
  %1658 = vmatmul.mubr.f32.gmra.mrb[0].mxu0 %v1558
  %v1659 = vpop.f32.mrb[0].mxu0
  %v1660 = vadd.f32 0.0, %v1659
  %v1661 = vpop.f32.mrb[0].mxu0
  %v1662 = vadd.f32 0.0, %v1661
  %1663 = vmatprep.mubr.f32.mxu0 0.0
  %1664 = vmatmul.mubr.f32.gmra.mrb[0].mxu0 %v1561
  %v1665 = vpop.f32.mrb[0].mxu0
  %v1666 = vadd.f32 0.0, %v1665
  %v1667 = vpop.f32.mrb[0].mxu0
  %v1668 = vadd.f32 0.0, %v1667
  %1669 = vmatprep.mubr.f32.mxu0 0.0
  %1670 = vmatmul.mubr.f32.gmra.mrb[0].mxu0 %v1564
  %v1671 = vpop.f32.mrb[0].mxu0
  %v1672 = vadd.f32 0.0, %v1671
  %v1673 = vpop.f32.mrb[0].mxu0
  %v1674 = vadd.f32 0.0, %v1673
  %1675 = vmatprep.mubr.f32.mxu0 0.0
  %1676 = vmatmul.mubr.f32.gmra.mrb[0].mxu0 %v1567
  %v1677 = vpop.f32.mrb[0].mxu0
  %v1678 = vadd.f32 0.0, %v1677
  %v1679 = vpop.f32.mrb[0].mxu0
  %v1680 = vadd.f32 0.0, %v1679
  %1681 = vdwg.mxu0
  %1683 = vrot.lane.b32.xlu0 %v1636, 80
  %v1684 = vpop.permute.xlu0 %1683
  %vm1685 = vcmask 130048
  %v1686 = vsel %vm1685, %v1636, 0
  %v1688 = vsel %vm1685, %v1684, 0
  %1690 = vmatprep.subr.mxu0 0.0
  %1691 = vmatpush1.xpose.msra.mxu0 %v1688
  %1692 = vmatprep.subr.mxu0 0.0
  %1693 = vmatpush1.xpose.msra.mxu0 0.0
  %1694 = vmatprep.subr.mxu0 0.0
  %1695 = vmatpush1.xpose.msra.mxu0 0.0
  %1696 = vmatprep.subr.mxu0 0.0
  %1697 = vmatpush1.xpose.msra.mxu0 0.0
  %1698 = vmatprep.subr.mxu0 0.0
  %1699 = vmatpush1.xpose.msra.mxu0 0.0
  %1700 = vmatprep.subr.mxu0 0.0
  %1701 = vmatpush1.xpose.msra.mxu0 0.0
  %1702 = vmatprep.subr.mxu0 0.0
  %1703 = vmatpush1.xpose.msra.mxu0 0.0
  %1704 = vmatprep.subr.mxu0 0.0
  %1705 = vmatpush1.xpose.msra.mxu0 0.0
  %1706 = vmatprep.subr.mxu0 0.0
  %1707 = vmatpush1.xpose.msra.mxu0 0.0
  %1708 = vmatprep.subr.mxu0 0.0
  %1709 = vmatpush1.xpose.msra.mxu0 0.0
  %1710 = vmatprep.subr.mxu0 0.0
  %1711 = vmatpush1.xpose.msra.mxu0 0.0
  %1712 = vmatprep.subr.mxu0 0.0
  %1713 = vmatpush1.xpose.msra.mxu0 0.0
  %1714 = vmatprep.subr.mxu0 0.0
  %1715 = vmatpush1.xpose.msra.mxu0 0.0
  %1716 = vmatprep.subr.mxu0 0.0
  %1717 = vmatpush1.xpose.msra.mxu0 0.0
  %1718 = vmatprep.subr.mxu0 0.0
  %1719 = vmatpush1.xpose.msra.mxu0 0.0
  %1720 = vmatprep.subr.mxu0 0.0
  %1721 = vmatpush1.xpose.msra.mxu0 0.0
  %1722 = vmatprep.subr.mxu0 0.0
  %1723 = vmatpush1.xpose.msra.mxu0 0.0
  %1724 = vmatprep.subr.mxu0 0.0
  %1725 = vmatpush1.xpose.msra.mxu0 0.0
  %1726 = vmatprep.subr.mxu0 0.0
  %1727 = vmatpush1.xpose.msra.mxu0 0.0
  %1728 = vmatprep.subr.mxu0 0.0
  %1729 = vmatpush1.xpose.msra.mxu0 0.0
  %1730 = vmatprep.subr.mxu0 0.0
  %1731 = vmatpush1.xpose.msra.mxu0 0.0
  %1732 = vmatprep.subr.mxu0 0.0
  %1733 = vmatpush1.xpose.msra.mxu0 0.0
  %1734 = vmatprep.subr.mxu0 0.0
  %1735 = vmatpush1.xpose.msra.mxu0 0.0
  %1736 = vmatprep.subr.mxu0 0.0
  %1737 = vmatpush1.xpose.msra.mxu0 0.0
  %1738 = vmatprep.subr.mxu0 0.0
  %1739 = vmatpush1.xpose.msra.mxu0 0.0
  %1740 = vmatprep.subr.mxu0 0.0
  %1741 = vmatpush1.xpose.msra.mxu0 0.0
  %1742 = vmatprep.subr.mxu0 0.0
  %1743 = vmatpush1.xpose.msra.mxu0 0.0
  %1744 = vmatprep.subr.mxu0 0.0
  %1745 = vmatpush1.xpose.msra.mxu0 0.0
  %1746 = vmatprep.subr.mxu0 0.0
  %1747 = vmatpush1.xpose.msra.mxu0 0.0
  %1748 = vmatprep.subr.mxu0 0.0
  %1749 = vmatpush1.xpose.msra.mxu0 0.0
  %1750 = vmatprep.subr.mxu0 0.0
  %1751 = vmatpush1.xpose.msra.mxu0 0.0
  %1752 = vmatprep.subr.mxu0 0.0
  %1753 = vmatpush1.xpose.msra.mxu0 0.0
  %1754 = vmatprep.mubr.f32.mxu0 0.0
  %1755 = vmatmul.mubr.f32.gmra.mrb[0].mxu0 %v1686
  %v1756 = vpop.f32.mrb[0].mxu0
  %v1757 = vadd.f32 0.0, %v1756
  %v1758 = vpop.f32.mrb[0].mxu0
  %1759 = vdwg.mxu0
  %1761 = vrot.lane.b32.xlu0 %v1642, 80
  %v1762 = vpop.permute.xlu0 %1761
  %v1763 = vsel %vm1685, %v1642, 0
  %v1765 = vsel %vm1685, %v1762, 0
  %1767 = vmatprep.subr.mxu0 0.0
  %1768 = vmatpush1.xpose.msra.mxu0 %v1765
  %1769 = vmatprep.subr.mxu0 0.0
  %1770 = vmatpush1.xpose.msra.mxu0 0.0
  %1771 = vmatprep.subr.mxu0 0.0
  %1772 = vmatpush1.xpose.msra.mxu0 0.0
  %1773 = vmatprep.subr.mxu0 0.0
  %1774 = vmatpush1.xpose.msra.mxu0 0.0
  %1775 = vmatprep.subr.mxu0 0.0
  %1776 = vmatpush1.xpose.msra.mxu0 0.0
  %1777 = vmatprep.subr.mxu0 0.0
  %1778 = vmatpush1.xpose.msra.mxu0 0.0
  %1779 = vmatprep.subr.mxu0 0.0
  %1780 = vmatpush1.xpose.msra.mxu0 0.0
  %1781 = vmatprep.subr.mxu0 0.0
  %1782 = vmatpush1.xpose.msra.mxu0 0.0
  %1783 = vmatprep.subr.mxu0 0.0
  %1784 = vmatpush1.xpose.msra.mxu0 0.0
  %1785 = vmatprep.subr.mxu0 0.0
  %1786 = vmatpush1.xpose.msra.mxu0 0.0
  %1787 = vmatprep.subr.mxu0 0.0
  %1788 = vmatpush1.xpose.msra.mxu0 0.0
  %1789 = vmatprep.subr.mxu0 0.0
  %1790 = vmatpush1.xpose.msra.mxu0 0.0
  %1791 = vmatprep.subr.mxu0 0.0
  %1792 = vmatpush1.xpose.msra.mxu0 0.0
  %1793 = vmatprep.subr.mxu0 0.0
  %1794 = vmatpush1.xpose.msra.mxu0 0.0
  %1795 = vmatprep.subr.mxu0 0.0
  %1796 = vmatpush1.xpose.msra.mxu0 0.0
  %1797 = vmatprep.subr.mxu0 0.0
  %1798 = vmatpush1.xpose.msra.mxu0 0.0
  %1799 = vmatprep.subr.mxu0 0.0
  %1800 = vmatpush1.xpose.msra.mxu0 0.0
  %1801 = vmatprep.subr.mxu0 0.0
  %1802 = vmatpush1.xpose.msra.mxu0 0.0
  %1803 = vmatprep.subr.mxu0 0.0
  %1804 = vmatpush1.xpose.msra.mxu0 0.0
  %1805 = vmatprep.subr.mxu0 0.0
  %1806 = vmatpush1.xpose.msra.mxu0 0.0
  %1807 = vmatprep.subr.mxu0 0.0
  %1808 = vmatpush1.xpose.msra.mxu0 0.0
  %1809 = vmatprep.subr.mxu0 0.0
  %1810 = vmatpush1.xpose.msra.mxu0 0.0
  %1811 = vmatprep.subr.mxu0 0.0
  %1812 = vmatpush1.xpose.msra.mxu0 0.0
  %1813 = vmatprep.subr.mxu0 0.0
  %1814 = vmatpush1.xpose.msra.mxu0 0.0
  %1815 = vmatprep.subr.mxu0 0.0
  %1816 = vmatpush1.xpose.msra.mxu0 0.0
  %1817 = vmatprep.subr.mxu0 0.0
  %1818 = vmatpush1.xpose.msra.mxu0 0.0
  %1819 = vmatprep.subr.mxu0 0.0
  %1820 = vmatpush1.xpose.msra.mxu0 0.0
  %1821 = vmatprep.subr.mxu0 0.0
  %1822 = vmatpush1.xpose.msra.mxu0 0.0
  %1823 = vmatprep.subr.mxu0 0.0
  %1824 = vmatpush1.xpose.msra.mxu0 0.0
  %1825 = vmatprep.subr.mxu0 0.0
  %1826 = vmatpush1.xpose.msra.mxu0 0.0
  %1827 = vmatprep.subr.mxu0 0.0
  %1828 = vmatpush1.xpose.msra.mxu0 0.0
  %1829 = vmatprep.subr.mxu0 0.0
  %1830 = vmatpush1.xpose.msra.mxu0 0.0
  %1831 = vmatprep.mubr.f32.mxu0 0.0
  %1832 = vmatmul.mubr.f32.gmra.mrb[0].mxu0 %v1763
  %v1833 = vpop.f32.mrb[0].mxu0
  %v1834 = vadd.f32 0.0, %v1833
  %v1835 = vpop.f32.mrb[0].mxu0
  %1836 = vdwg.mxu0
  %1838 = vrot.lane.b32.xlu0 %v1648, 80
  %v1839 = vpop.permute.xlu0 %1838
  %v1840 = vsel %vm1685, %v1648, 0
  %v1842 = vsel %vm1685, %v1839, 0
  %1844 = vmatprep.subr.mxu0 0.0
  %1845 = vmatpush1.xpose.msra.mxu0 %v1842
  %1846 = vmatprep.subr.mxu0 0.0
  %1847 = vmatpush1.xpose.msra.mxu0 0.0
  %1848 = vmatprep.subr.mxu0 0.0
  %1849 = vmatpush1.xpose.msra.mxu0 0.0
  %1850 = vmatprep.subr.mxu0 0.0
  %1851 = vmatpush1.xpose.msra.mxu0 0.0
  %1852 = vmatprep.subr.mxu0 0.0
  %1853 = vmatpush1.xpose.msra.mxu0 0.0
  %1854 = vmatprep.subr.mxu0 0.0
  %1855 = vmatpush1.xpose.msra.mxu0 0.0
  %1856 = vmatprep.subr.mxu0 0.0
  %1857 = vmatpush1.xpose.msra.mxu0 0.0
  %1858 = vmatprep.subr.mxu0 0.0
  %1859 = vmatpush1.xpose.msra.mxu0 0.0
  %1860 = vmatprep.subr.mxu0 0.0
  %1861 = vmatpush1.xpose.msra.mxu0 0.0
  %1862 = vmatprep.subr.mxu0 0.0
  %1863 = vmatpush1.xpose.msra.mxu0 0.0
  %1864 = vmatprep.subr.mxu0 0.0
  %1865 = vmatpush1.xpose.msra.mxu0 0.0
  %1866 = vmatprep.subr.mxu0 0.0
  %1867 = vmatpush1.xpose.msra.mxu0 0.0
  %1868 = vmatprep.subr.mxu0 0.0
  %1869 = vmatpush1.xpose.msra.mxu0 0.0
  %1870 = vmatprep.subr.mxu0 0.0
  %1871 = vmatpush1.xpose.msra.mxu0 0.0
  %1872 = vmatprep.subr.mxu0 0.0
  %1873 = vmatpush1.xpose.msra.mxu0 0.0
  %1874 = vmatprep.subr.mxu0 0.0
  %1875 = vmatpush1.xpose.msra.mxu0 0.0
  %1876 = vmatprep.subr.mxu0 0.0
  %1877 = vmatpush1.xpose.msra.mxu0 0.0
  %1878 = vmatprep.subr.mxu0 0.0
  %1879 = vmatpush1.xpose.msra.mxu0 0.0
  %1880 = vmatprep.subr.mxu0 0.0
  %1881 = vmatpush1.xpose.msra.mxu0 0.0
  %1882 = vmatprep.subr.mxu0 0.0
  %1883 = vmatpush1.xpose.msra.mxu0 0.0
  %1884 = vmatprep.subr.mxu0 0.0
  %1885 = vmatpush1.xpose.msra.mxu0 0.0
  %1886 = vmatprep.subr.mxu0 0.0
  %1887 = vmatpush1.xpose.msra.mxu0 0.0
  %1888 = vmatprep.subr.mxu0 0.0
  %1889 = vmatpush1.xpose.msra.mxu0 0.0
  %1890 = vmatprep.subr.mxu0 0.0
  %1891 = vmatpush1.xpose.msra.mxu0 0.0
  %1892 = vmatprep.subr.mxu0 0.0
  %1893 = vmatpush1.xpose.msra.mxu0 0.0
  %1894 = vmatprep.subr.mxu0 0.0
  %1895 = vmatpush1.xpose.msra.mxu0 0.0
  %1896 = vmatprep.subr.mxu0 0.0
  %1897 = vmatpush1.xpose.msra.mxu0 0.0
  %1898 = vmatprep.subr.mxu0 0.0
  %1899 = vmatpush1.xpose.msra.mxu0 0.0
  %1900 = vmatprep.subr.mxu0 0.0
  %1901 = vmatpush1.xpose.msra.mxu0 0.0
  %1902 = vmatprep.subr.mxu0 0.0
  %1903 = vmatpush1.xpose.msra.mxu0 0.0
  %1904 = vmatprep.subr.mxu0 0.0
  %1905 = vmatpush1.xpose.msra.mxu0 0.0
  %1906 = vmatprep.subr.mxu0 0.0
  %1907 = vmatpush1.xpose.msra.mxu0 0.0
  %1908 = vmatprep.mubr.f32.mxu0 0.0
  %1909 = vmatmul.mubr.f32.gmra.mrb[0].mxu0 %v1840
  %v1910 = vpop.f32.mrb[0].mxu0
  %v1911 = vadd.f32 0.0, %v1910
  %v1912 = vpop.f32.mrb[0].mxu0
  %1913 = vdwg.mxu0
  %1915 = vrot.lane.b32.xlu0 %v1654, 80
  %v1916 = vpop.permute.xlu0 %1915
  %v1917 = vsel %vm1685, %v1654, 0
  %v1919 = vsel %vm1685, %v1916, 0
  %1921 = vmatprep.subr.mxu0 0.0
  %1922 = vmatpush1.xpose.msra.mxu0 %v1919
  %1923 = vmatprep.subr.mxu0 0.0
  %1924 = vmatpush1.xpose.msra.mxu0 0.0
  %1925 = vmatprep.subr.mxu0 0.0
  %1926 = vmatpush1.xpose.msra.mxu0 0.0
  %1927 = vmatprep.subr.mxu0 0.0
  %1928 = vmatpush1.xpose.msra.mxu0 0.0
  %1929 = vmatprep.subr.mxu0 0.0
  %1930 = vmatpush1.xpose.msra.mxu0 0.0
  %1931 = vmatprep.subr.mxu0 0.0
  %1932 = vmatpush1.xpose.msra.mxu0 0.0
  %1933 = vmatprep.subr.mxu0 0.0
  %1934 = vmatpush1.xpose.msra.mxu0 0.0
  %1935 = vmatprep.subr.mxu0 0.0
  %1936 = vmatpush1.xpose.msra.mxu0 0.0
  %1937 = vmatprep.subr.mxu0 0.0
  %1938 = vmatpush1.xpose.msra.mxu0 0.0
  %1939 = vmatprep.subr.mxu0 0.0
  %1940 = vmatpush1.xpose.msra.mxu0 0.0
  %1941 = vmatprep.subr.mxu0 0.0
  %1942 = vmatpush1.xpose.msra.mxu0 0.0
  %1943 = vmatprep.subr.mxu0 0.0
  %1944 = vmatpush1.xpose.msra.mxu0 0.0
  %1945 = vmatprep.subr.mxu0 0.0
  %1946 = vmatpush1.xpose.msra.mxu0 0.0
  %1947 = vmatprep.subr.mxu0 0.0
  %1948 = vmatpush1.xpose.msra.mxu0 0.0
  %1949 = vmatprep.subr.mxu0 0.0
  %1950 = vmatpush1.xpose.msra.mxu0 0.0
  %1951 = vmatprep.subr.mxu0 0.0
  %1952 = vmatpush1.xpose.msra.mxu0 0.0
  %1953 = vmatprep.subr.mxu0 0.0
  %1954 = vmatpush1.xpose.msra.mxu0 0.0
  %1955 = vmatprep.subr.mxu0 0.0
  %1956 = vmatpush1.xpose.msra.mxu0 0.0
  %1957 = vmatprep.subr.mxu0 0.0
  %1958 = vmatpush1.xpose.msra.mxu0 0.0
  %1959 = vmatprep.subr.mxu0 0.0
  %1960 = vmatpush1.xpose.msra.mxu0 0.0
  %1961 = vmatprep.subr.mxu0 0.0
  %1962 = vmatpush1.xpose.msra.mxu0 0.0
  %1963 = vmatprep.subr.mxu0 0.0
  %1964 = vmatpush1.xpose.msra.mxu0 0.0
  %1965 = vmatprep.subr.mxu0 0.0
  %1966 = vmatpush1.xpose.msra.mxu0 0.0
  %1967 = vmatprep.subr.mxu0 0.0
  %1968 = vmatpush1.xpose.msra.mxu0 0.0
  %1969 = vmatprep.subr.mxu0 0.0
  %1970 = vmatpush1.xpose.msra.mxu0 0.0
  %1971 = vmatprep.subr.mxu0 0.0
  %1972 = vmatpush1.xpose.msra.mxu0 0.0
  %1973 = vmatprep.subr.mxu0 0.0
  %1974 = vmatpush1.xpose.msra.mxu0 0.0
  %1975 = vmatprep.subr.mxu0 0.0
  %1976 = vmatpush1.xpose.msra.mxu0 0.0
  %1977 = vmatprep.subr.mxu0 0.0
  %1978 = vmatpush1.xpose.msra.mxu0 0.0
  %1979 = vmatprep.subr.mxu0 0.0
  %1980 = vmatpush1.xpose.msra.mxu0 0.0
  %1981 = vmatprep.subr.mxu0 0.0
  %1982 = vmatpush1.xpose.msra.mxu0 0.0
  %1983 = vmatprep.subr.mxu0 0.0
  %1984 = vmatpush1.xpose.msra.mxu0 0.0
  %1985 = vmatprep.mubr.f32.mxu0 0.0
  %1986 = vmatmul.mubr.f32.gmra.mrb[0].mxu0 %v1917
  %v1987 = vpop.f32.mrb[0].mxu0
  %v1988 = vadd.f32 0.0, %v1987
  %v1989 = vpop.f32.mrb[0].mxu0
  %1990 = vdwg.mxu0
  %1992 = vrot.lane.b32.xlu0 %v1660, 80
  %v1993 = vpop.permute.xlu0 %1992
  %v1994 = vsel %vm1685, %v1660, 0
  %v1996 = vsel %vm1685, %v1993, 0
  %1998 = vmatprep.subr.mxu0 0.0
  %1999 = vmatpush1.xpose.msra.mxu0 %v1996
  %2000 = vmatprep.subr.mxu0 0.0
  %2001 = vmatpush1.xpose.msra.mxu0 0.0
  %2002 = vmatprep.subr.mxu0 0.0
  %2003 = vmatpush1.xpose.msra.mxu0 0.0
  %2004 = vmatprep.subr.mxu0 0.0
  %2005 = vmatpush1.xpose.msra.mxu0 0.0
  %2006 = vmatprep.subr.mxu0 0.0
  %2007 = vmatpush1.xpose.msra.mxu0 0.0
  %2008 = vmatprep.subr.mxu0 0.0
  %2009 = vmatpush1.xpose.msra.mxu0 0.0
  %2010 = vmatprep.subr.mxu0 0.0
  %2011 = vmatpush1.xpose.msra.mxu0 0.0
  %2012 = vmatprep.subr.mxu0 0.0
  %2013 = vmatpush1.xpose.msra.mxu0 0.0
  %2014 = vmatprep.subr.mxu0 0.0
  %2015 = vmatpush1.xpose.msra.mxu0 0.0
  %2016 = vmatprep.subr.mxu0 0.0
  %2017 = vmatpush1.xpose.msra.mxu0 0.0
  %2018 = vmatprep.subr.mxu0 0.0
  %2019 = vmatpush1.xpose.msra.mxu0 0.0
  %2020 = vmatprep.subr.mxu0 0.0
  %2021 = vmatpush1.xpose.msra.mxu0 0.0
  %2022 = vmatprep.subr.mxu0 0.0
  %2023 = vmatpush1.xpose.msra.mxu0 0.0
  %2024 = vmatprep.subr.mxu0 0.0
  %2025 = vmatpush1.xpose.msra.mxu0 0.0
  %2026 = vmatprep.subr.mxu0 0.0
  %2027 = vmatpush1.xpose.msra.mxu0 0.0
  %2028 = vmatprep.subr.mxu0 0.0
  %2029 = vmatpush1.xpose.msra.mxu0 0.0
  %2030 = vmatprep.subr.mxu0 0.0
  %2031 = vmatpush1.xpose.msra.mxu0 0.0
  %2032 = vmatprep.subr.mxu0 0.0
  %2033 = vmatpush1.xpose.msra.mxu0 0.0
  %2034 = vmatprep.subr.mxu0 0.0
  %2035 = vmatpush1.xpose.msra.mxu0 0.0
  %2036 = vmatprep.subr.mxu0 0.0
  %2037 = vmatpush1.xpose.msra.mxu0 0.0
  %2038 = vmatprep.subr.mxu0 0.0
  %2039 = vmatpush1.xpose.msra.mxu0 0.0
  %2040 = vmatprep.subr.mxu0 0.0
  %2041 = vmatpush1.xpose.msra.mxu0 0.0
  %2042 = vmatprep.subr.mxu0 0.0
  %2043 = vmatpush1.xpose.msra.mxu0 0.0
  %2044 = vmatprep.subr.mxu0 0.0
  %2045 = vmatpush1.xpose.msra.mxu0 0.0
  %2046 = vmatprep.subr.mxu0 0.0
  %2047 = vmatpush1.xpose.msra.mxu0 0.0
  %2048 = vmatprep.subr.mxu0 0.0
  %2049 = vmatpush1.xpose.msra.mxu0 0.0
  %2050 = vmatprep.subr.mxu0 0.0
  %2051 = vmatpush1.xpose.msra.mxu0 0.0
  %2052 = vmatprep.subr.mxu0 0.0
  %2053 = vmatpush1.xpose.msra.mxu0 0.0
  %2054 = vmatprep.subr.mxu0 0.0
  %2055 = vmatpush1.xpose.msra.mxu0 0.0
  %2056 = vmatprep.subr.mxu0 0.0
  %2057 = vmatpush1.xpose.msra.mxu0 0.0
  %2058 = vmatprep.subr.mxu0 0.0
  %2059 = vmatpush1.xpose.msra.mxu0 0.0
  %2060 = vmatprep.subr.mxu0 0.0
  %2061 = vmatpush1.xpose.msra.mxu0 0.0
  %2062 = vmatprep.mubr.f32.mxu0 0.0
  %2063 = vmatmul.mubr.f32.gmra.mrb[0].mxu0 %v1994
  %v2064 = vpop.f32.mrb[0].mxu0
  %v2065 = vadd.f32 0.0, %v2064
  %v2066 = vpop.f32.mrb[0].mxu0
  %2067 = vdwg.mxu0
  %2069 = vrot.lane.b32.xlu0 %v1666, 80
  %v2070 = vpop.permute.xlu0 %2069
  %v2071 = vsel %vm1685, %v1666, 0
  %v2073 = vsel %vm1685, %v2070, 0
  %2075 = vmatprep.subr.mxu0 0.0
  %2076 = vmatpush1.xpose.msra.mxu0 %v2073
  %2077 = vmatprep.subr.mxu0 0.0
  %2078 = vmatpush1.xpose.msra.mxu0 0.0
  %2079 = vmatprep.subr.mxu0 0.0
  %2080 = vmatpush1.xpose.msra.mxu0 0.0
  %2081 = vmatprep.subr.mxu0 0.0
  %2082 = vmatpush1.xpose.msra.mxu0 0.0
  %2083 = vmatprep.subr.mxu0 0.0
  %2084 = vmatpush1.xpose.msra.mxu0 0.0
  %2085 = vmatprep.subr.mxu0 0.0
  %2086 = vmatpush1.xpose.msra.mxu0 0.0
  %2087 = vmatprep.subr.mxu0 0.0
  %2088 = vmatpush1.xpose.msra.mxu0 0.0
  %2089 = vmatprep.subr.mxu0 0.0
  %2090 = vmatpush1.xpose.msra.mxu0 0.0
  %2091 = vmatprep.subr.mxu0 0.0
  %2092 = vmatpush1.xpose.msra.mxu0 0.0
  %2093 = vmatprep.subr.mxu0 0.0
  %2094 = vmatpush1.xpose.msra.mxu0 0.0
  %2095 = vmatprep.subr.mxu0 0.0
  %2096 = vmatpush1.xpose.msra.mxu0 0.0
  %2097 = vmatprep.subr.mxu0 0.0
  %2098 = vmatpush1.xpose.msra.mxu0 0.0
  %2099 = vmatprep.subr.mxu0 0.0
  %2100 = vmatpush1.xpose.msra.mxu0 0.0
  %2101 = vmatprep.subr.mxu0 0.0
  %2102 = vmatpush1.xpose.msra.mxu0 0.0
  %2103 = vmatprep.subr.mxu0 0.0
  %2104 = vmatpush1.xpose.msra.mxu0 0.0
  %2105 = vmatprep.subr.mxu0 0.0
  %2106 = vmatpush1.xpose.msra.mxu0 0.0
  %2107 = vmatprep.subr.mxu0 0.0
  %2108 = vmatpush1.xpose.msra.mxu0 0.0
  %2109 = vmatprep.subr.mxu0 0.0
  %2110 = vmatpush1.xpose.msra.mxu0 0.0
  %2111 = vmatprep.subr.mxu0 0.0
  %2112 = vmatpush1.xpose.msra.mxu0 0.0
  %2113 = vmatprep.subr.mxu0 0.0
  %2114 = vmatpush1.xpose.msra.mxu0 0.0
  %2115 = vmatprep.subr.mxu0 0.0
  %2116 = vmatpush1.xpose.msra.mxu0 0.0
  %2117 = vmatprep.subr.mxu0 0.0
  %2118 = vmatpush1.xpose.msra.mxu0 0.0
  %2119 = vmatprep.subr.mxu0 0.0
  %2120 = vmatpush1.xpose.msra.mxu0 0.0
  %2121 = vmatprep.subr.mxu0 0.0
  %2122 = vmatpush1.xpose.msra.mxu0 0.0
  %2123 = vmatprep.subr.mxu0 0.0
  %2124 = vmatpush1.xpose.msra.mxu0 0.0
  %2125 = vmatprep.subr.mxu0 0.0
  %2126 = vmatpush1.xpose.msra.mxu0 0.0
  %2127 = vmatprep.subr.mxu0 0.0
  %2128 = vmatpush1.xpose.msra.mxu0 0.0
  %2129 = vmatprep.subr.mxu0 0.0
  %2130 = vmatpush1.xpose.msra.mxu0 0.0
  %2131 = vmatprep.subr.mxu0 0.0
  %2132 = vmatpush1.xpose.msra.mxu0 0.0
  %2133 = vmatprep.subr.mxu0 0.0
  %2134 = vmatpush1.xpose.msra.mxu0 0.0
  %2135 = vmatprep.subr.mxu0 0.0
  %2136 = vmatpush1.xpose.msra.mxu0 0.0
  %2137 = vmatprep.subr.mxu0 0.0
  %2138 = vmatpush1.xpose.msra.mxu0 0.0
  %2139 = vmatprep.mubr.f32.mxu0 0.0
  %2140 = vmatmul.mubr.f32.gmra.mrb[0].mxu0 %v2071
  %v2141 = vpop.f32.mrb[0].mxu0
  %v2142 = vadd.f32 0.0, %v2141
  %v2143 = vpop.f32.mrb[0].mxu0
  %2144 = vdwg.mxu0
  %2146 = vrot.lane.b32.xlu0 %v1672, 80
  %v2147 = vpop.permute.xlu0 %2146
  %v2148 = vsel %vm1685, %v1672, 0
  %v2150 = vsel %vm1685, %v2147, 0
  %2152 = vmatprep.subr.mxu0 0.0
  %2153 = vmatpush1.xpose.msra.mxu0 %v2150
  %2154 = vmatprep.subr.mxu0 0.0
  %2155 = vmatpush1.xpose.msra.mxu0 0.0
  %2156 = vmatprep.subr.mxu0 0.0
  %2157 = vmatpush1.xpose.msra.mxu0 0.0
  %2158 = vmatprep.subr.mxu0 0.0
  %2159 = vmatpush1.xpose.msra.mxu0 0.0
  %2160 = vmatprep.subr.mxu0 0.0
  %2161 = vmatpush1.xpose.msra.mxu0 0.0
  %2162 = vmatprep.subr.mxu0 0.0
  %2163 = vmatpush1.xpose.msra.mxu0 0.0
  %2164 = vmatprep.subr.mxu0 0.0
  %2165 = vmatpush1.xpose.msra.mxu0 0.0
  %2166 = vmatprep.subr.mxu0 0.0
  %2167 = vmatpush1.xpose.msra.mxu0 0.0
  %2168 = vmatprep.subr.mxu0 0.0
  %2169 = vmatpush1.xpose.msra.mxu0 0.0
  %2170 = vmatprep.subr.mxu0 0.0
  %2171 = vmatpush1.xpose.msra.mxu0 0.0
  %2172 = vmatprep.subr.mxu0 0.0
  %2173 = vmatpush1.xpose.msra.mxu0 0.0
  %2174 = vmatprep.subr.mxu0 0.0
  %2175 = vmatpush1.xpose.msra.mxu0 0.0
  %2176 = vmatprep.subr.mxu0 0.0
  %2177 = vmatpush1.xpose.msra.mxu0 0.0
  %2178 = vmatprep.subr.mxu0 0.0
  %2179 = vmatpush1.xpose.msra.mxu0 0.0
  %2180 = vmatprep.subr.mxu0 0.0
  %2181 = vmatpush1.xpose.msra.mxu0 0.0
  %2182 = vmatprep.subr.mxu0 0.0
  %2183 = vmatpush1.xpose.msra.mxu0 0.0
  %2184 = vmatprep.subr.mxu0 0.0
  %2185 = vmatpush1.xpose.msra.mxu0 0.0
  %2186 = vmatprep.subr.mxu0 0.0
  %2187 = vmatpush1.xpose.msra.mxu0 0.0
  %2188 = vmatprep.subr.mxu0 0.0
  %2189 = vmatpush1.xpose.msra.mxu0 0.0
  %2190 = vmatprep.subr.mxu0 0.0
  %2191 = vmatpush1.xpose.msra.mxu0 0.0
  %2192 = vmatprep.subr.mxu0 0.0
  %2193 = vmatpush1.xpose.msra.mxu0 0.0
  %2194 = vmatprep.subr.mxu0 0.0
  %2195 = vmatpush1.xpose.msra.mxu0 0.0
  %2196 = vmatprep.subr.mxu0 0.0
  %2197 = vmatpush1.xpose.msra.mxu0 0.0
  %2198 = vmatprep.subr.mxu0 0.0
  %2199 = vmatpush1.xpose.msra.mxu0 0.0
  %2200 = vmatprep.subr.mxu0 0.0
  %2201 = vmatpush1.xpose.msra.mxu0 0.0
  %2202 = vmatprep.subr.mxu0 0.0
  %2203 = vmatpush1.xpose.msra.mxu0 0.0
  %2204 = vmatprep.subr.mxu0 0.0
  %2205 = vmatpush1.xpose.msra.mxu0 0.0
  %2206 = vmatprep.subr.mxu0 0.0
  %2207 = vmatpush1.xpose.msra.mxu0 0.0
  %2208 = vmatprep.subr.mxu0 0.0
  %2209 = vmatpush1.xpose.msra.mxu0 0.0
  %2210 = vmatprep.subr.mxu0 0.0
  %2211 = vmatpush1.xpose.msra.mxu0 0.0
  %2212 = vmatprep.subr.mxu0 0.0
  %2213 = vmatpush1.xpose.msra.mxu0 0.0
  %2214 = vmatprep.subr.mxu0 0.0
  %2215 = vmatpush1.xpose.msra.mxu0 0.0
  %2216 = vmatprep.mubr.f32.mxu0 0.0
  %2217 = vmatmul.mubr.f32.gmra.mrb[0].mxu0 %v2148
  %v2218 = vpop.f32.mrb[0].mxu0
  %v2219 = vadd.f32 0.0, %v2218
  %v2220 = vpop.f32.mrb[0].mxu0
  %2221 = vdwg.mxu0
  %2223 = vrot.lane.b32.xlu0 %v1678, 80
  %v2224 = vpop.permute.xlu0 %2223
  %v2225 = vsel %vm1685, %v1678, 0
  %v2227 = vsel %vm1685, %v2224, 0
  %2229 = vmatprep.subr.mxu0 0.0
  %2230 = vmatpush1.xpose.msra.mxu0 %v2227
  %2231 = vmatprep.subr.mxu0 0.0
  %2232 = vmatpush1.xpose.msra.mxu0 0.0
  %2233 = vmatprep.subr.mxu0 0.0
  %2234 = vmatpush1.xpose.msra.mxu0 0.0
  %2235 = vmatprep.subr.mxu0 0.0
  %2236 = vmatpush1.xpose.msra.mxu0 0.0
  %2237 = vmatprep.subr.mxu0 0.0
  %2238 = vmatpush1.xpose.msra.mxu0 0.0
  %2239 = vmatprep.subr.mxu0 0.0
  %2240 = vmatpush1.xpose.msra.mxu0 0.0
  %2241 = vmatprep.subr.mxu0 0.0
  %2242 = vmatpush1.xpose.msra.mxu0 0.0
  %2243 = vmatprep.subr.mxu0 0.0
  %2244 = vmatpush1.xpose.msra.mxu0 0.0
  %2245 = vmatprep.subr.mxu0 0.0
  %2246 = vmatpush1.xpose.msra.mxu0 0.0
  %2247 = vmatprep.subr.mxu0 0.0
  %2248 = vmatpush1.xpose.msra.mxu0 0.0
  %2249 = vmatprep.subr.mxu0 0.0
  %2250 = vmatpush1.xpose.msra.mxu0 0.0
  %2251 = vmatprep.subr.mxu0 0.0
  %2252 = vmatpush1.xpose.msra.mxu0 0.0
  %2253 = vmatprep.subr.mxu0 0.0
  %2254 = vmatpush1.xpose.msra.mxu0 0.0
  %2255 = vmatprep.subr.mxu0 0.0
  %2256 = vmatpush1.xpose.msra.mxu0 0.0
  %2257 = vmatprep.subr.mxu0 0.0
  %2258 = vmatpush1.xpose.msra.mxu0 0.0
  %2259 = vmatprep.subr.mxu0 0.0
  %2260 = vmatpush1.xpose.msra.mxu0 0.0
  %2261 = vmatprep.subr.mxu0 0.0
  %2262 = vmatpush1.xpose.msra.mxu0 0.0
  %2263 = vmatprep.subr.mxu0 0.0
  %2264 = vmatpush1.xpose.msra.mxu0 0.0
  %2265 = vmatprep.subr.mxu0 0.0
  %2266 = vmatpush1.xpose.msra.mxu0 0.0
  %2267 = vmatprep.subr.mxu0 0.0
  %2268 = vmatpush1.xpose.msra.mxu0 0.0
  %2269 = vmatprep.subr.mxu0 0.0
  %2270 = vmatpush1.xpose.msra.mxu0 0.0
  %2271 = vmatprep.subr.mxu0 0.0
  %2272 = vmatpush1.xpose.msra.mxu0 0.0
  %2273 = vmatprep.subr.mxu0 0.0
  %2274 = vmatpush1.xpose.msra.mxu0 0.0
  %2275 = vmatprep.subr.mxu0 0.0
  %2276 = vmatpush1.xpose.msra.mxu0 0.0
  %2277 = vmatprep.subr.mxu0 0.0
  %2278 = vmatpush1.xpose.msra.mxu0 0.0
  %2279 = vmatprep.subr.mxu0 0.0
  %2280 = vmatpush1.xpose.msra.mxu0 0.0
  %2281 = vmatprep.subr.mxu0 0.0
  %2282 = vmatpush1.xpose.msra.mxu0 0.0
  %2283 = vmatprep.subr.mxu0 0.0
  %2284 = vmatpush1.xpose.msra.mxu0 0.0
  %2285 = vmatprep.subr.mxu0 0.0
  %2286 = vmatpush1.xpose.msra.mxu0 0.0
  %2287 = vmatprep.subr.mxu0 0.0
  %2288 = vmatpush1.xpose.msra.mxu0 0.0
  %2289 = vmatprep.subr.mxu0 0.0
  %2290 = vmatpush1.xpose.msra.mxu0 0.0
  %2291 = vmatprep.subr.mxu0 0.0
  %2292 = vmatpush1.xpose.msra.mxu0 0.0
  %2293 = vmatprep.mubr.f32.mxu0 0.0
  %2294 = vmatmul.mubr.f32.gmra.mrb[0].mxu0 %v2225
  %v2295 = vpop.f32.mrb[0].mxu0
  %v2296 = vadd.f32 0.0, %v2295
  %v2297 = vpop.f32.mrb[0].mxu0
  %2298 = vdwg.mxu0
  %v2299 = vmul.f32 %v1757, 0.25
  %v2300 = vmul.f32 %v1834, 0.25
  %v2301 = vmul.f32 %v1911, 0.25
  %v2302 = vmul.f32 %v1988, 0.25
  %v2303 = vmul.f32 %v2065, 0.25
  %v2304 = vmul.f32 %v2142, 0.25
  %v2305 = vmul.f32 %v2219, 0.25
  %v2306 = vmul.f32 %v2296, 0.25
  %vm2307 = vcmask 64512
  %v2308 = vsel %vm2307, %v2299, -inf
  %2309 = vmax.xlane.f32.xlu0 %v2308
  %v2310 = vpop.xlane.xlu0 %2309
  %v2311 = vsel %vm2307, %v2300, -inf
  %2312 = vmax.xlane.f32.xlu0 %v2311
  %v2313 = vpop.xlane.xlu0 %2312
  %v2314 = vsel %vm2307, %v2301, -inf
  %2315 = vmax.xlane.f32.xlu0 %v2314
  %v2316 = vpop.xlane.xlu0 %2315
  %v2317 = vsel %vm2307, %v2302, -inf
  %2318 = vmax.xlane.f32.xlu0 %v2317
  %v2319 = vpop.xlane.xlu0 %2318
  %v2320 = vsel %vm2307, %v2303, -inf
  %2321 = vmax.xlane.f32.xlu0 %v2320
  %v2322 = vpop.xlane.xlu0 %2321
  %v2323 = vsel %vm2307, %v2304, -inf
  %2324 = vmax.xlane.f32.xlu0 %v2323
  %v2325 = vpop.xlane.xlu0 %2324
  %v2326 = vsel %vm2307, %v2305, -inf
  %2327 = vmax.xlane.f32.xlu0 %v2326
  %v2328 = vpop.xlane.xlu0 %2327
  %v2329 = vsel %vm2307, %v2306, -inf
  %2330 = vmax.xlane.f32.xlu0 %v2329
  %v2331 = vpop.xlane.xlu0 %2330
  %v2332 = vsub.f32 %v2299, %v2310
  %v2333 = vsub.f32 %v2300, %v2313
  %v2334 = vsub.f32 %v2301, %v2316
  %v2335 = vsub.f32 %v2302, %v2319
  %v2336 = vsub.f32 %v2303, %v2322
  %v2337 = vsub.f32 %v2304, %v2325
  %v2338 = vsub.f32 %v2305, %v2328
  %v2339 = vsub.f32 %v2306, %v2331
  %v2340 = vmul.f32 %v2332, 1.442695
  %v2341 = vpow.pop %v2340
  %v2342 = vmul.f32 %v2333, 1.442695
  %v2343 = vpow.pop %v2342
  %v2344 = vmul.f32 %v2334, 1.442695
  %v2345 = vpow.pop %v2344
  %v2346 = vmul.f32 %v2335, 1.442695
  %v2347 = vpow.pop %v2346
  %v2348 = vmul.f32 %v2336, 1.442695
  %v2349 = vpow.pop %v2348
  %v2350 = vmul.f32 %v2337, 1.442695
  %v2351 = vpow.pop %v2350
  %v2352 = vmul.f32 %v2338, 1.442695
  %v2353 = vpow.pop %v2352
  %v2354 = vmul.f32 %v2339, 1.442695
  %v2355 = vpow.pop %v2354
  %v2356 = vsel %vm2307, %v2341, 0.0
  %2357 = vadd.xlane.f32.xlu0 %v2356
  %v2358 = vpop.xlane.xlu0 %2357
  %v2359 = vsel %vm2307, %v2343, 0.0
  %2360 = vadd.xlane.f32.xlu0 %v2359
  %v2361 = vpop.xlane.xlu0 %2360
  %v2362 = vsel %vm2307, %v2345, 0.0
  %2363 = vadd.xlane.f32.xlu0 %v2362
  %v2364 = vpop.xlane.xlu0 %2363
  %v2365 = vsel %vm2307, %v2347, 0.0
  %2366 = vadd.xlane.f32.xlu0 %v2365
  %v2367 = vpop.xlane.xlu0 %2366
  %v2368 = vsel %vm2307, %v2349, 0.0
  %2369 = vadd.xlane.f32.xlu0 %v2368
  %v2370 = vpop.xlane.xlu0 %2369
  %v2371 = vsel %vm2307, %v2351, 0.0
  %2372 = vadd.xlane.f32.xlu0 %v2371
  %v2373 = vpop.xlane.xlu0 %2372
  %v2374 = vsel %vm2307, %v2353, 0.0
  %2375 = vadd.xlane.f32.xlu0 %v2374
  %v2376 = vpop.xlane.xlu0 %2375
  %v2377 = vsel %vm2307, %v2355, 0.0
  %2378 = vadd.xlane.f32.xlu0 %v2377
  %v2379 = vpop.xlane.xlu0 %2378
  %v2380 = vrcp.pop %v2358
  %v2381 = vmul.f32 %v2341, %v2380
  %v2382 = vrcp.pop %v2361
  %v2383 = vmul.f32 %v2343, %v2382
  %v2384 = vrcp.pop %v2364
  %v2385 = vmul.f32 %v2345, %v2384
  %v2386 = vrcp.pop %v2367
  %v2387 = vmul.f32 %v2347, %v2386
  %v2388 = vrcp.pop %v2370
  %v2389 = vmul.f32 %v2349, %v2388
  %v2390 = vrcp.pop %v2373
  %v2391 = vmul.f32 %v2351, %v2390
  %v2392 = vrcp.pop %v2376
  %v2393 = vmul.f32 %v2353, %v2392
  %v2394 = vrcp.pop %v2379
  %v2395 = vmul.f32 %v2355, %v2394
  %2396 = vrot.lane.b32.xlu0 %v1636, 32
  %v2397 = vpop.permute.xlu0 %2396
  %v2400 = vsel %vm2307, %v2381, 0
  %2402 = vmatprep.subr.mxu0 0.0
  %2403 = vmatpush1.msra.mxu0 %v2397
  %2404 = vmatprep.subr.mxu0 0.0
  %2405 = vmatpush1.msra.mxu0 0.0
  %2406 = vmatprep.subr.mxu0 0.0
  %2407 = vmatpush1.msra.mxu0 0.0
  %2408 = vmatprep.subr.mxu0 0.0
  %2409 = vmatpush1.msra.mxu0 0.0
  %2410 = vmatprep.subr.mxu0 0.0
  %2411 = vmatpush1.msra.mxu0 0.0
  %2412 = vmatprep.subr.mxu0 0.0
  %2413 = vmatpush1.msra.mxu0 0.0
  %2414 = vmatprep.subr.mxu0 0.0
  %2415 = vmatpush1.msra.mxu0 0.0
  %2416 = vmatprep.subr.mxu0 0.0
  %2417 = vmatpush1.msra.mxu0 0.0
  %2418 = vmatprep.subr.mxu0 0.0
  %2419 = vmatpush1.msra.mxu0 0.0
  %2420 = vmatprep.subr.mxu0 0.0
  %2421 = vmatpush1.msra.mxu0 0.0
  %2422 = vmatprep.subr.mxu0 0.0
  %2423 = vmatpush1.msra.mxu0 0.0
  %2424 = vmatprep.subr.mxu0 0.0
  %2425 = vmatpush1.msra.mxu0 0.0
  %2426 = vmatprep.subr.mxu0 0.0
  %2427 = vmatpush1.msra.mxu0 0.0
  %2428 = vmatprep.subr.mxu0 0.0
  %2429 = vmatpush1.msra.mxu0 0.0
  %2430 = vmatprep.subr.mxu0 0.0
  %2431 = vmatpush1.msra.mxu0 0.0
  %2432 = vmatprep.subr.mxu0 0.0
  %2433 = vmatpush1.msra.mxu0 0.0
  %2434 = vmatprep.subr.mxu0 0.0
  %2435 = vmatpush1.msra.mxu0 0.0
  %2436 = vmatprep.subr.mxu0 0.0
  %2437 = vmatpush1.msra.mxu0 0.0
  %2438 = vmatprep.subr.mxu0 0.0
  %2439 = vmatpush1.msra.mxu0 0.0
  %2440 = vmatprep.subr.mxu0 0.0
  %2441 = vmatpush1.msra.mxu0 0.0
  %2442 = vmatprep.subr.mxu0 0.0
  %2443 = vmatpush1.msra.mxu0 0.0
  %2444 = vmatprep.subr.mxu0 0.0
  %2445 = vmatpush1.msra.mxu0 0.0
  %2446 = vmatprep.subr.mxu0 0.0
  %2447 = vmatpush1.msra.mxu0 0.0
  %2448 = vmatprep.subr.mxu0 0.0
  %2449 = vmatpush1.msra.mxu0 0.0
  %2450 = vmatprep.subr.mxu0 0.0
  %2451 = vmatpush1.msra.mxu0 0.0
  %2452 = vmatprep.subr.mxu0 0.0
  %2453 = vmatpush1.msra.mxu0 0.0
  %2454 = vmatprep.subr.mxu0 0.0
  %2455 = vmatpush1.msra.mxu0 0.0
  %2456 = vmatprep.subr.mxu0 0.0
  %2457 = vmatpush1.msra.mxu0 0.0
  %2458 = vmatprep.subr.mxu0 0.0
  %2459 = vmatpush1.msra.mxu0 0.0
  %2460 = vmatprep.subr.mxu0 0.0
  %2461 = vmatpush1.msra.mxu0 0.0
  %2462 = vmatprep.subr.mxu0 0.0
  %2463 = vmatpush1.msra.mxu0 0.0
  %2464 = vmatprep.subr.mxu0 0.0
  %2465 = vmatpush1.msra.mxu0 0.0
  %2466 = vmatprep.mubr.f32.mxu0 0.0
  %2467 = vmatmul.mubr.f32.gmra.mrb[0].mxu0 %v2400
  %v2468 = vpop.f32.mrb[0].mxu0
  %v2469 = vadd.f32 0.0, %v2468
  %v2470 = vpop.f32.mrb[0].mxu0
  %2471 = vdwg.mxu0
  %2472 = vrot.lane.b32.xlu0 %v1642, 32
  %v2473 = vpop.permute.xlu0 %2472
  %v2476 = vsel %vm2307, %v2383, 0
  %2478 = vmatprep.subr.mxu0 0.0
  %2479 = vmatpush1.msra.mxu0 %v2473
  %2480 = vmatprep.subr.mxu0 0.0
  %2481 = vmatpush1.msra.mxu0 0.0
  %2482 = vmatprep.subr.mxu0 0.0
  %2483 = vmatpush1.msra.mxu0 0.0
  %2484 = vmatprep.subr.mxu0 0.0
  %2485 = vmatpush1.msra.mxu0 0.0
  %2486 = vmatprep.subr.mxu0 0.0
  %2487 = vmatpush1.msra.mxu0 0.0
  %2488 = vmatprep.subr.mxu0 0.0
  %2489 = vmatpush1.msra.mxu0 0.0
  %2490 = vmatprep.subr.mxu0 0.0
  %2491 = vmatpush1.msra.mxu0 0.0
  %2492 = vmatprep.subr.mxu0 0.0
  %2493 = vmatpush1.msra.mxu0 0.0
  %2494 = vmatprep.subr.mxu0 0.0
  %2495 = vmatpush1.msra.mxu0 0.0
  %2496 = vmatprep.subr.mxu0 0.0
  %2497 = vmatpush1.msra.mxu0 0.0
  %2498 = vmatprep.subr.mxu0 0.0
  %2499 = vmatpush1.msra.mxu0 0.0
  %2500 = vmatprep.subr.mxu0 0.0
  %2501 = vmatpush1.msra.mxu0 0.0
  %2502 = vmatprep.subr.mxu0 0.0
  %2503 = vmatpush1.msra.mxu0 0.0
  %2504 = vmatprep.subr.mxu0 0.0
  %2505 = vmatpush1.msra.mxu0 0.0
  %2506 = vmatprep.subr.mxu0 0.0
  %2507 = vmatpush1.msra.mxu0 0.0
  %2508 = vmatprep.subr.mxu0 0.0
  %2509 = vmatpush1.msra.mxu0 0.0
  %2510 = vmatprep.subr.mxu0 0.0
  %2511 = vmatpush1.msra.mxu0 0.0
  %2512 = vmatprep.subr.mxu0 0.0
  %2513 = vmatpush1.msra.mxu0 0.0
  %2514 = vmatprep.subr.mxu0 0.0
  %2515 = vmatpush1.msra.mxu0 0.0
  %2516 = vmatprep.subr.mxu0 0.0
  %2517 = vmatpush1.msra.mxu0 0.0
  %2518 = vmatprep.subr.mxu0 0.0
  %2519 = vmatpush1.msra.mxu0 0.0
  %2520 = vmatprep.subr.mxu0 0.0
  %2521 = vmatpush1.msra.mxu0 0.0
  %2522 = vmatprep.subr.mxu0 0.0
  %2523 = vmatpush1.msra.mxu0 0.0
  %2524 = vmatprep.subr.mxu0 0.0
  %2525 = vmatpush1.msra.mxu0 0.0
  %2526 = vmatprep.subr.mxu0 0.0
  %2527 = vmatpush1.msra.mxu0 0.0
  %2528 = vmatprep.subr.mxu0 0.0
  %2529 = vmatpush1.msra.mxu0 0.0
  %2530 = vmatprep.subr.mxu0 0.0
  %2531 = vmatpush1.msra.mxu0 0.0
  %2532 = vmatprep.subr.mxu0 0.0
  %2533 = vmatpush1.msra.mxu0 0.0
  %2534 = vmatprep.subr.mxu0 0.0
  %2535 = vmatpush1.msra.mxu0 0.0
  %2536 = vmatprep.subr.mxu0 0.0
  %2537 = vmatpush1.msra.mxu0 0.0
  %2538 = vmatprep.subr.mxu0 0.0
  %2539 = vmatpush1.msra.mxu0 0.0
  %2540 = vmatprep.subr.mxu0 0.0
  %2541 = vmatpush1.msra.mxu0 0.0
  %2542 = vmatprep.mubr.f32.mxu0 0.0
  %2543 = vmatmul.mubr.f32.gmra.mrb[0].mxu0 %v2476
  %v2544 = vpop.f32.mrb[0].mxu0
  %v2545 = vadd.f32 0.0, %v2544
  %v2546 = vpop.f32.mrb[0].mxu0
  %2547 = vdwg.mxu0
  %2548 = vrot.lane.b32.xlu0 %v1648, 32
  %v2549 = vpop.permute.xlu0 %2548
  %v2552 = vsel %vm2307, %v2385, 0
  %2554 = vmatprep.subr.mxu0 0.0
  %2555 = vmatpush1.msra.mxu0 %v2549
  %2556 = vmatprep.subr.mxu0 0.0
  %2557 = vmatpush1.msra.mxu0 0.0
  %2558 = vmatprep.subr.mxu0 0.0
  %2559 = vmatpush1.msra.mxu0 0.0
  %2560 = vmatprep.subr.mxu0 0.0
  %2561 = vmatpush1.msra.mxu0 0.0
  %2562 = vmatprep.subr.mxu0 0.0
  %2563 = vmatpush1.msra.mxu0 0.0
  %2564 = vmatprep.subr.mxu0 0.0
  %2565 = vmatpush1.msra.mxu0 0.0
  %2566 = vmatprep.subr.mxu0 0.0
  %2567 = vmatpush1.msra.mxu0 0.0
  %2568 = vmatprep.subr.mxu0 0.0
  %2569 = vmatpush1.msra.mxu0 0.0
  %2570 = vmatprep.subr.mxu0 0.0
  %2571 = vmatpush1.msra.mxu0 0.0
  %2572 = vmatprep.subr.mxu0 0.0
  %2573 = vmatpush1.msra.mxu0 0.0
  %2574 = vmatprep.subr.mxu0 0.0
  %2575 = vmatpush1.msra.mxu0 0.0
  %2576 = vmatprep.subr.mxu0 0.0
  %2577 = vmatpush1.msra.mxu0 0.0
  %2578 = vmatprep.subr.mxu0 0.0
  %2579 = vmatpush1.msra.mxu0 0.0
  %2580 = vmatprep.subr.mxu0 0.0
  %2581 = vmatpush1.msra.mxu0 0.0
  %2582 = vmatprep.subr.mxu0 0.0
  %2583 = vmatpush1.msra.mxu0 0.0
  %2584 = vmatprep.subr.mxu0 0.0
  %2585 = vmatpush1.msra.mxu0 0.0
  %2586 = vmatprep.subr.mxu0 0.0
  %2587 = vmatpush1.msra.mxu0 0.0
  %2588 = vmatprep.subr.mxu0 0.0
  %2589 = vmatpush1.msra.mxu0 0.0
  %2590 = vmatprep.subr.mxu0 0.0
  %2591 = vmatpush1.msra.mxu0 0.0
  %2592 = vmatprep.subr.mxu0 0.0
  %2593 = vmatpush1.msra.mxu0 0.0
  %2594 = vmatprep.subr.mxu0 0.0
  %2595 = vmatpush1.msra.mxu0 0.0
  %2596 = vmatprep.subr.mxu0 0.0
  %2597 = vmatpush1.msra.mxu0 0.0
  %2598 = vmatprep.subr.mxu0 0.0
  %2599 = vmatpush1.msra.mxu0 0.0
  %2600 = vmatprep.subr.mxu0 0.0
  %2601 = vmatpush1.msra.mxu0 0.0
  %2602 = vmatprep.subr.mxu0 0.0
  %2603 = vmatpush1.msra.mxu0 0.0
  %2604 = vmatprep.subr.mxu0 0.0
  %2605 = vmatpush1.msra.mxu0 0.0
  %2606 = vmatprep.subr.mxu0 0.0
  %2607 = vmatpush1.msra.mxu0 0.0
  %2608 = vmatprep.subr.mxu0 0.0
  %2609 = vmatpush1.msra.mxu0 0.0
  %2610 = vmatprep.subr.mxu0 0.0
  %2611 = vmatpush1.msra.mxu0 0.0
  %2612 = vmatprep.subr.mxu0 0.0
  %2613 = vmatpush1.msra.mxu0 0.0
  %2614 = vmatprep.subr.mxu0 0.0
  %2615 = vmatpush1.msra.mxu0 0.0
  %2616 = vmatprep.subr.mxu0 0.0
  %2617 = vmatpush1.msra.mxu0 0.0
  %2618 = vmatprep.mubr.f32.mxu0 0.0
  %2619 = vmatmul.mubr.f32.gmra.mrb[0].mxu0 %v2552
  %v2620 = vpop.f32.mrb[0].mxu0
  %v2621 = vadd.f32 0.0, %v2620
  %v2622 = vpop.f32.mrb[0].mxu0
  %2623 = vdwg.mxu0
  %2624 = vrot.lane.b32.xlu0 %v1654, 32
  %v2625 = vpop.permute.xlu0 %2624
  %v2628 = vsel %vm2307, %v2387, 0
  %2630 = vmatprep.subr.mxu0 0.0
  %2631 = vmatpush1.msra.mxu0 %v2625
  %2632 = vmatprep.subr.mxu0 0.0
  %2633 = vmatpush1.msra.mxu0 0.0
  %2634 = vmatprep.subr.mxu0 0.0
  %2635 = vmatpush1.msra.mxu0 0.0
  %2636 = vmatprep.subr.mxu0 0.0
  %2637 = vmatpush1.msra.mxu0 0.0
  %2638 = vmatprep.subr.mxu0 0.0
  %2639 = vmatpush1.msra.mxu0 0.0
  %2640 = vmatprep.subr.mxu0 0.0
  %2641 = vmatpush1.msra.mxu0 0.0
  %2642 = vmatprep.subr.mxu0 0.0
  %2643 = vmatpush1.msra.mxu0 0.0
  %2644 = vmatprep.subr.mxu0 0.0
  %2645 = vmatpush1.msra.mxu0 0.0
  %2646 = vmatprep.subr.mxu0 0.0
  %2647 = vmatpush1.msra.mxu0 0.0
  %2648 = vmatprep.subr.mxu0 0.0
  %2649 = vmatpush1.msra.mxu0 0.0
  %2650 = vmatprep.subr.mxu0 0.0
  %2651 = vmatpush1.msra.mxu0 0.0
  %2652 = vmatprep.subr.mxu0 0.0
  %2653 = vmatpush1.msra.mxu0 0.0
  %2654 = vmatprep.subr.mxu0 0.0
  %2655 = vmatpush1.msra.mxu0 0.0
  %2656 = vmatprep.subr.mxu0 0.0
  %2657 = vmatpush1.msra.mxu0 0.0
  %2658 = vmatprep.subr.mxu0 0.0
  %2659 = vmatpush1.msra.mxu0 0.0
  %2660 = vmatprep.subr.mxu0 0.0
  %2661 = vmatpush1.msra.mxu0 0.0
  %2662 = vmatprep.subr.mxu0 0.0
  %2663 = vmatpush1.msra.mxu0 0.0
  %2664 = vmatprep.subr.mxu0 0.0
  %2665 = vmatpush1.msra.mxu0 0.0
  %2666 = vmatprep.subr.mxu0 0.0
  %2667 = vmatpush1.msra.mxu0 0.0
  %2668 = vmatprep.subr.mxu0 0.0
  %2669 = vmatpush1.msra.mxu0 0.0
  %2670 = vmatprep.subr.mxu0 0.0
  %2671 = vmatpush1.msra.mxu0 0.0
  %2672 = vmatprep.subr.mxu0 0.0
  %2673 = vmatpush1.msra.mxu0 0.0
  %2674 = vmatprep.subr.mxu0 0.0
  %2675 = vmatpush1.msra.mxu0 0.0
  %2676 = vmatprep.subr.mxu0 0.0
  %2677 = vmatpush1.msra.mxu0 0.0
  %2678 = vmatprep.subr.mxu0 0.0
  %2679 = vmatpush1.msra.mxu0 0.0
  %2680 = vmatprep.subr.mxu0 0.0
  %2681 = vmatpush1.msra.mxu0 0.0
  %2682 = vmatprep.subr.mxu0 0.0
  %2683 = vmatpush1.msra.mxu0 0.0
  %2684 = vmatprep.subr.mxu0 0.0
  %2685 = vmatpush1.msra.mxu0 0.0
  %2686 = vmatprep.subr.mxu0 0.0
  %2687 = vmatpush1.msra.mxu0 0.0
  %2688 = vmatprep.subr.mxu0 0.0
  %2689 = vmatpush1.msra.mxu0 0.0
  %2690 = vmatprep.subr.mxu0 0.0
  %2691 = vmatpush1.msra.mxu0 0.0
  %2692 = vmatprep.subr.mxu0 0.0
  %2693 = vmatpush1.msra.mxu0 0.0
  %2694 = vmatprep.mubr.f32.mxu0 0.0
  %2695 = vmatmul.mubr.f32.gmra.mrb[0].mxu0 %v2628
  %v2696 = vpop.f32.mrb[0].mxu0
  %v2697 = vadd.f32 0.0, %v2696
  %v2698 = vpop.f32.mrb[0].mxu0
  %2699 = vdwg.mxu0
  %2700 = vrot.lane.b32.xlu0 %v1660, 32
  %v2701 = vpop.permute.xlu0 %2700
  %v2704 = vsel %vm2307, %v2389, 0
  %2706 = vmatprep.subr.mxu0 0.0
  %2707 = vmatpush1.msra.mxu0 %v2701
  %2708 = vmatprep.subr.mxu0 0.0
  %2709 = vmatpush1.msra.mxu0 0.0
  %2710 = vmatprep.subr.mxu0 0.0
  %2711 = vmatpush1.msra.mxu0 0.0
  %2712 = vmatprep.subr.mxu0 0.0
  %2713 = vmatpush1.msra.mxu0 0.0
  %2714 = vmatprep.subr.mxu0 0.0
  %2715 = vmatpush1.msra.mxu0 0.0
  %2716 = vmatprep.subr.mxu0 0.0
  %2717 = vmatpush1.msra.mxu0 0.0
  %2718 = vmatprep.subr.mxu0 0.0
  %2719 = vmatpush1.msra.mxu0 0.0
  %2720 = vmatprep.subr.mxu0 0.0
  %2721 = vmatpush1.msra.mxu0 0.0
  %2722 = vmatprep.subr.mxu0 0.0
  %2723 = vmatpush1.msra.mxu0 0.0
  %2724 = vmatprep.subr.mxu0 0.0
  %2725 = vmatpush1.msra.mxu0 0.0
  %2726 = vmatprep.subr.mxu0 0.0
  %2727 = vmatpush1.msra.mxu0 0.0
  %2728 = vmatprep.subr.mxu0 0.0
  %2729 = vmatpush1.msra.mxu0 0.0
  %2730 = vmatprep.subr.mxu0 0.0
  %2731 = vmatpush1.msra.mxu0 0.0
  %2732 = vmatprep.subr.mxu0 0.0
  %2733 = vmatpush1.msra.mxu0 0.0
  %2734 = vmatprep.subr.mxu0 0.0
  %2735 = vmatpush1.msra.mxu0 0.0
  %2736 = vmatprep.subr.mxu0 0.0
  %2737 = vmatpush1.msra.mxu0 0.0
  %2738 = vmatprep.subr.mxu0 0.0
  %2739 = vmatpush1.msra.mxu0 0.0
  %2740 = vmatprep.subr.mxu0 0.0
  %2741 = vmatpush1.msra.mxu0 0.0
  %2742 = vmatprep.subr.mxu0 0.0
  %2743 = vmatpush1.msra.mxu0 0.0
  %2744 = vmatprep.subr.mxu0 0.0
  %2745 = vmatpush1.msra.mxu0 0.0
  %2746 = vmatprep.subr.mxu0 0.0
  %2747 = vmatpush1.msra.mxu0 0.0
  %2748 = vmatprep.subr.mxu0 0.0
  %2749 = vmatpush1.msra.mxu0 0.0
  %2750 = vmatprep.subr.mxu0 0.0
  %2751 = vmatpush1.msra.mxu0 0.0
  %2752 = vmatprep.subr.mxu0 0.0
  %2753 = vmatpush1.msra.mxu0 0.0
  %2754 = vmatprep.subr.mxu0 0.0
  %2755 = vmatpush1.msra.mxu0 0.0
  %2756 = vmatprep.subr.mxu0 0.0
  %2757 = vmatpush1.msra.mxu0 0.0
  %2758 = vmatprep.subr.mxu0 0.0
  %2759 = vmatpush1.msra.mxu0 0.0
  %2760 = vmatprep.subr.mxu0 0.0
  %2761 = vmatpush1.msra.mxu0 0.0
  %2762 = vmatprep.subr.mxu0 0.0
  %2763 = vmatpush1.msra.mxu0 0.0
  %2764 = vmatprep.subr.mxu0 0.0
  %2765 = vmatpush1.msra.mxu0 0.0
  %2766 = vmatprep.subr.mxu0 0.0
  %2767 = vmatpush1.msra.mxu0 0.0
  %2768 = vmatprep.subr.mxu0 0.0
  %2769 = vmatpush1.msra.mxu0 0.0
  %2770 = vmatprep.mubr.f32.mxu0 0.0
  %2771 = vmatmul.mubr.f32.gmra.mrb[0].mxu0 %v2704
  %v2772 = vpop.f32.mrb[0].mxu0
  %v2773 = vadd.f32 0.0, %v2772
  %v2774 = vpop.f32.mrb[0].mxu0
  %2775 = vdwg.mxu0
  %2776 = vrot.lane.b32.xlu0 %v1666, 32
  %v2777 = vpop.permute.xlu0 %2776
  %v2780 = vsel %vm2307, %v2391, 0
  %2782 = vmatprep.subr.mxu0 0.0
  %2783 = vmatpush1.msra.mxu0 %v2777
  %2784 = vmatprep.subr.mxu0 0.0
  %2785 = vmatpush1.msra.mxu0 0.0
  %2786 = vmatprep.subr.mxu0 0.0
  %2787 = vmatpush1.msra.mxu0 0.0
  %2788 = vmatprep.subr.mxu0 0.0
  %2789 = vmatpush1.msra.mxu0 0.0
  %2790 = vmatprep.subr.mxu0 0.0
  %2791 = vmatpush1.msra.mxu0 0.0
  %2792 = vmatprep.subr.mxu0 0.0
  %2793 = vmatpush1.msra.mxu0 0.0
  %2794 = vmatprep.subr.mxu0 0.0
  %2795 = vmatpush1.msra.mxu0 0.0
  %2796 = vmatprep.subr.mxu0 0.0
  %2797 = vmatpush1.msra.mxu0 0.0
  %2798 = vmatprep.subr.mxu0 0.0
  %2799 = vmatpush1.msra.mxu0 0.0
  %2800 = vmatprep.subr.mxu0 0.0
  %2801 = vmatpush1.msra.mxu0 0.0
  %2802 = vmatprep.subr.mxu0 0.0
  %2803 = vmatpush1.msra.mxu0 0.0
  %2804 = vmatprep.subr.mxu0 0.0
  %2805 = vmatpush1.msra.mxu0 0.0
  %2806 = vmatprep.subr.mxu0 0.0
  %2807 = vmatpush1.msra.mxu0 0.0
  %2808 = vmatprep.subr.mxu0 0.0
  %2809 = vmatpush1.msra.mxu0 0.0
  %2810 = vmatprep.subr.mxu0 0.0
  %2811 = vmatpush1.msra.mxu0 0.0
  %2812 = vmatprep.subr.mxu0 0.0
  %2813 = vmatpush1.msra.mxu0 0.0
  %2814 = vmatprep.subr.mxu0 0.0
  %2815 = vmatpush1.msra.mxu0 0.0
  %2816 = vmatprep.subr.mxu0 0.0
  %2817 = vmatpush1.msra.mxu0 0.0
  %2818 = vmatprep.subr.mxu0 0.0
  %2819 = vmatpush1.msra.mxu0 0.0
  %2820 = vmatprep.subr.mxu0 0.0
  %2821 = vmatpush1.msra.mxu0 0.0
  %2822 = vmatprep.subr.mxu0 0.0
  %2823 = vmatpush1.msra.mxu0 0.0
  %2824 = vmatprep.subr.mxu0 0.0
  %2825 = vmatpush1.msra.mxu0 0.0
  %2826 = vmatprep.subr.mxu0 0.0
  %2827 = vmatpush1.msra.mxu0 0.0
  %2828 = vmatprep.subr.mxu0 0.0
  %2829 = vmatpush1.msra.mxu0 0.0
  %2830 = vmatprep.subr.mxu0 0.0
  %2831 = vmatpush1.msra.mxu0 0.0
  %2832 = vmatprep.subr.mxu0 0.0
  %2833 = vmatpush1.msra.mxu0 0.0
  %2834 = vmatprep.subr.mxu0 0.0
  %2835 = vmatpush1.msra.mxu0 0.0
  %2836 = vmatprep.subr.mxu0 0.0
  %2837 = vmatpush1.msra.mxu0 0.0
  %2838 = vmatprep.subr.mxu0 0.0
  %2839 = vmatpush1.msra.mxu0 0.0
  %2840 = vmatprep.subr.mxu0 0.0
  %2841 = vmatpush1.msra.mxu0 0.0
  %2842 = vmatprep.subr.mxu0 0.0
  %2843 = vmatpush1.msra.mxu0 0.0
  %2844 = vmatprep.subr.mxu0 0.0
  %2845 = vmatpush1.msra.mxu0 0.0
  %2846 = vmatprep.mubr.f32.mxu0 0.0
  %2847 = vmatmul.mubr.f32.gmra.mrb[0].mxu0 %v2780
  %v2848 = vpop.f32.mrb[0].mxu0
  %v2849 = vadd.f32 0.0, %v2848
  %v2850 = vpop.f32.mrb[0].mxu0
  %2851 = vdwg.mxu0
  %2852 = vrot.lane.b32.xlu0 %v1672, 32
  %v2853 = vpop.permute.xlu0 %2852
  %v2856 = vsel %vm2307, %v2393, 0
  %2858 = vmatprep.subr.mxu0 0.0
  %2859 = vmatpush1.msra.mxu0 %v2853
  %2860 = vmatprep.subr.mxu0 0.0
  %2861 = vmatpush1.msra.mxu0 0.0
  %2862 = vmatprep.subr.mxu0 0.0
  %2863 = vmatpush1.msra.mxu0 0.0
  %2864 = vmatprep.subr.mxu0 0.0
  %2865 = vmatpush1.msra.mxu0 0.0
  %2866 = vmatprep.subr.mxu0 0.0
  %2867 = vmatpush1.msra.mxu0 0.0
  %2868 = vmatprep.subr.mxu0 0.0
  %2869 = vmatpush1.msra.mxu0 0.0
  %2870 = vmatprep.subr.mxu0 0.0
  %2871 = vmatpush1.msra.mxu0 0.0
  %2872 = vmatprep.subr.mxu0 0.0
  %2873 = vmatpush1.msra.mxu0 0.0
  %2874 = vmatprep.subr.mxu0 0.0
  %2875 = vmatpush1.msra.mxu0 0.0
  %2876 = vmatprep.subr.mxu0 0.0
  %2877 = vmatpush1.msra.mxu0 0.0
  %2878 = vmatprep.subr.mxu0 0.0
  %2879 = vmatpush1.msra.mxu0 0.0
  %2880 = vmatprep.subr.mxu0 0.0
  %2881 = vmatpush1.msra.mxu0 0.0
  %2882 = vmatprep.subr.mxu0 0.0
  %2883 = vmatpush1.msra.mxu0 0.0
  %2884 = vmatprep.subr.mxu0 0.0
  %2885 = vmatpush1.msra.mxu0 0.0
  %2886 = vmatprep.subr.mxu0 0.0
  %2887 = vmatpush1.msra.mxu0 0.0
  %2888 = vmatprep.subr.mxu0 0.0
  %2889 = vmatpush1.msra.mxu0 0.0
  %2890 = vmatprep.subr.mxu0 0.0
  %2891 = vmatpush1.msra.mxu0 0.0
  %2892 = vmatprep.subr.mxu0 0.0
  %2893 = vmatpush1.msra.mxu0 0.0
  %2894 = vmatprep.subr.mxu0 0.0
  %2895 = vmatpush1.msra.mxu0 0.0
  %2896 = vmatprep.subr.mxu0 0.0
  %2897 = vmatpush1.msra.mxu0 0.0
  %2898 = vmatprep.subr.mxu0 0.0
  %2899 = vmatpush1.msra.mxu0 0.0
  %2900 = vmatprep.subr.mxu0 0.0
  %2901 = vmatpush1.msra.mxu0 0.0
  %2902 = vmatprep.subr.mxu0 0.0
  %2903 = vmatpush1.msra.mxu0 0.0
  %2904 = vmatprep.subr.mxu0 0.0
  %2905 = vmatpush1.msra.mxu0 0.0
  %2906 = vmatprep.subr.mxu0 0.0
  %2907 = vmatpush1.msra.mxu0 0.0
  %2908 = vmatprep.subr.mxu0 0.0
  %2909 = vmatpush1.msra.mxu0 0.0
  %2910 = vmatprep.subr.mxu0 0.0
  %2911 = vmatpush1.msra.mxu0 0.0
  %2912 = vmatprep.subr.mxu0 0.0
  %2913 = vmatpush1.msra.mxu0 0.0
  %2914 = vmatprep.subr.mxu0 0.0
  %2915 = vmatpush1.msra.mxu0 0.0
  %2916 = vmatprep.subr.mxu0 0.0
  %2917 = vmatpush1.msra.mxu0 0.0
  %2918 = vmatprep.subr.mxu0 0.0
  %2919 = vmatpush1.msra.mxu0 0.0
  %2920 = vmatprep.subr.mxu0 0.0
  %2921 = vmatpush1.msra.mxu0 0.0
  %2922 = vmatprep.mubr.f32.mxu0 0.0
  %2923 = vmatmul.mubr.f32.gmra.mrb[0].mxu0 %v2856
  %v2924 = vpop.f32.mrb[0].mxu0
  %v2925 = vadd.f32 0.0, %v2924
  %v2926 = vpop.f32.mrb[0].mxu0
  %2927 = vdwg.mxu0
  %2928 = vrot.lane.b32.xlu0 %v1678, 32
  %v2929 = vpop.permute.xlu0 %2928
  %v2932 = vsel %vm2307, %v2395, 0
  %2934 = vmatprep.subr.mxu0 0.0
  %2935 = vmatpush1.msra.mxu0 %v2929
  %2936 = vmatprep.subr.mxu0 0.0
  %2937 = vmatpush1.msra.mxu0 0.0
  %2938 = vmatprep.subr.mxu0 0.0
  %2939 = vmatpush1.msra.mxu0 0.0
  %2940 = vmatprep.subr.mxu0 0.0
  %2941 = vmatpush1.msra.mxu0 0.0
  %2942 = vmatprep.subr.mxu0 0.0
  %2943 = vmatpush1.msra.mxu0 0.0
  %2944 = vmatprep.subr.mxu0 0.0
  %2945 = vmatpush1.msra.mxu0 0.0
  %2946 = vmatprep.subr.mxu0 0.0
  %2947 = vmatpush1.msra.mxu0 0.0
  %2948 = vmatprep.subr.mxu0 0.0
  %2949 = vmatpush1.msra.mxu0 0.0
  %2950 = vmatprep.subr.mxu0 0.0
  %2951 = vmatpush1.msra.mxu0 0.0
  %2952 = vmatprep.subr.mxu0 0.0
  %2953 = vmatpush1.msra.mxu0 0.0
  %2954 = vmatprep.subr.mxu0 0.0
  %2955 = vmatpush1.msra.mxu0 0.0
  %2956 = vmatprep.subr.mxu0 0.0
  %2957 = vmatpush1.msra.mxu0 0.0
  %2958 = vmatprep.subr.mxu0 0.0
  %2959 = vmatpush1.msra.mxu0 0.0
  %2960 = vmatprep.subr.mxu0 0.0
  %2961 = vmatpush1.msra.mxu0 0.0
  %2962 = vmatprep.subr.mxu0 0.0
  %2963 = vmatpush1.msra.mxu0 0.0
  %2964 = vmatprep.subr.mxu0 0.0
  %2965 = vmatpush1.msra.mxu0 0.0
  %2966 = vmatprep.subr.mxu0 0.0
  %2967 = vmatpush1.msra.mxu0 0.0
  %2968 = vmatprep.subr.mxu0 0.0
  %2969 = vmatpush1.msra.mxu0 0.0
  %2970 = vmatprep.subr.mxu0 0.0
  %2971 = vmatpush1.msra.mxu0 0.0
  %2972 = vmatprep.subr.mxu0 0.0
  %2973 = vmatpush1.msra.mxu0 0.0
  %2974 = vmatprep.subr.mxu0 0.0
  %2975 = vmatpush1.msra.mxu0 0.0
  %2976 = vmatprep.subr.mxu0 0.0
  %2977 = vmatpush1.msra.mxu0 0.0
  %2978 = vmatprep.subr.mxu0 0.0
  %2979 = vmatpush1.msra.mxu0 0.0
  %2980 = vmatprep.subr.mxu0 0.0
  %2981 = vmatpush1.msra.mxu0 0.0
  %2982 = vmatprep.subr.mxu0 0.0
  %2983 = vmatpush1.msra.mxu0 0.0
  %2984 = vmatprep.subr.mxu0 0.0
  %2985 = vmatpush1.msra.mxu0 0.0
  %2986 = vmatprep.subr.mxu0 0.0
  %2987 = vmatpush1.msra.mxu0 0.0
  %2988 = vmatprep.subr.mxu0 0.0
  %2989 = vmatpush1.msra.mxu0 0.0
  %2990 = vmatprep.subr.mxu0 0.0
  %2991 = vmatpush1.msra.mxu0 0.0
  %2992 = vmatprep.subr.mxu0 0.0
  %2993 = vmatpush1.msra.mxu0 0.0
  %2994 = vmatprep.subr.mxu0 0.0
  %2995 = vmatpush1.msra.mxu0 0.0
  %2996 = vmatprep.subr.mxu0 0.0
  %2997 = vmatpush1.msra.mxu0 0.0
  %2998 = vmatprep.mubr.f32.mxu0 0.0
  %2999 = vmatmul.mubr.f32.gmra.mrb[0].mxu0 %v2932
  %v3000 = vpop.f32.mrb[0].mxu0
  %v3001 = vadd.f32 0.0, %v3000
  %v3002 = vpop.f32.mrb[0].mxu0
  %3003 = vdwg.mxu0
  %3004 = vrot.lane.b32.xlu0 %v1636, 112
  %v3005 = vpop.permute.xlu0 %3004
  %3006 = vrot.lane.b32.xlu0 %v1636, 64
  %v3007 = vpop.permute.xlu0 %3006
  %v3008 = vsel %vm1685, %v3005, 0
  %v3010 = vsel %vm1685, %v3007, 0
  %3012 = vmatprep.subr.mxu0 0.0
  %3013 = vmatpush1.xpose.msra.mxu0 %v3010
  %3014 = vmatprep.subr.mxu0 0.0
  %3015 = vmatpush1.xpose.msra.mxu0 0.0
  %3016 = vmatprep.subr.mxu0 0.0
  %3017 = vmatpush1.xpose.msra.mxu0 0.0
  %3018 = vmatprep.subr.mxu0 0.0
  %3019 = vmatpush1.xpose.msra.mxu0 0.0
  %3020 = vmatprep.subr.mxu0 0.0
  %3021 = vmatpush1.xpose.msra.mxu0 0.0
  %3022 = vmatprep.subr.mxu0 0.0
  %3023 = vmatpush1.xpose.msra.mxu0 0.0
  %3024 = vmatprep.subr.mxu0 0.0
  %3025 = vmatpush1.xpose.msra.mxu0 0.0
  %3026 = vmatprep.subr.mxu0 0.0
  %3027 = vmatpush1.xpose.msra.mxu0 0.0
  %3028 = vmatprep.subr.mxu0 0.0
  %3029 = vmatpush1.xpose.msra.mxu0 0.0
  %3030 = vmatprep.subr.mxu0 0.0
  %3031 = vmatpush1.xpose.msra.mxu0 0.0
  %3032 = vmatprep.subr.mxu0 0.0
  %3033 = vmatpush1.xpose.msra.mxu0 0.0
  %3034 = vmatprep.subr.mxu0 0.0
  %3035 = vmatpush1.xpose.msra.mxu0 0.0
  %3036 = vmatprep.subr.mxu0 0.0
  %3037 = vmatpush1.xpose.msra.mxu0 0.0
  %3038 = vmatprep.subr.mxu0 0.0
  %3039 = vmatpush1.xpose.msra.mxu0 0.0
  %3040 = vmatprep.subr.mxu0 0.0
  %3041 = vmatpush1.xpose.msra.mxu0 0.0
  %3042 = vmatprep.subr.mxu0 0.0
  %3043 = vmatpush1.xpose.msra.mxu0 0.0
  %3044 = vmatprep.subr.mxu0 0.0
  %3045 = vmatpush1.xpose.msra.mxu0 0.0
  %3046 = vmatprep.subr.mxu0 0.0
  %3047 = vmatpush1.xpose.msra.mxu0 0.0
  %3048 = vmatprep.subr.mxu0 0.0
  %3049 = vmatpush1.xpose.msra.mxu0 0.0
  %3050 = vmatprep.subr.mxu0 0.0
  %3051 = vmatpush1.xpose.msra.mxu0 0.0
  %3052 = vmatprep.subr.mxu0 0.0
  %3053 = vmatpush1.xpose.msra.mxu0 0.0
  %3054 = vmatprep.subr.mxu0 0.0
  %3055 = vmatpush1.xpose.msra.mxu0 0.0
  %3056 = vmatprep.subr.mxu0 0.0
  %3057 = vmatpush1.xpose.msra.mxu0 0.0
  %3058 = vmatprep.subr.mxu0 0.0
  %3059 = vmatpush1.xpose.msra.mxu0 0.0
  %3060 = vmatprep.subr.mxu0 0.0
  %3061 = vmatpush1.xpose.msra.mxu0 0.0
  %3062 = vmatprep.subr.mxu0 0.0
  %3063 = vmatpush1.xpose.msra.mxu0 0.0
  %3064 = vmatprep.subr.mxu0 0.0
  %3065 = vmatpush1.xpose.msra.mxu0 0.0
  %3066 = vmatprep.subr.mxu0 0.0
  %3067 = vmatpush1.xpose.msra.mxu0 0.0
  %3068 = vmatprep.subr.mxu0 0.0
  %3069 = vmatpush1.xpose.msra.mxu0 0.0
  %3070 = vmatprep.subr.mxu0 0.0
  %3071 = vmatpush1.xpose.msra.mxu0 0.0
  %3072 = vmatprep.subr.mxu0 0.0
  %3073 = vmatpush1.xpose.msra.mxu0 0.0
  %3074 = vmatprep.subr.mxu0 0.0
  %3075 = vmatpush1.xpose.msra.mxu0 0.0
  %3076 = vmatprep.mubr.f32.mxu0 0.0
  %3077 = vmatmul.mubr.f32.gmra.mrb[0].mxu0 %v3008
  %v3078 = vpop.f32.mrb[0].mxu0
  %v3079 = vadd.f32 0.0, %v3078
  %v3080 = vpop.f32.mrb[0].mxu0
  %3081 = vdwg.mxu0
  %3082 = vrot.lane.b32.xlu0 %v1642, 112
  %v3083 = vpop.permute.xlu0 %3082
  %3084 = vrot.lane.b32.xlu0 %v1642, 64
  %v3085 = vpop.permute.xlu0 %3084
  %v3086 = vsel %vm1685, %v3083, 0
  %v3088 = vsel %vm1685, %v3085, 0
  %3090 = vmatprep.subr.mxu0 0.0
  %3091 = vmatpush1.xpose.msra.mxu0 %v3088
  %3092 = vmatprep.subr.mxu0 0.0
  %3093 = vmatpush1.xpose.msra.mxu0 0.0
  %3094 = vmatprep.subr.mxu0 0.0
  %3095 = vmatpush1.xpose.msra.mxu0 0.0
  %3096 = vmatprep.subr.mxu0 0.0
  %3097 = vmatpush1.xpose.msra.mxu0 0.0
  %3098 = vmatprep.subr.mxu0 0.0
  %3099 = vmatpush1.xpose.msra.mxu0 0.0
  %3100 = vmatprep.subr.mxu0 0.0
  %3101 = vmatpush1.xpose.msra.mxu0 0.0
  %3102 = vmatprep.subr.mxu0 0.0
  %3103 = vmatpush1.xpose.msra.mxu0 0.0
  %3104 = vmatprep.subr.mxu0 0.0
  %3105 = vmatpush1.xpose.msra.mxu0 0.0
  %3106 = vmatprep.subr.mxu0 0.0
  %3107 = vmatpush1.xpose.msra.mxu0 0.0
  %3108 = vmatprep.subr.mxu0 0.0
  %3109 = vmatpush1.xpose.msra.mxu0 0.0
  %3110 = vmatprep.subr.mxu0 0.0
  %3111 = vmatpush1.xpose.msra.mxu0 0.0
  %3112 = vmatprep.subr.mxu0 0.0
  %3113 = vmatpush1.xpose.msra.mxu0 0.0
  %3114 = vmatprep.subr.mxu0 0.0
  %3115 = vmatpush1.xpose.msra.mxu0 0.0
  %3116 = vmatprep.subr.mxu0 0.0
  %3117 = vmatpush1.xpose.msra.mxu0 0.0
  %3118 = vmatprep.subr.mxu0 0.0
  %3119 = vmatpush1.xpose.msra.mxu0 0.0
  %3120 = vmatprep.subr.mxu0 0.0
  %3121 = vmatpush1.xpose.msra.mxu0 0.0
  %3122 = vmatprep.subr.mxu0 0.0
  %3123 = vmatpush1.xpose.msra.mxu0 0.0
  %3124 = vmatprep.subr.mxu0 0.0
  %3125 = vmatpush1.xpose.msra.mxu0 0.0
  %3126 = vmatprep.subr.mxu0 0.0
  %3127 = vmatpush1.xpose.msra.mxu0 0.0
  %3128 = vmatprep.subr.mxu0 0.0
  %3129 = vmatpush1.xpose.msra.mxu0 0.0
  %3130 = vmatprep.subr.mxu0 0.0
  %3131 = vmatpush1.xpose.msra.mxu0 0.0
  %3132 = vmatprep.subr.mxu0 0.0
  %3133 = vmatpush1.xpose.msra.mxu0 0.0
  %3134 = vmatprep.subr.mxu0 0.0
  %3135 = vmatpush1.xpose.msra.mxu0 0.0
  %3136 = vmatprep.subr.mxu0 0.0
  %3137 = vmatpush1.xpose.msra.mxu0 0.0
  %3138 = vmatprep.subr.mxu0 0.0
  %3139 = vmatpush1.xpose.msra.mxu0 0.0
  %3140 = vmatprep.subr.mxu0 0.0
  %3141 = vmatpush1.xpose.msra.mxu0 0.0
  %3142 = vmatprep.subr.mxu0 0.0
  %3143 = vmatpush1.xpose.msra.mxu0 0.0
  %3144 = vmatprep.subr.mxu0 0.0
  %3145 = vmatpush1.xpose.msra.mxu0 0.0
  %3146 = vmatprep.subr.mxu0 0.0
  %3147 = vmatpush1.xpose.msra.mxu0 0.0
  %3148 = vmatprep.subr.mxu0 0.0
  %3149 = vmatpush1.xpose.msra.mxu0 0.0
  %3150 = vmatprep.subr.mxu0 0.0
  %3151 = vmatpush1.xpose.msra.mxu0 0.0
  %3152 = vmatprep.subr.mxu0 0.0
  %3153 = vmatpush1.xpose.msra.mxu0 0.0
  %3154 = vmatprep.mubr.f32.mxu0 0.0
  %3155 = vmatmul.mubr.f32.gmra.mrb[0].mxu0 %v3086
  %v3156 = vpop.f32.mrb[0].mxu0
  %v3157 = vadd.f32 0.0, %v3156
  %v3158 = vpop.f32.mrb[0].mxu0
  %3159 = vdwg.mxu0
  %3160 = vrot.lane.b32.xlu0 %v1648, 112
  %v3161 = vpop.permute.xlu0 %3160
  %3162 = vrot.lane.b32.xlu0 %v1648, 64
  %v3163 = vpop.permute.xlu0 %3162
  %v3164 = vsel %vm1685, %v3161, 0
  %v3166 = vsel %vm1685, %v3163, 0
  %3168 = vmatprep.subr.mxu0 0.0
  %3169 = vmatpush1.xpose.msra.mxu0 %v3166
  %3170 = vmatprep.subr.mxu0 0.0
  %3171 = vmatpush1.xpose.msra.mxu0 0.0
  %3172 = vmatprep.subr.mxu0 0.0
  %3173 = vmatpush1.xpose.msra.mxu0 0.0
  %3174 = vmatprep.subr.mxu0 0.0
  %3175 = vmatpush1.xpose.msra.mxu0 0.0
  %3176 = vmatprep.subr.mxu0 0.0
  %3177 = vmatpush1.xpose.msra.mxu0 0.0
  %3178 = vmatprep.subr.mxu0 0.0
  %3179 = vmatpush1.xpose.msra.mxu0 0.0
  %3180 = vmatprep.subr.mxu0 0.0
  %3181 = vmatpush1.xpose.msra.mxu0 0.0
  %3182 = vmatprep.subr.mxu0 0.0
  %3183 = vmatpush1.xpose.msra.mxu0 0.0
  %3184 = vmatprep.subr.mxu0 0.0
  %3185 = vmatpush1.xpose.msra.mxu0 0.0
  %3186 = vmatprep.subr.mxu0 0.0
  %3187 = vmatpush1.xpose.msra.mxu0 0.0
  %3188 = vmatprep.subr.mxu0 0.0
  %3189 = vmatpush1.xpose.msra.mxu0 0.0
  %3190 = vmatprep.subr.mxu0 0.0
  %3191 = vmatpush1.xpose.msra.mxu0 0.0
  %3192 = vmatprep.subr.mxu0 0.0
  %3193 = vmatpush1.xpose.msra.mxu0 0.0
  %3194 = vmatprep.subr.mxu0 0.0
  %3195 = vmatpush1.xpose.msra.mxu0 0.0
  %3196 = vmatprep.subr.mxu0 0.0
  %3197 = vmatpush1.xpose.msra.mxu0 0.0
  %3198 = vmatprep.subr.mxu0 0.0
  %3199 = vmatpush1.xpose.msra.mxu0 0.0
  %3200 = vmatprep.subr.mxu0 0.0
  %3201 = vmatpush1.xpose.msra.mxu0 0.0
  %3202 = vmatprep.subr.mxu0 0.0
  %3203 = vmatpush1.xpose.msra.mxu0 0.0
  %3204 = vmatprep.subr.mxu0 0.0
  %3205 = vmatpush1.xpose.msra.mxu0 0.0
  %3206 = vmatprep.subr.mxu0 0.0
  %3207 = vmatpush1.xpose.msra.mxu0 0.0
  %3208 = vmatprep.subr.mxu0 0.0
  %3209 = vmatpush1.xpose.msra.mxu0 0.0
  %3210 = vmatprep.subr.mxu0 0.0
  %3211 = vmatpush1.xpose.msra.mxu0 0.0
  %3212 = vmatprep.subr.mxu0 0.0
  %3213 = vmatpush1.xpose.msra.mxu0 0.0
  %3214 = vmatprep.subr.mxu0 0.0
  %3215 = vmatpush1.xpose.msra.mxu0 0.0
  %3216 = vmatprep.subr.mxu0 0.0
  %3217 = vmatpush1.xpose.msra.mxu0 0.0
  %3218 = vmatprep.subr.mxu0 0.0
  %3219 = vmatpush1.xpose.msra.mxu0 0.0
  %3220 = vmatprep.subr.mxu0 0.0
  %3221 = vmatpush1.xpose.msra.mxu0 0.0
  %3222 = vmatprep.subr.mxu0 0.0
  %3223 = vmatpush1.xpose.msra.mxu0 0.0
  %3224 = vmatprep.subr.mxu0 0.0
  %3225 = vmatpush1.xpose.msra.mxu0 0.0
  %3226 = vmatprep.subr.mxu0 0.0
  %3227 = vmatpush1.xpose.msra.mxu0 0.0
  %3228 = vmatprep.subr.mxu0 0.0
  %3229 = vmatpush1.xpose.msra.mxu0 0.0
  %3230 = vmatprep.subr.mxu0 0.0
  %3231 = vmatpush1.xpose.msra.mxu0 0.0
  %3232 = vmatprep.mubr.f32.mxu0 0.0
  %3233 = vmatmul.mubr.f32.gmra.mrb[0].mxu0 %v3164
  %v3234 = vpop.f32.mrb[0].mxu0
  %v3235 = vadd.f32 0.0, %v3234
  %v3236 = vpop.f32.mrb[0].mxu0
  %3237 = vdwg.mxu0
  %3238 = vrot.lane.b32.xlu0 %v1654, 112
  %v3239 = vpop.permute.xlu0 %3238
  %3240 = vrot.lane.b32.xlu0 %v1654, 64
  %v3241 = vpop.permute.xlu0 %3240
  %v3242 = vsel %vm1685, %v3239, 0
  %v3244 = vsel %vm1685, %v3241, 0
  %3246 = vmatprep.subr.mxu0 0.0
  %3247 = vmatpush1.xpose.msra.mxu0 %v3244
  %3248 = vmatprep.subr.mxu0 0.0
  %3249 = vmatpush1.xpose.msra.mxu0 0.0
  %3250 = vmatprep.subr.mxu0 0.0
  %3251 = vmatpush1.xpose.msra.mxu0 0.0
  %3252 = vmatprep.subr.mxu0 0.0
  %3253 = vmatpush1.xpose.msra.mxu0 0.0
  %3254 = vmatprep.subr.mxu0 0.0
  %3255 = vmatpush1.xpose.msra.mxu0 0.0
  %3256 = vmatprep.subr.mxu0 0.0
  %3257 = vmatpush1.xpose.msra.mxu0 0.0
  %3258 = vmatprep.subr.mxu0 0.0
  %3259 = vmatpush1.xpose.msra.mxu0 0.0
  %3260 = vmatprep.subr.mxu0 0.0
  %3261 = vmatpush1.xpose.msra.mxu0 0.0
  %3262 = vmatprep.subr.mxu0 0.0
  %3263 = vmatpush1.xpose.msra.mxu0 0.0
  %3264 = vmatprep.subr.mxu0 0.0
  %3265 = vmatpush1.xpose.msra.mxu0 0.0
  %3266 = vmatprep.subr.mxu0 0.0
  %3267 = vmatpush1.xpose.msra.mxu0 0.0
  %3268 = vmatprep.subr.mxu0 0.0
  %3269 = vmatpush1.xpose.msra.mxu0 0.0
  %3270 = vmatprep.subr.mxu0 0.0
  %3271 = vmatpush1.xpose.msra.mxu0 0.0
  %3272 = vmatprep.subr.mxu0 0.0
  %3273 = vmatpush1.xpose.msra.mxu0 0.0
  %3274 = vmatprep.subr.mxu0 0.0
  %3275 = vmatpush1.xpose.msra.mxu0 0.0
  %3276 = vmatprep.subr.mxu0 0.0
  %3277 = vmatpush1.xpose.msra.mxu0 0.0
  %3278 = vmatprep.subr.mxu0 0.0
  %3279 = vmatpush1.xpose.msra.mxu0 0.0
  %3280 = vmatprep.subr.mxu0 0.0
  %3281 = vmatpush1.xpose.msra.mxu0 0.0
  %3282 = vmatprep.subr.mxu0 0.0
  %3283 = vmatpush1.xpose.msra.mxu0 0.0
  %3284 = vmatprep.subr.mxu0 0.0
  %3285 = vmatpush1.xpose.msra.mxu0 0.0
  %3286 = vmatprep.subr.mxu0 0.0
  %3287 = vmatpush1.xpose.msra.mxu0 0.0
  %3288 = vmatprep.subr.mxu0 0.0
  %3289 = vmatpush1.xpose.msra.mxu0 0.0
  %3290 = vmatprep.subr.mxu0 0.0
  %3291 = vmatpush1.xpose.msra.mxu0 0.0
  %3292 = vmatprep.subr.mxu0 0.0
  %3293 = vmatpush1.xpose.msra.mxu0 0.0
  %3294 = vmatprep.subr.mxu0 0.0
  %3295 = vmatpush1.xpose.msra.mxu0 0.0
  %3296 = vmatprep.subr.mxu0 0.0
  %3297 = vmatpush1.xpose.msra.mxu0 0.0
  %3298 = vmatprep.subr.mxu0 0.0
  %3299 = vmatpush1.xpose.msra.mxu0 0.0
  %3300 = vmatprep.subr.mxu0 0.0
  %3301 = vmatpush1.xpose.msra.mxu0 0.0
  %3302 = vmatprep.subr.mxu0 0.0
  %3303 = vmatpush1.xpose.msra.mxu0 0.0
  %3304 = vmatprep.subr.mxu0 0.0
  %3305 = vmatpush1.xpose.msra.mxu0 0.0
  %3306 = vmatprep.subr.mxu0 0.0
  %3307 = vmatpush1.xpose.msra.mxu0 0.0
  %3308 = vmatprep.subr.mxu0 0.0
  %3309 = vmatpush1.xpose.msra.mxu0 0.0
  %3310 = vmatprep.mubr.f32.mxu0 0.0
  %3311 = vmatmul.mubr.f32.gmra.mrb[0].mxu0 %v3242
  %v3312 = vpop.f32.mrb[0].mxu0
  %v3313 = vadd.f32 0.0, %v3312
  %v3314 = vpop.f32.mrb[0].mxu0
  %3315 = vdwg.mxu0
  %3316 = vrot.lane.b32.xlu0 %v1660, 112
  %v3317 = vpop.permute.xlu0 %3316
  %3318 = vrot.lane.b32.xlu0 %v1660, 64
  %v3319 = vpop.permute.xlu0 %3318
  %v3320 = vsel %vm1685, %v3317, 0
  %v3322 = vsel %vm1685, %v3319, 0
  %3324 = vmatprep.subr.mxu0 0.0
  %3325 = vmatpush1.xpose.msra.mxu0 %v3322
  %3326 = vmatprep.subr.mxu0 0.0
  %3327 = vmatpush1.xpose.msra.mxu0 0.0
  %3328 = vmatprep.subr.mxu0 0.0
  %3329 = vmatpush1.xpose.msra.mxu0 0.0
  %3330 = vmatprep.subr.mxu0 0.0
  %3331 = vmatpush1.xpose.msra.mxu0 0.0
  %3332 = vmatprep.subr.mxu0 0.0
  %3333 = vmatpush1.xpose.msra.mxu0 0.0
  %3334 = vmatprep.subr.mxu0 0.0
  %3335 = vmatpush1.xpose.msra.mxu0 0.0
  %3336 = vmatprep.subr.mxu0 0.0
  %3337 = vmatpush1.xpose.msra.mxu0 0.0
  %3338 = vmatprep.subr.mxu0 0.0
  %3339 = vmatpush1.xpose.msra.mxu0 0.0
  %3340 = vmatprep.subr.mxu0 0.0
  %3341 = vmatpush1.xpose.msra.mxu0 0.0
  %3342 = vmatprep.subr.mxu0 0.0
  %3343 = vmatpush1.xpose.msra.mxu0 0.0
  %3344 = vmatprep.subr.mxu0 0.0
  %3345 = vmatpush1.xpose.msra.mxu0 0.0
  %3346 = vmatprep.subr.mxu0 0.0
  %3347 = vmatpush1.xpose.msra.mxu0 0.0
  %3348 = vmatprep.subr.mxu0 0.0
  %3349 = vmatpush1.xpose.msra.mxu0 0.0
  %3350 = vmatprep.subr.mxu0 0.0
  %3351 = vmatpush1.xpose.msra.mxu0 0.0
  %3352 = vmatprep.subr.mxu0 0.0
  %3353 = vmatpush1.xpose.msra.mxu0 0.0
  %3354 = vmatprep.subr.mxu0 0.0
  %3355 = vmatpush1.xpose.msra.mxu0 0.0
  %3356 = vmatprep.subr.mxu0 0.0
  %3357 = vmatpush1.xpose.msra.mxu0 0.0
  %3358 = vmatprep.subr.mxu0 0.0
  %3359 = vmatpush1.xpose.msra.mxu0 0.0
  %3360 = vmatprep.subr.mxu0 0.0
  %3361 = vmatpush1.xpose.msra.mxu0 0.0
  %3362 = vmatprep.subr.mxu0 0.0
  %3363 = vmatpush1.xpose.msra.mxu0 0.0
  %3364 = vmatprep.subr.mxu0 0.0
  %3365 = vmatpush1.xpose.msra.mxu0 0.0
  %3366 = vmatprep.subr.mxu0 0.0
  %3367 = vmatpush1.xpose.msra.mxu0 0.0
  %3368 = vmatprep.subr.mxu0 0.0
  %3369 = vmatpush1.xpose.msra.mxu0 0.0
  %3370 = vmatprep.subr.mxu0 0.0
  %3371 = vmatpush1.xpose.msra.mxu0 0.0
  %3372 = vmatprep.subr.mxu0 0.0
  %3373 = vmatpush1.xpose.msra.mxu0 0.0
  %3374 = vmatprep.subr.mxu0 0.0
  %3375 = vmatpush1.xpose.msra.mxu0 0.0
  %3376 = vmatprep.subr.mxu0 0.0
  %3377 = vmatpush1.xpose.msra.mxu0 0.0
  %3378 = vmatprep.subr.mxu0 0.0
  %3379 = vmatpush1.xpose.msra.mxu0 0.0
  %3380 = vmatprep.subr.mxu0 0.0
  %3381 = vmatpush1.xpose.msra.mxu0 0.0
  %3382 = vmatprep.subr.mxu0 0.0
  %3383 = vmatpush1.xpose.msra.mxu0 0.0
  %3384 = vmatprep.subr.mxu0 0.0
  %3385 = vmatpush1.xpose.msra.mxu0 0.0
  %3386 = vmatprep.subr.mxu0 0.0
  %3387 = vmatpush1.xpose.msra.mxu0 0.0
  %3388 = vmatprep.mubr.f32.mxu0 0.0
  %3389 = vmatmul.mubr.f32.gmra.mrb[0].mxu0 %v3320
  %v3390 = vpop.f32.mrb[0].mxu0
  %v3391 = vadd.f32 0.0, %v3390
  %v3392 = vpop.f32.mrb[0].mxu0
  %3393 = vdwg.mxu0
  %3394 = vrot.lane.b32.xlu0 %v1666, 112
  %v3395 = vpop.permute.xlu0 %3394
  %3396 = vrot.lane.b32.xlu0 %v1666, 64
  %v3397 = vpop.permute.xlu0 %3396
  %v3398 = vsel %vm1685, %v3395, 0
  %v3400 = vsel %vm1685, %v3397, 0
  %3402 = vmatprep.subr.mxu0 0.0
  %3403 = vmatpush1.xpose.msra.mxu0 %v3400
  %3404 = vmatprep.subr.mxu0 0.0
  %3405 = vmatpush1.xpose.msra.mxu0 0.0
  %3406 = vmatprep.subr.mxu0 0.0
  %3407 = vmatpush1.xpose.msra.mxu0 0.0
  %3408 = vmatprep.subr.mxu0 0.0
  %3409 = vmatpush1.xpose.msra.mxu0 0.0
  %3410 = vmatprep.subr.mxu0 0.0
  %3411 = vmatpush1.xpose.msra.mxu0 0.0
  %3412 = vmatprep.subr.mxu0 0.0
  %3413 = vmatpush1.xpose.msra.mxu0 0.0
  %3414 = vmatprep.subr.mxu0 0.0
  %3415 = vmatpush1.xpose.msra.mxu0 0.0
  %3416 = vmatprep.subr.mxu0 0.0
  %3417 = vmatpush1.xpose.msra.mxu0 0.0
  %3418 = vmatprep.subr.mxu0 0.0
  %3419 = vmatpush1.xpose.msra.mxu0 0.0
  %3420 = vmatprep.subr.mxu0 0.0
  %3421 = vmatpush1.xpose.msra.mxu0 0.0
  %3422 = vmatprep.subr.mxu0 0.0
  %3423 = vmatpush1.xpose.msra.mxu0 0.0
  %3424 = vmatprep.subr.mxu0 0.0
  %3425 = vmatpush1.xpose.msra.mxu0 0.0
  %3426 = vmatprep.subr.mxu0 0.0
  %3427 = vmatpush1.xpose.msra.mxu0 0.0
  %3428 = vmatprep.subr.mxu0 0.0
  %3429 = vmatpush1.xpose.msra.mxu0 0.0
  %3430 = vmatprep.subr.mxu0 0.0
  %3431 = vmatpush1.xpose.msra.mxu0 0.0
  %3432 = vmatprep.subr.mxu0 0.0
  %3433 = vmatpush1.xpose.msra.mxu0 0.0
  %3434 = vmatprep.subr.mxu0 0.0
  %3435 = vmatpush1.xpose.msra.mxu0 0.0
  %3436 = vmatprep.subr.mxu0 0.0
  %3437 = vmatpush1.xpose.msra.mxu0 0.0
  %3438 = vmatprep.subr.mxu0 0.0
  %3439 = vmatpush1.xpose.msra.mxu0 0.0
  %3440 = vmatprep.subr.mxu0 0.0
  %3441 = vmatpush1.xpose.msra.mxu0 0.0
  %3442 = vmatprep.subr.mxu0 0.0
  %3443 = vmatpush1.xpose.msra.mxu0 0.0
  %3444 = vmatprep.subr.mxu0 0.0
  %3445 = vmatpush1.xpose.msra.mxu0 0.0
  %3446 = vmatprep.subr.mxu0 0.0
  %3447 = vmatpush1.xpose.msra.mxu0 0.0
  %3448 = vmatprep.subr.mxu0 0.0
  %3449 = vmatpush1.xpose.msra.mxu0 0.0
  %3450 = vmatprep.subr.mxu0 0.0
  %3451 = vmatpush1.xpose.msra.mxu0 0.0
  %3452 = vmatprep.subr.mxu0 0.0
  %3453 = vmatpush1.xpose.msra.mxu0 0.0
  %3454 = vmatprep.subr.mxu0 0.0
  %3455 = vmatpush1.xpose.msra.mxu0 0.0
  %3456 = vmatprep.subr.mxu0 0.0
  %3457 = vmatpush1.xpose.msra.mxu0 0.0
  %3458 = vmatprep.subr.mxu0 0.0
  %3459 = vmatpush1.xpose.msra.mxu0 0.0
  %3460 = vmatprep.subr.mxu0 0.0
  %3461 = vmatpush1.xpose.msra.mxu0 0.0
  %3462 = vmatprep.subr.mxu0 0.0
  %3463 = vmatpush1.xpose.msra.mxu0 0.0
  %3464 = vmatprep.subr.mxu0 0.0
  %3465 = vmatpush1.xpose.msra.mxu0 0.0
  %3466 = vmatprep.mubr.f32.mxu0 0.0
  %3467 = vmatmul.mubr.f32.gmra.mrb[0].mxu0 %v3398
  %v3468 = vpop.f32.mrb[0].mxu0
  %v3469 = vadd.f32 0.0, %v3468
  %v3470 = vpop.f32.mrb[0].mxu0
  %3471 = vdwg.mxu0
  %3472 = vrot.lane.b32.xlu0 %v1672, 112
  %v3473 = vpop.permute.xlu0 %3472
  %3474 = vrot.lane.b32.xlu0 %v1672, 64
  %v3475 = vpop.permute.xlu0 %3474
  %v3476 = vsel %vm1685, %v3473, 0
  %v3478 = vsel %vm1685, %v3475, 0
  %3480 = vmatprep.subr.mxu0 0.0
  %3481 = vmatpush1.xpose.msra.mxu0 %v3478
  %3482 = vmatprep.subr.mxu0 0.0
  %3483 = vmatpush1.xpose.msra.mxu0 0.0
  %3484 = vmatprep.subr.mxu0 0.0
  %3485 = vmatpush1.xpose.msra.mxu0 0.0
  %3486 = vmatprep.subr.mxu0 0.0
  %3487 = vmatpush1.xpose.msra.mxu0 0.0
  %3488 = vmatprep.subr.mxu0 0.0
  %3489 = vmatpush1.xpose.msra.mxu0 0.0
  %3490 = vmatprep.subr.mxu0 0.0
  %3491 = vmatpush1.xpose.msra.mxu0 0.0
  %3492 = vmatprep.subr.mxu0 0.0
  %3493 = vmatpush1.xpose.msra.mxu0 0.0
  %3494 = vmatprep.subr.mxu0 0.0
  %3495 = vmatpush1.xpose.msra.mxu0 0.0
  %3496 = vmatprep.subr.mxu0 0.0
  %3497 = vmatpush1.xpose.msra.mxu0 0.0
  %3498 = vmatprep.subr.mxu0 0.0
  %3499 = vmatpush1.xpose.msra.mxu0 0.0
  %3500 = vmatprep.subr.mxu0 0.0
  %3501 = vmatpush1.xpose.msra.mxu0 0.0
  %3502 = vmatprep.subr.mxu0 0.0
  %3503 = vmatpush1.xpose.msra.mxu0 0.0
  %3504 = vmatprep.subr.mxu0 0.0
  %3505 = vmatpush1.xpose.msra.mxu0 0.0
  %3506 = vmatprep.subr.mxu0 0.0
  %3507 = vmatpush1.xpose.msra.mxu0 0.0
  %3508 = vmatprep.subr.mxu0 0.0
  %3509 = vmatpush1.xpose.msra.mxu0 0.0
  %3510 = vmatprep.subr.mxu0 0.0
  %3511 = vmatpush1.xpose.msra.mxu0 0.0
  %3512 = vmatprep.subr.mxu0 0.0
  %3513 = vmatpush1.xpose.msra.mxu0 0.0
  %3514 = vmatprep.subr.mxu0 0.0
  %3515 = vmatpush1.xpose.msra.mxu0 0.0
  %3516 = vmatprep.subr.mxu0 0.0
  %3517 = vmatpush1.xpose.msra.mxu0 0.0
  %3518 = vmatprep.subr.mxu0 0.0
  %3519 = vmatpush1.xpose.msra.mxu0 0.0
  %3520 = vmatprep.subr.mxu0 0.0
  %3521 = vmatpush1.xpose.msra.mxu0 0.0
  %3522 = vmatprep.subr.mxu0 0.0
  %3523 = vmatpush1.xpose.msra.mxu0 0.0
  %3524 = vmatprep.subr.mxu0 0.0
  %3525 = vmatpush1.xpose.msra.mxu0 0.0
  %3526 = vmatprep.subr.mxu0 0.0
  %3527 = vmatpush1.xpose.msra.mxu0 0.0
  %3528 = vmatprep.subr.mxu0 0.0
  %3529 = vmatpush1.xpose.msra.mxu0 0.0
  %3530 = vmatprep.subr.mxu0 0.0
  %3531 = vmatpush1.xpose.msra.mxu0 0.0
  %3532 = vmatprep.subr.mxu0 0.0
  %3533 = vmatpush1.xpose.msra.mxu0 0.0
  %3534 = vmatprep.subr.mxu0 0.0
  %3535 = vmatpush1.xpose.msra.mxu0 0.0
  %3536 = vmatprep.subr.mxu0 0.0
  %3537 = vmatpush1.xpose.msra.mxu0 0.0
  %3538 = vmatprep.subr.mxu0 0.0
  %3539 = vmatpush1.xpose.msra.mxu0 0.0
  %3540 = vmatprep.subr.mxu0 0.0
  %3541 = vmatpush1.xpose.msra.mxu0 0.0
  %3542 = vmatprep.subr.mxu0 0.0
  %3543 = vmatpush1.xpose.msra.mxu0 0.0
  %3544 = vmatprep.mubr.f32.mxu0 0.0
  %3545 = vmatmul.mubr.f32.gmra.mrb[0].mxu0 %v3476
  %v3546 = vpop.f32.mrb[0].mxu0
  %v3547 = vadd.f32 0.0, %v3546
  %v3548 = vpop.f32.mrb[0].mxu0
  %3549 = vdwg.mxu0
  %3550 = vrot.lane.b32.xlu0 %v1678, 112
  %v3551 = vpop.permute.xlu0 %3550
  %3552 = vrot.lane.b32.xlu0 %v1678, 64
  %v3553 = vpop.permute.xlu0 %3552
  %v3554 = vsel %vm1685, %v3551, 0
  %v3556 = vsel %vm1685, %v3553, 0
  %3558 = vmatprep.subr.mxu0 0.0
  %3559 = vmatpush1.xpose.msra.mxu0 %v3556
  %3560 = vmatprep.subr.mxu0 0.0
  %3561 = vmatpush1.xpose.msra.mxu0 0.0
  %3562 = vmatprep.subr.mxu0 0.0
  %3563 = vmatpush1.xpose.msra.mxu0 0.0
  %3564 = vmatprep.subr.mxu0 0.0
  %3565 = vmatpush1.xpose.msra.mxu0 0.0
  %3566 = vmatprep.subr.mxu0 0.0
  %3567 = vmatpush1.xpose.msra.mxu0 0.0
  %3568 = vmatprep.subr.mxu0 0.0
  %3569 = vmatpush1.xpose.msra.mxu0 0.0
  %3570 = vmatprep.subr.mxu0 0.0
  %3571 = vmatpush1.xpose.msra.mxu0 0.0
  %3572 = vmatprep.subr.mxu0 0.0
  %3573 = vmatpush1.xpose.msra.mxu0 0.0
  %3574 = vmatprep.subr.mxu0 0.0
  %3575 = vmatpush1.xpose.msra.mxu0 0.0
  %3576 = vmatprep.subr.mxu0 0.0
  %3577 = vmatpush1.xpose.msra.mxu0 0.0
  %3578 = vmatprep.subr.mxu0 0.0
  %3579 = vmatpush1.xpose.msra.mxu0 0.0
  %3580 = vmatprep.subr.mxu0 0.0
  %3581 = vmatpush1.xpose.msra.mxu0 0.0
  %3582 = vmatprep.subr.mxu0 0.0
  %3583 = vmatpush1.xpose.msra.mxu0 0.0
  %3584 = vmatprep.subr.mxu0 0.0
  %3585 = vmatpush1.xpose.msra.mxu0 0.0
  %3586 = vmatprep.subr.mxu0 0.0
  %3587 = vmatpush1.xpose.msra.mxu0 0.0
  %3588 = vmatprep.subr.mxu0 0.0
  %3589 = vmatpush1.xpose.msra.mxu0 0.0
  %3590 = vmatprep.subr.mxu0 0.0
  %3591 = vmatpush1.xpose.msra.mxu0 0.0
  %3592 = vmatprep.subr.mxu0 0.0
  %3593 = vmatpush1.xpose.msra.mxu0 0.0
  %3594 = vmatprep.subr.mxu0 0.0
  %3595 = vmatpush1.xpose.msra.mxu0 0.0
  %3596 = vmatprep.subr.mxu0 0.0
  %3597 = vmatpush1.xpose.msra.mxu0 0.0
  %3598 = vmatprep.subr.mxu0 0.0
  %3599 = vmatpush1.xpose.msra.mxu0 0.0
  %3600 = vmatprep.subr.mxu0 0.0
  %3601 = vmatpush1.xpose.msra.mxu0 0.0
  %3602 = vmatprep.subr.mxu0 0.0
  %3603 = vmatpush1.xpose.msra.mxu0 0.0
  %3604 = vmatprep.subr.mxu0 0.0
  %3605 = vmatpush1.xpose.msra.mxu0 0.0
  %3606 = vmatprep.subr.mxu0 0.0
  %3607 = vmatpush1.xpose.msra.mxu0 0.0
  %3608 = vmatprep.subr.mxu0 0.0
  %3609 = vmatpush1.xpose.msra.mxu0 0.0
  %3610 = vmatprep.subr.mxu0 0.0
  %3611 = vmatpush1.xpose.msra.mxu0 0.0
  %3612 = vmatprep.subr.mxu0 0.0
  %3613 = vmatpush1.xpose.msra.mxu0 0.0
  %3614 = vmatprep.subr.mxu0 0.0
  %3615 = vmatpush1.xpose.msra.mxu0 0.0
  %3616 = vmatprep.subr.mxu0 0.0
  %3617 = vmatpush1.xpose.msra.mxu0 0.0
  %3618 = vmatprep.subr.mxu0 0.0
  %3619 = vmatpush1.xpose.msra.mxu0 0.0
  %3620 = vmatprep.subr.mxu0 0.0
  %3621 = vmatpush1.xpose.msra.mxu0 0.0
  %3622 = vmatprep.mubr.f32.mxu0 0.0
  %3623 = vmatmul.mubr.f32.gmra.mrb[0].mxu0 %v3554
  %v3624 = vpop.f32.mrb[0].mxu0
  %v3625 = vadd.f32 0.0, %v3624
  %v3626 = vpop.f32.mrb[0].mxu0
  %3627 = vdwg.mxu0
  %v3628 = vmul.f32 %v3079, 0.25
  %v3629 = vmul.f32 %v3157, 0.25
  %v3630 = vmul.f32 %v3235, 0.25
  %v3631 = vmul.f32 %v3313, 0.25
  %v3632 = vmul.f32 %v3391, 0.25
  %v3633 = vmul.f32 %v3469, 0.25
  %v3634 = vmul.f32 %v3547, 0.25
  %v3635 = vmul.f32 %v3625, 0.25
  %v3636 = vsel %vm2307, %v3628, -inf
  %3637 = vmax.xlane.f32.xlu0 %v3636
  %v3638 = vpop.xlane.xlu0 %3637
  %v3639 = vsel %vm2307, %v3629, -inf
  %3640 = vmax.xlane.f32.xlu0 %v3639
  %v3641 = vpop.xlane.xlu0 %3640
  %v3642 = vsel %vm2307, %v3630, -inf
  %3643 = vmax.xlane.f32.xlu0 %v3642
  %v3644 = vpop.xlane.xlu0 %3643
  %v3645 = vsel %vm2307, %v3631, -inf
  %3646 = vmax.xlane.f32.xlu0 %v3645
  %v3647 = vpop.xlane.xlu0 %3646
  %v3648 = vsel %vm2307, %v3632, -inf
  %3649 = vmax.xlane.f32.xlu0 %v3648
  %v3650 = vpop.xlane.xlu0 %3649
  %v3651 = vsel %vm2307, %v3633, -inf
  %3652 = vmax.xlane.f32.xlu0 %v3651
  %v3653 = vpop.xlane.xlu0 %3652
  %v3654 = vsel %vm2307, %v3634, -inf
  %3655 = vmax.xlane.f32.xlu0 %v3654
  %v3656 = vpop.xlane.xlu0 %3655
  %v3657 = vsel %vm2307, %v3635, -inf
  %3658 = vmax.xlane.f32.xlu0 %v3657
  %v3659 = vpop.xlane.xlu0 %3658
  %v3660 = vsub.f32 %v3628, %v3638
  %v3661 = vsub.f32 %v3629, %v3641
  %v3662 = vsub.f32 %v3630, %v3644
  %v3663 = vsub.f32 %v3631, %v3647
  %v3664 = vsub.f32 %v3632, %v3650
  %v3665 = vsub.f32 %v3633, %v3653
  %v3666 = vsub.f32 %v3634, %v3656
  %v3667 = vsub.f32 %v3635, %v3659
  %v3668 = vmul.f32 %v3660, 1.442695
  %v3669 = vpow.pop %v3668
  %v3670 = vmul.f32 %v3661, 1.442695
  %v3671 = vpow.pop %v3670
  %v3672 = vmul.f32 %v3662, 1.442695
  %v3673 = vpow.pop %v3672
  %v3674 = vmul.f32 %v3663, 1.442695
  %v3675 = vpow.pop %v3674
  %v3676 = vmul.f32 %v3664, 1.442695
  %v3677 = vpow.pop %v3676
  %v3678 = vmul.f32 %v3665, 1.442695
  %v3679 = vpow.pop %v3678
  %v3680 = vmul.f32 %v3666, 1.442695
  %v3681 = vpow.pop %v3680
  %v3682 = vmul.f32 %v3667, 1.442695
  %v3683 = vpow.pop %v3682
  %v3684 = vsel %vm2307, %v3669, 0.0
  %3685 = vadd.xlane.f32.xlu0 %v3684
  %v3686 = vpop.xlane.xlu0 %3685
  %v3687 = vsel %vm2307, %v3671, 0.0
  %3688 = vadd.xlane.f32.xlu0 %v3687
  %v3689 = vpop.xlane.xlu0 %3688
  %v3690 = vsel %vm2307, %v3673, 0.0
  %3691 = vadd.xlane.f32.xlu0 %v3690
  %v3692 = vpop.xlane.xlu0 %3691
  %v3693 = vsel %vm2307, %v3675, 0.0
  %3694 = vadd.xlane.f32.xlu0 %v3693
  %v3695 = vpop.xlane.xlu0 %3694
  %v3696 = vsel %vm2307, %v3677, 0.0
  %3697 = vadd.xlane.f32.xlu0 %v3696
  %v3698 = vpop.xlane.xlu0 %3697
  %v3699 = vsel %vm2307, %v3679, 0.0
  %3700 = vadd.xlane.f32.xlu0 %v3699
  %v3701 = vpop.xlane.xlu0 %3700
  %v3702 = vsel %vm2307, %v3681, 0.0
  %3703 = vadd.xlane.f32.xlu0 %v3702
  %v3704 = vpop.xlane.xlu0 %3703
  %v3705 = vsel %vm2307, %v3683, 0.0
  %3706 = vadd.xlane.f32.xlu0 %v3705
  %v3707 = vpop.xlane.xlu0 %3706
  %v3708 = vrcp.pop %v3686
  %v3709 = vmul.f32 %v3669, %v3708
  %v3710 = vrcp.pop %v3689
  %v3711 = vmul.f32 %v3671, %v3710
  %v3712 = vrcp.pop %v3692
  %v3713 = vmul.f32 %v3673, %v3712
  %v3714 = vrcp.pop %v3695
  %v3715 = vmul.f32 %v3675, %v3714
  %v3716 = vrcp.pop %v3698
  %v3717 = vmul.f32 %v3677, %v3716
  %v3718 = vrcp.pop %v3701
  %v3719 = vmul.f32 %v3679, %v3718
  %v3720 = vrcp.pop %v3704
  %v3721 = vmul.f32 %v3681, %v3720
  %v3722 = vrcp.pop %v3707
  %v3723 = vmul.f32 %v3683, %v3722
  %3724 = vrot.lane.b32.xlu0 %v1636, 16
  %v3725 = vpop.permute.xlu0 %3724
  %v3728 = vsel %vm2307, %v3709, 0
  %3730 = vmatprep.subr.mxu0 0.0
  %3731 = vmatpush1.msra.mxu0 %v3725
  %3732 = vmatprep.subr.mxu0 0.0
  %3733 = vmatpush1.msra.mxu0 0.0
  %3734 = vmatprep.subr.mxu0 0.0
  %3735 = vmatpush1.msra.mxu0 0.0
  %3736 = vmatprep.subr.mxu0 0.0
  %3737 = vmatpush1.msra.mxu0 0.0
  %3738 = vmatprep.subr.mxu0 0.0
  %3739 = vmatpush1.msra.mxu0 0.0
  %3740 = vmatprep.subr.mxu0 0.0
  %3741 = vmatpush1.msra.mxu0 0.0
  %3742 = vmatprep.subr.mxu0 0.0
  %3743 = vmatpush1.msra.mxu0 0.0
  %3744 = vmatprep.subr.mxu0 0.0
  %3745 = vmatpush1.msra.mxu0 0.0
  %3746 = vmatprep.subr.mxu0 0.0
  %3747 = vmatpush1.msra.mxu0 0.0
  %3748 = vmatprep.subr.mxu0 0.0
  %3749 = vmatpush1.msra.mxu0 0.0
  %3750 = vmatprep.subr.mxu0 0.0
  %3751 = vmatpush1.msra.mxu0 0.0
  %3752 = vmatprep.subr.mxu0 0.0
  %3753 = vmatpush1.msra.mxu0 0.0
  %3754 = vmatprep.subr.mxu0 0.0
  %3755 = vmatpush1.msra.mxu0 0.0
  %3756 = vmatprep.subr.mxu0 0.0
  %3757 = vmatpush1.msra.mxu0 0.0
  %3758 = vmatprep.subr.mxu0 0.0
  %3759 = vmatpush1.msra.mxu0 0.0
  %3760 = vmatprep.subr.mxu0 0.0
  %3761 = vmatpush1.msra.mxu0 0.0
  %3762 = vmatprep.subr.mxu0 0.0
  %3763 = vmatpush1.msra.mxu0 0.0
  %3764 = vmatprep.subr.mxu0 0.0
  %3765 = vmatpush1.msra.mxu0 0.0
  %3766 = vmatprep.subr.mxu0 0.0
  %3767 = vmatpush1.msra.mxu0 0.0
  %3768 = vmatprep.subr.mxu0 0.0
  %3769 = vmatpush1.msra.mxu0 0.0
  %3770 = vmatprep.subr.mxu0 0.0
  %3771 = vmatpush1.msra.mxu0 0.0
  %3772 = vmatprep.subr.mxu0 0.0
  %3773 = vmatpush1.msra.mxu0 0.0
  %3774 = vmatprep.subr.mxu0 0.0
  %3775 = vmatpush1.msra.mxu0 0.0
  %3776 = vmatprep.subr.mxu0 0.0
  %3777 = vmatpush1.msra.mxu0 0.0
  %3778 = vmatprep.subr.mxu0 0.0
  %3779 = vmatpush1.msra.mxu0 0.0
  %3780 = vmatprep.subr.mxu0 0.0
  %3781 = vmatpush1.msra.mxu0 0.0
  %3782 = vmatprep.subr.mxu0 0.0
  %3783 = vmatpush1.msra.mxu0 0.0
  %3784 = vmatprep.subr.mxu0 0.0
  %3785 = vmatpush1.msra.mxu0 0.0
  %3786 = vmatprep.subr.mxu0 0.0
  %3787 = vmatpush1.msra.mxu0 0.0
  %3788 = vmatprep.subr.mxu0 0.0
  %3789 = vmatpush1.msra.mxu0 0.0
  %3790 = vmatprep.subr.mxu0 0.0
  %3791 = vmatpush1.msra.mxu0 0.0
  %3792 = vmatprep.subr.mxu0 0.0
  %3793 = vmatpush1.msra.mxu0 0.0
  %3794 = vmatprep.mubr.f32.mxu0 0.0
  %3795 = vmatmul.mubr.f32.gmra.mrb[0].mxu0 %v3728
  %v3796 = vpop.f32.mrb[0].mxu0
  %v3797 = vadd.f32 0.0, %v3796
  %v3798 = vpop.f32.mrb[0].mxu0
  %3799 = vdwg.mxu0
  %3800 = vrot.lane.b32.xlu0 %v1642, 16
  %v3801 = vpop.permute.xlu0 %3800
  %v3804 = vsel %vm2307, %v3711, 0
  %3806 = vmatprep.subr.mxu0 0.0
  %3807 = vmatpush1.msra.mxu0 %v3801
  %3808 = vmatprep.subr.mxu0 0.0
  %3809 = vmatpush1.msra.mxu0 0.0
  %3810 = vmatprep.subr.mxu0 0.0
  %3811 = vmatpush1.msra.mxu0 0.0
  %3812 = vmatprep.subr.mxu0 0.0
  %3813 = vmatpush1.msra.mxu0 0.0
  %3814 = vmatprep.subr.mxu0 0.0
  %3815 = vmatpush1.msra.mxu0 0.0
  %3816 = vmatprep.subr.mxu0 0.0
  %3817 = vmatpush1.msra.mxu0 0.0
  %3818 = vmatprep.subr.mxu0 0.0
  %3819 = vmatpush1.msra.mxu0 0.0
  %3820 = vmatprep.subr.mxu0 0.0
  %3821 = vmatpush1.msra.mxu0 0.0
  %3822 = vmatprep.subr.mxu0 0.0
  %3823 = vmatpush1.msra.mxu0 0.0
  %3824 = vmatprep.subr.mxu0 0.0
  %3825 = vmatpush1.msra.mxu0 0.0
  %3826 = vmatprep.subr.mxu0 0.0
  %3827 = vmatpush1.msra.mxu0 0.0
  %3828 = vmatprep.subr.mxu0 0.0
  %3829 = vmatpush1.msra.mxu0 0.0
  %3830 = vmatprep.subr.mxu0 0.0
  %3831 = vmatpush1.msra.mxu0 0.0
  %3832 = vmatprep.subr.mxu0 0.0
  %3833 = vmatpush1.msra.mxu0 0.0
  %3834 = vmatprep.subr.mxu0 0.0
  %3835 = vmatpush1.msra.mxu0 0.0
  %3836 = vmatprep.subr.mxu0 0.0
  %3837 = vmatpush1.msra.mxu0 0.0
  %3838 = vmatprep.subr.mxu0 0.0
  %3839 = vmatpush1.msra.mxu0 0.0
  %3840 = vmatprep.subr.mxu0 0.0
  %3841 = vmatpush1.msra.mxu0 0.0
  %3842 = vmatprep.subr.mxu0 0.0
  %3843 = vmatpush1.msra.mxu0 0.0
  %3844 = vmatprep.subr.mxu0 0.0
  %3845 = vmatpush1.msra.mxu0 0.0
  %3846 = vmatprep.subr.mxu0 0.0
  %3847 = vmatpush1.msra.mxu0 0.0
  %3848 = vmatprep.subr.mxu0 0.0
  %3849 = vmatpush1.msra.mxu0 0.0
  %3850 = vmatprep.subr.mxu0 0.0
  %3851 = vmatpush1.msra.mxu0 0.0
  %3852 = vmatprep.subr.mxu0 0.0
  %3853 = vmatpush1.msra.mxu0 0.0
  %3854 = vmatprep.subr.mxu0 0.0
  %3855 = vmatpush1.msra.mxu0 0.0
  %3856 = vmatprep.subr.mxu0 0.0
  %3857 = vmatpush1.msra.mxu0 0.0
  %3858 = vmatprep.subr.mxu0 0.0
  %3859 = vmatpush1.msra.mxu0 0.0
  %3860 = vmatprep.subr.mxu0 0.0
  %3861 = vmatpush1.msra.mxu0 0.0
  %3862 = vmatprep.subr.mxu0 0.0
  %3863 = vmatpush1.msra.mxu0 0.0
  %3864 = vmatprep.subr.mxu0 0.0
  %3865 = vmatpush1.msra.mxu0 0.0
  %3866 = vmatprep.subr.mxu0 0.0
  %3867 = vmatpush1.msra.mxu0 0.0
  %3868 = vmatprep.subr.mxu0 0.0
  %3869 = vmatpush1.msra.mxu0 0.0
  %3870 = vmatprep.mubr.f32.mxu0 0.0
  %3871 = vmatmul.mubr.f32.gmra.mrb[0].mxu0 %v3804
  %v3872 = vpop.f32.mrb[0].mxu0
  %v3873 = vadd.f32 0.0, %v3872
  %v3874 = vpop.f32.mrb[0].mxu0
  %3875 = vdwg.mxu0
  %3876 = vrot.lane.b32.xlu0 %v1648, 16
  %v3877 = vpop.permute.xlu0 %3876
  %v3880 = vsel %vm2307, %v3713, 0
  %3882 = vmatprep.subr.mxu0 0.0
  %3883 = vmatpush1.msra.mxu0 %v3877
  %3884 = vmatprep.subr.mxu0 0.0
  %3885 = vmatpush1.msra.mxu0 0.0
  %3886 = vmatprep.subr.mxu0 0.0
  %3887 = vmatpush1.msra.mxu0 0.0
  %3888 = vmatprep.subr.mxu0 0.0
  %3889 = vmatpush1.msra.mxu0 0.0
  %3890 = vmatprep.subr.mxu0 0.0
  %3891 = vmatpush1.msra.mxu0 0.0
  %3892 = vmatprep.subr.mxu0 0.0
  %3893 = vmatpush1.msra.mxu0 0.0
  %3894 = vmatprep.subr.mxu0 0.0
  %3895 = vmatpush1.msra.mxu0 0.0
  %3896 = vmatprep.subr.mxu0 0.0
  %3897 = vmatpush1.msra.mxu0 0.0
  %3898 = vmatprep.subr.mxu0 0.0
  %3899 = vmatpush1.msra.mxu0 0.0
  %3900 = vmatprep.subr.mxu0 0.0
  %3901 = vmatpush1.msra.mxu0 0.0
  %3902 = vmatprep.subr.mxu0 0.0
  %3903 = vmatpush1.msra.mxu0 0.0
  %3904 = vmatprep.subr.mxu0 0.0
  %3905 = vmatpush1.msra.mxu0 0.0
  %3906 = vmatprep.subr.mxu0 0.0
  %3907 = vmatpush1.msra.mxu0 0.0
  %3908 = vmatprep.subr.mxu0 0.0
  %3909 = vmatpush1.msra.mxu0 0.0
  %3910 = vmatprep.subr.mxu0 0.0
  %3911 = vmatpush1.msra.mxu0 0.0
  %3912 = vmatprep.subr.mxu0 0.0
  %3913 = vmatpush1.msra.mxu0 0.0
  %3914 = vmatprep.subr.mxu0 0.0
  %3915 = vmatpush1.msra.mxu0 0.0
  %3916 = vmatprep.subr.mxu0 0.0
  %3917 = vmatpush1.msra.mxu0 0.0
  %3918 = vmatprep.subr.mxu0 0.0
  %3919 = vmatpush1.msra.mxu0 0.0
  %3920 = vmatprep.subr.mxu0 0.0
  %3921 = vmatpush1.msra.mxu0 0.0
  %3922 = vmatprep.subr.mxu0 0.0
  %3923 = vmatpush1.msra.mxu0 0.0
  %3924 = vmatprep.subr.mxu0 0.0
  %3925 = vmatpush1.msra.mxu0 0.0
  %3926 = vmatprep.subr.mxu0 0.0
  %3927 = vmatpush1.msra.mxu0 0.0
  %3928 = vmatprep.subr.mxu0 0.0
  %3929 = vmatpush1.msra.mxu0 0.0
  %3930 = vmatprep.subr.mxu0 0.0
  %3931 = vmatpush1.msra.mxu0 0.0
  %3932 = vmatprep.subr.mxu0 0.0
  %3933 = vmatpush1.msra.mxu0 0.0
  %3934 = vmatprep.subr.mxu0 0.0
  %3935 = vmatpush1.msra.mxu0 0.0
  %3936 = vmatprep.subr.mxu0 0.0
  %3937 = vmatpush1.msra.mxu0 0.0
  %3938 = vmatprep.subr.mxu0 0.0
  %3939 = vmatpush1.msra.mxu0 0.0
  %3940 = vmatprep.subr.mxu0 0.0
  %3941 = vmatpush1.msra.mxu0 0.0
  %3942 = vmatprep.subr.mxu0 0.0
  %3943 = vmatpush1.msra.mxu0 0.0
  %3944 = vmatprep.subr.mxu0 0.0
  %3945 = vmatpush1.msra.mxu0 0.0
  %3946 = vmatprep.mubr.f32.mxu0 0.0
  %3947 = vmatmul.mubr.f32.gmra.mrb[0].mxu0 %v3880
  %v3948 = vpop.f32.mrb[0].mxu0
  %v3949 = vadd.f32 0.0, %v3948
  %v3950 = vpop.f32.mrb[0].mxu0
  %3951 = vdwg.mxu0
  %3952 = vrot.lane.b32.xlu0 %v1654, 16
  %v3953 = vpop.permute.xlu0 %3952
  %v3956 = vsel %vm2307, %v3715, 0
  %3958 = vmatprep.subr.mxu0 0.0
  %3959 = vmatpush1.msra.mxu0 %v3953
  %3960 = vmatprep.subr.mxu0 0.0
  %3961 = vmatpush1.msra.mxu0 0.0
  %3962 = vmatprep.subr.mxu0 0.0
  %3963 = vmatpush1.msra.mxu0 0.0
  %3964 = vmatprep.subr.mxu0 0.0
  %3965 = vmatpush1.msra.mxu0 0.0
  %3966 = vmatprep.subr.mxu0 0.0
  %3967 = vmatpush1.msra.mxu0 0.0
  %3968 = vmatprep.subr.mxu0 0.0
  %3969 = vmatpush1.msra.mxu0 0.0
  %3970 = vmatprep.subr.mxu0 0.0
  %3971 = vmatpush1.msra.mxu0 0.0
  %3972 = vmatprep.subr.mxu0 0.0
  %3973 = vmatpush1.msra.mxu0 0.0
  %3974 = vmatprep.subr.mxu0 0.0
  %3975 = vmatpush1.msra.mxu0 0.0
  %3976 = vmatprep.subr.mxu0 0.0
  %3977 = vmatpush1.msra.mxu0 0.0
  %3978 = vmatprep.subr.mxu0 0.0
  %3979 = vmatpush1.msra.mxu0 0.0
  %3980 = vmatprep.subr.mxu0 0.0
  %3981 = vmatpush1.msra.mxu0 0.0
  %3982 = vmatprep.subr.mxu0 0.0
  %3983 = vmatpush1.msra.mxu0 0.0
  %3984 = vmatprep.subr.mxu0 0.0
  %3985 = vmatpush1.msra.mxu0 0.0
  %3986 = vmatprep.subr.mxu0 0.0
  %3987 = vmatpush1.msra.mxu0 0.0
  %3988 = vmatprep.subr.mxu0 0.0
  %3989 = vmatpush1.msra.mxu0 0.0
  %3990 = vmatprep.subr.mxu0 0.0
  %3991 = vmatpush1.msra.mxu0 0.0
  %3992 = vmatprep.subr.mxu0 0.0
  %3993 = vmatpush1.msra.mxu0 0.0
  %3994 = vmatprep.subr.mxu0 0.0
  %3995 = vmatpush1.msra.mxu0 0.0
  %3996 = vmatprep.subr.mxu0 0.0
  %3997 = vmatpush1.msra.mxu0 0.0
  %3998 = vmatprep.subr.mxu0 0.0
  %3999 = vmatpush1.msra.mxu0 0.0
  %4000 = vmatprep.subr.mxu0 0.0
  %4001 = vmatpush1.msra.mxu0 0.0
  %4002 = vmatprep.subr.mxu0 0.0
  %4003 = vmatpush1.msra.mxu0 0.0
  %4004 = vmatprep.subr.mxu0 0.0
  %4005 = vmatpush1.msra.mxu0 0.0
  %4006 = vmatprep.subr.mxu0 0.0
  %4007 = vmatpush1.msra.mxu0 0.0
  %4008 = vmatprep.subr.mxu0 0.0
  %4009 = vmatpush1.msra.mxu0 0.0
  %4010 = vmatprep.subr.mxu0 0.0
  %4011 = vmatpush1.msra.mxu0 0.0
  %4012 = vmatprep.subr.mxu0 0.0
  %4013 = vmatpush1.msra.mxu0 0.0
  %4014 = vmatprep.subr.mxu0 0.0
  %4015 = vmatpush1.msra.mxu0 0.0
  %4016 = vmatprep.subr.mxu0 0.0
  %4017 = vmatpush1.msra.mxu0 0.0
  %4018 = vmatprep.subr.mxu0 0.0
  %4019 = vmatpush1.msra.mxu0 0.0
  %4020 = vmatprep.subr.mxu0 0.0
  %4021 = vmatpush1.msra.mxu0 0.0
  %4022 = vmatprep.mubr.f32.mxu0 0.0
  %4023 = vmatmul.mubr.f32.gmra.mrb[0].mxu0 %v3956
  %v4024 = vpop.f32.mrb[0].mxu0
  %v4025 = vadd.f32 0.0, %v4024
  %v4026 = vpop.f32.mrb[0].mxu0
  %4027 = vdwg.mxu0
  %4028 = vrot.lane.b32.xlu0 %v1660, 16
  %v4029 = vpop.permute.xlu0 %4028
  %v4032 = vsel %vm2307, %v3717, 0
  %4034 = vmatprep.subr.mxu0 0.0
  %4035 = vmatpush1.msra.mxu0 %v4029
  %4036 = vmatprep.subr.mxu0 0.0
  %4037 = vmatpush1.msra.mxu0 0.0
  %4038 = vmatprep.subr.mxu0 0.0
  %4039 = vmatpush1.msra.mxu0 0.0
  %4040 = vmatprep.subr.mxu0 0.0
  %4041 = vmatpush1.msra.mxu0 0.0
  %4042 = vmatprep.subr.mxu0 0.0
  %4043 = vmatpush1.msra.mxu0 0.0
  %4044 = vmatprep.subr.mxu0 0.0
  %4045 = vmatpush1.msra.mxu0 0.0
  %4046 = vmatprep.subr.mxu0 0.0
  %4047 = vmatpush1.msra.mxu0 0.0
  %4048 = vmatprep.subr.mxu0 0.0
  %4049 = vmatpush1.msra.mxu0 0.0
  %4050 = vmatprep.subr.mxu0 0.0
  %4051 = vmatpush1.msra.mxu0 0.0
  %4052 = vmatprep.subr.mxu0 0.0
  %4053 = vmatpush1.msra.mxu0 0.0
  %4054 = vmatprep.subr.mxu0 0.0
  %4055 = vmatpush1.msra.mxu0 0.0
  %4056 = vmatprep.subr.mxu0 0.0
  %4057 = vmatpush1.msra.mxu0 0.0
  %4058 = vmatprep.subr.mxu0 0.0
  %4059 = vmatpush1.msra.mxu0 0.0
  %4060 = vmatprep.subr.mxu0 0.0
  %4061 = vmatpush1.msra.mxu0 0.0
  %4062 = vmatprep.subr.mxu0 0.0
  %4063 = vmatpush1.msra.mxu0 0.0
  %4064 = vmatprep.subr.mxu0 0.0
  %4065 = vmatpush1.msra.mxu0 0.0
  %4066 = vmatprep.subr.mxu0 0.0
  %4067 = vmatpush1.msra.mxu0 0.0
  %4068 = vmatprep.subr.mxu0 0.0
  %4069 = vmatpush1.msra.mxu0 0.0
  %4070 = vmatprep.subr.mxu0 0.0
  %4071 = vmatpush1.msra.mxu0 0.0
  %4072 = vmatprep.subr.mxu0 0.0
  %4073 = vmatpush1.msra.mxu0 0.0
  %4074 = vmatprep.subr.mxu0 0.0
  %4075 = vmatpush1.msra.mxu0 0.0
  %4076 = vmatprep.subr.mxu0 0.0
  %4077 = vmatpush1.msra.mxu0 0.0
  %4078 = vmatprep.subr.mxu0 0.0
  %4079 = vmatpush1.msra.mxu0 0.0
  %4080 = vmatprep.subr.mxu0 0.0
  %4081 = vmatpush1.msra.mxu0 0.0
  %4082 = vmatprep.subr.mxu0 0.0
  %4083 = vmatpush1.msra.mxu0 0.0
  %4084 = vmatprep.subr.mxu0 0.0
  %4085 = vmatpush1.msra.mxu0 0.0
  %4086 = vmatprep.subr.mxu0 0.0
  %4087 = vmatpush1.msra.mxu0 0.0
  %4088 = vmatprep.subr.mxu0 0.0
  %4089 = vmatpush1.msra.mxu0 0.0
  %4090 = vmatprep.subr.mxu0 0.0
  %4091 = vmatpush1.msra.mxu0 0.0
  %4092 = vmatprep.subr.mxu0 0.0
  %4093 = vmatpush1.msra.mxu0 0.0
  %4094 = vmatprep.subr.mxu0 0.0
  %4095 = vmatpush1.msra.mxu0 0.0
  %4096 = vmatprep.subr.mxu0 0.0
  %4097 = vmatpush1.msra.mxu0 0.0
  %4098 = vmatprep.mubr.f32.mxu0 0.0
  %4099 = vmatmul.mubr.f32.gmra.mrb[0].mxu0 %v4032
  %v4100 = vpop.f32.mrb[0].mxu0
  %v4101 = vadd.f32 0.0, %v4100
  %v4102 = vpop.f32.mrb[0].mxu0
  %4103 = vdwg.mxu0
  %4104 = vrot.lane.b32.xlu0 %v1666, 16
  %v4105 = vpop.permute.xlu0 %4104
  %v4108 = vsel %vm2307, %v3719, 0
  %4110 = vmatprep.subr.mxu0 0.0
  %4111 = vmatpush1.msra.mxu0 %v4105
  %4112 = vmatprep.subr.mxu0 0.0
  %4113 = vmatpush1.msra.mxu0 0.0
  %4114 = vmatprep.subr.mxu0 0.0
  %4115 = vmatpush1.msra.mxu0 0.0
  %4116 = vmatprep.subr.mxu0 0.0
  %4117 = vmatpush1.msra.mxu0 0.0
  %4118 = vmatprep.subr.mxu0 0.0
  %4119 = vmatpush1.msra.mxu0 0.0
  %4120 = vmatprep.subr.mxu0 0.0
  %4121 = vmatpush1.msra.mxu0 0.0
  %4122 = vmatprep.subr.mxu0 0.0
  %4123 = vmatpush1.msra.mxu0 0.0
  %4124 = vmatprep.subr.mxu0 0.0
  %4125 = vmatpush1.msra.mxu0 0.0
  %4126 = vmatprep.subr.mxu0 0.0
  %4127 = vmatpush1.msra.mxu0 0.0
  %4128 = vmatprep.subr.mxu0 0.0
  %4129 = vmatpush1.msra.mxu0 0.0
  %4130 = vmatprep.subr.mxu0 0.0
  %4131 = vmatpush1.msra.mxu0 0.0
  %4132 = vmatprep.subr.mxu0 0.0
  %4133 = vmatpush1.msra.mxu0 0.0
  %4134 = vmatprep.subr.mxu0 0.0
  %4135 = vmatpush1.msra.mxu0 0.0
  %4136 = vmatprep.subr.mxu0 0.0
  %4137 = vmatpush1.msra.mxu0 0.0
  %4138 = vmatprep.subr.mxu0 0.0
  %4139 = vmatpush1.msra.mxu0 0.0
  %4140 = vmatprep.subr.mxu0 0.0
  %4141 = vmatpush1.msra.mxu0 0.0
  %4142 = vmatprep.subr.mxu0 0.0
  %4143 = vmatpush1.msra.mxu0 0.0
  %4144 = vmatprep.subr.mxu0 0.0
  %4145 = vmatpush1.msra.mxu0 0.0
  %4146 = vmatprep.subr.mxu0 0.0
  %4147 = vmatpush1.msra.mxu0 0.0
  %4148 = vmatprep.subr.mxu0 0.0
  %4149 = vmatpush1.msra.mxu0 0.0
  %4150 = vmatprep.subr.mxu0 0.0
  %4151 = vmatpush1.msra.mxu0 0.0
  %4152 = vmatprep.subr.mxu0 0.0
  %4153 = vmatpush1.msra.mxu0 0.0
  %4154 = vmatprep.subr.mxu0 0.0
  %4155 = vmatpush1.msra.mxu0 0.0
  %4156 = vmatprep.subr.mxu0 0.0
  %4157 = vmatpush1.msra.mxu0 0.0
  %4158 = vmatprep.subr.mxu0 0.0
  %4159 = vmatpush1.msra.mxu0 0.0
  %4160 = vmatprep.subr.mxu0 0.0
  %4161 = vmatpush1.msra.mxu0 0.0
  %4162 = vmatprep.subr.mxu0 0.0
  %4163 = vmatpush1.msra.mxu0 0.0
  %4164 = vmatprep.subr.mxu0 0.0
  %4165 = vmatpush1.msra.mxu0 0.0
  %4166 = vmatprep.subr.mxu0 0.0
  %4167 = vmatpush1.msra.mxu0 0.0
  %4168 = vmatprep.subr.mxu0 0.0
  %4169 = vmatpush1.msra.mxu0 0.0
  %4170 = vmatprep.subr.mxu0 0.0
  %4171 = vmatpush1.msra.mxu0 0.0
  %4172 = vmatprep.subr.mxu0 0.0
  %4173 = vmatpush1.msra.mxu0 0.0
  %4174 = vmatprep.mubr.f32.mxu0 0.0
  %4175 = vmatmul.mubr.f32.gmra.mrb[0].mxu0 %v4108
  %v4176 = vpop.f32.mrb[0].mxu0
  %v4177 = vadd.f32 0.0, %v4176
  %v4178 = vpop.f32.mrb[0].mxu0
  %4179 = vdwg.mxu0
  %4180 = vrot.lane.b32.xlu0 %v1672, 16
  %v4181 = vpop.permute.xlu0 %4180
  %v4184 = vsel %vm2307, %v3721, 0
  %4186 = vmatprep.subr.mxu0 0.0
  %4187 = vmatpush1.msra.mxu0 %v4181
  %4188 = vmatprep.subr.mxu0 0.0
  %4189 = vmatpush1.msra.mxu0 0.0
  %4190 = vmatprep.subr.mxu0 0.0
  %4191 = vmatpush1.msra.mxu0 0.0
  %4192 = vmatprep.subr.mxu0 0.0
  %4193 = vmatpush1.msra.mxu0 0.0
  %4194 = vmatprep.subr.mxu0 0.0
  %4195 = vmatpush1.msra.mxu0 0.0
  %4196 = vmatprep.subr.mxu0 0.0
  %4197 = vmatpush1.msra.mxu0 0.0
  %4198 = vmatprep.subr.mxu0 0.0
  %4199 = vmatpush1.msra.mxu0 0.0
  %4200 = vmatprep.subr.mxu0 0.0
  %4201 = vmatpush1.msra.mxu0 0.0
  %4202 = vmatprep.subr.mxu0 0.0
  %4203 = vmatpush1.msra.mxu0 0.0
  %4204 = vmatprep.subr.mxu0 0.0
  %4205 = vmatpush1.msra.mxu0 0.0
  %4206 = vmatprep.subr.mxu0 0.0
  %4207 = vmatpush1.msra.mxu0 0.0
  %4208 = vmatprep.subr.mxu0 0.0
  %4209 = vmatpush1.msra.mxu0 0.0
  %4210 = vmatprep.subr.mxu0 0.0
  %4211 = vmatpush1.msra.mxu0 0.0
  %4212 = vmatprep.subr.mxu0 0.0
  %4213 = vmatpush1.msra.mxu0 0.0
  %4214 = vmatprep.subr.mxu0 0.0
  %4215 = vmatpush1.msra.mxu0 0.0
  %4216 = vmatprep.subr.mxu0 0.0
  %4217 = vmatpush1.msra.mxu0 0.0
  %4218 = vmatprep.subr.mxu0 0.0
  %4219 = vmatpush1.msra.mxu0 0.0
  %4220 = vmatprep.subr.mxu0 0.0
  %4221 = vmatpush1.msra.mxu0 0.0
  %4222 = vmatprep.subr.mxu0 0.0
  %4223 = vmatpush1.msra.mxu0 0.0
  %4224 = vmatprep.subr.mxu0 0.0
  %4225 = vmatpush1.msra.mxu0 0.0
  %4226 = vmatprep.subr.mxu0 0.0
  %4227 = vmatpush1.msra.mxu0 0.0
  %4228 = vmatprep.subr.mxu0 0.0
  %4229 = vmatpush1.msra.mxu0 0.0
  %4230 = vmatprep.subr.mxu0 0.0
  %4231 = vmatpush1.msra.mxu0 0.0
  %4232 = vmatprep.subr.mxu0 0.0
  %4233 = vmatpush1.msra.mxu0 0.0
  %4234 = vmatprep.subr.mxu0 0.0
  %4235 = vmatpush1.msra.mxu0 0.0
  %4236 = vmatprep.subr.mxu0 0.0
  %4237 = vmatpush1.msra.mxu0 0.0
  %4238 = vmatprep.subr.mxu0 0.0
  %4239 = vmatpush1.msra.mxu0 0.0
  %4240 = vmatprep.subr.mxu0 0.0
  %4241 = vmatpush1.msra.mxu0 0.0
  %4242 = vmatprep.subr.mxu0 0.0
  %4243 = vmatpush1.msra.mxu0 0.0
  %4244 = vmatprep.subr.mxu0 0.0
  %4245 = vmatpush1.msra.mxu0 0.0
  %4246 = vmatprep.subr.mxu0 0.0
  %4247 = vmatpush1.msra.mxu0 0.0
  %4248 = vmatprep.subr.mxu0 0.0
  %4249 = vmatpush1.msra.mxu0 0.0
  %4250 = vmatprep.mubr.f32.mxu0 0.0
  %4251 = vmatmul.mubr.f32.gmra.mrb[0].mxu0 %v4184
  %v4252 = vpop.f32.mrb[0].mxu0
  %v4253 = vadd.f32 0.0, %v4252
  %v4254 = vpop.f32.mrb[0].mxu0
  %4255 = vdwg.mxu0
  %4256 = vrot.lane.b32.xlu0 %v1678, 16
  %v4257 = vpop.permute.xlu0 %4256
  %v4260 = vsel %vm2307, %v3723, 0
  %4262 = vmatprep.subr.mxu0 0.0
  %4263 = vmatpush1.msra.mxu0 %v4257
  %4264 = vmatprep.subr.mxu0 0.0
  %4265 = vmatpush1.msra.mxu0 0.0
  %4266 = vmatprep.subr.mxu0 0.0
  %4267 = vmatpush1.msra.mxu0 0.0
  %4268 = vmatprep.subr.mxu0 0.0
  %4269 = vmatpush1.msra.mxu0 0.0
  %4270 = vmatprep.subr.mxu0 0.0
  %4271 = vmatpush1.msra.mxu0 0.0
  %4272 = vmatprep.subr.mxu0 0.0
  %4273 = vmatpush1.msra.mxu0 0.0
  %4274 = vmatprep.subr.mxu0 0.0
  %4275 = vmatpush1.msra.mxu0 0.0
  %4276 = vmatprep.subr.mxu0 0.0
  %4277 = vmatpush1.msra.mxu0 0.0
  %4278 = vmatprep.subr.mxu0 0.0
  %4279 = vmatpush1.msra.mxu0 0.0
  %4280 = vmatprep.subr.mxu0 0.0
  %4281 = vmatpush1.msra.mxu0 0.0
  %4282 = vmatprep.subr.mxu0 0.0
  %4283 = vmatpush1.msra.mxu0 0.0
  %4284 = vmatprep.subr.mxu0 0.0
  %4285 = vmatpush1.msra.mxu0 0.0
  %4286 = vmatprep.subr.mxu0 0.0
  %4287 = vmatpush1.msra.mxu0 0.0
  %4288 = vmatprep.subr.mxu0 0.0
  %4289 = vmatpush1.msra.mxu0 0.0
  %4290 = vmatprep.subr.mxu0 0.0
  %4291 = vmatpush1.msra.mxu0 0.0
  %4292 = vmatprep.subr.mxu0 0.0
  %4293 = vmatpush1.msra.mxu0 0.0
  %4294 = vmatprep.subr.mxu0 0.0
  %4295 = vmatpush1.msra.mxu0 0.0
  %4296 = vmatprep.subr.mxu0 0.0
  %4297 = vmatpush1.msra.mxu0 0.0
  %4298 = vmatprep.subr.mxu0 0.0
  %4299 = vmatpush1.msra.mxu0 0.0
  %4300 = vmatprep.subr.mxu0 0.0
  %4301 = vmatpush1.msra.mxu0 0.0
  %4302 = vmatprep.subr.mxu0 0.0
  %4303 = vmatpush1.msra.mxu0 0.0
  %4304 = vmatprep.subr.mxu0 0.0
  %4305 = vmatpush1.msra.mxu0 0.0
  %4306 = vmatprep.subr.mxu0 0.0
  %4307 = vmatpush1.msra.mxu0 0.0
  %4308 = vmatprep.subr.mxu0 0.0
  %4309 = vmatpush1.msra.mxu0 0.0
  %4310 = vmatprep.subr.mxu0 0.0
  %4311 = vmatpush1.msra.mxu0 0.0
  %4312 = vmatprep.subr.mxu0 0.0
  %4313 = vmatpush1.msra.mxu0 0.0
  %4314 = vmatprep.subr.mxu0 0.0
  %4315 = vmatpush1.msra.mxu0 0.0
  %4316 = vmatprep.subr.mxu0 0.0
  %4317 = vmatpush1.msra.mxu0 0.0
  %4318 = vmatprep.subr.mxu0 0.0
  %4319 = vmatpush1.msra.mxu0 0.0
  %4320 = vmatprep.subr.mxu0 0.0
  %4321 = vmatpush1.msra.mxu0 0.0
  %4322 = vmatprep.subr.mxu0 0.0
  %4323 = vmatpush1.msra.mxu0 0.0
  %4324 = vmatprep.subr.mxu0 0.0
  %4325 = vmatpush1.msra.mxu0 0.0
  %4326 = vmatprep.mubr.f32.mxu0 0.0
  %4327 = vmatmul.mubr.f32.gmra.mrb[0].mxu0 %v4260
  %v4328 = vpop.f32.mrb[0].mxu0
  %v4329 = vadd.f32 0.0, %v4328
  %v4330 = vpop.f32.mrb[0].mxu0
  %4331 = vdwg.mxu0
  %4332 = vrot.lane.b32.xlu0 %v1636, 96
  %v4333 = vpop.permute.xlu0 %4332
  %4334 = vrot.lane.b32.xlu0 %v1636, 48
  %v4335 = vpop.permute.xlu0 %4334
  %v4336 = vsel %vm1685, %v4333, 0
  %v4338 = vsel %vm1685, %v4335, 0
  %4340 = vmatprep.subr.mxu0 0.0
  %4341 = vmatpush1.xpose.msra.mxu0 %v4338
  %4342 = vmatprep.subr.mxu0 0.0
  %4343 = vmatpush1.xpose.msra.mxu0 0.0
  %4344 = vmatprep.subr.mxu0 0.0
  %4345 = vmatpush1.xpose.msra.mxu0 0.0
  %4346 = vmatprep.subr.mxu0 0.0
  %4347 = vmatpush1.xpose.msra.mxu0 0.0
  %4348 = vmatprep.subr.mxu0 0.0
  %4349 = vmatpush1.xpose.msra.mxu0 0.0
  %4350 = vmatprep.subr.mxu0 0.0
  %4351 = vmatpush1.xpose.msra.mxu0 0.0
  %4352 = vmatprep.subr.mxu0 0.0
  %4353 = vmatpush1.xpose.msra.mxu0 0.0
  %4354 = vmatprep.subr.mxu0 0.0
  %4355 = vmatpush1.xpose.msra.mxu0 0.0
  %4356 = vmatprep.subr.mxu0 0.0
  %4357 = vmatpush1.xpose.msra.mxu0 0.0
  %4358 = vmatprep.subr.mxu0 0.0
  %4359 = vmatpush1.xpose.msra.mxu0 0.0
  %4360 = vmatprep.subr.mxu0 0.0
  %4361 = vmatpush1.xpose.msra.mxu0 0.0
  %4362 = vmatprep.subr.mxu0 0.0
  %4363 = vmatpush1.xpose.msra.mxu0 0.0
  %4364 = vmatprep.subr.mxu0 0.0
  %4365 = vmatpush1.xpose.msra.mxu0 0.0
  %4366 = vmatprep.subr.mxu0 0.0
  %4367 = vmatpush1.xpose.msra.mxu0 0.0
  %4368 = vmatprep.subr.mxu0 0.0
  %4369 = vmatpush1.xpose.msra.mxu0 0.0
  %4370 = vmatprep.subr.mxu0 0.0
  %4371 = vmatpush1.xpose.msra.mxu0 0.0
  %4372 = vmatprep.subr.mxu0 0.0
  %4373 = vmatpush1.xpose.msra.mxu0 0.0
  %4374 = vmatprep.subr.mxu0 0.0
  %4375 = vmatpush1.xpose.msra.mxu0 0.0
  %4376 = vmatprep.subr.mxu0 0.0
  %4377 = vmatpush1.xpose.msra.mxu0 0.0
  %4378 = vmatprep.subr.mxu0 0.0
  %4379 = vmatpush1.xpose.msra.mxu0 0.0
  %4380 = vmatprep.subr.mxu0 0.0
  %4381 = vmatpush1.xpose.msra.mxu0 0.0
  %4382 = vmatprep.subr.mxu0 0.0
  %4383 = vmatpush1.xpose.msra.mxu0 0.0
  %4384 = vmatprep.subr.mxu0 0.0
  %4385 = vmatpush1.xpose.msra.mxu0 0.0
  %4386 = vmatprep.subr.mxu0 0.0
  %4387 = vmatpush1.xpose.msra.mxu0 0.0
  %4388 = vmatprep.subr.mxu0 0.0
  %4389 = vmatpush1.xpose.msra.mxu0 0.0
  %4390 = vmatprep.subr.mxu0 0.0
  %4391 = vmatpush1.xpose.msra.mxu0 0.0
  %4392 = vmatprep.subr.mxu0 0.0
  %4393 = vmatpush1.xpose.msra.mxu0 0.0
  %4394 = vmatprep.subr.mxu0 0.0
  %4395 = vmatpush1.xpose.msra.mxu0 0.0
  %4396 = vmatprep.subr.mxu0 0.0
  %4397 = vmatpush1.xpose.msra.mxu0 0.0
  %4398 = vmatprep.subr.mxu0 0.0
  %4399 = vmatpush1.xpose.msra.mxu0 0.0
  %4400 = vmatprep.subr.mxu0 0.0
  %4401 = vmatpush1.xpose.msra.mxu0 0.0
  %4402 = vmatprep.subr.mxu0 0.0
  %4403 = vmatpush1.xpose.msra.mxu0 0.0
  %4404 = vmatprep.mubr.f32.mxu0 0.0
  %4405 = vmatmul.mubr.f32.gmra.mrb[0].mxu0 %v4336
  %v4406 = vpop.f32.mrb[0].mxu0
  %v4407 = vadd.f32 0.0, %v4406
  %v4408 = vpop.f32.mrb[0].mxu0
  %4409 = vdwg.mxu0
  %4410 = vrot.lane.b32.xlu0 %v1642, 96
  %v4411 = vpop.permute.xlu0 %4410
  %4412 = vrot.lane.b32.xlu0 %v1642, 48
  %v4413 = vpop.permute.xlu0 %4412
  %v4414 = vsel %vm1685, %v4411, 0
  %v4416 = vsel %vm1685, %v4413, 0
  %4418 = vmatprep.subr.mxu0 0.0
  %4419 = vmatpush1.xpose.msra.mxu0 %v4416
  %4420 = vmatprep.subr.mxu0 0.0
  %4421 = vmatpush1.xpose.msra.mxu0 0.0
  %4422 = vmatprep.subr.mxu0 0.0
  %4423 = vmatpush1.xpose.msra.mxu0 0.0
  %4424 = vmatprep.subr.mxu0 0.0
  %4425 = vmatpush1.xpose.msra.mxu0 0.0
  %4426 = vmatprep.subr.mxu0 0.0
  %4427 = vmatpush1.xpose.msra.mxu0 0.0
  %4428 = vmatprep.subr.mxu0 0.0
  %4429 = vmatpush1.xpose.msra.mxu0 0.0
  %4430 = vmatprep.subr.mxu0 0.0
  %4431 = vmatpush1.xpose.msra.mxu0 0.0
  %4432 = vmatprep.subr.mxu0 0.0
  %4433 = vmatpush1.xpose.msra.mxu0 0.0
  %4434 = vmatprep.subr.mxu0 0.0
  %4435 = vmatpush1.xpose.msra.mxu0 0.0
  %4436 = vmatprep.subr.mxu0 0.0
  %4437 = vmatpush1.xpose.msra.mxu0 0.0
  %4438 = vmatprep.subr.mxu0 0.0
  %4439 = vmatpush1.xpose.msra.mxu0 0.0
  %4440 = vmatprep.subr.mxu0 0.0
  %4441 = vmatpush1.xpose.msra.mxu0 0.0
  %4442 = vmatprep.subr.mxu0 0.0
  %4443 = vmatpush1.xpose.msra.mxu0 0.0
  %4444 = vmatprep.subr.mxu0 0.0
  %4445 = vmatpush1.xpose.msra.mxu0 0.0
  %4446 = vmatprep.subr.mxu0 0.0
  %4447 = vmatpush1.xpose.msra.mxu0 0.0
  %4448 = vmatprep.subr.mxu0 0.0
  %4449 = vmatpush1.xpose.msra.mxu0 0.0
  %4450 = vmatprep.subr.mxu0 0.0
  %4451 = vmatpush1.xpose.msra.mxu0 0.0
  %4452 = vmatprep.subr.mxu0 0.0
  %4453 = vmatpush1.xpose.msra.mxu0 0.0
  %4454 = vmatprep.subr.mxu0 0.0
  %4455 = vmatpush1.xpose.msra.mxu0 0.0
  %4456 = vmatprep.subr.mxu0 0.0
  %4457 = vmatpush1.xpose.msra.mxu0 0.0
  %4458 = vmatprep.subr.mxu0 0.0
  %4459 = vmatpush1.xpose.msra.mxu0 0.0
  %4460 = vmatprep.subr.mxu0 0.0
  %4461 = vmatpush1.xpose.msra.mxu0 0.0
  %4462 = vmatprep.subr.mxu0 0.0
  %4463 = vmatpush1.xpose.msra.mxu0 0.0
  %4464 = vmatprep.subr.mxu0 0.0
  %4465 = vmatpush1.xpose.msra.mxu0 0.0
  %4466 = vmatprep.subr.mxu0 0.0
  %4467 = vmatpush1.xpose.msra.mxu0 0.0
  %4468 = vmatprep.subr.mxu0 0.0
  %4469 = vmatpush1.xpose.msra.mxu0 0.0
  %4470 = vmatprep.subr.mxu0 0.0
  %4471 = vmatpush1.xpose.msra.mxu0 0.0
  %4472 = vmatprep.subr.mxu0 0.0
  %4473 = vmatpush1.xpose.msra.mxu0 0.0
  %4474 = vmatprep.subr.mxu0 0.0
  %4475 = vmatpush1.xpose.msra.mxu0 0.0
  %4476 = vmatprep.subr.mxu0 0.0
  %4477 = vmatpush1.xpose.msra.mxu0 0.0
  %4478 = vmatprep.subr.mxu0 0.0
  %4479 = vmatpush1.xpose.msra.mxu0 0.0
  %4480 = vmatprep.subr.mxu0 0.0
  %4481 = vmatpush1.xpose.msra.mxu0 0.0
  %4482 = vmatprep.mubr.f32.mxu0 0.0
  %4483 = vmatmul.mubr.f32.gmra.mrb[0].mxu0 %v4414
  %v4484 = vpop.f32.mrb[0].mxu0
  %v4485 = vadd.f32 0.0, %v4484
  %v4486 = vpop.f32.mrb[0].mxu0
  %4487 = vdwg.mxu0
  %4488 = vrot.lane.b32.xlu0 %v1648, 96
  %v4489 = vpop.permute.xlu0 %4488
  %4490 = vrot.lane.b32.xlu0 %v1648, 48
  %v4491 = vpop.permute.xlu0 %4490
  %v4492 = vsel %vm1685, %v4489, 0
  %v4494 = vsel %vm1685, %v4491, 0
  %4496 = vmatprep.subr.mxu0 0.0
  %4497 = vmatpush1.xpose.msra.mxu0 %v4494
  %4498 = vmatprep.subr.mxu0 0.0
  %4499 = vmatpush1.xpose.msra.mxu0 0.0
  %4500 = vmatprep.subr.mxu0 0.0
  %4501 = vmatpush1.xpose.msra.mxu0 0.0
  %4502 = vmatprep.subr.mxu0 0.0
  %4503 = vmatpush1.xpose.msra.mxu0 0.0
  %4504 = vmatprep.subr.mxu0 0.0
  %4505 = vmatpush1.xpose.msra.mxu0 0.0
  %4506 = vmatprep.subr.mxu0 0.0
  %4507 = vmatpush1.xpose.msra.mxu0 0.0
  %4508 = vmatprep.subr.mxu0 0.0
  %4509 = vmatpush1.xpose.msra.mxu0 0.0
  %4510 = vmatprep.subr.mxu0 0.0
  %4511 = vmatpush1.xpose.msra.mxu0 0.0
  %4512 = vmatprep.subr.mxu0 0.0
  %4513 = vmatpush1.xpose.msra.mxu0 0.0
  %4514 = vmatprep.subr.mxu0 0.0
  %4515 = vmatpush1.xpose.msra.mxu0 0.0
  %4516 = vmatprep.subr.mxu0 0.0
  %4517 = vmatpush1.xpose.msra.mxu0 0.0
  %4518 = vmatprep.subr.mxu0 0.0
  %4519 = vmatpush1.xpose.msra.mxu0 0.0
  %4520 = vmatprep.subr.mxu0 0.0
  %4521 = vmatpush1.xpose.msra.mxu0 0.0
  %4522 = vmatprep.subr.mxu0 0.0
  %4523 = vmatpush1.xpose.msra.mxu0 0.0
  %4524 = vmatprep.subr.mxu0 0.0
  %4525 = vmatpush1.xpose.msra.mxu0 0.0
  %4526 = vmatprep.subr.mxu0 0.0
  %4527 = vmatpush1.xpose.msra.mxu0 0.0
  %4528 = vmatprep.subr.mxu0 0.0
  %4529 = vmatpush1.xpose.msra.mxu0 0.0
  %4530 = vmatprep.subr.mxu0 0.0
  %4531 = vmatpush1.xpose.msra.mxu0 0.0
  %4532 = vmatprep.subr.mxu0 0.0
  %4533 = vmatpush1.xpose.msra.mxu0 0.0
  %4534 = vmatprep.subr.mxu0 0.0
  %4535 = vmatpush1.xpose.msra.mxu0 0.0
  %4536 = vmatprep.subr.mxu0 0.0
  %4537 = vmatpush1.xpose.msra.mxu0 0.0
  %4538 = vmatprep.subr.mxu0 0.0
  %4539 = vmatpush1.xpose.msra.mxu0 0.0
  %4540 = vmatprep.subr.mxu0 0.0
  %4541 = vmatpush1.xpose.msra.mxu0 0.0
  %4542 = vmatprep.subr.mxu0 0.0
  %4543 = vmatpush1.xpose.msra.mxu0 0.0
  %4544 = vmatprep.subr.mxu0 0.0
  %4545 = vmatpush1.xpose.msra.mxu0 0.0
  %4546 = vmatprep.subr.mxu0 0.0
  %4547 = vmatpush1.xpose.msra.mxu0 0.0
  %4548 = vmatprep.subr.mxu0 0.0
  %4549 = vmatpush1.xpose.msra.mxu0 0.0
  %4550 = vmatprep.subr.mxu0 0.0
  %4551 = vmatpush1.xpose.msra.mxu0 0.0
  %4552 = vmatprep.subr.mxu0 0.0
  %4553 = vmatpush1.xpose.msra.mxu0 0.0
  %4554 = vmatprep.subr.mxu0 0.0
  %4555 = vmatpush1.xpose.msra.mxu0 0.0
  %4556 = vmatprep.subr.mxu0 0.0
  %4557 = vmatpush1.xpose.msra.mxu0 0.0
  %4558 = vmatprep.subr.mxu0 0.0
  %4559 = vmatpush1.xpose.msra.mxu0 0.0
  %4560 = vmatprep.mubr.f32.mxu0 0.0
  %4561 = vmatmul.mubr.f32.gmra.mrb[0].mxu0 %v4492
  %v4562 = vpop.f32.mrb[0].mxu0
  %v4563 = vadd.f32 0.0, %v4562
  %v4564 = vpop.f32.mrb[0].mxu0
  %4565 = vdwg.mxu0
  %4566 = vrot.lane.b32.xlu0 %v1654, 96
  %v4567 = vpop.permute.xlu0 %4566
  %4568 = vrot.lane.b32.xlu0 %v1654, 48
  %v4569 = vpop.permute.xlu0 %4568
  %v4570 = vsel %vm1685, %v4567, 0
  %v4572 = vsel %vm1685, %v4569, 0
  %4574 = vmatprep.subr.mxu0 0.0
  %4575 = vmatpush1.xpose.msra.mxu0 %v4572
  %4576 = vmatprep.subr.mxu0 0.0
  %4577 = vmatpush1.xpose.msra.mxu0 0.0
  %4578 = vmatprep.subr.mxu0 0.0
  %4579 = vmatpush1.xpose.msra.mxu0 0.0
  %4580 = vmatprep.subr.mxu0 0.0
  %4581 = vmatpush1.xpose.msra.mxu0 0.0
  %4582 = vmatprep.subr.mxu0 0.0
  %4583 = vmatpush1.xpose.msra.mxu0 0.0
  %4584 = vmatprep.subr.mxu0 0.0
  %4585 = vmatpush1.xpose.msra.mxu0 0.0
  %4586 = vmatprep.subr.mxu0 0.0
  %4587 = vmatpush1.xpose.msra.mxu0 0.0
  %4588 = vmatprep.subr.mxu0 0.0
  %4589 = vmatpush1.xpose.msra.mxu0 0.0
  %4590 = vmatprep.subr.mxu0 0.0
  %4591 = vmatpush1.xpose.msra.mxu0 0.0
  %4592 = vmatprep.subr.mxu0 0.0
  %4593 = vmatpush1.xpose.msra.mxu0 0.0
  %4594 = vmatprep.subr.mxu0 0.0
  %4595 = vmatpush1.xpose.msra.mxu0 0.0
  %4596 = vmatprep.subr.mxu0 0.0
  %4597 = vmatpush1.xpose.msra.mxu0 0.0
  %4598 = vmatprep.subr.mxu0 0.0
  %4599 = vmatpush1.xpose.msra.mxu0 0.0
  %4600 = vmatprep.subr.mxu0 0.0
  %4601 = vmatpush1.xpose.msra.mxu0 0.0
  %4602 = vmatprep.subr.mxu0 0.0
  %4603 = vmatpush1.xpose.msra.mxu0 0.0
  %4604 = vmatprep.subr.mxu0 0.0
  %4605 = vmatpush1.xpose.msra.mxu0 0.0
  %4606 = vmatprep.subr.mxu0 0.0
  %4607 = vmatpush1.xpose.msra.mxu0 0.0
  %4608 = vmatprep.subr.mxu0 0.0
  %4609 = vmatpush1.xpose.msra.mxu0 0.0
  %4610 = vmatprep.subr.mxu0 0.0
  %4611 = vmatpush1.xpose.msra.mxu0 0.0
  %4612 = vmatprep.subr.mxu0 0.0
  %4613 = vmatpush1.xpose.msra.mxu0 0.0
  %4614 = vmatprep.subr.mxu0 0.0
  %4615 = vmatpush1.xpose.msra.mxu0 0.0
  %4616 = vmatprep.subr.mxu0 0.0
  %4617 = vmatpush1.xpose.msra.mxu0 0.0
  %4618 = vmatprep.subr.mxu0 0.0
  %4619 = vmatpush1.xpose.msra.mxu0 0.0
  %4620 = vmatprep.subr.mxu0 0.0
  %4621 = vmatpush1.xpose.msra.mxu0 0.0
  %4622 = vmatprep.subr.mxu0 0.0
  %4623 = vmatpush1.xpose.msra.mxu0 0.0
  %4624 = vmatprep.subr.mxu0 0.0
  %4625 = vmatpush1.xpose.msra.mxu0 0.0
  %4626 = vmatprep.subr.mxu0 0.0
  %4627 = vmatpush1.xpose.msra.mxu0 0.0
  %4628 = vmatprep.subr.mxu0 0.0
  %4629 = vmatpush1.xpose.msra.mxu0 0.0
  %4630 = vmatprep.subr.mxu0 0.0
  %4631 = vmatpush1.xpose.msra.mxu0 0.0
  %4632 = vmatprep.subr.mxu0 0.0
  %4633 = vmatpush1.xpose.msra.mxu0 0.0
  %4634 = vmatprep.subr.mxu0 0.0
  %4635 = vmatpush1.xpose.msra.mxu0 0.0
  %4636 = vmatprep.subr.mxu0 0.0
  %4637 = vmatpush1.xpose.msra.mxu0 0.0
  %4638 = vmatprep.mubr.f32.mxu0 0.0
  %4639 = vmatmul.mubr.f32.gmra.mrb[0].mxu0 %v4570
  %v4640 = vpop.f32.mrb[0].mxu0
  %v4641 = vadd.f32 0.0, %v4640
  %v4642 = vpop.f32.mrb[0].mxu0
  %4643 = vdwg.mxu0
  %4644 = vrot.lane.b32.xlu0 %v1660, 96
  %v4645 = vpop.permute.xlu0 %4644
  %4646 = vrot.lane.b32.xlu0 %v1660, 48
  %v4647 = vpop.permute.xlu0 %4646
  %v4648 = vsel %vm1685, %v4645, 0
  %v4650 = vsel %vm1685, %v4647, 0
  %4652 = vmatprep.subr.mxu0 0.0
  %4653 = vmatpush1.xpose.msra.mxu0 %v4650
  %4654 = vmatprep.subr.mxu0 0.0
  %4655 = vmatpush1.xpose.msra.mxu0 0.0
  %4656 = vmatprep.subr.mxu0 0.0
  %4657 = vmatpush1.xpose.msra.mxu0 0.0
  %4658 = vmatprep.subr.mxu0 0.0
  %4659 = vmatpush1.xpose.msra.mxu0 0.0
  %4660 = vmatprep.subr.mxu0 0.0
  %4661 = vmatpush1.xpose.msra.mxu0 0.0
  %4662 = vmatprep.subr.mxu0 0.0
  %4663 = vmatpush1.xpose.msra.mxu0 0.0
  %4664 = vmatprep.subr.mxu0 0.0
  %4665 = vmatpush1.xpose.msra.mxu0 0.0
  %4666 = vmatprep.subr.mxu0 0.0
  %4667 = vmatpush1.xpose.msra.mxu0 0.0
  %4668 = vmatprep.subr.mxu0 0.0
  %4669 = vmatpush1.xpose.msra.mxu0 0.0
  %4670 = vmatprep.subr.mxu0 0.0
  %4671 = vmatpush1.xpose.msra.mxu0 0.0
  %4672 = vmatprep.subr.mxu0 0.0
  %4673 = vmatpush1.xpose.msra.mxu0 0.0
  %4674 = vmatprep.subr.mxu0 0.0
  %4675 = vmatpush1.xpose.msra.mxu0 0.0
  %4676 = vmatprep.subr.mxu0 0.0
  %4677 = vmatpush1.xpose.msra.mxu0 0.0
  %4678 = vmatprep.subr.mxu0 0.0
  %4679 = vmatpush1.xpose.msra.mxu0 0.0
  %4680 = vmatprep.subr.mxu0 0.0
  %4681 = vmatpush1.xpose.msra.mxu0 0.0
  %4682 = vmatprep.subr.mxu0 0.0
  %4683 = vmatpush1.xpose.msra.mxu0 0.0
  %4684 = vmatprep.subr.mxu0 0.0
  %4685 = vmatpush1.xpose.msra.mxu0 0.0
  %4686 = vmatprep.subr.mxu0 0.0
  %4687 = vmatpush1.xpose.msra.mxu0 0.0
  %4688 = vmatprep.subr.mxu0 0.0
  %4689 = vmatpush1.xpose.msra.mxu0 0.0
  %4690 = vmatprep.subr.mxu0 0.0
  %4691 = vmatpush1.xpose.msra.mxu0 0.0
  %4692 = vmatprep.subr.mxu0 0.0
  %4693 = vmatpush1.xpose.msra.mxu0 0.0
  %4694 = vmatprep.subr.mxu0 0.0
  %4695 = vmatpush1.xpose.msra.mxu0 0.0
  %4696 = vmatprep.subr.mxu0 0.0
  %4697 = vmatpush1.xpose.msra.mxu0 0.0
  %4698 = vmatprep.subr.mxu0 0.0
  %4699 = vmatpush1.xpose.msra.mxu0 0.0
  %4700 = vmatprep.subr.mxu0 0.0
  %4701 = vmatpush1.xpose.msra.mxu0 0.0
  %4702 = vmatprep.subr.mxu0 0.0
  %4703 = vmatpush1.xpose.msra.mxu0 0.0
  %4704 = vmatprep.subr.mxu0 0.0
  %4705 = vmatpush1.xpose.msra.mxu0 0.0
  %4706 = vmatprep.subr.mxu0 0.0
  %4707 = vmatpush1.xpose.msra.mxu0 0.0
  %4708 = vmatprep.subr.mxu0 0.0
  %4709 = vmatpush1.xpose.msra.mxu0 0.0
  %4710 = vmatprep.subr.mxu0 0.0
  %4711 = vmatpush1.xpose.msra.mxu0 0.0
  %4712 = vmatprep.subr.mxu0 0.0
  %4713 = vmatpush1.xpose.msra.mxu0 0.0
  %4714 = vmatprep.subr.mxu0 0.0
  %4715 = vmatpush1.xpose.msra.mxu0 0.0
  %4716 = vmatprep.mubr.f32.mxu0 0.0
  %4717 = vmatmul.mubr.f32.gmra.mrb[0].mxu0 %v4648
  %v4718 = vpop.f32.mrb[0].mxu0
  %v4719 = vadd.f32 0.0, %v4718
  %v4720 = vpop.f32.mrb[0].mxu0
  %4721 = vdwg.mxu0
  %4722 = vrot.lane.b32.xlu0 %v1666, 96
  %v4723 = vpop.permute.xlu0 %4722
  %4724 = vrot.lane.b32.xlu0 %v1666, 48
  %v4725 = vpop.permute.xlu0 %4724
  %v4726 = vsel %vm1685, %v4723, 0
  %v4728 = vsel %vm1685, %v4725, 0
  %4730 = vmatprep.subr.mxu0 0.0
  %4731 = vmatpush1.xpose.msra.mxu0 %v4728
  %4732 = vmatprep.subr.mxu0 0.0
  %4733 = vmatpush1.xpose.msra.mxu0 0.0
  %4734 = vmatprep.subr.mxu0 0.0
  %4735 = vmatpush1.xpose.msra.mxu0 0.0
  %4736 = vmatprep.subr.mxu0 0.0
  %4737 = vmatpush1.xpose.msra.mxu0 0.0
  %4738 = vmatprep.subr.mxu0 0.0
  %4739 = vmatpush1.xpose.msra.mxu0 0.0
  %4740 = vmatprep.subr.mxu0 0.0
  %4741 = vmatpush1.xpose.msra.mxu0 0.0
  %4742 = vmatprep.subr.mxu0 0.0
  %4743 = vmatpush1.xpose.msra.mxu0 0.0
  %4744 = vmatprep.subr.mxu0 0.0
  %4745 = vmatpush1.xpose.msra.mxu0 0.0
  %4746 = vmatprep.subr.mxu0 0.0
  %4747 = vmatpush1.xpose.msra.mxu0 0.0
  %4748 = vmatprep.subr.mxu0 0.0
  %4749 = vmatpush1.xpose.msra.mxu0 0.0
  %4750 = vmatprep.subr.mxu0 0.0
  %4751 = vmatpush1.xpose.msra.mxu0 0.0
  %4752 = vmatprep.subr.mxu0 0.0
  %4753 = vmatpush1.xpose.msra.mxu0 0.0
  %4754 = vmatprep.subr.mxu0 0.0
  %4755 = vmatpush1.xpose.msra.mxu0 0.0
  %4756 = vmatprep.subr.mxu0 0.0
  %4757 = vmatpush1.xpose.msra.mxu0 0.0
  %4758 = vmatprep.subr.mxu0 0.0
  %4759 = vmatpush1.xpose.msra.mxu0 0.0
  %4760 = vmatprep.subr.mxu0 0.0
  %4761 = vmatpush1.xpose.msra.mxu0 0.0
  %4762 = vmatprep.subr.mxu0 0.0
  %4763 = vmatpush1.xpose.msra.mxu0 0.0
  %4764 = vmatprep.subr.mxu0 0.0
  %4765 = vmatpush1.xpose.msra.mxu0 0.0
  %4766 = vmatprep.subr.mxu0 0.0
  %4767 = vmatpush1.xpose.msra.mxu0 0.0
  %4768 = vmatprep.subr.mxu0 0.0
  %4769 = vmatpush1.xpose.msra.mxu0 0.0
  %4770 = vmatprep.subr.mxu0 0.0
  %4771 = vmatpush1.xpose.msra.mxu0 0.0
  %4772 = vmatprep.subr.mxu0 0.0
  %4773 = vmatpush1.xpose.msra.mxu0 0.0
  %4774 = vmatprep.subr.mxu0 0.0
  %4775 = vmatpush1.xpose.msra.mxu0 0.0
  %4776 = vmatprep.subr.mxu0 0.0
  %4777 = vmatpush1.xpose.msra.mxu0 0.0
  %4778 = vmatprep.subr.mxu0 0.0
  %4779 = vmatpush1.xpose.msra.mxu0 0.0
  %4780 = vmatprep.subr.mxu0 0.0
  %4781 = vmatpush1.xpose.msra.mxu0 0.0
  %4782 = vmatprep.subr.mxu0 0.0
  %4783 = vmatpush1.xpose.msra.mxu0 0.0
  %4784 = vmatprep.subr.mxu0 0.0
  %4785 = vmatpush1.xpose.msra.mxu0 0.0
  %4786 = vmatprep.subr.mxu0 0.0
  %4787 = vmatpush1.xpose.msra.mxu0 0.0
  %4788 = vmatprep.subr.mxu0 0.0
  %4789 = vmatpush1.xpose.msra.mxu0 0.0
  %4790 = vmatprep.subr.mxu0 0.0
  %4791 = vmatpush1.xpose.msra.mxu0 0.0
  %4792 = vmatprep.subr.mxu0 0.0
  %4793 = vmatpush1.xpose.msra.mxu0 0.0
  %4794 = vmatprep.mubr.f32.mxu0 0.0
  %4795 = vmatmul.mubr.f32.gmra.mrb[0].mxu0 %v4726
  %v4796 = vpop.f32.mrb[0].mxu0
  %v4797 = vadd.f32 0.0, %v4796
  %v4798 = vpop.f32.mrb[0].mxu0
  %4799 = vdwg.mxu0
  %4800 = vrot.lane.b32.xlu0 %v1672, 96
  %v4801 = vpop.permute.xlu0 %4800
  %4802 = vrot.lane.b32.xlu0 %v1672, 48
  %v4803 = vpop.permute.xlu0 %4802
  %v4804 = vsel %vm1685, %v4801, 0
  %v4806 = vsel %vm1685, %v4803, 0
  %4808 = vmatprep.subr.mxu0 0.0
  %4809 = vmatpush1.xpose.msra.mxu0 %v4806
  %4810 = vmatprep.subr.mxu0 0.0
  %4811 = vmatpush1.xpose.msra.mxu0 0.0
  %4812 = vmatprep.subr.mxu0 0.0
  %4813 = vmatpush1.xpose.msra.mxu0 0.0
  %4814 = vmatprep.subr.mxu0 0.0
  %4815 = vmatpush1.xpose.msra.mxu0 0.0
  %4816 = vmatprep.subr.mxu0 0.0
  %4817 = vmatpush1.xpose.msra.mxu0 0.0
  %4818 = vmatprep.subr.mxu0 0.0
  %4819 = vmatpush1.xpose.msra.mxu0 0.0
  %4820 = vmatprep.subr.mxu0 0.0
  %4821 = vmatpush1.xpose.msra.mxu0 0.0
  %4822 = vmatprep.subr.mxu0 0.0
  %4823 = vmatpush1.xpose.msra.mxu0 0.0
  %4824 = vmatprep.subr.mxu0 0.0
  %4825 = vmatpush1.xpose.msra.mxu0 0.0
  %4826 = vmatprep.subr.mxu0 0.0
  %4827 = vmatpush1.xpose.msra.mxu0 0.0
  %4828 = vmatprep.subr.mxu0 0.0
  %4829 = vmatpush1.xpose.msra.mxu0 0.0
  %4830 = vmatprep.subr.mxu0 0.0
  %4831 = vmatpush1.xpose.msra.mxu0 0.0
  %4832 = vmatprep.subr.mxu0 0.0
  %4833 = vmatpush1.xpose.msra.mxu0 0.0
  %4834 = vmatprep.subr.mxu0 0.0
  %4835 = vmatpush1.xpose.msra.mxu0 0.0
  %4836 = vmatprep.subr.mxu0 0.0
  %4837 = vmatpush1.xpose.msra.mxu0 0.0
  %4838 = vmatprep.subr.mxu0 0.0
  %4839 = vmatpush1.xpose.msra.mxu0 0.0
  %4840 = vmatprep.subr.mxu0 0.0
  %4841 = vmatpush1.xpose.msra.mxu0 0.0
  %4842 = vmatprep.subr.mxu0 0.0
  %4843 = vmatpush1.xpose.msra.mxu0 0.0
  %4844 = vmatprep.subr.mxu0 0.0
  %4845 = vmatpush1.xpose.msra.mxu0 0.0
  %4846 = vmatprep.subr.mxu0 0.0
  %4847 = vmatpush1.xpose.msra.mxu0 0.0
  %4848 = vmatprep.subr.mxu0 0.0
  %4849 = vmatpush1.xpose.msra.mxu0 0.0
  %4850 = vmatprep.subr.mxu0 0.0
  %4851 = vmatpush1.xpose.msra.mxu0 0.0
  %4852 = vmatprep.subr.mxu0 0.0
  %4853 = vmatpush1.xpose.msra.mxu0 0.0
  %4854 = vmatprep.subr.mxu0 0.0
  %4855 = vmatpush1.xpose.msra.mxu0 0.0
  %4856 = vmatprep.subr.mxu0 0.0
  %4857 = vmatpush1.xpose.msra.mxu0 0.0
  %4858 = vmatprep.subr.mxu0 0.0
  %4859 = vmatpush1.xpose.msra.mxu0 0.0
  %4860 = vmatprep.subr.mxu0 0.0
  %4861 = vmatpush1.xpose.msra.mxu0 0.0
  %4862 = vmatprep.subr.mxu0 0.0
  %4863 = vmatpush1.xpose.msra.mxu0 0.0
  %4864 = vmatprep.subr.mxu0 0.0
  %4865 = vmatpush1.xpose.msra.mxu0 0.0
  %4866 = vmatprep.subr.mxu0 0.0
  %4867 = vmatpush1.xpose.msra.mxu0 0.0
  %4868 = vmatprep.subr.mxu0 0.0
  %4869 = vmatpush1.xpose.msra.mxu0 0.0
  %4870 = vmatprep.subr.mxu0 0.0
  %4871 = vmatpush1.xpose.msra.mxu0 0.0
  %4872 = vmatprep.mubr.f32.mxu0 0.0
  %4873 = vmatmul.mubr.f32.gmra.mrb[0].mxu0 %v4804
  %v4874 = vpop.f32.mrb[0].mxu0
  %v4875 = vadd.f32 0.0, %v4874
  %v4876 = vpop.f32.mrb[0].mxu0
  %4877 = vdwg.mxu0
  %4878 = vrot.lane.b32.xlu0 %v1678, 96
  %v4879 = vpop.permute.xlu0 %4878
  %4880 = vrot.lane.b32.xlu0 %v1678, 48
  %v4881 = vpop.permute.xlu0 %4880
  %v4882 = vsel %vm1685, %v4879, 0
  %v4884 = vsel %vm1685, %v4881, 0
  %4886 = vmatprep.subr.mxu0 0.0
  %4887 = vmatpush1.xpose.msra.mxu0 %v4884
  %4888 = vmatprep.subr.mxu0 0.0
  %4889 = vmatpush1.xpose.msra.mxu0 0.0
  %4890 = vmatprep.subr.mxu0 0.0
  %4891 = vmatpush1.xpose.msra.mxu0 0.0
  %4892 = vmatprep.subr.mxu0 0.0
  %4893 = vmatpush1.xpose.msra.mxu0 0.0
  %4894 = vmatprep.subr.mxu0 0.0
  %4895 = vmatpush1.xpose.msra.mxu0 0.0
  %4896 = vmatprep.subr.mxu0 0.0
  %4897 = vmatpush1.xpose.msra.mxu0 0.0
  %4898 = vmatprep.subr.mxu0 0.0
  %4899 = vmatpush1.xpose.msra.mxu0 0.0
  %4900 = vmatprep.subr.mxu0 0.0
  %4901 = vmatpush1.xpose.msra.mxu0 0.0
  %4902 = vmatprep.subr.mxu0 0.0
  %4903 = vmatpush1.xpose.msra.mxu0 0.0
  %4904 = vmatprep.subr.mxu0 0.0
  %4905 = vmatpush1.xpose.msra.mxu0 0.0
  %4906 = vmatprep.subr.mxu0 0.0
  %4907 = vmatpush1.xpose.msra.mxu0 0.0
  %4908 = vmatprep.subr.mxu0 0.0
  %4909 = vmatpush1.xpose.msra.mxu0 0.0
  %4910 = vmatprep.subr.mxu0 0.0
  %4911 = vmatpush1.xpose.msra.mxu0 0.0
  %4912 = vmatprep.subr.mxu0 0.0
  %4913 = vmatpush1.xpose.msra.mxu0 0.0
  %4914 = vmatprep.subr.mxu0 0.0
  %4915 = vmatpush1.xpose.msra.mxu0 0.0
  %4916 = vmatprep.subr.mxu0 0.0
  %4917 = vmatpush1.xpose.msra.mxu0 0.0
  %4918 = vmatprep.subr.mxu0 0.0
  %4919 = vmatpush1.xpose.msra.mxu0 0.0
  %4920 = vmatprep.subr.mxu0 0.0
  %4921 = vmatpush1.xpose.msra.mxu0 0.0
  %4922 = vmatprep.subr.mxu0 0.0
  %4923 = vmatpush1.xpose.msra.mxu0 0.0
  %4924 = vmatprep.subr.mxu0 0.0
  %4925 = vmatpush1.xpose.msra.mxu0 0.0
  %4926 = vmatprep.subr.mxu0 0.0
  %4927 = vmatpush1.xpose.msra.mxu0 0.0
  %4928 = vmatprep.subr.mxu0 0.0
  %4929 = vmatpush1.xpose.msra.mxu0 0.0
  %4930 = vmatprep.subr.mxu0 0.0
  %4931 = vmatpush1.xpose.msra.mxu0 0.0
  %4932 = vmatprep.subr.mxu0 0.0
  %4933 = vmatpush1.xpose.msra.mxu0 0.0
  %4934 = vmatprep.subr.mxu0 0.0
  %4935 = vmatpush1.xpose.msra.mxu0 0.0
  %4936 = vmatprep.subr.mxu0 0.0
  %4937 = vmatpush1.xpose.msra.mxu0 0.0
  %4938 = vmatprep.subr.mxu0 0.0
  %4939 = vmatpush1.xpose.msra.mxu0 0.0
  %4940 = vmatprep.subr.mxu0 0.0
  %4941 = vmatpush1.xpose.msra.mxu0 0.0
  %4942 = vmatprep.subr.mxu0 0.0
  %4943 = vmatpush1.xpose.msra.mxu0 0.0
  %4944 = vmatprep.subr.mxu0 0.0
  %4945 = vmatpush1.xpose.msra.mxu0 0.0
  %4946 = vmatprep.subr.mxu0 0.0
  %4947 = vmatpush1.xpose.msra.mxu0 0.0
  %4948 = vmatprep.subr.mxu0 0.0
  %4949 = vmatpush1.xpose.msra.mxu0 0.0
  %4950 = vmatprep.mubr.f32.mxu0 0.0
  %4951 = vmatmul.mubr.f32.gmra.mrb[0].mxu0 %v4882
  %v4952 = vpop.f32.mrb[0].mxu0
  %v4953 = vadd.f32 0.0, %v4952
  %v4954 = vpop.f32.mrb[0].mxu0
  %4955 = vdwg.mxu0
  %v4956 = vmul.f32 %v4407, 0.25
  %v4957 = vmul.f32 %v4485, 0.25
  %v4958 = vmul.f32 %v4563, 0.25
  %v4959 = vmul.f32 %v4641, 0.25
  %v4960 = vmul.f32 %v4719, 0.25
  %v4961 = vmul.f32 %v4797, 0.25
  %v4962 = vmul.f32 %v4875, 0.25
  %v4963 = vmul.f32 %v4953, 0.25
  %v4964 = vsel %vm2307, %v4956, -inf
  %4965 = vmax.xlane.f32.xlu0 %v4964
  %v4966 = vpop.xlane.xlu0 %4965
  %v4967 = vsel %vm2307, %v4957, -inf
  %4968 = vmax.xlane.f32.xlu0 %v4967
  %v4969 = vpop.xlane.xlu0 %4968
  %v4970 = vsel %vm2307, %v4958, -inf
  %4971 = vmax.xlane.f32.xlu0 %v4970
  %v4972 = vpop.xlane.xlu0 %4971
  %v4973 = vsel %vm2307, %v4959, -inf
  %4974 = vmax.xlane.f32.xlu0 %v4973
  %v4975 = vpop.xlane.xlu0 %4974
  %v4976 = vsel %vm2307, %v4960, -inf
  %4977 = vmax.xlane.f32.xlu0 %v4976
  %v4978 = vpop.xlane.xlu0 %4977
  %v4979 = vsel %vm2307, %v4961, -inf
  %4980 = vmax.xlane.f32.xlu0 %v4979
  %v4981 = vpop.xlane.xlu0 %4980
  %v4982 = vsel %vm2307, %v4962, -inf
  %4983 = vmax.xlane.f32.xlu0 %v4982
  %v4984 = vpop.xlane.xlu0 %4983
  %v4985 = vsel %vm2307, %v4963, -inf
  %4986 = vmax.xlane.f32.xlu0 %v4985
  %v4987 = vpop.xlane.xlu0 %4986
  %v4988 = vsub.f32 %v4956, %v4966
  %v4989 = vsub.f32 %v4957, %v4969
  %v4990 = vsub.f32 %v4958, %v4972
  %v4991 = vsub.f32 %v4959, %v4975
  %v4992 = vsub.f32 %v4960, %v4978
  %v4993 = vsub.f32 %v4961, %v4981
  %v4994 = vsub.f32 %v4962, %v4984
  %v4995 = vsub.f32 %v4963, %v4987
  %v4996 = vmul.f32 %v4988, 1.442695
  %v4997 = vpow.pop %v4996
  %v4998 = vmul.f32 %v4989, 1.442695
  %v4999 = vpow.pop %v4998
  %v5000 = vmul.f32 %v4990, 1.442695
  %v5001 = vpow.pop %v5000
  %v5002 = vmul.f32 %v4991, 1.442695
  %v5003 = vpow.pop %v5002
  %v5004 = vmul.f32 %v4992, 1.442695
  %v5005 = vpow.pop %v5004
  %v5006 = vmul.f32 %v4993, 1.442695
  %v5007 = vpow.pop %v5006
  %v5008 = vmul.f32 %v4994, 1.442695
  %v5009 = vpow.pop %v5008
  %v5010 = vmul.f32 %v4995, 1.442695
  %v5011 = vpow.pop %v5010
  %v5012 = vsel %vm2307, %v4997, 0.0
  %5013 = vadd.xlane.f32.xlu0 %v5012
  %v5014 = vpop.xlane.xlu0 %5013
  %v5015 = vsel %vm2307, %v4999, 0.0
  %5016 = vadd.xlane.f32.xlu0 %v5015
  %v5017 = vpop.xlane.xlu0 %5016
  %v5018 = vsel %vm2307, %v5001, 0.0
  %5019 = vadd.xlane.f32.xlu0 %v5018
  %v5020 = vpop.xlane.xlu0 %5019
  %v5021 = vsel %vm2307, %v5003, 0.0
  %5022 = vadd.xlane.f32.xlu0 %v5021
  %v5023 = vpop.xlane.xlu0 %5022
  %v5024 = vsel %vm2307, %v5005, 0.0
  %5025 = vadd.xlane.f32.xlu0 %v5024
  %v5026 = vpop.xlane.xlu0 %5025
  %v5027 = vsel %vm2307, %v5007, 0.0
  %5028 = vadd.xlane.f32.xlu0 %v5027
  %v5029 = vpop.xlane.xlu0 %5028
  %v5030 = vsel %vm2307, %v5009, 0.0
  %5031 = vadd.xlane.f32.xlu0 %v5030
  %v5032 = vpop.xlane.xlu0 %5031
  %v5033 = vsel %vm2307, %v5011, 0.0
  %5034 = vadd.xlane.f32.xlu0 %v5033
  %v5035 = vpop.xlane.xlu0 %5034
  %v5036 = vrcp.pop %v5014
  %v5037 = vmul.f32 %v4997, %v5036
  %v5038 = vrcp.pop %v5017
  %v5039 = vmul.f32 %v4999, %v5038
  %v5040 = vrcp.pop %v5020
  %v5041 = vmul.f32 %v5001, %v5040
  %v5042 = vrcp.pop %v5023
  %v5043 = vmul.f32 %v5003, %v5042
  %v5044 = vrcp.pop %v5026
  %v5045 = vmul.f32 %v5005, %v5044
  %v5046 = vrcp.pop %v5029
  %v5047 = vmul.f32 %v5007, %v5046
  %v5048 = vrcp.pop %v5032
  %v5049 = vmul.f32 %v5009, %v5048
  %v5050 = vrcp.pop %v5035
  %v5051 = vmul.f32 %v5011, %v5050
  %v5053 = vsel %vm2307, %v5037, 0
  %5055 = vmatprep.subr.mxu0 0.0
  %5056 = vmatpush1.msra.mxu0 %v1638
  %5057 = vmatprep.subr.mxu0 0.0
  %5058 = vmatpush1.msra.mxu0 0.0
  %5059 = vmatprep.subr.mxu0 0.0
  %5060 = vmatpush1.msra.mxu0 0.0
  %5061 = vmatprep.subr.mxu0 0.0
  %5062 = vmatpush1.msra.mxu0 0.0
  %5063 = vmatprep.subr.mxu0 0.0
  %5064 = vmatpush1.msra.mxu0 0.0
  %5065 = vmatprep.subr.mxu0 0.0
  %5066 = vmatpush1.msra.mxu0 0.0
  %5067 = vmatprep.subr.mxu0 0.0
  %5068 = vmatpush1.msra.mxu0 0.0
  %5069 = vmatprep.subr.mxu0 0.0
  %5070 = vmatpush1.msra.mxu0 0.0
  %5071 = vmatprep.subr.mxu0 0.0
  %5072 = vmatpush1.msra.mxu0 0.0
  %5073 = vmatprep.subr.mxu0 0.0
  %5074 = vmatpush1.msra.mxu0 0.0
  %5075 = vmatprep.subr.mxu0 0.0
  %5076 = vmatpush1.msra.mxu0 0.0
  %5077 = vmatprep.subr.mxu0 0.0
  %5078 = vmatpush1.msra.mxu0 0.0
  %5079 = vmatprep.subr.mxu0 0.0
  %5080 = vmatpush1.msra.mxu0 0.0
  %5081 = vmatprep.subr.mxu0 0.0
  %5082 = vmatpush1.msra.mxu0 0.0
  %5083 = vmatprep.subr.mxu0 0.0
  %5084 = vmatpush1.msra.mxu0 0.0
  %5085 = vmatprep.subr.mxu0 0.0
  %5086 = vmatpush1.msra.mxu0 0.0
  %5087 = vmatprep.subr.mxu0 0.0
  %5088 = vmatpush1.msra.mxu0 0.0
  %5089 = vmatprep.subr.mxu0 0.0
  %5090 = vmatpush1.msra.mxu0 0.0
  %5091 = vmatprep.subr.mxu0 0.0
  %5092 = vmatpush1.msra.mxu0 0.0
  %5093 = vmatprep.subr.mxu0 0.0
  %5094 = vmatpush1.msra.mxu0 0.0
  %5095 = vmatprep.subr.mxu0 0.0
  %5096 = vmatpush1.msra.mxu0 0.0
  %5097 = vmatprep.subr.mxu0 0.0
  %5098 = vmatpush1.msra.mxu0 0.0
  %5099 = vmatprep.subr.mxu0 0.0
  %5100 = vmatpush1.msra.mxu0 0.0
  %5101 = vmatprep.subr.mxu0 0.0
  %5102 = vmatpush1.msra.mxu0 0.0
  %5103 = vmatprep.subr.mxu0 0.0
  %5104 = vmatpush1.msra.mxu0 0.0
  %5105 = vmatprep.subr.mxu0 0.0
  %5106 = vmatpush1.msra.mxu0 0.0
  %5107 = vmatprep.subr.mxu0 0.0
  %5108 = vmatpush1.msra.mxu0 0.0
  %5109 = vmatprep.subr.mxu0 0.0
  %5110 = vmatpush1.msra.mxu0 0.0
  %5111 = vmatprep.subr.mxu0 0.0
  %5112 = vmatpush1.msra.mxu0 0.0
  %5113 = vmatprep.subr.mxu0 0.0
  %5114 = vmatpush1.msra.mxu0 0.0
  %5115 = vmatprep.subr.mxu0 0.0
  %5116 = vmatpush1.msra.mxu0 0.0
  %5117 = vmatprep.subr.mxu0 0.0
  %5118 = vmatpush1.msra.mxu0 0.0
  %5119 = vmatprep.mubr.f32.mxu0 0.0
  %5120 = vmatmul.mubr.f32.gmra.mrb[0].mxu0 %v5053
  %v5121 = vpop.f32.mrb[0].mxu0
  %v5122 = vadd.f32 0.0, %v5121
  %v5123 = vpop.f32.mrb[0].mxu0
  %5124 = vdwg.mxu0
  %v5126 = vsel %vm2307, %v5039, 0
  %5128 = vmatprep.subr.mxu0 0.0
  %5129 = vmatpush1.msra.mxu0 %v1644
  %5130 = vmatprep.subr.mxu0 0.0
  %5131 = vmatpush1.msra.mxu0 0.0
  %5132 = vmatprep.subr.mxu0 0.0
  %5133 = vmatpush1.msra.mxu0 0.0
  %5134 = vmatprep.subr.mxu0 0.0
  %5135 = vmatpush1.msra.mxu0 0.0
  %5136 = vmatprep.subr.mxu0 0.0
  %5137 = vmatpush1.msra.mxu0 0.0
  %5138 = vmatprep.subr.mxu0 0.0
  %5139 = vmatpush1.msra.mxu0 0.0
  %5140 = vmatprep.subr.mxu0 0.0
  %5141 = vmatpush1.msra.mxu0 0.0
  %5142 = vmatprep.subr.mxu0 0.0
  %5143 = vmatpush1.msra.mxu0 0.0
  %5144 = vmatprep.subr.mxu0 0.0
  %5145 = vmatpush1.msra.mxu0 0.0
  %5146 = vmatprep.subr.mxu0 0.0
  %5147 = vmatpush1.msra.mxu0 0.0
  %5148 = vmatprep.subr.mxu0 0.0
  %5149 = vmatpush1.msra.mxu0 0.0
  %5150 = vmatprep.subr.mxu0 0.0
  %5151 = vmatpush1.msra.mxu0 0.0
  %5152 = vmatprep.subr.mxu0 0.0
  %5153 = vmatpush1.msra.mxu0 0.0
  %5154 = vmatprep.subr.mxu0 0.0
  %5155 = vmatpush1.msra.mxu0 0.0
  %5156 = vmatprep.subr.mxu0 0.0
  %5157 = vmatpush1.msra.mxu0 0.0
  %5158 = vmatprep.subr.mxu0 0.0
  %5159 = vmatpush1.msra.mxu0 0.0
  %5160 = vmatprep.subr.mxu0 0.0
  %5161 = vmatpush1.msra.mxu0 0.0
  %5162 = vmatprep.subr.mxu0 0.0
  %5163 = vmatpush1.msra.mxu0 0.0
  %5164 = vmatprep.subr.mxu0 0.0
  %5165 = vmatpush1.msra.mxu0 0.0
  %5166 = vmatprep.subr.mxu0 0.0
  %5167 = vmatpush1.msra.mxu0 0.0
  %5168 = vmatprep.subr.mxu0 0.0
  %5169 = vmatpush1.msra.mxu0 0.0
  %5170 = vmatprep.subr.mxu0 0.0
  %5171 = vmatpush1.msra.mxu0 0.0
  %5172 = vmatprep.subr.mxu0 0.0
  %5173 = vmatpush1.msra.mxu0 0.0
  %5174 = vmatprep.subr.mxu0 0.0
  %5175 = vmatpush1.msra.mxu0 0.0
  %5176 = vmatprep.subr.mxu0 0.0
  %5177 = vmatpush1.msra.mxu0 0.0
  %5178 = vmatprep.subr.mxu0 0.0
  %5179 = vmatpush1.msra.mxu0 0.0
  %5180 = vmatprep.subr.mxu0 0.0
  %5181 = vmatpush1.msra.mxu0 0.0
  %5182 = vmatprep.subr.mxu0 0.0
  %5183 = vmatpush1.msra.mxu0 0.0
  %5184 = vmatprep.subr.mxu0 0.0
  %5185 = vmatpush1.msra.mxu0 0.0
  %5186 = vmatprep.subr.mxu0 0.0
  %5187 = vmatpush1.msra.mxu0 0.0
  %5188 = vmatprep.subr.mxu0 0.0
  %5189 = vmatpush1.msra.mxu0 0.0
  %5190 = vmatprep.subr.mxu0 0.0
  %5191 = vmatpush1.msra.mxu0 0.0
  %5192 = vmatprep.mubr.f32.mxu0 0.0
  %5193 = vmatmul.mubr.f32.gmra.mrb[0].mxu0 %v5126
  %v5194 = vpop.f32.mrb[0].mxu0
  %v5195 = vadd.f32 0.0, %v5194
  %v5196 = vpop.f32.mrb[0].mxu0
  %5197 = vdwg.mxu0
  %v5199 = vsel %vm2307, %v5041, 0
  %5201 = vmatprep.subr.mxu0 0.0
  %5202 = vmatpush1.msra.mxu0 %v1650
  %5203 = vmatprep.subr.mxu0 0.0
  %5204 = vmatpush1.msra.mxu0 0.0
  %5205 = vmatprep.subr.mxu0 0.0
  %5206 = vmatpush1.msra.mxu0 0.0
  %5207 = vmatprep.subr.mxu0 0.0
  %5208 = vmatpush1.msra.mxu0 0.0
  %5209 = vmatprep.subr.mxu0 0.0
  %5210 = vmatpush1.msra.mxu0 0.0
  %5211 = vmatprep.subr.mxu0 0.0
  %5212 = vmatpush1.msra.mxu0 0.0
  %5213 = vmatprep.subr.mxu0 0.0
  %5214 = vmatpush1.msra.mxu0 0.0
  %5215 = vmatprep.subr.mxu0 0.0
  %5216 = vmatpush1.msra.mxu0 0.0
  %5217 = vmatprep.subr.mxu0 0.0
  %5218 = vmatpush1.msra.mxu0 0.0
  %5219 = vmatprep.subr.mxu0 0.0
  %5220 = vmatpush1.msra.mxu0 0.0
  %5221 = vmatprep.subr.mxu0 0.0
  %5222 = vmatpush1.msra.mxu0 0.0
  %5223 = vmatprep.subr.mxu0 0.0
  %5224 = vmatpush1.msra.mxu0 0.0
  %5225 = vmatprep.subr.mxu0 0.0
  %5226 = vmatpush1.msra.mxu0 0.0
  %5227 = vmatprep.subr.mxu0 0.0
  %5228 = vmatpush1.msra.mxu0 0.0
  %5229 = vmatprep.subr.mxu0 0.0
  %5230 = vmatpush1.msra.mxu0 0.0
  %5231 = vmatprep.subr.mxu0 0.0
  %5232 = vmatpush1.msra.mxu0 0.0
  %5233 = vmatprep.subr.mxu0 0.0
  %5234 = vmatpush1.msra.mxu0 0.0
  %5235 = vmatprep.subr.mxu0 0.0
  %5236 = vmatpush1.msra.mxu0 0.0
  %5237 = vmatprep.subr.mxu0 0.0
  %5238 = vmatpush1.msra.mxu0 0.0
  %5239 = vmatprep.subr.mxu0 0.0
  %5240 = vmatpush1.msra.mxu0 0.0
  %5241 = vmatprep.subr.mxu0 0.0
  %5242 = vmatpush1.msra.mxu0 0.0
  %5243 = vmatprep.subr.mxu0 0.0
  %5244 = vmatpush1.msra.mxu0 0.0
  %5245 = vmatprep.subr.mxu0 0.0
  %5246 = vmatpush1.msra.mxu0 0.0
  %5247 = vmatprep.subr.mxu0 0.0
  %5248 = vmatpush1.msra.mxu0 0.0
  %5249 = vmatprep.subr.mxu0 0.0
  %5250 = vmatpush1.msra.mxu0 0.0
  %5251 = vmatprep.subr.mxu0 0.0
  %5252 = vmatpush1.msra.mxu0 0.0
  %5253 = vmatprep.subr.mxu0 0.0
  %5254 = vmatpush1.msra.mxu0 0.0
  %5255 = vmatprep.subr.mxu0 0.0
  %5256 = vmatpush1.msra.mxu0 0.0
  %5257 = vmatprep.subr.mxu0 0.0
  %5258 = vmatpush1.msra.mxu0 0.0
  %5259 = vmatprep.subr.mxu0 0.0
  %5260 = vmatpush1.msra.mxu0 0.0
  %5261 = vmatprep.subr.mxu0 0.0
  %5262 = vmatpush1.msra.mxu0 0.0
  %5263 = vmatprep.subr.mxu0 0.0
  %5264 = vmatpush1.msra.mxu0 0.0
  %5265 = vmatprep.mubr.f32.mxu0 0.0
  %5266 = vmatmul.mubr.f32.gmra.mrb[0].mxu0 %v5199
  %v5267 = vpop.f32.mrb[0].mxu0
  %v5268 = vadd.f32 0.0, %v5267
  %v5269 = vpop.f32.mrb[0].mxu0
  %5270 = vdwg.mxu0
  %v5272 = vsel %vm2307, %v5043, 0
  %5274 = vmatprep.subr.mxu0 0.0
  %5275 = vmatpush1.msra.mxu0 %v1656
  %5276 = vmatprep.subr.mxu0 0.0
  %5277 = vmatpush1.msra.mxu0 0.0
  %5278 = vmatprep.subr.mxu0 0.0
  %5279 = vmatpush1.msra.mxu0 0.0
  %5280 = vmatprep.subr.mxu0 0.0
  %5281 = vmatpush1.msra.mxu0 0.0
  %5282 = vmatprep.subr.mxu0 0.0
  %5283 = vmatpush1.msra.mxu0 0.0
  %5284 = vmatprep.subr.mxu0 0.0
  %5285 = vmatpush1.msra.mxu0 0.0
  %5286 = vmatprep.subr.mxu0 0.0
  %5287 = vmatpush1.msra.mxu0 0.0
  %5288 = vmatprep.subr.mxu0 0.0
  %5289 = vmatpush1.msra.mxu0 0.0
  %5290 = vmatprep.subr.mxu0 0.0
  %5291 = vmatpush1.msra.mxu0 0.0
  %5292 = vmatprep.subr.mxu0 0.0
  %5293 = vmatpush1.msra.mxu0 0.0
  %5294 = vmatprep.subr.mxu0 0.0
  %5295 = vmatpush1.msra.mxu0 0.0
  %5296 = vmatprep.subr.mxu0 0.0
  %5297 = vmatpush1.msra.mxu0 0.0
  %5298 = vmatprep.subr.mxu0 0.0
  %5299 = vmatpush1.msra.mxu0 0.0
  %5300 = vmatprep.subr.mxu0 0.0
  %5301 = vmatpush1.msra.mxu0 0.0
  %5302 = vmatprep.subr.mxu0 0.0
  %5303 = vmatpush1.msra.mxu0 0.0
  %5304 = vmatprep.subr.mxu0 0.0
  %5305 = vmatpush1.msra.mxu0 0.0
  %5306 = vmatprep.subr.mxu0 0.0
  %5307 = vmatpush1.msra.mxu0 0.0
  %5308 = vmatprep.subr.mxu0 0.0
  %5309 = vmatpush1.msra.mxu0 0.0
  %5310 = vmatprep.subr.mxu0 0.0
  %5311 = vmatpush1.msra.mxu0 0.0
  %5312 = vmatprep.subr.mxu0 0.0
  %5313 = vmatpush1.msra.mxu0 0.0
  %5314 = vmatprep.subr.mxu0 0.0
  %5315 = vmatpush1.msra.mxu0 0.0
  %5316 = vmatprep.subr.mxu0 0.0
  %5317 = vmatpush1.msra.mxu0 0.0
  %5318 = vmatprep.subr.mxu0 0.0
  %5319 = vmatpush1.msra.mxu0 0.0
  %5320 = vmatprep.subr.mxu0 0.0
  %5321 = vmatpush1.msra.mxu0 0.0
  %5322 = vmatprep.subr.mxu0 0.0
  %5323 = vmatpush1.msra.mxu0 0.0
  %5324 = vmatprep.subr.mxu0 0.0
  %5325 = vmatpush1.msra.mxu0 0.0
  %5326 = vmatprep.subr.mxu0 0.0
  %5327 = vmatpush1.msra.mxu0 0.0
  %5328 = vmatprep.subr.mxu0 0.0
  %5329 = vmatpush1.msra.mxu0 0.0
  %5330 = vmatprep.subr.mxu0 0.0
  %5331 = vmatpush1.msra.mxu0 0.0
  %5332 = vmatprep.subr.mxu0 0.0
  %5333 = vmatpush1.msra.mxu0 0.0
  %5334 = vmatprep.subr.mxu0 0.0
  %5335 = vmatpush1.msra.mxu0 0.0
  %5336 = vmatprep.subr.mxu0 0.0
  %5337 = vmatpush1.msra.mxu0 0.0
  %5338 = vmatprep.mubr.f32.mxu0 0.0
  %5339 = vmatmul.mubr.f32.gmra.mrb[0].mxu0 %v5272
  %v5340 = vpop.f32.mrb[0].mxu0
  %v5341 = vadd.f32 0.0, %v5340
  %v5342 = vpop.f32.mrb[0].mxu0
  %5343 = vdwg.mxu0
  %v5345 = vsel %vm2307, %v5045, 0
  %5347 = vmatprep.subr.mxu0 0.0
  %5348 = vmatpush1.msra.mxu0 %v1662
  %5349 = vmatprep.subr.mxu0 0.0
  %5350 = vmatpush1.msra.mxu0 0.0
  %5351 = vmatprep.subr.mxu0 0.0
  %5352 = vmatpush1.msra.mxu0 0.0
  %5353 = vmatprep.subr.mxu0 0.0
  %5354 = vmatpush1.msra.mxu0 0.0
  %5355 = vmatprep.subr.mxu0 0.0
  %5356 = vmatpush1.msra.mxu0 0.0
  %5357 = vmatprep.subr.mxu0 0.0
  %5358 = vmatpush1.msra.mxu0 0.0
  %5359 = vmatprep.subr.mxu0 0.0
  %5360 = vmatpush1.msra.mxu0 0.0
  %5361 = vmatprep.subr.mxu0 0.0
  %5362 = vmatpush1.msra.mxu0 0.0
  %5363 = vmatprep.subr.mxu0 0.0
  %5364 = vmatpush1.msra.mxu0 0.0
  %5365 = vmatprep.subr.mxu0 0.0
  %5366 = vmatpush1.msra.mxu0 0.0
  %5367 = vmatprep.subr.mxu0 0.0
  %5368 = vmatpush1.msra.mxu0 0.0
  %5369 = vmatprep.subr.mxu0 0.0
  %5370 = vmatpush1.msra.mxu0 0.0
  %5371 = vmatprep.subr.mxu0 0.0
  %5372 = vmatpush1.msra.mxu0 0.0
  %5373 = vmatprep.subr.mxu0 0.0
  %5374 = vmatpush1.msra.mxu0 0.0
  %5375 = vmatprep.subr.mxu0 0.0
  %5376 = vmatpush1.msra.mxu0 0.0
  %5377 = vmatprep.subr.mxu0 0.0
  %5378 = vmatpush1.msra.mxu0 0.0
  %5379 = vmatprep.subr.mxu0 0.0
  %5380 = vmatpush1.msra.mxu0 0.0
  %5381 = vmatprep.subr.mxu0 0.0
  %5382 = vmatpush1.msra.mxu0 0.0
  %5383 = vmatprep.subr.mxu0 0.0
  %5384 = vmatpush1.msra.mxu0 0.0
  %5385 = vmatprep.subr.mxu0 0.0
  %5386 = vmatpush1.msra.mxu0 0.0
  %5387 = vmatprep.subr.mxu0 0.0
  %5388 = vmatpush1.msra.mxu0 0.0
  %5389 = vmatprep.subr.mxu0 0.0
  %5390 = vmatpush1.msra.mxu0 0.0
  %5391 = vmatprep.subr.mxu0 0.0
  %5392 = vmatpush1.msra.mxu0 0.0
  %5393 = vmatprep.subr.mxu0 0.0
  %5394 = vmatpush1.msra.mxu0 0.0
  %5395 = vmatprep.subr.mxu0 0.0
  %5396 = vmatpush1.msra.mxu0 0.0
  %5397 = vmatprep.subr.mxu0 0.0
  %5398 = vmatpush1.msra.mxu0 0.0
  %5399 = vmatprep.subr.mxu0 0.0
  %5400 = vmatpush1.msra.mxu0 0.0
  %5401 = vmatprep.subr.mxu0 0.0
  %5402 = vmatpush1.msra.mxu0 0.0
  %5403 = vmatprep.subr.mxu0 0.0
  %5404 = vmatpush1.msra.mxu0 0.0
  %5405 = vmatprep.subr.mxu0 0.0
  %5406 = vmatpush1.msra.mxu0 0.0
  %5407 = vmatprep.subr.mxu0 0.0
  %5408 = vmatpush1.msra.mxu0 0.0
  %5409 = vmatprep.subr.mxu0 0.0
  %5410 = vmatpush1.msra.mxu0 0.0
  %5411 = vmatprep.mubr.f32.mxu0 0.0
  %5412 = vmatmul.mubr.f32.gmra.mrb[0].mxu0 %v5345
  %v5413 = vpop.f32.mrb[0].mxu0
  %v5414 = vadd.f32 0.0, %v5413
  %v5415 = vpop.f32.mrb[0].mxu0
  %5416 = vdwg.mxu0
  %v5418 = vsel %vm2307, %v5047, 0
  %5420 = vmatprep.subr.mxu0 0.0
  %5421 = vmatpush1.msra.mxu0 %v1668
  %5422 = vmatprep.subr.mxu0 0.0
  %5423 = vmatpush1.msra.mxu0 0.0
  %5424 = vmatprep.subr.mxu0 0.0
  %5425 = vmatpush1.msra.mxu0 0.0
  %5426 = vmatprep.subr.mxu0 0.0
  %5427 = vmatpush1.msra.mxu0 0.0
  %5428 = vmatprep.subr.mxu0 0.0
  %5429 = vmatpush1.msra.mxu0 0.0
  %5430 = vmatprep.subr.mxu0 0.0
  %5431 = vmatpush1.msra.mxu0 0.0
  %5432 = vmatprep.subr.mxu0 0.0
  %5433 = vmatpush1.msra.mxu0 0.0
  %5434 = vmatprep.subr.mxu0 0.0
  %5435 = vmatpush1.msra.mxu0 0.0
  %5436 = vmatprep.subr.mxu0 0.0
  %5437 = vmatpush1.msra.mxu0 0.0
  %5438 = vmatprep.subr.mxu0 0.0
  %5439 = vmatpush1.msra.mxu0 0.0
  %5440 = vmatprep.subr.mxu0 0.0
  %5441 = vmatpush1.msra.mxu0 0.0
  %5442 = vmatprep.subr.mxu0 0.0
  %5443 = vmatpush1.msra.mxu0 0.0
  %5444 = vmatprep.subr.mxu0 0.0
  %5445 = vmatpush1.msra.mxu0 0.0
  %5446 = vmatprep.subr.mxu0 0.0
  %5447 = vmatpush1.msra.mxu0 0.0
  %5448 = vmatprep.subr.mxu0 0.0
  %5449 = vmatpush1.msra.mxu0 0.0
  %5450 = vmatprep.subr.mxu0 0.0
  %5451 = vmatpush1.msra.mxu0 0.0
  %5452 = vmatprep.subr.mxu0 0.0
  %5453 = vmatpush1.msra.mxu0 0.0
  %5454 = vmatprep.subr.mxu0 0.0
  %5455 = vmatpush1.msra.mxu0 0.0
  %5456 = vmatprep.subr.mxu0 0.0
  %5457 = vmatpush1.msra.mxu0 0.0
  %5458 = vmatprep.subr.mxu0 0.0
  %5459 = vmatpush1.msra.mxu0 0.0
  %5460 = vmatprep.subr.mxu0 0.0
  %5461 = vmatpush1.msra.mxu0 0.0
  %5462 = vmatprep.subr.mxu0 0.0
  %5463 = vmatpush1.msra.mxu0 0.0
  %5464 = vmatprep.subr.mxu0 0.0
  %5465 = vmatpush1.msra.mxu0 0.0
  %5466 = vmatprep.subr.mxu0 0.0
  %5467 = vmatpush1.msra.mxu0 0.0
  %5468 = vmatprep.subr.mxu0 0.0
  %5469 = vmatpush1.msra.mxu0 0.0
  %5470 = vmatprep.subr.mxu0 0.0
  %5471 = vmatpush1.msra.mxu0 0.0
  %5472 = vmatprep.subr.mxu0 0.0
  %5473 = vmatpush1.msra.mxu0 0.0
  %5474 = vmatprep.subr.mxu0 0.0
  %5475 = vmatpush1.msra.mxu0 0.0
  %5476 = vmatprep.subr.mxu0 0.0
  %5477 = vmatpush1.msra.mxu0 0.0
  %5478 = vmatprep.subr.mxu0 0.0
  %5479 = vmatpush1.msra.mxu0 0.0
  %5480 = vmatprep.subr.mxu0 0.0
  %5481 = vmatpush1.msra.mxu0 0.0
  %5482 = vmatprep.subr.mxu0 0.0
  %5483 = vmatpush1.msra.mxu0 0.0
  %5484 = vmatprep.mubr.f32.mxu0 0.0
  %5485 = vmatmul.mubr.f32.gmra.mrb[0].mxu0 %v5418
  %v5486 = vpop.f32.mrb[0].mxu0
  %v5487 = vadd.f32 0.0, %v5486
  %v5488 = vpop.f32.mrb[0].mxu0
  %5489 = vdwg.mxu0
  %v5491 = vsel %vm2307, %v5049, 0
  %5493 = vmatprep.subr.mxu0 0.0
  %5494 = vmatpush1.msra.mxu0 %v1674
  %5495 = vmatprep.subr.mxu0 0.0
  %5496 = vmatpush1.msra.mxu0 0.0
  %5497 = vmatprep.subr.mxu0 0.0
  %5498 = vmatpush1.msra.mxu0 0.0
  %5499 = vmatprep.subr.mxu0 0.0
  %5500 = vmatpush1.msra.mxu0 0.0
  %5501 = vmatprep.subr.mxu0 0.0
  %5502 = vmatpush1.msra.mxu0 0.0
  %5503 = vmatprep.subr.mxu0 0.0
  %5504 = vmatpush1.msra.mxu0 0.0
  %5505 = vmatprep.subr.mxu0 0.0
  %5506 = vmatpush1.msra.mxu0 0.0
  %5507 = vmatprep.subr.mxu0 0.0
  %5508 = vmatpush1.msra.mxu0 0.0
  %5509 = vmatprep.subr.mxu0 0.0
  %5510 = vmatpush1.msra.mxu0 0.0
  %5511 = vmatprep.subr.mxu0 0.0
  %5512 = vmatpush1.msra.mxu0 0.0
  %5513 = vmatprep.subr.mxu0 0.0
  %5514 = vmatpush1.msra.mxu0 0.0
  %5515 = vmatprep.subr.mxu0 0.0
  %5516 = vmatpush1.msra.mxu0 0.0
  %5517 = vmatprep.subr.mxu0 0.0
  %5518 = vmatpush1.msra.mxu0 0.0
  %5519 = vmatprep.subr.mxu0 0.0
  %5520 = vmatpush1.msra.mxu0 0.0
  %5521 = vmatprep.subr.mxu0 0.0
  %5522 = vmatpush1.msra.mxu0 0.0
  %5523 = vmatprep.subr.mxu0 0.0
  %5524 = vmatpush1.msra.mxu0 0.0
  %5525 = vmatprep.subr.mxu0 0.0
  %5526 = vmatpush1.msra.mxu0 0.0
  %5527 = vmatprep.subr.mxu0 0.0
  %5528 = vmatpush1.msra.mxu0 0.0
  %5529 = vmatprep.subr.mxu0 0.0
  %5530 = vmatpush1.msra.mxu0 0.0
  %5531 = vmatprep.subr.mxu0 0.0
  %5532 = vmatpush1.msra.mxu0 0.0
  %5533 = vmatprep.subr.mxu0 0.0
  %5534 = vmatpush1.msra.mxu0 0.0
  %5535 = vmatprep.subr.mxu0 0.0
  %5536 = vmatpush1.msra.mxu0 0.0
  %5537 = vmatprep.subr.mxu0 0.0
  %5538 = vmatpush1.msra.mxu0 0.0
  %5539 = vmatprep.subr.mxu0 0.0
  %5540 = vmatpush1.msra.mxu0 0.0
  %5541 = vmatprep.subr.mxu0 0.0
  %5542 = vmatpush1.msra.mxu0 0.0
  %5543 = vmatprep.subr.mxu0 0.0
  %5544 = vmatpush1.msra.mxu0 0.0
  %5545 = vmatprep.subr.mxu0 0.0
  %5546 = vmatpush1.msra.mxu0 0.0
  %5547 = vmatprep.subr.mxu0 0.0
  %5548 = vmatpush1.msra.mxu0 0.0
  %5549 = vmatprep.subr.mxu0 0.0
  %5550 = vmatpush1.msra.mxu0 0.0
  %5551 = vmatprep.subr.mxu0 0.0
  %5552 = vmatpush1.msra.mxu0 0.0
  %5553 = vmatprep.subr.mxu0 0.0
  %5554 = vmatpush1.msra.mxu0 0.0
  %5555 = vmatprep.subr.mxu0 0.0
  %5556 = vmatpush1.msra.mxu0 0.0
  %5557 = vmatprep.mubr.f32.mxu0 0.0
  %5558 = vmatmul.mubr.f32.gmra.mrb[0].mxu0 %v5491
  %v5559 = vpop.f32.mrb[0].mxu0
  %v5560 = vadd.f32 0.0, %v5559
  %v5561 = vpop.f32.mrb[0].mxu0
  %5562 = vdwg.mxu0
  %v5564 = vsel %vm2307, %v5051, 0
  %5566 = vmatprep.subr.mxu0 0.0
  %5567 = vmatpush1.msra.mxu0 %v1680
  %5568 = vmatprep.subr.mxu0 0.0
  %5569 = vmatpush1.msra.mxu0 0.0
  %5570 = vmatprep.subr.mxu0 0.0
  %5571 = vmatpush1.msra.mxu0 0.0
  %5572 = vmatprep.subr.mxu0 0.0
  %5573 = vmatpush1.msra.mxu0 0.0
  %5574 = vmatprep.subr.mxu0 0.0
  %5575 = vmatpush1.msra.mxu0 0.0
  %5576 = vmatprep.subr.mxu0 0.0
  %5577 = vmatpush1.msra.mxu0 0.0
  %5578 = vmatprep.subr.mxu0 0.0
  %5579 = vmatpush1.msra.mxu0 0.0
  %5580 = vmatprep.subr.mxu0 0.0
  %5581 = vmatpush1.msra.mxu0 0.0
  %5582 = vmatprep.subr.mxu0 0.0
  %5583 = vmatpush1.msra.mxu0 0.0
  %5584 = vmatprep.subr.mxu0 0.0
  %5585 = vmatpush1.msra.mxu0 0.0
  %5586 = vmatprep.subr.mxu0 0.0
  %5587 = vmatpush1.msra.mxu0 0.0
  %5588 = vmatprep.subr.mxu0 0.0
  %5589 = vmatpush1.msra.mxu0 0.0
  %5590 = vmatprep.subr.mxu0 0.0
  %5591 = vmatpush1.msra.mxu0 0.0
  %5592 = vmatprep.subr.mxu0 0.0
  %5593 = vmatpush1.msra.mxu0 0.0
  %5594 = vmatprep.subr.mxu0 0.0
  %5595 = vmatpush1.msra.mxu0 0.0
  %5596 = vmatprep.subr.mxu0 0.0
  %5597 = vmatpush1.msra.mxu0 0.0
  %5598 = vmatprep.subr.mxu0 0.0
  %5599 = vmatpush1.msra.mxu0 0.0
  %5600 = vmatprep.subr.mxu0 0.0
  %5601 = vmatpush1.msra.mxu0 0.0
  %5602 = vmatprep.subr.mxu0 0.0
  %5603 = vmatpush1.msra.mxu0 0.0
  %5604 = vmatprep.subr.mxu0 0.0
  %5605 = vmatpush1.msra.mxu0 0.0
  %5606 = vmatprep.subr.mxu0 0.0
  %5607 = vmatpush1.msra.mxu0 0.0
  %5608 = vmatprep.subr.mxu0 0.0
  %5609 = vmatpush1.msra.mxu0 0.0
  %5610 = vmatprep.subr.mxu0 0.0
  %5611 = vmatpush1.msra.mxu0 0.0
  %5612 = vmatprep.subr.mxu0 0.0
  %5613 = vmatpush1.msra.mxu0 0.0
  %5614 = vmatprep.subr.mxu0 0.0
  %5615 = vmatpush1.msra.mxu0 0.0
  %5616 = vmatprep.subr.mxu0 0.0
  %5617 = vmatpush1.msra.mxu0 0.0
  %5618 = vmatprep.subr.mxu0 0.0
  %5619 = vmatpush1.msra.mxu0 0.0
  %5620 = vmatprep.subr.mxu0 0.0
  %5621 = vmatpush1.msra.mxu0 0.0
  %5622 = vmatprep.subr.mxu0 0.0
  %5623 = vmatpush1.msra.mxu0 0.0
  %5624 = vmatprep.subr.mxu0 0.0
  %5625 = vmatpush1.msra.mxu0 0.0
  %5626 = vmatprep.subr.mxu0 0.0
  %5627 = vmatpush1.msra.mxu0 0.0
  %5628 = vmatprep.subr.mxu0 0.0
  %5629 = vmatpush1.msra.mxu0 0.0
  %5630 = vmatprep.mubr.f32.mxu0 0.0
  %5631 = vmatmul.mubr.f32.gmra.mrb[0].mxu0 %v5564
  %v5632 = vpop.f32.mrb[0].mxu0
  %v5633 = vadd.f32 0.0, %v5632
  %v5634 = vpop.f32.mrb[0].mxu0
  %5635 = vdwg.mxu0
  %5644 = vrot.lane.b32.xlu0 %v3797, 16
  %v5645 = vpop.permute.xlu0 %5644
  %5646 = vrot.lane.b32.xlu0 %v3873, 16
  %v5647 = vpop.permute.xlu0 %5646
  %5648 = vrot.lane.b32.xlu0 %v3949, 16
  %v5649 = vpop.permute.xlu0 %5648
  %5650 = vrot.lane.b32.xlu0 %v4025, 16
  %v5651 = vpop.permute.xlu0 %5650
  %5652 = vrot.lane.b32.xlu0 %v4101, 16
  %v5653 = vpop.permute.xlu0 %5652
  %5654 = vrot.lane.b32.xlu0 %v4177, 16
  %v5655 = vpop.permute.xlu0 %5654
  %5656 = vrot.lane.b32.xlu0 %v4253, 16
  %v5657 = vpop.permute.xlu0 %5656
  %5658 = vrot.lane.b32.xlu0 %v4329, 16
  %v5659 = vpop.permute.xlu0 %5658
  %5676 = vrot.lane.b32.xlu0 %v5122, 32
  %v5677 = vpop.permute.xlu0 %5676
  %5678 = vrot.lane.b32.xlu0 %v5195, 32
  %v5679 = vpop.permute.xlu0 %5678
  %5680 = vrot.lane.b32.xlu0 %v5268, 32
  %v5681 = vpop.permute.xlu0 %5680
  %5682 = vrot.lane.b32.xlu0 %v5341, 32
  %v5683 = vpop.permute.xlu0 %5682
  %5684 = vrot.lane.b32.xlu0 %v5414, 32
  %v5685 = vpop.permute.xlu0 %5684
  %5686 = vrot.lane.b32.xlu0 %v5487, 32
  %v5687 = vpop.permute.xlu0 %5686
  %5688 = vrot.lane.b32.xlu0 %v5560, 32
  %v5689 = vpop.permute.xlu0 %5688
  %5690 = vrot.lane.b32.xlu0 %v5633, 32
  %v5691 = vpop.permute.xlu0 %5690
  %v5700 = vsel %vm1685, %v2469, %v5645
  %v5701 = vsel %vm1685, %v2545, %v5647
  %v5702 = vsel %vm1685, %v2621, %v5649
  %v5703 = vsel %vm1685, %v2697, %v5651
  %v5704 = vsel %vm1685, %v2773, %v5653
  %v5705 = vsel %vm1685, %v2849, %v5655
  %v5706 = vsel %vm1685, %v2925, %v5657
  %v5707 = vsel %vm1685, %v3001, %v5659
  %v5708 = vsel %vm46, %v5700, %v5677
  %v5709 = vsel %vm46, %v5701, %v5679
  %v5710 = vsel %vm46, %v5702, %v5681
  %v5711 = vsel %vm46, %v5703, %v5683
  %v5712 = vsel %vm46, %v5704, %v5685
  %v5713 = vsel %vm46, %v5705, %v5687
  %v5714 = vsel %vm46, %v5706, %v5689
  %v5715 = vsel %vm46, %v5707, %v5691
  %v5716 = vld [vmem:[%s4] sm:$0xff]
  %v5717 = vld [vmem:[%s4 + $0x8] sm:$0xff]
  %v5718 = vld [vmem:[%s4 + $0x10] sm:$0xff]
  %v5719 = vld [vmem:[%s4 + $0x18] sm:$0xff]
  %v5720 = vld [vmem:[%s4 + $0x20] sm:$0xff]
  %v5721 = vld [vmem:[%s4 + $0x28] sm:$0xff]
  %vm5722 = vcmask 392192
  %v5724 = vsel %vm5722, %v5708, 0
  %v5727 = vsel %vm5722, %v5709, 0
  %v5730 = vsel %vm5722, %v5710, 0
  %v5733 = vsel %vm5722, %v5711, 0
  %v5736 = vsel %vm5722, %v5712, 0
  %v5739 = vsel %vm5722, %v5713, 0
  %v5742 = vsel %vm5722, %v5714, 0
  %v5745 = vsel %vm5722, %v5715, 0
  %5747 = vmatprep.subr.mxu0 0.0
  %5748 = vmatpush1.msra.mxu0 %v5716
  %5749 = vmatprep.subr.mxu0 0.0
  %5750 = vmatpush1.msra.mxu0 %v5717
  %5751 = vmatprep.subr.mxu0 0.0
  %5752 = vmatpush1.msra.mxu0 %v5718
  %5753 = vmatprep.subr.mxu0 0.0
  %5754 = vmatpush1.msra.mxu0 %v5719
  %5755 = vmatprep.subr.mxu0 0.0
  %5756 = vmatpush1.msra.mxu0 %v5720
  %5757 = vmatprep.subr.mxu0 0.0
  %5758 = vmatpush1.msra.mxu0 %v5721
  %5759 = vmatprep.subr.mxu0 0.0
  %5760 = vmatpush1.msra.mxu0 0.0
  %5761 = vmatprep.subr.mxu0 0.0
  %5762 = vmatpush1.msra.mxu0 0.0
  %5763 = vmatprep.subr.mxu0 0.0
  %5764 = vmatpush1.msra.mxu0 0.0
  %5765 = vmatprep.subr.mxu0 0.0
  %5766 = vmatpush1.msra.mxu0 0.0
  %5767 = vmatprep.subr.mxu0 0.0
  %5768 = vmatpush1.msra.mxu0 0.0
  %5769 = vmatprep.subr.mxu0 0.0
  %5770 = vmatpush1.msra.mxu0 0.0
  %5771 = vmatprep.subr.mxu0 0.0
  %5772 = vmatpush1.msra.mxu0 0.0
  %5773 = vmatprep.subr.mxu0 0.0
  %5774 = vmatpush1.msra.mxu0 0.0
  %5775 = vmatprep.subr.mxu0 0.0
  %5776 = vmatpush1.msra.mxu0 0.0
  %5777 = vmatprep.subr.mxu0 0.0
  %5778 = vmatpush1.msra.mxu0 0.0
  %5779 = vmatprep.subr.mxu0 0.0
  %5780 = vmatpush1.msra.mxu0 0.0
  %5781 = vmatprep.subr.mxu0 0.0
  %5782 = vmatpush1.msra.mxu0 0.0
  %5783 = vmatprep.subr.mxu0 0.0
  %5784 = vmatpush1.msra.mxu0 0.0
  %5785 = vmatprep.subr.mxu0 0.0
  %5786 = vmatpush1.msra.mxu0 0.0
  %5787 = vmatprep.subr.mxu0 0.0
  %5788 = vmatpush1.msra.mxu0 0.0
  %5789 = vmatprep.subr.mxu0 0.0
  %5790 = vmatpush1.msra.mxu0 0.0
  %5791 = vmatprep.subr.mxu0 0.0
  %5792 = vmatpush1.msra.mxu0 0.0
  %5793 = vmatprep.subr.mxu0 0.0
  %5794 = vmatpush1.msra.mxu0 0.0
  %5795 = vmatprep.subr.mxu0 0.0
  %5796 = vmatpush1.msra.mxu0 0.0
  %5797 = vmatprep.subr.mxu0 0.0
  %5798 = vmatpush1.msra.mxu0 0.0
  %5799 = vmatprep.subr.mxu0 0.0
  %5800 = vmatpush1.msra.mxu0 0.0
  %5801 = vmatprep.subr.mxu0 0.0
  %5802 = vmatpush1.msra.mxu0 0.0
  %5803 = vmatprep.subr.mxu0 0.0
  %5804 = vmatpush1.msra.mxu0 0.0
  %5805 = vmatprep.subr.mxu0 0.0
  %5806 = vmatpush1.msra.mxu0 0.0
  %5807 = vmatprep.subr.mxu0 0.0
  %5808 = vmatpush1.msra.mxu0 0.0
  %5809 = vmatprep.subr.mxu0 0.0
  %5810 = vmatpush1.msra.mxu0 0.0
  %5811 = vmatprep.mubr.f32.mxu0 0.0
  %5812 = vmatmul.mubr.f32.gmra.mrb[0].mxu0 %v5724
  %v5813 = vpop.f32.mrb[0].mxu0
  %v5814 = vadd.f32 0.0, %v5813
  %v5815 = vpop.f32.mrb[0].mxu0
  %5816 = vmatprep.mubr.f32.mxu0 0.0
  %5817 = vmatmul.mubr.f32.gmra.mrb[0].mxu0 %v5727
  %v5818 = vpop.f32.mrb[0].mxu0
  %v5819 = vadd.f32 0.0, %v5818
  %v5820 = vpop.f32.mrb[0].mxu0
  %5821 = vmatprep.mubr.f32.mxu0 0.0
  %5822 = vmatmul.mubr.f32.gmra.mrb[0].mxu0 %v5730
  %v5823 = vpop.f32.mrb[0].mxu0
  %v5824 = vadd.f32 0.0, %v5823
  %v5825 = vpop.f32.mrb[0].mxu0
  %5826 = vmatprep.mubr.f32.mxu0 0.0
  %5827 = vmatmul.mubr.f32.gmra.mrb[0].mxu0 %v5733
  %v5828 = vpop.f32.mrb[0].mxu0
  %v5829 = vadd.f32 0.0, %v5828
  %v5830 = vpop.f32.mrb[0].mxu0
  %5831 = vmatprep.mubr.f32.mxu0 0.0
  %5832 = vmatmul.mubr.f32.gmra.mrb[0].mxu0 %v5736
  %v5833 = vpop.f32.mrb[0].mxu0
  %v5834 = vadd.f32 0.0, %v5833
  %v5835 = vpop.f32.mrb[0].mxu0
  %5836 = vmatprep.mubr.f32.mxu0 0.0
  %5837 = vmatmul.mubr.f32.gmra.mrb[0].mxu0 %v5739
  %v5838 = vpop.f32.mrb[0].mxu0
  %v5839 = vadd.f32 0.0, %v5838
  %v5840 = vpop.f32.mrb[0].mxu0
  %5841 = vmatprep.mubr.f32.mxu0 0.0
  %5842 = vmatmul.mubr.f32.gmra.mrb[0].mxu0 %v5742
  %v5843 = vpop.f32.mrb[0].mxu0
  %v5844 = vadd.f32 0.0, %v5843
  %v5845 = vpop.f32.mrb[0].mxu0
  %5846 = vmatprep.mubr.f32.mxu0 0.0
  %5847 = vmatmul.mubr.f32.gmra.mrb[0].mxu0 %v5745
  %v5848 = vpop.f32.mrb[0].mxu0
  %v5849 = vadd.f32 0.0, %v5848
  %v5850 = vpop.f32.mrb[0].mxu0
  %5851 = vdwg.mxu0
  %v5852 = vadd.f32 %v1529, %v5814
  %v5853 = vadd.f32 %v1530, %v5819
  %v5854 = vadd.f32 %v1531, %v5824
  %v5855 = vadd.f32 %v1532, %v5829
  %v5856 = vadd.f32 %v1533, %v5834
  %v5857 = vadd.f32 %v1534, %v5839
  %v5858 = vadd.f32 %v1535, %v5844
  %v5859 = vadd.f32 %v1536, %v5849
  %v5860 = vlaneseq
  %v5861 = vshrl.u32 %v5860, 7
  %v5862 = vsub.s32 1, %v5861
  %v5863 = vrot.slane %v29, %v5862
  %v5864 = vadd.f32 %v5852, %v5863
  %v5865 = vadd.f32 %v5853, %v5863
  %v5866 = vadd.f32 %v5854, %v5863
  %v5867 = vadd.f32 %v5855, %v5863
  %v5868 = vadd.f32 %v5856, %v5863
  %v5869 = vadd.f32 %v5857, %v5863
  %v5870 = vadd.f32 %v5858, %v5863
  %v5871 = vadd.f32 %v5859, %v5863
  %v5872 = vsel %vm46, %v5864, 0.0
  %5873 = vadd.xlane.f32.xlu0 %v5872
  %v5874 = vpop.xlane.xlu0 %5873
  %v5875 = vsel %vm46, %v5865, 0.0
  %5876 = vadd.xlane.f32.xlu0 %v5875
  %v5877 = vpop.xlane.xlu0 %5876
  %v5878 = vsel %vm46, %v5866, 0.0
  %5879 = vadd.xlane.f32.xlu0 %v5878
  %v5880 = vpop.xlane.xlu0 %5879
  %v5881 = vsel %vm46, %v5867, 0.0
  %5882 = vadd.xlane.f32.xlu0 %v5881
  %v5883 = vpop.xlane.xlu0 %5882
  %v5884 = vsel %vm46, %v5868, 0.0
  %5885 = vadd.xlane.f32.xlu0 %v5884
  %v5886 = vpop.xlane.xlu0 %5885
  %v5887 = vsel %vm46, %v5869, 0.0
  %5888 = vadd.xlane.f32.xlu0 %v5887
  %v5889 = vpop.xlane.xlu0 %5888
  %v5890 = vsel %vm46, %v5870, 0.0
  %5891 = vadd.xlane.f32.xlu0 %v5890
  %v5892 = vpop.xlane.xlu0 %5891
  %v5893 = vsel %vm46, %v5871, 0.0
  %5894 = vadd.xlane.f32.xlu0 %v5893
  %v5895 = vpop.xlane.xlu0 %5894
  %v5896 = vrcp.pop 32.0
  %v5897 = vmul.f32 %v5874, %v5896
  %v5898 = vmul.f32 %v5877, %v5896
  %v5899 = vmul.f32 %v5880, %v5896
  %v5900 = vmul.f32 %v5883, %v5896
  %v5901 = vmul.f32 %v5886, %v5896
  %v5902 = vmul.f32 %v5889, %v5896
  %v5903 = vmul.f32 %v5892, %v5896
  %v5904 = vmul.f32 %v5895, %v5896
  %v5905 = vsub.f32 %v5864, %v5897
  %v5906 = vsub.f32 %v5865, %v5898
  %v5907 = vsub.f32 %v5866, %v5899
  %v5908 = vsub.f32 %v5867, %v5900
  %v5909 = vsub.f32 %v5868, %v5901
  %v5910 = vsub.f32 %v5869, %v5902
  %v5911 = vsub.f32 %v5870, %v5903
  %v5912 = vsub.f32 %v5871, %v5904
  %v5913 = vmul.f32 %v5905, %v5905
  %v5914 = vmul.f32 %v5906, %v5906
  %v5915 = vmul.f32 %v5907, %v5907
  %v5916 = vmul.f32 %v5908, %v5908
  %v5917 = vmul.f32 %v5909, %v5909
  %v5918 = vmul.f32 %v5910, %v5910
  %v5919 = vmul.f32 %v5911, %v5911
  %v5920 = vmul.f32 %v5912, %v5912
  %v5921 = vsel %vm46, %v5913, 0.0
  %5922 = vadd.xlane.f32.xlu0 %v5921
  %v5923 = vpop.xlane.xlu0 %5922
  %v5924 = vsel %vm46, %v5914, 0.0
  %5925 = vadd.xlane.f32.xlu0 %v5924
  %v5926 = vpop.xlane.xlu0 %5925
  %v5927 = vsel %vm46, %v5915, 0.0
  %5928 = vadd.xlane.f32.xlu0 %v5927
  %v5929 = vpop.xlane.xlu0 %5928
  %v5930 = vsel %vm46, %v5916, 0.0
  %5931 = vadd.xlane.f32.xlu0 %v5930
  %v5932 = vpop.xlane.xlu0 %5931
  %v5933 = vsel %vm46, %v5917, 0.0
  %5934 = vadd.xlane.f32.xlu0 %v5933
  %v5935 = vpop.xlane.xlu0 %5934
  %v5936 = vsel %vm46, %v5918, 0.0
  %5937 = vadd.xlane.f32.xlu0 %v5936
  %v5938 = vpop.xlane.xlu0 %5937
  %v5939 = vsel %vm46, %v5919, 0.0
  %5940 = vadd.xlane.f32.xlu0 %v5939
  %v5941 = vpop.xlane.xlu0 %5940
  %v5942 = vsel %vm46, %v5920, 0.0
  %5943 = vadd.xlane.f32.xlu0 %v5942
  %v5944 = vpop.xlane.xlu0 %5943
  %v5945 = vmul.f32 %v5923, 0.032258064
  %v5946 = vmul.f32 %v5926, 0.032258064
  %v5947 = vmul.f32 %v5929, 0.032258064
  %v5948 = vmul.f32 %v5932, 0.032258064
  %v5949 = vmul.f32 %v5935, 0.032258064
  %v5950 = vmul.f32 %v5938, 0.032258064
  %v5951 = vmul.f32 %v5941, 0.032258064
  %v5952 = vmul.f32 %v5944, 0.032258064
  %v5953 = vrsqrt.pop %v5945
  %v5954 = vmul.f32 %v5945, %v5953
  %vm5955 = vcmp.eq.f32.partialorder %v5945, inf
  %v5956 = vsel %vm5955, %v5945, %v5954
  %vm5957 = vcmp.eq.f32.partialorder %v5945, 0.0
  %v5958 = vand.u32 %v5945, 2147483648
  %v5959 = vsel %vm5957, %v5958, %v5956
  %v5960 = vrsqrt.pop %v5946
  %v5961 = vmul.f32 %v5946, %v5960
  %vm5962 = vcmp.eq.f32.partialorder %v5946, inf
  %v5963 = vsel %vm5962, %v5946, %v5961
  %vm5964 = vcmp.eq.f32.partialorder %v5946, 0.0
  %v5965 = vand.u32 %v5946, 2147483648
  %v5966 = vsel %vm5964, %v5965, %v5963
  %v5967 = vrsqrt.pop %v5947
  %v5968 = vmul.f32 %v5947, %v5967
  %vm5969 = vcmp.eq.f32.partialorder %v5947, inf
  %v5970 = vsel %vm5969, %v5947, %v5968
  %vm5971 = vcmp.eq.f32.partialorder %v5947, 0.0
  %v5972 = vand.u32 %v5947, 2147483648
  %v5973 = vsel %vm5971, %v5972, %v5970
  %v5974 = vrsqrt.pop %v5948
  %v5975 = vmul.f32 %v5948, %v5974
  %vm5976 = vcmp.eq.f32.partialorder %v5948, inf
  %v5977 = vsel %vm5976, %v5948, %v5975
  %vm5978 = vcmp.eq.f32.partialorder %v5948, 0.0
  %v5979 = vand.u32 %v5948, 2147483648
  %v5980 = vsel %vm5978, %v5979, %v5977
  %v5981 = vrsqrt.pop %v5949
  %v5982 = vmul.f32 %v5949, %v5981
  %vm5983 = vcmp.eq.f32.partialorder %v5949, inf
  %v5984 = vsel %vm5983, %v5949, %v5982
  %vm5985 = vcmp.eq.f32.partialorder %v5949, 0.0
  %v5986 = vand.u32 %v5949, 2147483648
  %v5987 = vsel %vm5985, %v5986, %v5984
  %v5988 = vrsqrt.pop %v5950
  %v5989 = vmul.f32 %v5950, %v5988
  %vm5990 = vcmp.eq.f32.partialorder %v5950, inf
  %v5991 = vsel %vm5990, %v5950, %v5989
  %vm5992 = vcmp.eq.f32.partialorder %v5950, 0.0
  %v5993 = vand.u32 %v5950, 2147483648
  %v5994 = vsel %vm5992, %v5993, %v5991
  %v5995 = vrsqrt.pop %v5951
  %v5996 = vmul.f32 %v5951, %v5995
  %vm5997 = vcmp.eq.f32.partialorder %v5951, inf
  %v5998 = vsel %vm5997, %v5951, %v5996
  %vm5999 = vcmp.eq.f32.partialorder %v5951, 0.0
  %v6000 = vand.u32 %v5951, 2147483648
  %v6001 = vsel %vm5999, %v6000, %v5998
  %v6002 = vrsqrt.pop %v5952
  %v6003 = vmul.f32 %v5952, %v6002
  %vm6004 = vcmp.eq.f32.partialorder %v5952, inf
  %v6005 = vsel %vm6004, %v5952, %v6003
  %vm6006 = vcmp.eq.f32.partialorder %v5952, 0.0
  %v6007 = vand.u32 %v5952, 2147483648
  %v6008 = vsel %vm6006, %v6007, %v6005
  %v6009 = vadd.f32 %v5959, 0.001
  %v6010 = vadd.f32 %v5966, 0.001
  %v6011 = vadd.f32 %v5973, 0.001
  %v6012 = vadd.f32 %v5980, 0.001
  %v6013 = vadd.f32 %v5987, 0.001
  %v6014 = vadd.f32 %v5994, 0.001
  %v6015 = vadd.f32 %v6001, 0.001
  %v6016 = vadd.f32 %v6008, 0.001
  %v6017 = vrcp.pop %v6009
  %v6018 = vmul.f32 %v5905, %v6017
  %v6019 = vrcp.pop %v6010
  %v6020 = vmul.f32 %v5906, %v6019
  %v6021 = vrcp.pop %v6011
  %v6022 = vmul.f32 %v5907, %v6021
  %v6023 = vrcp.pop %v6012
  %v6024 = vmul.f32 %v5908, %v6023
  %v6025 = vrcp.pop %v6013
  %v6026 = vmul.f32 %v5909, %v6025
  %v6027 = vrcp.pop %v6014
  %v6028 = vmul.f32 %v5910, %v6027
  %v6029 = vrcp.pop %v6015
  %v6030 = vmul.f32 %v5911, %v6029
  %v6031 = vrcp.pop %v6016
  %v6032 = vmul.f32 %v5912, %v6031
  %v6033 = vlaneseq
  %v6034 = vshrl.u32 %v6033, 7
  %v6035 = vsub.s32 2, %v6034
  %v6036 = vrot.slane %v29, %v6035
  %v6037 = vmul.f32 %v6036, %v6018
  %v6038 = vmul.f32 %v6036, %v6020
  %v6039 = vmul.f32 %v6036, %v6022
  %v6040 = vmul.f32 %v6036, %v6024
  %v6041 = vmul.f32 %v6036, %v6026
  %v6042 = vmul.f32 %v6036, %v6028
  %v6043 = vmul.f32 %v6036, %v6030
  %v6044 = vmul.f32 %v6036, %v6032
  %v6045 = vlaneseq
  %v6046 = vshrl.u32 %v6045, 7
  %v6047 = vsub.s32 3, %v6046
  %v6048 = vrot.slane %v29, %v6047
  %v6049 = vadd.f32 %v6037, %v6048
  %v6050 = vadd.f32 %v6038, %v6048
  %v6051 = vadd.f32 %v6039, %v6048
  %v6052 = vadd.f32 %v6040, %v6048
  %v6053 = vadd.f32 %v6041, %v6048
  %v6054 = vadd.f32 %v6042, %v6048
  %v6055 = vadd.f32 %v6043, %v6048
  %v6056 = vadd.f32 %v6044, %v6048
  %6057 = vst.msk [vmem:[#allocation2] sm:$0xff] %vm46, %v6049
  %6058 = vst.msk [vmem:[#allocation2 + $0x8] sm:$0xff] %vm46, %v6050
  %6059 = vst.msk [vmem:[#allocation2 + $0x10] sm:$0xff] %vm46, %v6051
  %6060 = vst.msk [vmem:[#allocation2 + $0x18] sm:$0xff] %vm46, %v6052
  %6061 = vst.msk [vmem:[#allocation2 + $0x20] sm:$0xff] %vm46, %v6053
  %6062 = vst.msk [vmem:[#allocation2 + $0x28] sm:$0xff] %vm46, %v6054
  %6063 = vst.msk [vmem:[#allocation2 + $0x30] sm:$0xff] %vm46, %v6055
  %6064 = vst.msk [vmem:[#allocation2 + $0x38] sm:$0xff] %vm46, %v6056
  %v6065 = vld [vmem:[#allocation2] sm:$0x1]
  %v6066 = vld [vmem:[#allocation2 + $0x8] sm:$0x1]
  %v6067 = vld [vmem:[#allocation2 + $0x10] sm:$0x1]
  %v6068 = vld [vmem:[#allocation2 + $0x18] sm:$0x1]
  %v6069 = vld [vmem:[#allocation2 + $0x20] sm:$0x1]
  %v6070 = vld [vmem:[#allocation2 + $0x28] sm:$0x1]
  %v6071 = vld [vmem:[#allocation2 + $0x30] sm:$0x1]
  %v6072 = vld [vmem:[#allocation2 + $0x38] sm:$0x1]
  %v6073 = vld [vmem:[%s5] sm:$0xff]
  %v6074 = vld [vmem:[%s5 + $0x8] sm:$0xff]
  %v6075 = vld [vmem:[%s5 + $0x10] sm:$0xff]
  %v6076 = vld [vmem:[%s5 + $0x18] sm:$0xff]
  %v6077 = vld [vmem:[#allocation2 + $0x1] sm:$0x1]
  %v6078 = vld [vmem:[#allocation2 + $0x9] sm:$0x1]
  %v6079 = vld [vmem:[#allocation2 + $0x11] sm:$0x1]
  %v6080 = vld [vmem:[#allocation2 + $0x19] sm:$0x1]
  %v6081 = vld [vmem:[#allocation2 + $0x21] sm:$0x1]
  %v6082 = vld [vmem:[#allocation2 + $0x29] sm:$0x1]
  %v6083 = vld [vmem:[#allocation2 + $0x31] sm:$0x1]
  %v6084 = vld [vmem:[#allocation2 + $0x39] sm:$0x1]
  %s6085 = scalar_lea.vmem %s5, 32
  %v6086 = vld [vmem:[%s6085] sm:$0xff]
  %v6087 = vld [vmem:[%s6085 + $0x8] sm:$0xff]
  %v6088 = vld [vmem:[%s6085 + $0x10] sm:$0xff]
  %v6089 = vld [vmem:[%s6085 + $0x18] sm:$0xff]
  %v6098 = vrot.slane %v6078, 7
  %vm6099 = vcmask 1041409
  %v6100 = vsel %vm6099, %v6098, %v6077
  %v6101 = vrot.slane %v6079, 6
  %vm6102 = vcmask 1042434
  %v6103 = vsel %vm6102, %v6101, %v6100
  %v6104 = vrot.slane %v6080, 5
  %vm6105 = vcmask 1043459
  %v6106 = vsel %vm6105, %v6104, %v6103
  %v6107 = vrot.slane %v6081, 4
  %vm6108 = vcmask 1044484
  %v6109 = vsel %vm6108, %v6107, %v6106
  %v6110 = vrot.slane %v6082, 3
  %vm6111 = vcmask 1045509
  %v6112 = vsel %vm6111, %v6110, %v6109
  %v6113 = vrot.slane %v6083, 2
  %vm6114 = vcmask 1046534
  %v6115 = vsel %vm6114, %v6113, %v6112
  %v6116 = vrot.slane %v6084, 1
  %vm6117 = vcmask 1047559
  %v6118 = vsel %vm6117, %v6116, %v6115
  %v6119 = vsel %vm46, %v6118, 0
  %6121 = vmatprep.subr.mxu0 0.0
  %6122 = vmatpush1.msra.mxu0 %v6086
  %6123 = vmatprep.subr.mxu0 0.0
  %6124 = vmatpush1.msra.mxu0 %v6087
  %6125 = vmatprep.subr.mxu0 0.0
  %6126 = vmatpush1.msra.mxu0 %v6088
  %6127 = vmatprep.subr.mxu0 0.0
  %6128 = vmatpush1.msra.mxu0 %v6089
  %6129 = vmatprep.subr.mxu0 0.0
  %6130 = vmatpush1.msra.mxu0 0.0
  %6131 = vmatprep.subr.mxu0 0.0
  %6132 = vmatpush1.msra.mxu0 0.0
  %6133 = vmatprep.subr.mxu0 0.0
  %6134 = vmatpush1.msra.mxu0 0.0
  %6135 = vmatprep.subr.mxu0 0.0
  %6136 = vmatpush1.msra.mxu0 0.0
  %6137 = vmatprep.subr.mxu0 0.0
  %6138 = vmatpush1.msra.mxu0 0.0
  %6139 = vmatprep.subr.mxu0 0.0
  %6140 = vmatpush1.msra.mxu0 0.0
  %6141 = vmatprep.subr.mxu0 0.0
  %6142 = vmatpush1.msra.mxu0 0.0
  %6143 = vmatprep.subr.mxu0 0.0
  %6144 = vmatpush1.msra.mxu0 0.0
  %6145 = vmatprep.subr.mxu0 0.0
  %6146 = vmatpush1.msra.mxu0 0.0
  %6147 = vmatprep.subr.mxu0 0.0
  %6148 = vmatpush1.msra.mxu0 0.0
  %6149 = vmatprep.subr.mxu0 0.0
  %6150 = vmatpush1.msra.mxu0 0.0
  %6151 = vmatprep.subr.mxu0 0.0
  %6152 = vmatpush1.msra.mxu0 0.0
  %6153 = vmatprep.subr.mxu0 0.0
  %6154 = vmatpush1.msra.mxu0 0.0
  %6155 = vmatprep.subr.mxu0 0.0
  %6156 = vmatpush1.msra.mxu0 0.0
  %6157 = vmatprep.subr.mxu0 0.0
  %6158 = vmatpush1.msra.mxu0 0.0
  %6159 = vmatprep.subr.mxu0 0.0
  %6160 = vmatpush1.msra.mxu0 0.0
  %6161 = vmatprep.subr.mxu0 0.0
  %6162 = vmatpush1.msra.mxu0 0.0
  %6163 = vmatprep.subr.mxu0 0.0
  %6164 = vmatpush1.msra.mxu0 0.0
  %6165 = vmatprep.subr.mxu0 0.0
  %6166 = vmatpush1.msra.mxu0 0.0
  %6167 = vmatprep.subr.mxu0 0.0
  %6168 = vmatpush1.msra.mxu0 0.0
  %6169 = vmatprep.subr.mxu0 0.0
  %6170 = vmatpush1.msra.mxu0 0.0
  %6171 = vmatprep.subr.mxu0 0.0
  %6172 = vmatpush1.msra.mxu0 0.0
  %6173 = vmatprep.subr.mxu0 0.0
  %6174 = vmatpush1.msra.mxu0 0.0
  %6175 = vmatprep.subr.mxu0 0.0
  %6176 = vmatpush1.msra.mxu0 0.0
  %6177 = vmatprep.subr.mxu0 0.0
  %6178 = vmatpush1.msra.mxu0 0.0
  %6179 = vmatprep.subr.mxu0 0.0
  %6180 = vmatpush1.msra.mxu0 0.0
  %6181 = vmatprep.subr.mxu0 0.0
  %6182 = vmatpush1.msra.mxu0 0.0
  %6183 = vmatprep.subr.mxu0 0.0
  %6184 = vmatpush1.msra.mxu0 0.0
  %6185 = vmatprep.mubr.f32.mxu0 0.0
  %6186 = vmatmul.mubr.f32.gmra.mrb[0].mxu0 %v6119
  %v6187 = vpop.f32.mrb[0].mxu0
  %v6188 = vadd.f32 0.0, %v6187
  %v6189 = vpop.f32.mrb[0].mxu0
  %6190 = vdwg.mxu0
  %v6199 = vrot.slane %v6066, 7
  %v6200 = vsel %vm6099, %v6199, %v6065
  %v6201 = vrot.slane %v6067, 6
  %v6202 = vsel %vm6102, %v6201, %v6200
  %v6203 = vrot.slane %v6068, 5
  %v6204 = vsel %vm6105, %v6203, %v6202
  %v6205 = vrot.slane %v6069, 4
  %v6206 = vsel %vm6108, %v6205, %v6204
  %v6207 = vrot.slane %v6070, 3
  %v6208 = vsel %vm6111, %v6207, %v6206
  %v6209 = vrot.slane %v6071, 2
  %v6210 = vsel %vm6114, %v6209, %v6208
  %v6211 = vrot.slane %v6072, 1
  %v6212 = vsel %vm6117, %v6211, %v6210
  %v6213 = vsel %vm46, %v6212, 0
  %6215 = vmatprep.subr.mxu0 0.0
  %6216 = vmatpush1.msra.mxu0 %v6073
  %6217 = vmatprep.subr.mxu0 0.0
  %6218 = vmatpush1.msra.mxu0 %v6074
  %6219 = vmatprep.subr.mxu0 0.0
  %6220 = vmatpush1.msra.mxu0 %v6075
  %6221 = vmatprep.subr.mxu0 0.0
  %6222 = vmatpush1.msra.mxu0 %v6076
  %6223 = vmatprep.subr.mxu0 0.0
  %6224 = vmatpush1.msra.mxu0 0.0
  %6225 = vmatprep.subr.mxu0 0.0
  %6226 = vmatpush1.msra.mxu0 0.0
  %6227 = vmatprep.subr.mxu0 0.0
  %6228 = vmatpush1.msra.mxu0 0.0
  %6229 = vmatprep.subr.mxu0 0.0
  %6230 = vmatpush1.msra.mxu0 0.0
  %6231 = vmatprep.subr.mxu0 0.0
  %6232 = vmatpush1.msra.mxu0 0.0
  %6233 = vmatprep.subr.mxu0 0.0
  %6234 = vmatpush1.msra.mxu0 0.0
  %6235 = vmatprep.subr.mxu0 0.0
  %6236 = vmatpush1.msra.mxu0 0.0
  %6237 = vmatprep.subr.mxu0 0.0
  %6238 = vmatpush1.msra.mxu0 0.0
  %6239 = vmatprep.subr.mxu0 0.0
  %6240 = vmatpush1.msra.mxu0 0.0
  %6241 = vmatprep.subr.mxu0 0.0
  %6242 = vmatpush1.msra.mxu0 0.0
  %6243 = vmatprep.subr.mxu0 0.0
  %6244 = vmatpush1.msra.mxu0 0.0
  %6245 = vmatprep.subr.mxu0 0.0
  %6246 = vmatpush1.msra.mxu0 0.0
  %6247 = vmatprep.subr.mxu0 0.0
  %6248 = vmatpush1.msra.mxu0 0.0
  %6249 = vmatprep.subr.mxu0 0.0
  %6250 = vmatpush1.msra.mxu0 0.0
  %6251 = vmatprep.subr.mxu0 0.0
  %6252 = vmatpush1.msra.mxu0 0.0
  %6253 = vmatprep.subr.mxu0 0.0
  %6254 = vmatpush1.msra.mxu0 0.0
  %6255 = vmatprep.subr.mxu0 0.0
  %6256 = vmatpush1.msra.mxu0 0.0
  %6257 = vmatprep.subr.mxu0 0.0
  %6258 = vmatpush1.msra.mxu0 0.0
  %6259 = vmatprep.subr.mxu0 0.0
  %6260 = vmatpush1.msra.mxu0 0.0
  %6261 = vmatprep.subr.mxu0 0.0
  %6262 = vmatpush1.msra.mxu0 0.0
  %6263 = vmatprep.subr.mxu0 0.0
  %6264 = vmatpush1.msra.mxu0 0.0
  %6265 = vmatprep.subr.mxu0 0.0
  %6266 = vmatpush1.msra.mxu0 0.0
  %6267 = vmatprep.subr.mxu0 0.0
  %6268 = vmatpush1.msra.mxu0 0.0
  %6269 = vmatprep.subr.mxu0 0.0
  %6270 = vmatpush1.msra.mxu0 0.0
  %6271 = vmatprep.subr.mxu0 0.0
  %6272 = vmatpush1.msra.mxu0 0.0
  %6273 = vmatprep.subr.mxu0 0.0
  %6274 = vmatpush1.msra.mxu0 0.0
  %6275 = vmatprep.subr.mxu0 0.0
  %6276 = vmatpush1.msra.mxu0 0.0
  %6277 = vmatprep.subr.mxu0 0.0
  %6278 = vmatpush1.msra.mxu0 0.0
  %6279 = vmatprep.mubr.f32.mxu0 0.0
  %6280 = vmatmul.mubr.f32.gmra.mrb[0].mxu0 %v6213
  %v6281 = vpop.f32.mrb[0].mxu0
  %v6282 = vadd.f32 %v6188, %v6281
  %v6283 = vpop.f32.mrb[0].mxu0
  %6284 = vdwg.mxu0
  %v6285 = vld [vmem:[#allocation2 + $0x2] sm:$0x1]
  %v6286 = vld [vmem:[#allocation2 + $0xa] sm:$0x1]
  %v6287 = vld [vmem:[#allocation2 + $0x12] sm:$0x1]
  %v6288 = vld [vmem:[#allocation2 + $0x1a] sm:$0x1]
  %v6289 = vld [vmem:[#allocation2 + $0x22] sm:$0x1]
  %v6290 = vld [vmem:[#allocation2 + $0x2a] sm:$0x1]
  %v6291 = vld [vmem:[#allocation2 + $0x32] sm:$0x1]
  %v6292 = vld [vmem:[#allocation2 + $0x3a] sm:$0x1]
  %s6293 = scalar_lea.vmem %s5, 64
  %v6294 = vld [vmem:[%s6293] sm:$0xff]
  %v6295 = vld [vmem:[%s6293 + $0x8] sm:$0xff]
  %v6296 = vld [vmem:[%s6293 + $0x10] sm:$0xff]
  %v6297 = vld [vmem:[%s6293 + $0x18] sm:$0xff]
  %v6306 = vrot.slane %v6286, 7
  %v6307 = vsel %vm6099, %v6306, %v6285
  %v6308 = vrot.slane %v6287, 6
  %v6309 = vsel %vm6102, %v6308, %v6307
  %v6310 = vrot.slane %v6288, 5
  %v6311 = vsel %vm6105, %v6310, %v6309
  %v6312 = vrot.slane %v6289, 4
  %v6313 = vsel %vm6108, %v6312, %v6311
  %v6314 = vrot.slane %v6290, 3
  %v6315 = vsel %vm6111, %v6314, %v6313
  %v6316 = vrot.slane %v6291, 2
  %v6317 = vsel %vm6114, %v6316, %v6315
  %v6318 = vrot.slane %v6292, 1
  %v6319 = vsel %vm6117, %v6318, %v6317
  %v6320 = vsel %vm46, %v6319, 0
  %6322 = vmatprep.subr.mxu0 0.0
  %6323 = vmatpush1.msra.mxu0 %v6294
  %6324 = vmatprep.subr.mxu0 0.0
  %6325 = vmatpush1.msra.mxu0 %v6295
  %6326 = vmatprep.subr.mxu0 0.0
  %6327 = vmatpush1.msra.mxu0 %v6296
  %6328 = vmatprep.subr.mxu0 0.0
  %6329 = vmatpush1.msra.mxu0 %v6297
  %6330 = vmatprep.subr.mxu0 0.0
  %6331 = vmatpush1.msra.mxu0 0.0
  %6332 = vmatprep.subr.mxu0 0.0
  %6333 = vmatpush1.msra.mxu0 0.0
  %6334 = vmatprep.subr.mxu0 0.0
  %6335 = vmatpush1.msra.mxu0 0.0
  %6336 = vmatprep.subr.mxu0 0.0
  %6337 = vmatpush1.msra.mxu0 0.0
  %6338 = vmatprep.subr.mxu0 0.0
  %6339 = vmatpush1.msra.mxu0 0.0
  %6340 = vmatprep.subr.mxu0 0.0
  %6341 = vmatpush1.msra.mxu0 0.0
  %6342 = vmatprep.subr.mxu0 0.0
  %6343 = vmatpush1.msra.mxu0 0.0
  %6344 = vmatprep.subr.mxu0 0.0
  %6345 = vmatpush1.msra.mxu0 0.0
  %6346 = vmatprep.subr.mxu0 0.0
  %6347 = vmatpush1.msra.mxu0 0.0
  %6348 = vmatprep.subr.mxu0 0.0
  %6349 = vmatpush1.msra.mxu0 0.0
  %6350 = vmatprep.subr.mxu0 0.0
  %6351 = vmatpush1.msra.mxu0 0.0
  %6352 = vmatprep.subr.mxu0 0.0
  %6353 = vmatpush1.msra.mxu0 0.0
  %6354 = vmatprep.subr.mxu0 0.0
  %6355 = vmatpush1.msra.mxu0 0.0
  %6356 = vmatprep.subr.mxu0 0.0
  %6357 = vmatpush1.msra.mxu0 0.0
  %6358 = vmatprep.subr.mxu0 0.0
  %6359 = vmatpush1.msra.mxu0 0.0
  %6360 = vmatprep.subr.mxu0 0.0
  %6361 = vmatpush1.msra.mxu0 0.0
  %6362 = vmatprep.subr.mxu0 0.0
  %6363 = vmatpush1.msra.mxu0 0.0
  %6364 = vmatprep.subr.mxu0 0.0
  %6365 = vmatpush1.msra.mxu0 0.0
  %6366 = vmatprep.subr.mxu0 0.0
  %6367 = vmatpush1.msra.mxu0 0.0
  %6368 = vmatprep.subr.mxu0 0.0
  %6369 = vmatpush1.msra.mxu0 0.0
  %6370 = vmatprep.subr.mxu0 0.0
  %6371 = vmatpush1.msra.mxu0 0.0
  %6372 = vmatprep.subr.mxu0 0.0
  %6373 = vmatpush1.msra.mxu0 0.0
  %6374 = vmatprep.subr.mxu0 0.0
  %6375 = vmatpush1.msra.mxu0 0.0
  %6376 = vmatprep.subr.mxu0 0.0
  %6377 = vmatpush1.msra.mxu0 0.0
  %6378 = vmatprep.subr.mxu0 0.0
  %6379 = vmatpush1.msra.mxu0 0.0
  %6380 = vmatprep.subr.mxu0 0.0
  %6381 = vmatpush1.msra.mxu0 0.0
  %6382 = vmatprep.subr.mxu0 0.0
  %6383 = vmatpush1.msra.mxu0 0.0
  %6384 = vmatprep.subr.mxu0 0.0
  %6385 = vmatpush1.msra.mxu0 0.0
  %6386 = vmatprep.mubr.f32.mxu0 0.0
  %6387 = vmatmul.mubr.f32.gmra.mrb[0].mxu0 %v6320
  %v6388 = vpop.f32.mrb[0].mxu0
  %v6389 = vadd.f32 0.0, %v6388
  %v6390 = vpop.f32.mrb[0].mxu0
  %6391 = vdwg.mxu0
  %v6392 = vadd.f32 %v6282, %v6389
  %v6393 = vld [vmem:[#allocation2 + $0x3] sm:$0x1]
  %v6394 = vld [vmem:[#allocation2 + $0xb] sm:$0x1]
  %v6395 = vld [vmem:[#allocation2 + $0x13] sm:$0x1]
  %v6396 = vld [vmem:[#allocation2 + $0x1b] sm:$0x1]
  %v6397 = vld [vmem:[#allocation2 + $0x23] sm:$0x1]
  %v6398 = vld [vmem:[#allocation2 + $0x2b] sm:$0x1]
  %v6399 = vld [vmem:[#allocation2 + $0x33] sm:$0x1]
  %v6400 = vld [vmem:[#allocation2 + $0x3b] sm:$0x1]
  %s6401 = scalar_lea.vmem %s5, 96
  %v6402 = vld [vmem:[%s6401] sm:$0xff]
  %v6403 = vld [vmem:[%s6401 + $0x8] sm:$0xff]
  %v6404 = vld [vmem:[%s6401 + $0x10] sm:$0xff]
  %v6405 = vld [vmem:[%s6401 + $0x18] sm:$0xff]
  %v6414 = vrot.slane %v6394, 7
  %v6415 = vsel %vm6099, %v6414, %v6393
  %v6416 = vrot.slane %v6395, 6
  %v6417 = vsel %vm6102, %v6416, %v6415
  %v6418 = vrot.slane %v6396, 5
  %v6419 = vsel %vm6105, %v6418, %v6417
  %v6420 = vrot.slane %v6397, 4
  %v6421 = vsel %vm6108, %v6420, %v6419
  %v6422 = vrot.slane %v6398, 3
  %v6423 = vsel %vm6111, %v6422, %v6421
  %v6424 = vrot.slane %v6399, 2
  %v6425 = vsel %vm6114, %v6424, %v6423
  %v6426 = vrot.slane %v6400, 1
  %v6427 = vsel %vm6117, %v6426, %v6425
  %v6428 = vsel %vm46, %v6427, 0
  %6430 = vmatprep.subr.mxu0 0.0
  %6431 = vmatpush1.msra.mxu0 %v6402
  %6432 = vmatprep.subr.mxu0 0.0
  %6433 = vmatpush1.msra.mxu0 %v6403
  %6434 = vmatprep.subr.mxu0 0.0
  %6435 = vmatpush1.msra.mxu0 %v6404
  %6436 = vmatprep.subr.mxu0 0.0
  %6437 = vmatpush1.msra.mxu0 %v6405
  %6438 = vmatprep.subr.mxu0 0.0
  %6439 = vmatpush1.msra.mxu0 0.0
  %6440 = vmatprep.subr.mxu0 0.0
  %6441 = vmatpush1.msra.mxu0 0.0
  %6442 = vmatprep.subr.mxu0 0.0
  %6443 = vmatpush1.msra.mxu0 0.0
  %6444 = vmatprep.subr.mxu0 0.0
  %6445 = vmatpush1.msra.mxu0 0.0
  %6446 = vmatprep.subr.mxu0 0.0
  %6447 = vmatpush1.msra.mxu0 0.0
  %6448 = vmatprep.subr.mxu0 0.0
  %6449 = vmatpush1.msra.mxu0 0.0
  %6450 = vmatprep.subr.mxu0 0.0
  %6451 = vmatpush1.msra.mxu0 0.0
  %6452 = vmatprep.subr.mxu0 0.0
  %6453 = vmatpush1.msra.mxu0 0.0
  %6454 = vmatprep.subr.mxu0 0.0
  %6455 = vmatpush1.msra.mxu0 0.0
  %6456 = vmatprep.subr.mxu0 0.0
  %6457 = vmatpush1.msra.mxu0 0.0
  %6458 = vmatprep.subr.mxu0 0.0
  %6459 = vmatpush1.msra.mxu0 0.0
  %6460 = vmatprep.subr.mxu0 0.0
  %6461 = vmatpush1.msra.mxu0 0.0
  %6462 = vmatprep.subr.mxu0 0.0
  %6463 = vmatpush1.msra.mxu0 0.0
  %6464 = vmatprep.subr.mxu0 0.0
  %6465 = vmatpush1.msra.mxu0 0.0
  %6466 = vmatprep.subr.mxu0 0.0
  %6467 = vmatpush1.msra.mxu0 0.0
  %6468 = vmatprep.subr.mxu0 0.0
  %6469 = vmatpush1.msra.mxu0 0.0
  %6470 = vmatprep.subr.mxu0 0.0
  %6471 = vmatpush1.msra.mxu0 0.0
  %6472 = vmatprep.subr.mxu0 0.0
  %6473 = vmatpush1.msra.mxu0 0.0
  %6474 = vmatprep.subr.mxu0 0.0
  %6475 = vmatpush1.msra.mxu0 0.0
  %6476 = vmatprep.subr.mxu0 0.0
  %6477 = vmatpush1.msra.mxu0 0.0
  %6478 = vmatprep.subr.mxu0 0.0
  %6479 = vmatpush1.msra.mxu0 0.0
  %6480 = vmatprep.subr.mxu0 0.0
  %6481 = vmatpush1.msra.mxu0 0.0
  %6482 = vmatprep.subr.mxu0 0.0
  %6483 = vmatpush1.msra.mxu0 0.0
  %6484 = vmatprep.subr.mxu0 0.0
  %6485 = vmatpush1.msra.mxu0 0.0
  %6486 = vmatprep.subr.mxu0 0.0
  %6487 = vmatpush1.msra.mxu0 0.0
  %6488 = vmatprep.subr.mxu0 0.0
  %6489 = vmatpush1.msra.mxu0 0.0
  %6490 = vmatprep.subr.mxu0 0.0
  %6491 = vmatpush1.msra.mxu0 0.0
  %6492 = vmatprep.subr.mxu0 0.0
  %6493 = vmatpush1.msra.mxu0 0.0
  %6494 = vmatprep.mubr.f32.mxu0 0.0
  %6495 = vmatmul.mubr.f32.gmra.mrb[0].mxu0 %v6428
  %v6496 = vpop.f32.mrb[0].mxu0
  %v6497 = vadd.f32 0.0, %v6496
  %v6498 = vpop.f32.mrb[0].mxu0
  %6499 = vdwg.mxu0
  %v6500 = vadd.f32 %v6392, %v6497
  %v6501 = vld [vmem:[#allocation2 + $0x4] sm:$0x1]
  %v6502 = vld [vmem:[#allocation2 + $0xc] sm:$0x1]
  %v6503 = vld [vmem:[#allocation2 + $0x14] sm:$0x1]
  %v6504 = vld [vmem:[#allocation2 + $0x1c] sm:$0x1]
  %v6505 = vld [vmem:[#allocation2 + $0x24] sm:$0x1]
  %v6506 = vld [vmem:[#allocation2 + $0x2c] sm:$0x1]
  %v6507 = vld [vmem:[#allocation2 + $0x34] sm:$0x1]
  %v6508 = vld [vmem:[#allocation2 + $0x3c] sm:$0x1]
  %s6509 = scalar_lea.vmem %s5, 128
  %v6510 = vld [vmem:[%s6509] sm:$0xff]
  %v6511 = vld [vmem:[%s6509 + $0x8] sm:$0xff]
  %v6512 = vld [vmem:[%s6509 + $0x10] sm:$0xff]
  %v6513 = vld [vmem:[%s6509 + $0x18] sm:$0xff]
  %v6522 = vrot.slane %v6502, 7
  %v6523 = vsel %vm6099, %v6522, %v6501
  %v6524 = vrot.slane %v6503, 6
  %v6525 = vsel %vm6102, %v6524, %v6523
  %v6526 = vrot.slane %v6504, 5
  %v6527 = vsel %vm6105, %v6526, %v6525
  %v6528 = vrot.slane %v6505, 4
  %v6529 = vsel %vm6108, %v6528, %v6527
  %v6530 = vrot.slane %v6506, 3
  %v6531 = vsel %vm6111, %v6530, %v6529
  %v6532 = vrot.slane %v6507, 2
  %v6533 = vsel %vm6114, %v6532, %v6531
  %v6534 = vrot.slane %v6508, 1
  %v6535 = vsel %vm6117, %v6534, %v6533
  %v6536 = vsel %vm46, %v6535, 0
  %6538 = vmatprep.subr.mxu0 0.0
  %6539 = vmatpush1.msra.mxu0 %v6510
  %6540 = vmatprep.subr.mxu0 0.0
  %6541 = vmatpush1.msra.mxu0 %v6511
  %6542 = vmatprep.subr.mxu0 0.0
  %6543 = vmatpush1.msra.mxu0 %v6512
  %6544 = vmatprep.subr.mxu0 0.0
  %6545 = vmatpush1.msra.mxu0 %v6513
  %6546 = vmatprep.subr.mxu0 0.0
  %6547 = vmatpush1.msra.mxu0 0.0
  %6548 = vmatprep.subr.mxu0 0.0
  %6549 = vmatpush1.msra.mxu0 0.0
  %6550 = vmatprep.subr.mxu0 0.0
  %6551 = vmatpush1.msra.mxu0 0.0
  %6552 = vmatprep.subr.mxu0 0.0
  %6553 = vmatpush1.msra.mxu0 0.0
  %6554 = vmatprep.subr.mxu0 0.0
  %6555 = vmatpush1.msra.mxu0 0.0
  %6556 = vmatprep.subr.mxu0 0.0
  %6557 = vmatpush1.msra.mxu0 0.0
  %6558 = vmatprep.subr.mxu0 0.0
  %6559 = vmatpush1.msra.mxu0 0.0
  %6560 = vmatprep.subr.mxu0 0.0
  %6561 = vmatpush1.msra.mxu0 0.0
  %6562 = vmatprep.subr.mxu0 0.0
  %6563 = vmatpush1.msra.mxu0 0.0
  %6564 = vmatprep.subr.mxu0 0.0
  %6565 = vmatpush1.msra.mxu0 0.0
  %6566 = vmatprep.subr.mxu0 0.0
  %6567 = vmatpush1.msra.mxu0 0.0
  %6568 = vmatprep.subr.mxu0 0.0
  %6569 = vmatpush1.msra.mxu0 0.0
  %6570 = vmatprep.subr.mxu0 0.0
  %6571 = vmatpush1.msra.mxu0 0.0
  %6572 = vmatprep.subr.mxu0 0.0
  %6573 = vmatpush1.msra.mxu0 0.0
  %6574 = vmatprep.subr.mxu0 0.0
  %6575 = vmatpush1.msra.mxu0 0.0
  %6576 = vmatprep.subr.mxu0 0.0
  %6577 = vmatpush1.msra.mxu0 0.0
  %6578 = vmatprep.subr.mxu0 0.0
  %6579 = vmatpush1.msra.mxu0 0.0
  %6580 = vmatprep.subr.mxu0 0.0
  %6581 = vmatpush1.msra.mxu0 0.0
  %6582 = vmatprep.subr.mxu0 0.0
  %6583 = vmatpush1.msra.mxu0 0.0
  %6584 = vmatprep.subr.mxu0 0.0
  %6585 = vmatpush1.msra.mxu0 0.0
  %6586 = vmatprep.subr.mxu0 0.0
  %6587 = vmatpush1.msra.mxu0 0.0
  %6588 = vmatprep.subr.mxu0 0.0
  %6589 = vmatpush1.msra.mxu0 0.0
  %6590 = vmatprep.subr.mxu0 0.0
  %6591 = vmatpush1.msra.mxu0 0.0
  %6592 = vmatprep.subr.mxu0 0.0
  %6593 = vmatpush1.msra.mxu0 0.0
  %6594 = vmatprep.subr.mxu0 0.0
  %6595 = vmatpush1.msra.mxu0 0.0
  %6596 = vmatprep.subr.mxu0 0.0
  %6597 = vmatpush1.msra.mxu0 0.0
  %6598 = vmatprep.subr.mxu0 0.0
  %6599 = vmatpush1.msra.mxu0 0.0
  %6600 = vmatprep.subr.mxu0 0.0
  %6601 = vmatpush1.msra.mxu0 0.0
  %6602 = vmatprep.mubr.f32.mxu0 0.0
  %6603 = vmatmul.mubr.f32.gmra.mrb[0].mxu0 %v6536
  %v6604 = vpop.f32.mrb[0].mxu0
  %v6605 = vadd.f32 0.0, %v6604
  %v6606 = vpop.f32.mrb[0].mxu0
  %6607 = vdwg.mxu0
  %v6608 = vadd.f32 %v6500, %v6605
  %v6609 = vld [vmem:[#allocation2 + $0x5] sm:$0x1]
  %v6610 = vld [vmem:[#allocation2 + $0xd] sm:$0x1]
  %v6611 = vld [vmem:[#allocation2 + $0x15] sm:$0x1]
  %v6612 = vld [vmem:[#allocation2 + $0x1d] sm:$0x1]
  %v6613 = vld [vmem:[#allocation2 + $0x25] sm:$0x1]
  %v6614 = vld [vmem:[#allocation2 + $0x2d] sm:$0x1]
  %v6615 = vld [vmem:[#allocation2 + $0x35] sm:$0x1]
  %v6616 = vld [vmem:[#allocation2 + $0x3d] sm:$0x1]
  %s6617 = scalar_lea.vmem %s5, 160
  %v6618 = vld [vmem:[%s6617] sm:$0xff]
  %v6619 = vld [vmem:[%s6617 + $0x8] sm:$0xff]
  %v6620 = vld [vmem:[%s6617 + $0x10] sm:$0xff]
  %v6621 = vld [vmem:[%s6617 + $0x18] sm:$0xff]
  %v6630 = vrot.slane %v6610, 7
  %v6631 = vsel %vm6099, %v6630, %v6609
  %v6632 = vrot.slane %v6611, 6
  %v6633 = vsel %vm6102, %v6632, %v6631
  %v6634 = vrot.slane %v6612, 5
  %v6635 = vsel %vm6105, %v6634, %v6633
  %v6636 = vrot.slane %v6613, 4
  %v6637 = vsel %vm6108, %v6636, %v6635
  %v6638 = vrot.slane %v6614, 3
  %v6639 = vsel %vm6111, %v6638, %v6637
  %v6640 = vrot.slane %v6615, 2
  %v6641 = vsel %vm6114, %v6640, %v6639
  %v6642 = vrot.slane %v6616, 1
  %v6643 = vsel %vm6117, %v6642, %v6641
  %v6644 = vsel %vm46, %v6643, 0
  %6646 = vmatprep.subr.mxu0 0.0
  %6647 = vmatpush1.msra.mxu0 %v6618
  %6648 = vmatprep.subr.mxu0 0.0
  %6649 = vmatpush1.msra.mxu0 %v6619
  %6650 = vmatprep.subr.mxu0 0.0
  %6651 = vmatpush1.msra.mxu0 %v6620
  %6652 = vmatprep.subr.mxu0 0.0
  %6653 = vmatpush1.msra.mxu0 %v6621
  %6654 = vmatprep.subr.mxu0 0.0
  %6655 = vmatpush1.msra.mxu0 0.0
  %6656 = vmatprep.subr.mxu0 0.0
  %6657 = vmatpush1.msra.mxu0 0.0
  %6658 = vmatprep.subr.mxu0 0.0
  %6659 = vmatpush1.msra.mxu0 0.0
  %6660 = vmatprep.subr.mxu0 0.0
  %6661 = vmatpush1.msra.mxu0 0.0
  %6662 = vmatprep.subr.mxu0 0.0
  %6663 = vmatpush1.msra.mxu0 0.0
  %6664 = vmatprep.subr.mxu0 0.0
  %6665 = vmatpush1.msra.mxu0 0.0
  %6666 = vmatprep.subr.mxu0 0.0
  %6667 = vmatpush1.msra.mxu0 0.0
  %6668 = vmatprep.subr.mxu0 0.0
  %6669 = vmatpush1.msra.mxu0 0.0
  %6670 = vmatprep.subr.mxu0 0.0
  %6671 = vmatpush1.msra.mxu0 0.0
  %6672 = vmatprep.subr.mxu0 0.0
  %6673 = vmatpush1.msra.mxu0 0.0
  %6674 = vmatprep.subr.mxu0 0.0
  %6675 = vmatpush1.msra.mxu0 0.0
  %6676 = vmatprep.subr.mxu0 0.0
  %6677 = vmatpush1.msra.mxu0 0.0
  %6678 = vmatprep.subr.mxu0 0.0
  %6679 = vmatpush1.msra.mxu0 0.0
  %6680 = vmatprep.subr.mxu0 0.0
  %6681 = vmatpush1.msra.mxu0 0.0
  %6682 = vmatprep.subr.mxu0 0.0
  %6683 = vmatpush1.msra.mxu0 0.0
  %6684 = vmatprep.subr.mxu0 0.0
  %6685 = vmatpush1.msra.mxu0 0.0
  %6686 = vmatprep.subr.mxu0 0.0
  %6687 = vmatpush1.msra.mxu0 0.0
  %6688 = vmatprep.subr.mxu0 0.0
  %6689 = vmatpush1.msra.mxu0 0.0
  %6690 = vmatprep.subr.mxu0 0.0
  %6691 = vmatpush1.msra.mxu0 0.0
  %6692 = vmatprep.subr.mxu0 0.0
  %6693 = vmatpush1.msra.mxu0 0.0
  %6694 = vmatprep.subr.mxu0 0.0
  %6695 = vmatpush1.msra.mxu0 0.0
  %6696 = vmatprep.subr.mxu0 0.0
  %6697 = vmatpush1.msra.mxu0 0.0
  %6698 = vmatprep.subr.mxu0 0.0
  %6699 = vmatpush1.msra.mxu0 0.0
  %6700 = vmatprep.subr.mxu0 0.0
  %6701 = vmatpush1.msra.mxu0 0.0
  %6702 = vmatprep.subr.mxu0 0.0
  %6703 = vmatpush1.msra.mxu0 0.0
  %6704 = vmatprep.subr.mxu0 0.0
  %6705 = vmatpush1.msra.mxu0 0.0
  %6706 = vmatprep.subr.mxu0 0.0
  %6707 = vmatpush1.msra.mxu0 0.0
  %6708 = vmatprep.subr.mxu0 0.0
  %6709 = vmatpush1.msra.mxu0 0.0
  %6710 = vmatprep.mubr.f32.mxu0 0.0
  %6711 = vmatmul.mubr.f32.gmra.mrb[0].mxu0 %v6644
  %v6712 = vpop.f32.mrb[0].mxu0
  %v6713 = vadd.f32 0.0, %v6712
  %v6714 = vpop.f32.mrb[0].mxu0
  %6715 = vdwg.mxu0
  %v6716 = vadd.f32 %v6608, %v6713
  %v6717 = vld [vmem:[#allocation2 + $0x6] sm:$0x1]
  %v6718 = vld [vmem:[#allocation2 + $0xe] sm:$0x1]
  %v6719 = vld [vmem:[#allocation2 + $0x16] sm:$0x1]
  %v6720 = vld [vmem:[#allocation2 + $0x1e] sm:$0x1]
  %v6721 = vld [vmem:[#allocation2 + $0x26] sm:$0x1]
  %v6722 = vld [vmem:[#allocation2 + $0x2e] sm:$0x1]
  %v6723 = vld [vmem:[#allocation2 + $0x36] sm:$0x1]
  %v6724 = vld [vmem:[#allocation2 + $0x3e] sm:$0x1]
  %s6725 = scalar_lea.vmem %s5, 192
  %v6726 = vld [vmem:[%s6725] sm:$0xff]
  %v6727 = vld [vmem:[%s6725 + $0x8] sm:$0xff]
  %v6728 = vld [vmem:[%s6725 + $0x10] sm:$0xff]
  %v6729 = vld [vmem:[%s6725 + $0x18] sm:$0xff]
  %v6738 = vrot.slane %v6718, 7
  %v6739 = vsel %vm6099, %v6738, %v6717
  %v6740 = vrot.slane %v6719, 6
  %v6741 = vsel %vm6102, %v6740, %v6739
  %v6742 = vrot.slane %v6720, 5
  %v6743 = vsel %vm6105, %v6742, %v6741
  %v6744 = vrot.slane %v6721, 4
  %v6745 = vsel %vm6108, %v6744, %v6743
  %v6746 = vrot.slane %v6722, 3
  %v6747 = vsel %vm6111, %v6746, %v6745
  %v6748 = vrot.slane %v6723, 2
  %v6749 = vsel %vm6114, %v6748, %v6747
  %v6750 = vrot.slane %v6724, 1
  %v6751 = vsel %vm6117, %v6750, %v6749
  %v6752 = vsel %vm46, %v6751, 0
  %6754 = vmatprep.subr.mxu0 0.0
  %6755 = vmatpush1.msra.mxu0 %v6726
  %6756 = vmatprep.subr.mxu0 0.0
  %6757 = vmatpush1.msra.mxu0 %v6727
  %6758 = vmatprep.subr.mxu0 0.0
  %6759 = vmatpush1.msra.mxu0 %v6728
  %6760 = vmatprep.subr.mxu0 0.0
  %6761 = vmatpush1.msra.mxu0 %v6729
  %6762 = vmatprep.subr.mxu0 0.0
  %6763 = vmatpush1.msra.mxu0 0.0
  %6764 = vmatprep.subr.mxu0 0.0
  %6765 = vmatpush1.msra.mxu0 0.0
  %6766 = vmatprep.subr.mxu0 0.0
  %6767 = vmatpush1.msra.mxu0 0.0
  %6768 = vmatprep.subr.mxu0 0.0
  %6769 = vmatpush1.msra.mxu0 0.0
  %6770 = vmatprep.subr.mxu0 0.0
  %6771 = vmatpush1.msra.mxu0 0.0
  %6772 = vmatprep.subr.mxu0 0.0
  %6773 = vmatpush1.msra.mxu0 0.0
  %6774 = vmatprep.subr.mxu0 0.0
  %6775 = vmatpush1.msra.mxu0 0.0
  %6776 = vmatprep.subr.mxu0 0.0
  %6777 = vmatpush1.msra.mxu0 0.0
  %6778 = vmatprep.subr.mxu0 0.0
  %6779 = vmatpush1.msra.mxu0 0.0
  %6780 = vmatprep.subr.mxu0 0.0
  %6781 = vmatpush1.msra.mxu0 0.0
  %6782 = vmatprep.subr.mxu0 0.0
  %6783 = vmatpush1.msra.mxu0 0.0
  %6784 = vmatprep.subr.mxu0 0.0
  %6785 = vmatpush1.msra.mxu0 0.0
  %6786 = vmatprep.subr.mxu0 0.0
  %6787 = vmatpush1.msra.mxu0 0.0
  %6788 = vmatprep.subr.mxu0 0.0
  %6789 = vmatpush1.msra.mxu0 0.0
  %6790 = vmatprep.subr.mxu0 0.0
  %6791 = vmatpush1.msra.mxu0 0.0
  %6792 = vmatprep.subr.mxu0 0.0
  %6793 = vmatpush1.msra.mxu0 0.0
  %6794 = vmatprep.subr.mxu0 0.0
  %6795 = vmatpush1.msra.mxu0 0.0
  %6796 = vmatprep.subr.mxu0 0.0
  %6797 = vmatpush1.msra.mxu0 0.0
  %6798 = vmatprep.subr.mxu0 0.0
  %6799 = vmatpush1.msra.mxu0 0.0
  %6800 = vmatprep.subr.mxu0 0.0
  %6801 = vmatpush1.msra.mxu0 0.0
  %6802 = vmatprep.subr.mxu0 0.0
  %6803 = vmatpush1.msra.mxu0 0.0
  %6804 = vmatprep.subr.mxu0 0.0
  %6805 = vmatpush1.msra.mxu0 0.0
  %6806 = vmatprep.subr.mxu0 0.0
  %6807 = vmatpush1.msra.mxu0 0.0
  %6808 = vmatprep.subr.mxu0 0.0
  %6809 = vmatpush1.msra.mxu0 0.0
  %6810 = vmatprep.subr.mxu0 0.0
  %6811 = vmatpush1.msra.mxu0 0.0
  %6812 = vmatprep.subr.mxu0 0.0
  %6813 = vmatpush1.msra.mxu0 0.0
  %6814 = vmatprep.subr.mxu0 0.0
  %6815 = vmatpush1.msra.mxu0 0.0
  %6816 = vmatprep.subr.mxu0 0.0
  %6817 = vmatpush1.msra.mxu0 0.0
  %6818 = vmatprep.mubr.f32.mxu0 0.0
  %6819 = vmatmul.mubr.f32.gmra.mrb[0].mxu0 %v6752
  %v6820 = vpop.f32.mrb[0].mxu0
  %v6821 = vadd.f32 0.0, %v6820
  %v6822 = vpop.f32.mrb[0].mxu0
  %6823 = vdwg.mxu0
  %v6824 = vadd.f32 %v6716, %v6821
  %v6825 = vld [vmem:[#allocation2 + $0x7] sm:$0x1]
  %v6826 = vld [vmem:[#allocation2 + $0xf] sm:$0x1]
  %v6827 = vld [vmem:[#allocation2 + $0x17] sm:$0x1]
  %v6828 = vld [vmem:[#allocation2 + $0x1f] sm:$0x1]
  %v6829 = vld [vmem:[#allocation2 + $0x27] sm:$0x1]
  %v6830 = vld [vmem:[#allocation2 + $0x2f] sm:$0x1]
  %v6831 = vld [vmem:[#allocation2 + $0x37] sm:$0x1]
  %v6832 = vld [vmem:[#allocation2 + $0x3f] sm:$0x1]
  %s6833 = scalar_lea.vmem %s5, 224
  %v6834 = vld [vmem:[%s6833] sm:$0xff]
  %v6835 = vld [vmem:[%s6833 + $0x8] sm:$0xff]
  %v6836 = vld [vmem:[%s6833 + $0x10] sm:$0xff]
  %v6837 = vld [vmem:[%s6833 + $0x18] sm:$0xff]
  %v6846 = vrot.slane %v6826, 7
  %v6847 = vsel %vm6099, %v6846, %v6825
  %v6848 = vrot.slane %v6827, 6
  %v6849 = vsel %vm6102, %v6848, %v6847
  %v6850 = vrot.slane %v6828, 5
  %v6851 = vsel %vm6105, %v6850, %v6849
  %v6852 = vrot.slane %v6829, 4
  %v6853 = vsel %vm6108, %v6852, %v6851
  %v6854 = vrot.slane %v6830, 3
  %v6855 = vsel %vm6111, %v6854, %v6853
  %v6856 = vrot.slane %v6831, 2
  %v6857 = vsel %vm6114, %v6856, %v6855
  %v6858 = vrot.slane %v6832, 1
  %v6859 = vsel %vm6117, %v6858, %v6857
  %v6860 = vsel %vm46, %v6859, 0
  %6862 = vmatprep.subr.mxu0 0.0
  %6863 = vmatpush1.msra.mxu0 %v6834
  %6864 = vmatprep.subr.mxu0 0.0
  %6865 = vmatpush1.msra.mxu0 %v6835
  %6866 = vmatprep.subr.mxu0 0.0
  %6867 = vmatpush1.msra.mxu0 %v6836
  %6868 = vmatprep.subr.mxu0 0.0
  %6869 = vmatpush1.msra.mxu0 %v6837
  %6870 = vmatprep.subr.mxu0 0.0
  %6871 = vmatpush1.msra.mxu0 0.0
  %6872 = vmatprep.subr.mxu0 0.0
  %6873 = vmatpush1.msra.mxu0 0.0
  %6874 = vmatprep.subr.mxu0 0.0
  %6875 = vmatpush1.msra.mxu0 0.0
  %6876 = vmatprep.subr.mxu0 0.0
  %6877 = vmatpush1.msra.mxu0 0.0
  %6878 = vmatprep.subr.mxu0 0.0
  %6879 = vmatpush1.msra.mxu0 0.0
  %6880 = vmatprep.subr.mxu0 0.0
  %6881 = vmatpush1.msra.mxu0 0.0
  %6882 = vmatprep.subr.mxu0 0.0
  %6883 = vmatpush1.msra.mxu0 0.0
  %6884 = vmatprep.subr.mxu0 0.0
  %6885 = vmatpush1.msra.mxu0 0.0
  %6886 = vmatprep.subr.mxu0 0.0
  %6887 = vmatpush1.msra.mxu0 0.0
  %6888 = vmatprep.subr.mxu0 0.0
  %6889 = vmatpush1.msra.mxu0 0.0
  %6890 = vmatprep.subr.mxu0 0.0
  %6891 = vmatpush1.msra.mxu0 0.0
  %6892 = vmatprep.subr.mxu0 0.0
  %6893 = vmatpush1.msra.mxu0 0.0
  %6894 = vmatprep.subr.mxu0 0.0
  %6895 = vmatpush1.msra.mxu0 0.0
  %6896 = vmatprep.subr.mxu0 0.0
  %6897 = vmatpush1.msra.mxu0 0.0
  %6898 = vmatprep.subr.mxu0 0.0
  %6899 = vmatpush1.msra.mxu0 0.0
  %6900 = vmatprep.subr.mxu0 0.0
  %6901 = vmatpush1.msra.mxu0 0.0
  %6902 = vmatprep.subr.mxu0 0.0
  %6903 = vmatpush1.msra.mxu0 0.0
  %6904 = vmatprep.subr.mxu0 0.0
  %6905 = vmatpush1.msra.mxu0 0.0
  %6906 = vmatprep.subr.mxu0 0.0
  %6907 = vmatpush1.msra.mxu0 0.0
  %6908 = vmatprep.subr.mxu0 0.0
  %6909 = vmatpush1.msra.mxu0 0.0
  %6910 = vmatprep.subr.mxu0 0.0
  %6911 = vmatpush1.msra.mxu0 0.0
  %6912 = vmatprep.subr.mxu0 0.0
  %6913 = vmatpush1.msra.mxu0 0.0
  %6914 = vmatprep.subr.mxu0 0.0
  %6915 = vmatpush1.msra.mxu0 0.0
  %6916 = vmatprep.subr.mxu0 0.0
  %6917 = vmatpush1.msra.mxu0 0.0
  %6918 = vmatprep.subr.mxu0 0.0
  %6919 = vmatpush1.msra.mxu0 0.0
  %6920 = vmatprep.subr.mxu0 0.0
  %6921 = vmatpush1.msra.mxu0 0.0
  %6922 = vmatprep.subr.mxu0 0.0
  %6923 = vmatpush1.msra.mxu0 0.0
  %6924 = vmatprep.subr.mxu0 0.0
  %6925 = vmatpush1.msra.mxu0 0.0
  %6926 = vmatprep.mubr.f32.mxu0 0.0
  %6927 = vmatmul.mubr.f32.gmra.mrb[0].mxu0 %v6860
  %v6928 = vpop.f32.mrb[0].mxu0
  %v6929 = vadd.f32 0.0, %v6928
  %v6930 = vpop.f32.mrb[0].mxu0
  %6931 = vdwg.mxu0
  %v6932 = vadd.f32 %v6824, %v6929
  %v6933 = vlaneseq
  %v6934 = vshrl.u32 %v6933, 7
  %v6935 = vsub.s32 4, %v6934
  %v6936 = vrot.slane %v29, %v6935
  %v6937 = vadd.f32 %v6932, %v6936
  %v6938 = vld [vmem:[%s6] sm:$0xff]
  %v6939 = vld [vmem:[%s6 + $0x8] sm:$0xff]
  %v6940 = vlaneseq
  %v6941 = vshrl.u32 %v6940, 7
  %v6942 = vsub.s32 5, %v6941
  %v6943 = vrot.slane %v29, %v6942
  %v6945 = vsel %vm1685, %v6937, 0
  %6947 = vmatprep.subr.mxu0 0.0
  %6948 = vmatpush1.msra.mxu0 %v6938
  %6949 = vmatprep.subr.mxu0 0.0
  %6950 = vmatpush1.msra.mxu0 %v6939
  %6951 = vmatprep.subr.mxu0 0.0
  %6952 = vmatpush1.msra.mxu0 0.0
  %6953 = vmatprep.subr.mxu0 0.0
  %6954 = vmatpush1.msra.mxu0 0.0
  %6955 = vmatprep.subr.mxu0 0.0
  %6956 = vmatpush1.msra.mxu0 0.0
  %6957 = vmatprep.subr.mxu0 0.0
  %6958 = vmatpush1.msra.mxu0 0.0
  %6959 = vmatprep.subr.mxu0 0.0
  %6960 = vmatpush1.msra.mxu0 0.0
  %6961 = vmatprep.subr.mxu0 0.0
  %6962 = vmatpush1.msra.mxu0 0.0
  %6963 = vmatprep.subr.mxu0 0.0
  %6964 = vmatpush1.msra.mxu0 0.0
  %6965 = vmatprep.subr.mxu0 0.0
  %6966 = vmatpush1.msra.mxu0 0.0
  %6967 = vmatprep.subr.mxu0 0.0
  %6968 = vmatpush1.msra.mxu0 0.0
  %6969 = vmatprep.subr.mxu0 0.0
  %6970 = vmatpush1.msra.mxu0 0.0
  %6971 = vmatprep.subr.mxu0 0.0
  %6972 = vmatpush1.msra.mxu0 0.0
  %6973 = vmatprep.subr.mxu0 0.0
  %6974 = vmatpush1.msra.mxu0 0.0
  %6975 = vmatprep.subr.mxu0 0.0
  %6976 = vmatpush1.msra.mxu0 0.0
  %6977 = vmatprep.subr.mxu0 0.0
  %6978 = vmatpush1.msra.mxu0 0.0
  %6979 = vmatprep.subr.mxu0 0.0
  %6980 = vmatpush1.msra.mxu0 0.0
  %6981 = vmatprep.subr.mxu0 0.0
  %6982 = vmatpush1.msra.mxu0 0.0
  %6983 = vmatprep.subr.mxu0 0.0
  %6984 = vmatpush1.msra.mxu0 0.0
  %6985 = vmatprep.subr.mxu0 0.0
  %6986 = vmatpush1.msra.mxu0 0.0
  %6987 = vmatprep.subr.mxu0 0.0
  %6988 = vmatpush1.msra.mxu0 0.0
  %6989 = vmatprep.subr.mxu0 0.0
  %6990 = vmatpush1.msra.mxu0 0.0
  %6991 = vmatprep.subr.mxu0 0.0
  %6992 = vmatpush1.msra.mxu0 0.0
  %6993 = vmatprep.subr.mxu0 0.0
  %6994 = vmatpush1.msra.mxu0 0.0
  %6995 = vmatprep.subr.mxu0 0.0
  %6996 = vmatpush1.msra.mxu0 0.0
  %6997 = vmatprep.subr.mxu0 0.0
  %6998 = vmatpush1.msra.mxu0 0.0
  %6999 = vmatprep.subr.mxu0 0.0
  %7000 = vmatpush1.msra.mxu0 0.0
  %7001 = vmatprep.subr.mxu0 0.0
  %7002 = vmatpush1.msra.mxu0 0.0
  %7003 = vmatprep.subr.mxu0 0.0
  %7004 = vmatpush1.msra.mxu0 0.0
  %7005 = vmatprep.subr.mxu0 0.0
  %7006 = vmatpush1.msra.mxu0 0.0
  %7007 = vmatprep.subr.mxu0 0.0
  %7008 = vmatpush1.msra.mxu0 0.0
  %7009 = vmatprep.subr.mxu0 0.0
  %7010 = vmatpush1.msra.mxu0 0.0
  %7011 = vmatprep.mubr.f32.mxu0 0.0
  %7012 = vmatmul.mubr.f32.gmra.mrb[0].mxu0 %v6945
  %v7013 = vpop.f32.mrb[0].mxu0
  %v7014 = vadd.f32 %v6943, %v7013
  %v7015 = vpop.f32.mrb[0].mxu0
  %7016 = vdwg.mxu0
  %7017 = vst.msk [vmem:[%s8] sm:$0xff] %vm2307, %v7014
  // Predicated region
  $region34: #{forward.1} parent=0 // pred_check
    _
  $region35: #{forward.1} parent=0 // pred_check_branch
    %7019 = sbr.rel (0) target = $region37
  $region36: #{forward.1} parent=0 // pred_region
    _
  $region37: #{forward.1} parent=0 // pred_fallthru
    _
  // Predicated region
  $region38: #{forward.1} parent=0 // pred_check
    _
  $region39: #{forward.1} parent=0 // pred_check_branch
    %7021 = sbr.rel (0) target = $region41
  $region40: #{forward.1} parent=0 // pred_region
    _
  $region41: #{forward.1} parent=0 // pred_fallthru
    _

</llo_original>
